<compile_context>
chip_gen: v6e
topology: v6e:2x2x1
jax: 0.10.0
libtpu: 0.0.40
codegen_flags: <defaults>
</compile_context>

<pallas_src>
import numpy as np
import jax
import jax.numpy as jnp
from jax.experimental import pallas as pl
from jax.experimental.pallas import tpu as pltpu

_LANE = 128  # fc output dims are zero-padded to a full 128-lane register
_VMEM = pl.BlockSpec(memory_space=pltpu.MemorySpace.VMEM)


# ---------------------------------------------------------------------------
# Static structural matrices (depend only on shapes; built once with numpy)
# ---------------------------------------------------------------------------

def _pool_matrix(h, w):
    """(h*w, (h//2)*(w//2)) matrix implementing AvgPool2d(kernel=2, stride=2)."""
    ho, wo = h // 2, w // 2
    m = np.zeros((h * w, ho * wo), np.float32)
    for i in range(h):
        for j in range(w):
            m[i * w + j, (i // 2) * wo + (j // 2)] = 0.25
    return m


def _shift_matrices(hin, k, hout):
    """(k*k, hin*hin, hout*hout) one-hot matrices.

    S[di*k+dj] maps a (hin x hin) feature map (flattened on the lane axis) to the
    (hout x hout) window of columns (i+di, j+dj) -- i.e. the per-offset patch
    selection of a valid kxk convolution, expressed as a matmul.
    """
    s = np.zeros((k * k, hin * hin, hout * hout), np.float32)
    for di in range(k):
        for dj in range(k):
            d = di * k + dj
            for i in range(hout):
                for j in range(hout):
                    s[d, (i + di) * hin + (j + dj), i * hout + j] = 1.0
    return s


# ---------------------------------------------------------------------------
# The single fused Pallas kernel
# ---------------------------------------------------------------------------
# Layouts (B = batch):
#   cols1 : (25*B, 784)   rows (kernel-offset, b), cols (i, j) of the 28x28 output
#   y1/a1 : (6*B,  784/196)  rows (conv1-out-channel, b)
#   y2/a2 : (16*B, 100/25)   rows (conv2-out-channel, b)
#   fc    : (B, 128) zero-padded feature axis (lane-dense store)

def _lenet_fused_kernel(cols1_ref, w1k_ref, b1k_ref, p1_ref,
                        s2_ref, w2k_ref, b2k_ref, p2_ref,
                        fc1w_ref, fc1b_ref, fc2w_ref, fc2b_ref,
                        fc3w_ref, fc3b_ref, out_ref):
    f32 = jnp.float32
    B = out_ref.shape[0]

    # conv1 (one matmul on im2col columns) + bias + tanh          -> (6B, 784)
    y1 = jnp.dot(w1k_ref[...], cols1_ref[...], preferred_element_type=f32)
    y1 = jnp.tanh(y1 + b1k_ref[...])

    # pool1 as matmul with the constant 0/0.25 pooling matrix      -> (6B, 196)
    a1 = jnp.dot(y1, p1_ref[...], preferred_element_type=f32)

    # conv2 as 25 shifted matmuls (patch selection via S2 matrices) -> (16B, 100)
    acc = None
    for d in range(25):
        shifted = jnp.dot(a1, s2_ref[d], preferred_element_type=f32)      # (6B, 100)
        term = jnp.dot(w2k_ref[d], shifted, preferred_element_type=f32)   # (16B, 100)
        acc = term if acc is None else acc + term
    y2 = jnp.tanh(acc + b2k_ref[...])

    # pool2                                                        -> (16B, 25)
    a2 = jnp.dot(y2, p2_ref[...], preferred_element_type=f32)

    # fc1: the PyTorch .view(B, -1) flatten is folded into a per-channel sum of
    # matmuls (rows c*B:(c+1)*B of a2 are channel c for all batch elements).
    h = None
    for c in range(16):
        blk = a2[c * B:(c + 1) * B, :]                                    # (B, 25)
        term = jnp.dot(blk, fc1w_ref[c], preferred_element_type=f32)      # (B, 128)
        h = term if h is None else h + term
    h = jnp.tanh(h + fc1b_ref[...])

    # fc2, fc3 (feature dims zero-padded to 128 lanes)
    h = jnp.tanh(jnp.dot(h, fc2w_ref[...], preferred_element_type=f32) + fc2b_ref[...])
    h = jnp.tanh(jnp.dot(h, fc3w_ref[...], preferred_element_type=f32) + fc3b_ref[...])
    out_ref[...] = h


# ---------------------------------------------------------------------------
# Parameter preparation (done once, outside the jitted forward)
# ---------------------------------------------------------------------------

def _pad_last(a, target):
    pad = [(0, 0)] * (a.ndim - 1) + [(0, target - a.shape[-1])]
    return jnp.pad(a, pad)


def _pad2(a, rows, cols):
    return jnp.pad(a, ((0, rows - a.shape[0]), (0, cols - a.shape[1])))


def prepare_params(params, batch):
    """Repack PyTorch-layout parameters into the fused-kernel operands."""
    B = batch
    eye_b = jnp.eye(B, dtype=jnp.float32)

    w1m = params["cnn1_w"].reshape(6, 25).astype(jnp.float32)       # (cout, di*5+dj)
    w2 = params["cnn2_w"].astype(jnp.float32)                        # (16, 6, 5, 5)

    prep = {
        # conv1: kron with I_B so rows are (cout, b) and cols of cols1 are (offset, b)
        "w1k": jnp.kron(w1m, eye_b),                                  # (6B, 25B)
        "b1k": jnp.repeat(params["cnn1_b"].astype(jnp.float32), B).reshape(6 * B, 1),
        "p1": jnp.asarray(_pool_matrix(28, 28)),                      # (784, 196)
        # conv2: per-offset channel-mixing matrices kron I_B
        "s2": jnp.asarray(_shift_matrices(14, 5, 10)),                # (25, 196, 100)
        "w2k": jnp.einsum("oipq,bc->pqobic", w2, eye_b).reshape(25, 16 * B, 6 * B),
        "b2k": jnp.repeat(params["cnn2_b"].astype(jnp.float32), B).reshape(16 * B, 1),
        "p2": jnp.asarray(_pool_matrix(10, 10)),                      # (100, 25)
        # fc weights: transpose to (in, out), split fc1's input by channel,
        # zero-pad output features to 128 lanes.
        "fc1w": _pad_last(params["fc1_w"].T.reshape(16, 25, 120), _LANE),  # (16,25,128)
        "fc1b": _pad_last(params["fc1_b"], _LANE).reshape(1, _LANE),
        "fc2w": _pad2(params["fc2_w"].T, _LANE, _LANE),               # (128, 128)
        "fc2b": _pad_last(params["fc2_b"], _LANE).reshape(1, _LANE),
        "fc3w": _pad2(params["fc3_w"].T, _LANE, _LANE),               # (128, 128)
        "fc3b": _pad_last(params["fc3_b"], _LANE).reshape(1, _LANE),
    }
    return prep


# ---------------------------------------------------------------------------
# Forward pass (single pallas_call, everything else fused by jax.jit)
# ---------------------------------------------------------------------------

@jax.jit
def lenet_forward(prep, x):
    B = x.shape[0]
    # conv1 im2col (tiny: 25*B*784 f32); rows ordered (kernel-offset, b).
    xp = jnp.pad(x[:, 0].astype(jnp.float32), ((0, 0), (2, 2), (2, 2)))   # (B, 32, 32)
    cols1 = jnp.stack(
        [xp[:, di:di + 28, dj:dj + 28] for di in range(5) for dj in range(5)],
        axis=0,
    ).reshape(25 * B, 28 * 28)                                            # (25B, 784)

    out = pl.pallas_call(
        _lenet_fused_kernel,
        out_shape=jax.ShapeDtypeStruct((B, _LANE), jnp.float32),
        in_specs=[_VMEM] * 14,
        out_specs=_VMEM,
    )(cols1, prep["w1k"], prep["b1k"], prep["p1"], prep["s2"], prep["w2k"],
      prep["b2k"], prep["p2"], prep["fc1w"], prep["fc1b"], prep["fc2w"],
      prep["fc2b"], prep["fc3w"], prep["fc3b"])

    return out[:, :10]                                                    # (B, 10)


# ---------------------------------------------------------------------------
# Parameter init (deterministic, PyTorch-default-style uniform bounds)
# ---------------------------------------------------------------------------

def _uniform(key, shape, bound):
    return jax.random.uniform(key, shape, jnp.float32, -bound, bound)


def init_params(key):
    ks = jax.random.split(key, 10)
    params = {}
    bnd = 1.0 / np.sqrt(1 * 5 * 5)
    params["cnn1_w"] = _uniform(ks[0], (6, 1, 5, 5), bnd)
    params["cnn1_b"] = _uniform(ks[1], (6,), bnd)
    bnd = 1.0 / np.sqrt(6 * 5 * 5)
    params["cnn2_w"] = _uniform(ks[2], (16, 6, 5, 5), bnd)
    params["cnn2_b"] = _uniform(ks[3], (16,), bnd)
    bnd = 1.0 / np.sqrt(400.0)
    params["fc1_w"] = _uniform(ks[4], (120, 400), bnd)
    params["fc1_b"] = _uniform(ks[5], (120,), bnd)
    bnd = 1.0 / np.sqrt(120.0)
    params["fc2_w"] = _uniform(ks[6], (84, 120), bnd)
    params["fc2_b"] = _uniform(ks[7], (84,), bnd)
    bnd = 1.0 / np.sqrt(84.0)
    params["fc3_w"] = _uniform(ks[8], (10, 84), bnd)
    params["fc3_b"] = _uniform(ks[9], (10,), bnd)
    return params


# ---------------------------------------------------------------------------
# Pure numpy reference (mirrors my_LeNet_Model.forward) for self-check
# ---------------------------------------------------------------------------

def _reference_forward(params, x):
    p = {k: np.asarray(v, np.float32) for k, v in params.items()}
    xb = np.asarray(x, np.float32)

    def conv(xi, w, b, pad):
        Bn, C, H, W = xi.shape
        O, _, kh, kw = w.shape
        xpd = np.pad(xi, ((0, 0), (0, 0), (pad, pad), (pad, pad)))
        Ho, Wo = H + 2 * pad - kh + 1, W + 2 * pad - kw + 1
        out = np.zeros((Bn, O, Ho, Wo), np.float32)
        for di in range(kh):
            for dj in range(kw):
                out += np.einsum("bchw,oc->bohw",
                                 xpd[:, :, di:di + Ho, dj:dj + Wo], w[:, :, di, dj])
        return out + b.reshape(1, O, 1, 1)

    def pool(v):
        return 0.25 * (v[:, :, 0::2, 0::2] + v[:, :, 0::2, 1::2]
                       + v[:, :, 1::2, 0::2] + v[:, :, 1::2, 1::2])

    h = pool(np.tanh(conv(xb, p["cnn1_w"], p["cnn1_b"], 2)))
    h = pool(np.tanh(conv(h, p["cnn2_w"], p["cnn2_b"], 0)))
    h = h.reshape(h.shape[0], -1)
    h = np.tanh(h @ p["fc1_w"].T + p["fc1_b"])
    h = np.tanh(h @ p["fc2_w"].T + p["fc2_b"])
    h = np.tanh(h @ p["fc3_w"].T + p["fc3_b"])
    return h


if __name__ == "__main__":
    key = jax.random.PRNGKey(0)
    k_param, k_x = jax.random.split(key)
    params = init_params(k_param)

    batch = 2
    x = jax.random.normal(k_x, (batch, 1, 28, 28), dtype=jnp.float32)

    prep = prepare_params(params, batch)
    y = lenet_forward(prep, x)
    y = jax.block_until_ready(y)

    assert y.shape == (batch, 10) and y.dtype == jnp.float32
    assert bool(jnp.all(jnp.isfinite(y)))

    ref = _reference_forward(params, x)
    err = float(np.max(np.abs(np.asarray(y) - ref)))
    assert err < 5e-2, f"kernel/reference mismatch: max abs err = {err}"

    print("KERNEL_OK")
</pallas_src>

<mosaic_0001>
module attributes {stable_mosaic.version = 11 : i64} {
  func.func @_lenet_fused_kernel(%arg0: memref<50x784xf32, #tpu.memory_space<vmem>>, %arg1: memref<12x50xf32, #tpu.memory_space<vmem>>, %arg2: memref<12x1xf32, #tpu.memory_space<vmem>>, %arg3: memref<784x196xf32, #tpu.memory_space<vmem>>, %arg4: memref<25x196x100xf32, #tpu.memory_space<vmem>>, %arg5: memref<25x32x12xf32, #tpu.memory_space<vmem>>, %arg6: memref<32x1xf32, #tpu.memory_space<vmem>>, %arg7: memref<100x25xf32, #tpu.memory_space<vmem>>, %arg8: memref<16x25x128xf32, #tpu.memory_space<vmem>>, %arg9: memref<1x128xf32, #tpu.memory_space<vmem>>, %arg10: memref<128x128xf32, #tpu.memory_space<vmem>>, %arg11: memref<1x128xf32, #tpu.memory_space<vmem>>, %arg12: memref<128x128xf32, #tpu.memory_space<vmem>>, %arg13: memref<1x128xf32, #tpu.memory_space<vmem>>, %arg14: memref<2x128xf32, #tpu.memory_space<vmem>>) attributes {dimension_semantics = [], scalar_prefetch = 0 : i64, scratch_operands = 0 : i64, tpu.core_type = #tpu.core_type<tc>} {
    %c0 = arith.constant 0 : index
    %c0_0 = arith.constant 0 : index
    %0 = vector.load %arg1[%c0, %c0_0] : memref<12x50xf32, #tpu.memory_space<vmem>>, vector<12x50xf32>
    %c0_1 = arith.constant 0 : index
    %c0_2 = arith.constant 0 : index
    %1 = vector.load %arg0[%c0_1, %c0_2] : memref<50x784xf32, #tpu.memory_space<vmem>>, vector<50x784xf32>
    %cst = arith.constant dense<0.000000e+00> : vector<12x784xf32>
    %2 = tpu.matmul %0, %1, %cst {dimension_numbers = #tpu.dot_dimension_numbers<[1], [0], [0], [1], [0, 0, 1, 1], [], []>} : vector<12x50xf32>, vector<50x784xf32>, vector<12x784xf32> -> vector<12x784xf32>
    %c0_3 = arith.constant 0 : index
    %c0_4 = arith.constant 0 : index
    %3 = vector.load %arg2[%c0_3, %c0_4] : memref<12x1xf32, #tpu.memory_space<vmem>>, vector<12x1xf32>
    %4 = vector.broadcast %3 : vector<12x1xf32> to vector<12x784xf32>
    %5 = arith.addf %2, %4 : vector<12x784xf32>
    %6 = math.tanh %5 : vector<12x784xf32>
    %c0_5 = arith.constant 0 : index
    %c0_6 = arith.constant 0 : index
    %7 = vector.load %arg3[%c0_5, %c0_6] : memref<784x196xf32, #tpu.memory_space<vmem>>, vector<784x196xf32>
    %cst_7 = arith.constant dense<0.000000e+00> : vector<12x196xf32>
    %8 = tpu.matmul %6, %7, %cst_7 {dimension_numbers = #tpu.dot_dimension_numbers<[1], [0], [0], [1], [0, 0, 1, 1], [], []>} : vector<12x784xf32>, vector<784x196xf32>, vector<12x196xf32> -> vector<12x196xf32>
    %c0_8 = arith.constant 0 : index
    %c0_9 = arith.constant 0 : index
    %c0_10 = arith.constant 0 : index
    %9 = vector.load %arg4[%c0_8, %c0_9, %c0_10] : memref<25x196x100xf32, #tpu.memory_space<vmem>>, vector<1x196x100xf32>
    %10 = vector.shape_cast %9 : vector<1x196x100xf32> to vector<196x100xf32>
    %cst_11 = arith.constant dense<0.000000e+00> : vector<12x100xf32>
    %11 = tpu.matmul %8, %10, %cst_11 {dimension_numbers = #tpu.dot_dimension_numbers<[1], [0], [0], [1], [0, 0, 1, 1], [], []>} : vector<12x196xf32>, vector<196x100xf32>, vector<12x100xf32> -> vector<12x100xf32>
    %c0_12 = arith.constant 0 : index
    %c0_13 = arith.constant 0 : index
    %c0_14 = arith.constant 0 : index
    %12 = vector.load %arg5[%c0_12, %c0_13, %c0_14] : memref<25x32x12xf32, #tpu.memory_space<vmem>>, vector<1x32x12xf32>
    %13 = vector.shape_cast %12 : vector<1x32x12xf32> to vector<32x12xf32>
    %cst_15 = arith.constant dense<0.000000e+00> : vector<32x100xf32>
    %14 = tpu.matmul %13, %11, %cst_15 {dimension_numbers = #tpu.dot_dimension_numbers<[1], [0], [0], [1], [0, 0, 1, 1], [], []>} : vector<32x12xf32>, vector<12x100xf32>, vector<32x100xf32> -> vector<32x100xf32>
    %c1 = arith.constant 1 : index
    %c0_16 = arith.constant 0 : index
    %c0_17 = arith.constant 0 : index
    %15 = vector.load %arg4[%c1, %c0_16, %c0_17] : memref<25x196x100xf32, #tpu.memory_space<vmem>>, vector<1x196x100xf32>
    %16 = vector.shape_cast %15 : vector<1x196x100xf32> to vector<196x100xf32>
    %cst_18 = arith.constant dense<0.000000e+00> : vector<12x100xf32>
    %17 = tpu.matmul %8, %16, %cst_18 {dimension_numbers = #tpu.dot_dimension_numbers<[1], [0], [0], [1], [0, 0, 1, 1], [], []>} : vector<12x196xf32>, vector<196x100xf32>, vector<12x100xf32> -> vector<12x100xf32>
    %c1_19 = arith.constant 1 : index
    %c0_20 = arith.constant 0 : index
    %c0_21 = arith.constant 0 : index
    %18 = vector.load %arg5[%c1_19, %c0_20, %c0_21] : memref<25x32x12xf32, #tpu.memory_space<vmem>>, vector<1x32x12xf32>
    %19 = vector.shape_cast %18 : vector<1x32x12xf32> to vector<32x12xf32>
    %cst_22 = arith.constant dense<0.000000e+00> : vector<32x100xf32>
    %20 = tpu.matmul %19, %17, %cst_22 {dimension_numbers = #tpu.dot_dimension_numbers<[1], [0], [0], [1], [0, 0, 1, 1], [], []>} : vector<32x12xf32>, vector<12x100xf32>, vector<32x100xf32> -> vector<32x100xf32>
    %21 = arith.addf %14, %20 : vector<32x100xf32>
    %c2 = arith.constant 2 : index
    %c0_23 = arith.constant 0 : index
    %c0_24 = arith.constant 0 : index
    %22 = vector.load %arg4[%c2, %c0_23, %c0_24] : memref<25x196x100xf32, #tpu.memory_space<vmem>>, vector<1x196x100xf32>
    %23 = vector.shape_cast %22 : vector<1x196x100xf32> to vector<196x100xf32>
    %cst_25 = arith.constant dense<0.000000e+00> : vector<12x100xf32>
    %24 = tpu.matmul %8, %23, %cst_25 {dimension_numbers = #tpu.dot_dimension_numbers<[1], [0], [0], [1], [0, 0, 1, 1], [], []>} : vector<12x196xf32>, vector<196x100xf32>, vector<12x100xf32> -> vector<12x100xf32>
    %c2_26 = arith.constant 2 : index
    %c0_27 = arith.constant 0 : index
    %c0_28 = arith.constant 0 : index
    %25 = vector.load %arg5[%c2_26, %c0_27, %c0_28] : memref<25x32x12xf32, #tpu.memory_space<vmem>>, vector<1x32x12xf32>
    %26 = vector.shape_cast %25 : vector<1x32x12xf32> to vector<32x12xf32>
    %cst_29 = arith.constant dense<0.000000e+00> : vector<32x100xf32>
    %27 = tpu.matmul %26, %24, %cst_29 {dimension_numbers = #tpu.dot_dimension_numbers<[1], [0], [0], [1], [0, 0, 1, 1], [], []>} : vector<32x12xf32>, vector<12x100xf32>, vector<32x100xf32> -> vector<32x100xf32>
    %28 = arith.addf %21, %27 : vector<32x100xf32>
    %c3 = arith.constant 3 : index
    %c0_30 = arith.constant 0 : index
    %c0_31 = arith.constant 0 : index
    %29 = vector.load %arg4[%c3, %c0_30, %c0_31] : memref<25x196x100xf32, #tpu.memory_space<vmem>>, vector<1x196x100xf32>
    %30 = vector.shape_cast %29 : vector<1x196x100xf32> to vector<196x100xf32>
    %cst_32 = arith.constant dense<0.000000e+00> : vector<12x100xf32>
    %31 = tpu.matmul %8, %30, %cst_32 {dimension_numbers = #tpu.dot_dimension_numbers<[1], [0], [0], [1], [0, 0, 1, 1], [], []>} : vector<12x196xf32>, vector<196x100xf32>, vector<12x100xf32> -> vector<12x100xf32>
    %c3_33 = arith.constant 3 : index
    %c0_34 = arith.constant 0 : index
    %c0_35 = arith.constant 0 : index
    %32 = vector.load %arg5[%c3_33, %c0_34, %c0_35] : memref<25x32x12xf32, #tpu.memory_space<vmem>>, vector<1x32x12xf32>
    %33 = vector.shape_cast %32 : vector<1x32x12xf32> to vector<32x12xf32>
    %cst_36 = arith.constant dense<0.000000e+00> : vector<32x100xf32>
    %34 = tpu.matmul %33, %31, %cst_36 {dimension_numbers = #tpu.dot_dimension_numbers<[1], [0], [0], [1], [0, 0, 1, 1], [], []>} : vector<32x12xf32>, vector<12x100xf32>, vector<32x100xf32> -> vector<32x100xf32>
    %35 = arith.addf %28, %34 : vector<32x100xf32>
    %c4 = arith.constant 4 : index
    %c0_37 = arith.constant 0 : index
    %c0_38 = arith.constant 0 : index
    %36 = vector.load %arg4[%c4, %c0_37, %c0_38] : memref<25x196x100xf32, #tpu.memory_space<vmem>>, vector<1x196x100xf32>
    %37 = vector.shape_cast %36 : vector<1x196x100xf32> to vector<196x100xf32>
    %cst_39 = arith.constant dense<0.000000e+00> : vector<12x100xf32>
    %38 = tpu.matmul %8, %37, %cst_39 {dimension_numbers = #tpu.dot_dimension_numbers<[1], [0], [0], [1], [0, 0, 1, 1], [], []>} : vector<12x196xf32>, vector<196x100xf32>, vector<12x100xf32> -> vector<12x100xf32>
    %c4_40 = arith.constant 4 : index
    %c0_41 = arith.constant 0 : index
    %c0_42 = arith.constant 0 : index
    %39 = vector.load %arg5[%c4_40, %c0_41, %c0_42] : memref<25x32x12xf32, #tpu.memory_space<vmem>>, vector<1x32x12xf32>
    %40 = vector.shape_cast %39 : vector<1x32x12xf32> to vector<32x12xf32>
    %cst_43 = arith.constant dense<0.000000e+00> : vector<32x100xf32>
    %41 = tpu.matmul %40, %38, %cst_43 {dimension_numbers = #tpu.dot_dimension_numbers<[1], [0], [0], [1], [0, 0, 1, 1], [], []>} : vector<32x12xf32>, vector<12x100xf32>, vector<32x100xf32> -> vector<32x100xf32>
    %42 = arith.addf %35, %41 : vector<32x100xf32>
    %c5 = arith.constant 5 : index
    %c0_44 = arith.constant 0 : index
    %c0_45 = arith.constant 0 : index
    %43 = vector.load %arg4[%c5, %c0_44, %c0_45] : memref<25x196x100xf32, #tpu.memory_space<vmem>>, vector<1x196x100xf32>
    %44 = vector.shape_cast %43 : vector<1x196x100xf32> to vector<196x100xf32>
    %cst_46 = arith.constant dense<0.000000e+00> : vector<12x100xf32>
    %45 = tpu.matmul %8, %44, %cst_46 {dimension_numbers = #tpu.dot_dimension_numbers<[1], [0], [0], [1], [0, 0, 1, 1], [], []>} : vector<12x196xf32>, vector<196x100xf32>, vector<12x100xf32> -> vector<12x100xf32>
    %c5_47 = arith.constant 5 : index
    %c0_48 = arith.constant 0 : index
    %c0_49 = arith.constant 0 : index
    %46 = vector.load %arg5[%c5_47, %c0_48, %c0_49] : memref<25x32x12xf32, #tpu.memory_space<vmem>>, vector<1x32x12xf32>
    %47 = vector.shape_cast %46 : vector<1x32x12xf32> to vector<32x12xf32>
    %cst_50 = arith.constant dense<0.000000e+00> : vector<32x100xf32>
    %48 = tpu.matmul %47, %45, %cst_50 {dimension_numbers = #tpu.dot_dimension_numbers<[1], [0], [0], [1], [0, 0, 1, 1], [], []>} : vector<32x12xf32>, vector<12x100xf32>, vector<32x100xf32> -> vector<32x100xf32>
    %49 = arith.addf %42, %48 : vector<32x100xf32>
    %c6 = arith.constant 6 : index
    %c0_51 = arith.constant 0 : index
    %c0_52 = arith.constant 0 : index
    %50 = vector.load %arg4[%c6, %c0_51, %c0_52] : memref<25x196x100xf32, #tpu.memory_space<vmem>>, vector<1x196x100xf32>
    %51 = vector.shape_cast %50 : vector<1x196x100xf32> to vector<196x100xf32>
    %cst_53 = arith.constant dense<0.000000e+00> : vector<12x100xf32>
    %52 = tpu.matmul %8, %51, %cst_53 {dimension_numbers = #tpu.dot_dimension_numbers<[1], [0], [0], [1], [0, 0, 1, 1], [], []>} : vector<12x196xf32>, vector<196x100xf32>, vector<12x100xf32> -> vector<12x100xf32>
    %c6_54 = arith.constant 6 : index
    %c0_55 = arith.constant 0 : index
    %c0_56 = arith.constant 0 : index
    %53 = vector.load %arg5[%c6_54, %c0_55, %c0_56] : memref<25x32x12xf32, #tpu.memory_space<vmem>>, vector<1x32x12xf32>
    %54 = vector.shape_cast %53 : vector<1x32x12xf32> to vector<32x12xf32>
    %cst_57 = arith.constant dense<0.000000e+00> : vector<32x100xf32>
    %55 = tpu.matmul %54, %52, %cst_57 {dimension_numbers = #tpu.dot_dimension_numbers<[1], [0], [0], [1], [0, 0, 1, 1], [], []>} : vector<32x12xf32>, vector<12x100xf32>, vector<32x100xf32> -> vector<32x100xf32>
    %56 = arith.addf %49, %55 : vector<32x100xf32>
    %c7 = arith.constant 7 : index
    %c0_58 = arith.constant 0 : index
    %c0_59 = arith.constant 0 : index
    %57 = vector.load %arg4[%c7, %c0_58, %c0_59] : memref<25x196x100xf32, #tpu.memory_space<vmem>>, vector<1x196x100xf32>
    %58 = vector.shape_cast %57 : vector<1x196x100xf32> to vector<196x100xf32>
    %cst_60 = arith.constant dense<0.000000e+00> : vector<12x100xf32>
    %59 = tpu.matmul %8, %58, %cst_60 {dimension_numbers = #tpu.dot_dimension_numbers<[1], [0], [0], [1], [0, 0, 1, 1], [], []>} : vector<12x196xf32>, vector<196x100xf32>, vector<12x100xf32> -> vector<12x100xf32>
    %c7_61 = arith.constant 7 : index
    %c0_62 = arith.constant 0 : index
    %c0_63 = arith.constant 0 : index
    %60 = vector.load %arg5[%c7_61, %c0_62, %c0_63] : memref<25x32x12xf32, #tpu.memory_space<vmem>>, vector<1x32x12xf32>
    %61 = vector.shape_cast %60 : vector<1x32x12xf32> to vector<32x12xf32>
    %cst_64 = arith.constant dense<0.000000e+00> : vector<32x100xf32>
    %62 = tpu.matmul %61, %59, %cst_64 {dimension_numbers = #tpu.dot_dimension_numbers<[1], [0], [0], [1], [0, 0, 1, 1], [], []>} : vector<32x12xf32>, vector<12x100xf32>, vector<32x100xf32> -> vector<32x100xf32>
    %63 = arith.addf %56, %62 : vector<32x100xf32>
    %c8 = arith.constant 8 : index
    %c0_65 = arith.constant 0 : index
    %c0_66 = arith.constant 0 : index
    %64 = vector.load %arg4[%c8, %c0_65, %c0_66] : memref<25x196x100xf32, #tpu.memory_space<vmem>>, vector<1x196x100xf32>
    %65 = vector.shape_cast %64 : vector<1x196x100xf32> to vector<196x100xf32>
    %cst_67 = arith.constant dense<0.000000e+00> : vector<12x100xf32>
    %66 = tpu.matmul %8, %65, %cst_67 {dimension_numbers = #tpu.dot_dimension_numbers<[1], [0], [0], [1], [0, 0, 1, 1], [], []>} : vector<12x196xf32>, vector<196x100xf32>, vector<12x100xf32> -> vector<12x100xf32>
    %c8_68 = arith.constant 8 : index
    %c0_69 = arith.constant 0 : index
    %c0_70 = arith.constant 0 : index
    %67 = vector.load %arg5[%c8_68, %c0_69, %c0_70] : memref<25x32x12xf32, #tpu.memory_space<vmem>>, vector<1x32x12xf32>
    %68 = vector.shape_cast %67 : vector<1x32x12xf32> to vector<32x12xf32>
    %cst_71 = arith.constant dense<0.000000e+00> : vector<32x100xf32>
    %69 = tpu.matmul %68, %66, %cst_71 {dimension_numbers = #tpu.dot_dimension_numbers<[1], [0], [0], [1], [0, 0, 1, 1], [], []>} : vector<32x12xf32>, vector<12x100xf32>, vector<32x100xf32> -> vector<32x100xf32>
    %70 = arith.addf %63, %69 : vector<32x100xf32>
    %c9 = arith.constant 9 : index
    %c0_72 = arith.constant 0 : index
    %c0_73 = arith.constant 0 : index
    %71 = vector.load %arg4[%c9, %c0_72, %c0_73] : memref<25x196x100xf32, #tpu.memory_space<vmem>>, vector<1x196x100xf32>
    %72 = vector.shape_cast %71 : vector<1x196x100xf32> to vector<196x100xf32>
    %cst_74 = arith.constant dense<0.000000e+00> : vector<12x100xf32>
    %73 = tpu.matmul %8, %72, %cst_74 {dimension_numbers = #tpu.dot_dimension_numbers<[1], [0], [0], [1], [0, 0, 1, 1], [], []>} : vector<12x196xf32>, vector<196x100xf32>, vector<12x100xf32> -> vector<12x100xf32>
    %c9_75 = arith.constant 9 : index
    %c0_76 = arith.constant 0 : index
    %c0_77 = arith.constant 0 : index
    %74 = vector.load %arg5[%c9_75, %c0_76, %c0_77] : memref<25x32x12xf32, #tpu.memory_space<vmem>>, vector<1x32x12xf32>
    %75 = vector.shape_cast %74 : vector<1x32x12xf32> to vector<32x12xf32>
    %cst_78 = arith.constant dense<0.000000e+00> : vector<32x100xf32>
    %76 = tpu.matmul %75, %73, %cst_78 {dimension_numbers = #tpu.dot_dimension_numbers<[1], [0], [0], [1], [0, 0, 1, 1], [], []>} : vector<32x12xf32>, vector<12x100xf32>, vector<32x100xf32> -> vector<32x100xf32>
    %77 = arith.addf %70, %76 : vector<32x100xf32>
    %c10 = arith.constant 10 : index
    %c0_79 = arith.constant 0 : index
    %c0_80 = arith.constant 0 : index
    %78 = vector.load %arg4[%c10, %c0_79, %c0_80] : memref<25x196x100xf32, #tpu.memory_space<vmem>>, vector<1x196x100xf32>
    %79 = vector.shape_cast %78 : vector<1x196x100xf32> to vector<196x100xf32>
    %cst_81 = arith.constant dense<0.000000e+00> : vector<12x100xf32>
    %80 = tpu.matmul %8, %79, %cst_81 {dimension_numbers = #tpu.dot_dimension_numbers<[1], [0], [0], [1], [0, 0, 1, 1], [], []>} : vector<12x196xf32>, vector<196x100xf32>, vector<12x100xf32> -> vector<12x100xf32>
    %c10_82 = arith.constant 10 : index
    %c0_83 = arith.constant 0 : index
    %c0_84 = arith.constant 0 : index
    %81 = vector.load %arg5[%c10_82, %c0_83, %c0_84] : memref<25x32x12xf32, #tpu.memory_space<vmem>>, vector<1x32x12xf32>
    %82 = vector.shape_cast %81 : vector<1x32x12xf32> to vector<32x12xf32>
    %cst_85 = arith.constant dense<0.000000e+00> : vector<32x100xf32>
    %83 = tpu.matmul %82, %80, %cst_85 {dimension_numbers = #tpu.dot_dimension_numbers<[1], [0], [0], [1], [0, 0, 1, 1], [], []>} : vector<32x12xf32>, vector<12x100xf32>, vector<32x100xf32> -> vector<32x100xf32>
    %84 = arith.addf %77, %83 : vector<32x100xf32>
    %c11 = arith.constant 11 : index
    %c0_86 = arith.constant 0 : index
    %c0_87 = arith.constant 0 : index
    %85 = vector.load %arg4[%c11, %c0_86, %c0_87] : memref<25x196x100xf32, #tpu.memory_space<vmem>>, vector<1x196x100xf32>
    %86 = vector.shape_cast %85 : vector<1x196x100xf32> to vector<196x100xf32>
    %cst_88 = arith.constant dense<0.000000e+00> : vector<12x100xf32>
    %87 = tpu.matmul %8, %86, %cst_88 {dimension_numbers = #tpu.dot_dimension_numbers<[1], [0], [0], [1], [0, 0, 1, 1], [], []>} : vector<12x196xf32>, vector<196x100xf32>, vector<12x100xf32> -> vector<12x100xf32>
    %c11_89 = arith.constant 11 : index
    %c0_90 = arith.constant 0 : index
    %c0_91 = arith.constant 0 : index
    %88 = vector.load %arg5[%c11_89, %c0_90, %c0_91] : memref<25x32x12xf32, #tpu.memory_space<vmem>>, vector<1x32x12xf32>
    %89 = vector.shape_cast %88 : vector<1x32x12xf32> to vector<32x12xf32>
    %cst_92 = arith.constant dense<0.000000e+00> : vector<32x100xf32>
    %90 = tpu.matmul %89, %87, %cst_92 {dimension_numbers = #tpu.dot_dimension_numbers<[1], [0], [0], [1], [0, 0, 1, 1], [], []>} : vector<32x12xf32>, vector<12x100xf32>, vector<32x100xf32> -> vector<32x100xf32>
    %91 = arith.addf %84, %90 : vector<32x100xf32>
    %c12 = arith.constant 12 : index
    %c0_93 = arith.constant 0 : index
    %c0_94 = arith.constant 0 : index
    %92 = vector.load %arg4[%c12, %c0_93, %c0_94] : memref<25x196x100xf32, #tpu.memory_space<vmem>>, vector<1x196x100xf32>
    %93 = vector.shape_cast %92 : vector<1x196x100xf32> to vector<196x100xf32>
    %cst_95 = arith.constant dense<0.000000e+00> : vector<12x100xf32>
    %94 = tpu.matmul %8, %93, %cst_95 {dimension_numbers = #tpu.dot_dimension_numbers<[1], [0], [0], [1], [0, 0, 1, 1], [], []>} : vector<12x196xf32>, vector<196x100xf32>, vector<12x100xf32> -> vector<12x100xf32>
    %c12_96 = arith.constant 12 : index
    %c0_97 = arith.constant 0 : index
    %c0_98 = arith.constant 0 : index
    %95 = vector.load %arg5[%c12_96, %c0_97, %c0_98] : memref<25x32x12xf32, #tpu.memory_space<vmem>>, vector<1x32x12xf32>
    %96 = vector.shape_cast %95 : vector<1x32x12xf32> to vector<32x12xf32>
    %cst_99 = arith.constant dense<0.000000e+00> : vector<32x100xf32>
    %97 = tpu.matmul %96, %94, %cst_99 {dimension_numbers = #tpu.dot_dimension_numbers<[1], [0], [0], [1], [0, 0, 1, 1], [], []>} : vector<32x12xf32>, vector<12x100xf32>, vector<32x100xf32> -> vector<32x100xf32>
    %98 = arith.addf %91, %97 : vector<32x100xf32>
    %c13 = arith.constant 13 : index
    %c0_100 = arith.constant 0 : index
    %c0_101 = arith.constant 0 : index
    %99 = vector.load %arg4[%c13, %c0_100, %c0_101] : memref<25x196x100xf32, #tpu.memory_space<vmem>>, vector<1x196x100xf32>
    %100 = vector.shape_cast %99 : vector<1x196x100xf32> to vector<196x100xf32>
    %cst_102 = arith.constant dense<0.000000e+00> : vector<12x100xf32>
    %101 = tpu.matmul %8, %100, %cst_102 {dimension_numbers = #tpu.dot_dimension_numbers<[1], [0], [0], [1], [0, 0, 1, 1], [], []>} : vector<12x196xf32>, vector<196x100xf32>, vector<12x100xf32> -> vector<12x100xf32>
    %c13_103 = arith.constant 13 : index
    %c0_104 = arith.constant 0 : index
    %c0_105 = arith.constant 0 : index
    %102 = vector.load %arg5[%c13_103, %c0_104, %c0_105] : memref<25x32x12xf32, #tpu.memory_space<vmem>>, vector<1x32x12xf32>
    %103 = vector.shape_cast %102 : vector<1x32x12xf32> to vector<32x12xf32>
    %cst_106 = arith.constant dense<0.000000e+00> : vector<32x100xf32>
    %104 = tpu.matmul %103, %101, %cst_106 {dimension_numbers = #tpu.dot_dimension_numbers<[1], [0], [0], [1], [0, 0, 1, 1], [], []>} : vector<32x12xf32>, vector<12x100xf32>, vector<32x100xf32> -> vector<32x100xf32>
    %105 = arith.addf %98, %104 : vector<32x100xf32>
    %c14 = arith.constant 14 : index
    %c0_107 = arith.constant 0 : index
    %c0_108 = arith.constant 0 : index
    %106 = vector.load %arg4[%c14, %c0_107, %c0_108] : memref<25x196x100xf32, #tpu.memory_space<vmem>>, vector<1x196x100xf32>
    %107 = vector.shape_cast %106 : vector<1x196x100xf32> to vector<196x100xf32>
    %cst_109 = arith.constant dense<0.000000e+00> : vector<12x100xf32>
    %108 = tpu.matmul %8, %107, %cst_109 {dimension_numbers = #tpu.dot_dimension_numbers<[1], [0], [0], [1], [0, 0, 1, 1], [], []>} : vector<12x196xf32>, vector<196x100xf32>, vector<12x100xf32> -> vector<12x100xf32>
    %c14_110 = arith.constant 14 : index
    %c0_111 = arith.constant 0 : index
    %c0_112 = arith.constant 0 : index
    %109 = vector.load %arg5[%c14_110, %c0_111, %c0_112] : memref<25x32x12xf32, #tpu.memory_space<vmem>>, vector<1x32x12xf32>
    %110 = vector.shape_cast %109 : vector<1x32x12xf32> to vector<32x12xf32>
    %cst_113 = arith.constant dense<0.000000e+00> : vector<32x100xf32>
    %111 = tpu.matmul %110, %108, %cst_113 {dimension_numbers = #tpu.dot_dimension_numbers<[1], [0], [0], [1], [0, 0, 1, 1], [], []>} : vector<32x12xf32>, vector<12x100xf32>, vector<32x100xf32> -> vector<32x100xf32>
    %112 = arith.addf %105, %111 : vector<32x100xf32>
    %c15 = arith.constant 15 : index
    %c0_114 = arith.constant 0 : index
    %c0_115 = arith.constant 0 : index
    %113 = vector.load %arg4[%c15, %c0_114, %c0_115] : memref<25x196x100xf32, #tpu.memory_space<vmem>>, vector<1x196x100xf32>
    %114 = vector.shape_cast %113 : vector<1x196x100xf32> to vector<196x100xf32>
    %cst_116 = arith.constant dense<0.000000e+00> : vector<12x100xf32>
    %115 = tpu.matmul %8, %114, %cst_116 {dimension_numbers = #tpu.dot_dimension_numbers<[1], [0], [0], [1], [0, 0, 1, 1], [], []>} : vector<12x196xf32>, vector<196x100xf32>, vector<12x100xf32> -> vector<12x100xf32>
    %c15_117 = arith.constant 15 : index
    %c0_118 = arith.constant 0 : index
    %c0_119 = arith.constant 0 : index
    %116 = vector.load %arg5[%c15_117, %c0_118, %c0_119] : memref<25x32x12xf32, #tpu.memory_space<vmem>>, vector<1x32x12xf32>
    %117 = vector.shape_cast %116 : vector<1x32x12xf32> to vector<32x12xf32>
    %cst_120 = arith.constant dense<0.000000e+00> : vector<32x100xf32>
    %118 = tpu.matmul %117, %115, %cst_120 {dimension_numbers = #tpu.dot_dimension_numbers<[1], [0], [0], [1], [0, 0, 1, 1], [], []>} : vector<32x12xf32>, vector<12x100xf32>, vector<32x100xf32> -> vector<32x100xf32>
    %119 = arith.addf %112, %118 : vector<32x100xf32>
    %c16 = arith.constant 16 : index
    %c0_121 = arith.constant 0 : index
    %c0_122 = arith.constant 0 : index
    %120 = vector.load %arg4[%c16, %c0_121, %c0_122] : memref<25x196x100xf32, #tpu.memory_space<vmem>>, vector<1x196x100xf32>
    %121 = vector.shape_cast %120 : vector<1x196x100xf32> to vector<196x100xf32>
    %cst_123 = arith.constant dense<0.000000e+00> : vector<12x100xf32>
    %122 = tpu.matmul %8, %121, %cst_123 {dimension_numbers = #tpu.dot_dimension_numbers<[1], [0], [0], [1], [0, 0, 1, 1], [], []>} : vector<12x196xf32>, vector<196x100xf32>, vector<12x100xf32> -> vector<12x100xf32>
    %c16_124 = arith.constant 16 : index
    %c0_125 = arith.constant 0 : index
    %c0_126 = arith.constant 0 : index
    %123 = vector.load %arg5[%c16_124, %c0_125, %c0_126] : memref<25x32x12xf32, #tpu.memory_space<vmem>>, vector<1x32x12xf32>
    %124 = vector.shape_cast %123 : vector<1x32x12xf32> to vector<32x12xf32>
    %cst_127 = arith.constant dense<0.000000e+00> : vector<32x100xf32>
    %125 = tpu.matmul %124, %122, %cst_127 {dimension_numbers = #tpu.dot_dimension_numbers<[1], [0], [0], [1], [0, 0, 1, 1], [], []>} : vector<32x12xf32>, vector<12x100xf32>, vector<32x100xf32> -> vector<32x100xf32>
    %126 = arith.addf %119, %125 : vector<32x100xf32>
    %c17 = arith.constant 17 : index
    %c0_128 = arith.constant 0 : index
    %c0_129 = arith.constant 0 : index
    %127 = vector.load %arg4[%c17, %c0_128, %c0_129] : memref<25x196x100xf32, #tpu.memory_space<vmem>>, vector<1x196x100xf32>
    %128 = vector.shape_cast %127 : vector<1x196x100xf32> to vector<196x100xf32>
    %cst_130 = arith.constant dense<0.000000e+00> : vector<12x100xf32>
    %129 = tpu.matmul %8, %128, %cst_130 {dimension_numbers = #tpu.dot_dimension_numbers<[1], [0], [0], [1], [0, 0, 1, 1], [], []>} : vector<12x196xf32>, vector<196x100xf32>, vector<12x100xf32> -> vector<12x100xf32>
    %c17_131 = arith.constant 17 : index
    %c0_132 = arith.constant 0 : index
    %c0_133 = arith.constant 0 : index
    %130 = vector.load %arg5[%c17_131, %c0_132, %c0_133] : memref<25x32x12xf32, #tpu.memory_space<vmem>>, vector<1x32x12xf32>
    %131 = vector.shape_cast %130 : vector<1x32x12xf32> to vector<32x12xf32>
    %cst_134 = arith.constant dense<0.000000e+00> : vector<32x100xf32>
    %132 = tpu.matmul %131, %129, %cst_134 {dimension_numbers = #tpu.dot_dimension_numbers<[1], [0], [0], [1], [0, 0, 1, 1], [], []>} : vector<32x12xf32>, vector<12x100xf32>, vector<32x100xf32> -> vector<32x100xf32>
    %133 = arith.addf %126, %132 : vector<32x100xf32>
    %c18 = arith.constant 18 : index
    %c0_135 = arith.constant 0 : index
    %c0_136 = arith.constant 0 : index
    %134 = vector.load %arg4[%c18, %c0_135, %c0_136] : memref<25x196x100xf32, #tpu.memory_space<vmem>>, vector<1x196x100xf32>
    %135 = vector.shape_cast %134 : vector<1x196x100xf32> to vector<196x100xf32>
    %cst_137 = arith.constant dense<0.000000e+00> : vector<12x100xf32>
    %136 = tpu.matmul %8, %135, %cst_137 {dimension_numbers = #tpu.dot_dimension_numbers<[1], [0], [0], [1], [0, 0, 1, 1], [], []>} : vector<12x196xf32>, vector<196x100xf32>, vector<12x100xf32> -> vector<12x100xf32>
    %c18_138 = arith.constant 18 : index
    %c0_139 = arith.constant 0 : index
    %c0_140 = arith.constant 0 : index
    %137 = vector.load %arg5[%c18_138, %c0_139, %c0_140] : memref<25x32x12xf32, #tpu.memory_space<vmem>>, vector<1x32x12xf32>
    %138 = vector.shape_cast %137 : vector<1x32x12xf32> to vector<32x12xf32>
    %cst_141 = arith.constant dense<0.000000e+00> : vector<32x100xf32>
    %139 = tpu.matmul %138, %136, %cst_141 {dimension_numbers = #tpu.dot_dimension_numbers<[1], [0], [0], [1], [0, 0, 1, 1], [], []>} : vector<32x12xf32>, vector<12x100xf32>, vector<32x100xf32> -> vector<32x100xf32>
    %140 = arith.addf %133, %139 : vector<32x100xf32>
    %c19 = arith.constant 19 : index
    %c0_142 = arith.constant 0 : index
    %c0_143 = arith.constant 0 : index
    %141 = vector.load %arg4[%c19, %c0_142, %c0_143] : memref<25x196x100xf32, #tpu.memory_space<vmem>>, vector<1x196x100xf32>
    %142 = vector.shape_cast %141 : vector<1x196x100xf32> to vector<196x100xf32>
    %cst_144 = arith.constant dense<0.000000e+00> : vector<12x100xf32>
    %143 = tpu.matmul %8, %142, %cst_144 {dimension_numbers = #tpu.dot_dimension_numbers<[1], [0], [0], [1], [0, 0, 1, 1], [], []>} : vector<12x196xf32>, vector<196x100xf32>, vector<12x100xf32> -> vector<12x100xf32>
    %c19_145 = arith.constant 19 : index
    %c0_146 = arith.constant 0 : index
    %c0_147 = arith.constant 0 : index
    %144 = vector.load %arg5[%c19_145, %c0_146, %c0_147] : memref<25x32x12xf32, #tpu.memory_space<vmem>>, vector<1x32x12xf32>
    %145 = vector.shape_cast %144 : vector<1x32x12xf32> to vector<32x12xf32>
    %cst_148 = arith.constant dense<0.000000e+00> : vector<32x100xf32>
    %146 = tpu.matmul %145, %143, %cst_148 {dimension_numbers = #tpu.dot_dimension_numbers<[1], [0], [0], [1], [0, 0, 1, 1], [], []>} : vector<32x12xf32>, vector<12x100xf32>, vector<32x100xf32> -> vector<32x100xf32>
    %147 = arith.addf %140, %146 : vector<32x100xf32>
    %c20 = arith.constant 20 : index
    %c0_149 = arith.constant 0 : index
    %c0_150 = arith.constant 0 : index
    %148 = vector.load %arg4[%c20, %c0_149, %c0_150] : memref<25x196x100xf32, #tpu.memory_space<vmem>>, vector<1x196x100xf32>
    %149 = vector.shape_cast %148 : vector<1x196x100xf32> to vector<196x100xf32>
    %cst_151 = arith.constant dense<0.000000e+00> : vector<12x100xf32>
    %150 = tpu.matmul %8, %149, %cst_151 {dimension_numbers = #tpu.dot_dimension_numbers<[1], [0], [0], [1], [0, 0, 1, 1], [], []>} : vector<12x196xf32>, vector<196x100xf32>, vector<12x100xf32> -> vector<12x100xf32>
    %c20_152 = arith.constant 20 : index
    %c0_153 = arith.constant 0 : index
    %c0_154 = arith.constant 0 : index
    %151 = vector.load %arg5[%c20_152, %c0_153, %c0_154] : memref<25x32x12xf32, #tpu.memory_space<vmem>>, vector<1x32x12xf32>
    %152 = vector.shape_cast %151 : vector<1x32x12xf32> to vector<32x12xf32>
    %cst_155 = arith.constant dense<0.000000e+00> : vector<32x100xf32>
    %153 = tpu.matmul %152, %150, %cst_155 {dimension_numbers = #tpu.dot_dimension_numbers<[1], [0], [0], [1], [0, 0, 1, 1], [], []>} : vector<32x12xf32>, vector<12x100xf32>, vector<32x100xf32> -> vector<32x100xf32>
    %154 = arith.addf %147, %153 : vector<32x100xf32>
    %c21 = arith.constant 21 : index
    %c0_156 = arith.constant 0 : index
    %c0_157 = arith.constant 0 : index
    %155 = vector.load %arg4[%c21, %c0_156, %c0_157] : memref<25x196x100xf32, #tpu.memory_space<vmem>>, vector<1x196x100xf32>
    %156 = vector.shape_cast %155 : vector<1x196x100xf32> to vector<196x100xf32>
    %cst_158 = arith.constant dense<0.000000e+00> : vector<12x100xf32>
    %157 = tpu.matmul %8, %156, %cst_158 {dimension_numbers = #tpu.dot_dimension_numbers<[1], [0], [0], [1], [0, 0, 1, 1], [], []>} : vector<12x196xf32>, vector<196x100xf32>, vector<12x100xf32> -> vector<12x100xf32>
    %c21_159 = arith.constant 21 : index
    %c0_160 = arith.constant 0 : index
    %c0_161 = arith.constant 0 : index
    %158 = vector.load %arg5[%c21_159, %c0_160, %c0_161] : memref<25x32x12xf32, #tpu.memory_space<vmem>>, vector<1x32x12xf32>
    %159 = vector.shape_cast %158 : vector<1x32x12xf32> to vector<32x12xf32>
    %cst_162 = arith.constant dense<0.000000e+00> : vector<32x100xf32>
    %160 = tpu.matmul %159, %157, %cst_162 {dimension_numbers = #tpu.dot_dimension_numbers<[1], [0], [0], [1], [0, 0, 1, 1], [], []>} : vector<32x12xf32>, vector<12x100xf32>, vector<32x100xf32> -> vector<32x100xf32>
    %161 = arith.addf %154, %160 : vector<32x100xf32>
    %c22 = arith.constant 22 : index
    %c0_163 = arith.constant 0 : index
    %c0_164 = arith.constant 0 : index
    %162 = vector.load %arg4[%c22, %c0_163, %c0_164] : memref<25x196x100xf32, #tpu.memory_space<vmem>>, vector<1x196x100xf32>
    %163 = vector.shape_cast %162 : vector<1x196x100xf32> to vector<196x100xf32>
    %cst_165 = arith.constant dense<0.000000e+00> : vector<12x100xf32>
    %164 = tpu.matmul %8, %163, %cst_165 {dimension_numbers = #tpu.dot_dimension_numbers<[1], [0], [0], [1], [0, 0, 1, 1], [], []>} : vector<12x196xf32>, vector<196x100xf32>, vector<12x100xf32> -> vector<12x100xf32>
    %c22_166 = arith.constant 22 : index
    %c0_167 = arith.constant 0 : index
    %c0_168 = arith.constant 0 : index
    %165 = vector.load %arg5[%c22_166, %c0_167, %c0_168] : memref<25x32x12xf32, #tpu.memory_space<vmem>>, vector<1x32x12xf32>
    %166 = vector.shape_cast %165 : vector<1x32x12xf32> to vector<32x12xf32>
    %cst_169 = arith.constant dense<0.000000e+00> : vector<32x100xf32>
    %167 = tpu.matmul %166, %164, %cst_169 {dimension_numbers = #tpu.dot_dimension_numbers<[1], [0], [0], [1], [0, 0, 1, 1], [], []>} : vector<32x12xf32>, vector<12x100xf32>, vector<32x100xf32> -> vector<32x100xf32>
    %168 = arith.addf %161, %167 : vector<32x100xf32>
    %c23 = arith.constant 23 : index
    %c0_170 = arith.constant 0 : index
    %c0_171 = arith.constant 0 : index
    %169 = vector.load %arg4[%c23, %c0_170, %c0_171] : memref<25x196x100xf32, #tpu.memory_space<vmem>>, vector<1x196x100xf32>
    %170 = vector.shape_cast %169 : vector<1x196x100xf32> to vector<196x100xf32>
    %cst_172 = arith.constant dense<0.000000e+00> : vector<12x100xf32>
    %171 = tpu.matmul %8, %170, %cst_172 {dimension_numbers = #tpu.dot_dimension_numbers<[1], [0], [0], [1], [0, 0, 1, 1], [], []>} : vector<12x196xf32>, vector<196x100xf32>, vector<12x100xf32> -> vector<12x100xf32>
    %c23_173 = arith.constant 23 : index
    %c0_174 = arith.constant 0 : index
    %c0_175 = arith.constant 0 : index
    %172 = vector.load %arg5[%c23_173, %c0_174, %c0_175] : memref<25x32x12xf32, #tpu.memory_space<vmem>>, vector<1x32x12xf32>
    %173 = vector.shape_cast %172 : vector<1x32x12xf32> to vector<32x12xf32>
    %cst_176 = arith.constant dense<0.000000e+00> : vector<32x100xf32>
    %174 = tpu.matmul %173, %171, %cst_176 {dimension_numbers = #tpu.dot_dimension_numbers<[1], [0], [0], [1], [0, 0, 1, 1], [], []>} : vector<32x12xf32>, vector<12x100xf32>, vector<32x100xf32> -> vector<32x100xf32>
    %175 = arith.addf %168, %174 : vector<32x100xf32>
    %c24 = arith.constant 24 : index
    %c0_177 = arith.constant 0 : index
    %c0_178 = arith.constant 0 : index
    %176 = vector.load %arg4[%c24, %c0_177, %c0_178] : memref<25x196x100xf32, #tpu.memory_space<vmem>>, vector<1x196x100xf32>
    %177 = vector.shape_cast %176 : vector<1x196x100xf32> to vector<196x100xf32>
    %cst_179 = arith.constant dense<0.000000e+00> : vector<12x100xf32>
    %178 = tpu.matmul %8, %177, %cst_179 {dimension_numbers = #tpu.dot_dimension_numbers<[1], [0], [0], [1], [0, 0, 1, 1], [], []>} : vector<12x196xf32>, vector<196x100xf32>, vector<12x100xf32> -> vector<12x100xf32>
    %c24_180 = arith.constant 24 : index
    %c0_181 = arith.constant 0 : index
    %c0_182 = arith.constant 0 : index
    %179 = vector.load %arg5[%c24_180, %c0_181, %c0_182] : memref<25x32x12xf32, #tpu.memory_space<vmem>>, vector<1x32x12xf32>
    %180 = vector.shape_cast %179 : vector<1x32x12xf32> to vector<32x12xf32>
    %cst_183 = arith.constant dense<0.000000e+00> : vector<32x100xf32>
    %181 = tpu.matmul %180, %178, %cst_183 {dimension_numbers = #tpu.dot_dimension_numbers<[1], [0], [0], [1], [0, 0, 1, 1], [], []>} : vector<32x12xf32>, vector<12x100xf32>, vector<32x100xf32> -> vector<32x100xf32>
    %182 = arith.addf %175, %181 : vector<32x100xf32>
    %c0_184 = arith.constant 0 : index
    %c0_185 = arith.constant 0 : index
    %183 = vector.load %arg6[%c0_184, %c0_185] : memref<32x1xf32, #tpu.memory_space<vmem>>, vector<32x1xf32>
    %184 = vector.broadcast %183 : vector<32x1xf32> to vector<32x100xf32>
    %185 = arith.addf %182, %184 : vector<32x100xf32>
    %186 = math.tanh %185 : vector<32x100xf32>
    %c0_186 = arith.constant 0 : index
    %c0_187 = arith.constant 0 : index
    %187 = vector.load %arg7[%c0_186, %c0_187] : memref<100x25xf32, #tpu.memory_space<vmem>>, vector<100x25xf32>
    %cst_188 = arith.constant dense<0.000000e+00> : vector<32x25xf32>
    %188 = tpu.matmul %186, %187, %cst_188 {dimension_numbers = #tpu.dot_dimension_numbers<[1], [0], [0], [1], [0, 0, 1, 1], [], []>} : vector<32x100xf32>, vector<100x25xf32>, vector<32x25xf32> -> vector<32x25xf32>
    %189 = vector.extract_strided_slice %188 {offsets = [0, 0], sizes = [2, 25], strides = [1, 1]} : vector<32x25xf32> to vector<2x25xf32>
    %c0_189 = arith.constant 0 : index
    %c0_190 = arith.constant 0 : index
    %c0_191 = arith.constant 0 : index
    %190 = vector.load %arg8[%c0_189, %c0_190, %c0_191] : memref<16x25x128xf32, #tpu.memory_space<vmem>>, vector<1x25x128xf32>
    %191 = vector.shape_cast %190 : vector<1x25x128xf32> to vector<25x128xf32>
    %cst_192 = arith.constant dense<0.000000e+00> : vector<2x128xf32>
    %192 = tpu.matmul %189, %191, %cst_192 {dimension_numbers = #tpu.dot_dimension_numbers<[1], [0], [0], [1], [0, 0, 1, 1], [], []>} : vector<2x25xf32>, vector<25x128xf32>, vector<2x128xf32> -> vector<2x128xf32>
    %193 = vector.extract_strided_slice %188 {offsets = [2, 0], sizes = [2, 25], strides = [1, 1]} : vector<32x25xf32> to vector<2x25xf32>
    %c1_193 = arith.constant 1 : index
    %c0_194 = arith.constant 0 : index
    %c0_195 = arith.constant 0 : index
    %194 = vector.load %arg8[%c1_193, %c0_194, %c0_195] : memref<16x25x128xf32, #tpu.memory_space<vmem>>, vector<1x25x128xf32>
    %195 = vector.shape_cast %194 : vector<1x25x128xf32> to vector<25x128xf32>
    %cst_196 = arith.constant dense<0.000000e+00> : vector<2x128xf32>
    %196 = tpu.matmul %193, %195, %cst_196 {dimension_numbers = #tpu.dot_dimension_numbers<[1], [0], [0], [1], [0, 0, 1, 1], [], []>} : vector<2x25xf32>, vector<25x128xf32>, vector<2x128xf32> -> vector<2x128xf32>
    %197 = arith.addf %192, %196 : vector<2x128xf32>
    %198 = vector.extract_strided_slice %188 {offsets = [4, 0], sizes = [2, 25], strides = [1, 1]} : vector<32x25xf32> to vector<2x25xf32>
    %c2_197 = arith.constant 2 : index
    %c0_198 = arith.constant 0 : index
    %c0_199 = arith.constant 0 : index
    %199 = vector.load %arg8[%c2_197, %c0_198, %c0_199] : memref<16x25x128xf32, #tpu.memory_space<vmem>>, vector<1x25x128xf32>
    %200 = vector.shape_cast %199 : vector<1x25x128xf32> to vector<25x128xf32>
    %cst_200 = arith.constant dense<0.000000e+00> : vector<2x128xf32>
    %201 = tpu.matmul %198, %200, %cst_200 {dimension_numbers = #tpu.dot_dimension_numbers<[1], [0], [0], [1], [0, 0, 1, 1], [], []>} : vector<2x25xf32>, vector<25x128xf32>, vector<2x128xf32> -> vector<2x128xf32>
    %202 = arith.addf %197, %201 : vector<2x128xf32>
    %203 = vector.extract_strided_slice %188 {offsets = [6, 0], sizes = [2, 25], strides = [1, 1]} : vector<32x25xf32> to vector<2x25xf32>
    %c3_201 = arith.constant 3 : index
    %c0_202 = arith.constant 0 : index
    %c0_203 = arith.constant 0 : index
    %204 = vector.load %arg8[%c3_201, %c0_202, %c0_203] : memref<16x25x128xf32, #tpu.memory_space<vmem>>, vector<1x25x128xf32>
    %205 = vector.shape_cast %204 : vector<1x25x128xf32> to vector<25x128xf32>
    %cst_204 = arith.constant dense<0.000000e+00> : vector<2x128xf32>
    %206 = tpu.matmul %203, %205, %cst_204 {dimension_numbers = #tpu.dot_dimension_numbers<[1], [0], [0], [1], [0, 0, 1, 1], [], []>} : vector<2x25xf32>, vector<25x128xf32>, vector<2x128xf32> -> vector<2x128xf32>
    %207 = arith.addf %202, %206 : vector<2x128xf32>
    %208 = vector.extract_strided_slice %188 {offsets = [8, 0], sizes = [2, 25], strides = [1, 1]} : vector<32x25xf32> to vector<2x25xf32>
    %c4_205 = arith.constant 4 : index
    %c0_206 = arith.constant 0 : index
    %c0_207 = arith.constant 0 : index
    %209 = vector.load %arg8[%c4_205, %c0_206, %c0_207] : memref<16x25x128xf32, #tpu.memory_space<vmem>>, vector<1x25x128xf32>
    %210 = vector.shape_cast %209 : vector<1x25x128xf32> to vector<25x128xf32>
    %cst_208 = arith.constant dense<0.000000e+00> : vector<2x128xf32>
    %211 = tpu.matmul %208, %210, %cst_208 {dimension_numbers = #tpu.dot_dimension_numbers<[1], [0], [0], [1], [0, 0, 1, 1], [], []>} : vector<2x25xf32>, vector<25x128xf32>, vector<2x128xf32> -> vector<2x128xf32>
    %212 = arith.addf %207, %211 : vector<2x128xf32>
    %213 = vector.extract_strided_slice %188 {offsets = [10, 0], sizes = [2, 25], strides = [1, 1]} : vector<32x25xf32> to vector<2x25xf32>
    %c5_209 = arith.constant 5 : index
    %c0_210 = arith.constant 0 : index
    %c0_211 = arith.constant 0 : index
    %214 = vector.load %arg8[%c5_209, %c0_210, %c0_211] : memref<16x25x128xf32, #tpu.memory_space<vmem>>, vector<1x25x128xf32>
    %215 = vector.shape_cast %214 : vector<1x25x128xf32> to vector<25x128xf32>
    %cst_212 = arith.constant dense<0.000000e+00> : vector<2x128xf32>
    %216 = tpu.matmul %213, %215, %cst_212 {dimension_numbers = #tpu.dot_dimension_numbers<[1], [0], [0], [1], [0, 0, 1, 1], [], []>} : vector<2x25xf32>, vector<25x128xf32>, vector<2x128xf32> -> vector<2x128xf32>
    %217 = arith.addf %212, %216 : vector<2x128xf32>
    %218 = vector.extract_strided_slice %188 {offsets = [12, 0], sizes = [2, 25], strides = [1, 1]} : vector<32x25xf32> to vector<2x25xf32>
    %c6_213 = arith.constant 6 : index
    %c0_214 = arith.constant 0 : index
    %c0_215 = arith.constant 0 : index
    %219 = vector.load %arg8[%c6_213, %c0_214, %c0_215] : memref<16x25x128xf32, #tpu.memory_space<vmem>>, vector<1x25x128xf32>
    %220 = vector.shape_cast %219 : vector<1x25x128xf32> to vector<25x128xf32>
    %cst_216 = arith.constant dense<0.000000e+00> : vector<2x128xf32>
    %221 = tpu.matmul %218, %220, %cst_216 {dimension_numbers = #tpu.dot_dimension_numbers<[1], [0], [0], [1], [0, 0, 1, 1], [], []>} : vector<2x25xf32>, vector<25x128xf32>, vector<2x128xf32> -> vector<2x128xf32>
    %222 = arith.addf %217, %221 : vector<2x128xf32>
    %223 = vector.extract_strided_slice %188 {offsets = [14, 0], sizes = [2, 25], strides = [1, 1]} : vector<32x25xf32> to vector<2x25xf32>
    %c7_217 = arith.constant 7 : index
    %c0_218 = arith.constant 0 : index
    %c0_219 = arith.constant 0 : index
    %224 = vector.load %arg8[%c7_217, %c0_218, %c0_219] : memref<16x25x128xf32, #tpu.memory_space<vmem>>, vector<1x25x128xf32>
    %225 = vector.shape_cast %224 : vector<1x25x128xf32> to vector<25x128xf32>
    %cst_220 = arith.constant dense<0.000000e+00> : vector<2x128xf32>
    %226 = tpu.matmul %223, %225, %cst_220 {dimension_numbers = #tpu.dot_dimension_numbers<[1], [0], [0], [1], [0, 0, 1, 1], [], []>} : vector<2x25xf32>, vector<25x128xf32>, vector<2x128xf32> -> vector<2x128xf32>
    %227 = arith.addf %222, %226 : vector<2x128xf32>
    %228 = vector.extract_strided_slice %188 {offsets = [16, 0], sizes = [2, 25], strides = [1, 1]} : vector<32x25xf32> to vector<2x25xf32>
    %c8_221 = arith.constant 8 : index
    %c0_222 = arith.constant 0 : index
    %c0_223 = arith.constant 0 : index
    %229 = vector.load %arg8[%c8_221, %c0_222, %c0_223] : memref<16x25x128xf32, #tpu.memory_space<vmem>>, vector<1x25x128xf32>
    %230 = vector.shape_cast %229 : vector<1x25x128xf32> to vector<25x128xf32>
    %cst_224 = arith.constant dense<0.000000e+00> : vector<2x128xf32>
    %231 = tpu.matmul %228, %230, %cst_224 {dimension_numbers = #tpu.dot_dimension_numbers<[1], [0], [0], [1], [0, 0, 1, 1], [], []>} : vector<2x25xf32>, vector<25x128xf32>, vector<2x128xf32> -> vector<2x128xf32>
    %232 = arith.addf %227, %231 : vector<2x128xf32>
    %233 = vector.extract_strided_slice %188 {offsets = [18, 0], sizes = [2, 25], strides = [1, 1]} : vector<32x25xf32> to vector<2x25xf32>
    %c9_225 = arith.constant 9 : index
    %c0_226 = arith.constant 0 : index
    %c0_227 = arith.constant 0 : index
    %234 = vector.load %arg8[%c9_225, %c0_226, %c0_227] : memref<16x25x128xf32, #tpu.memory_space<vmem>>, vector<1x25x128xf32>
    %235 = vector.shape_cast %234 : vector<1x25x128xf32> to vector<25x128xf32>
    %cst_228 = arith.constant dense<0.000000e+00> : vector<2x128xf32>
    %236 = tpu.matmul %233, %235, %cst_228 {dimension_numbers = #tpu.dot_dimension_numbers<[1], [0], [0], [1], [0, 0, 1, 1], [], []>} : vector<2x25xf32>, vector<25x128xf32>, vector<2x128xf32> -> vector<2x128xf32>
    %237 = arith.addf %232, %236 : vector<2x128xf32>
    %238 = vector.extract_strided_slice %188 {offsets = [20, 0], sizes = [2, 25], strides = [1, 1]} : vector<32x25xf32> to vector<2x25xf32>
    %c10_229 = arith.constant 10 : index
    %c0_230 = arith.constant 0 : index
    %c0_231 = arith.constant 0 : index
    %239 = vector.load %arg8[%c10_229, %c0_230, %c0_231] : memref<16x25x128xf32, #tpu.memory_space<vmem>>, vector<1x25x128xf32>
    %240 = vector.shape_cast %239 : vector<1x25x128xf32> to vector<25x128xf32>
    %cst_232 = arith.constant dense<0.000000e+00> : vector<2x128xf32>
    %241 = tpu.matmul %238, %240, %cst_232 {dimension_numbers = #tpu.dot_dimension_numbers<[1], [0], [0], [1], [0, 0, 1, 1], [], []>} : vector<2x25xf32>, vector<25x128xf32>, vector<2x128xf32> -> vector<2x128xf32>
    %242 = arith.addf %237, %241 : vector<2x128xf32>
    %243 = vector.extract_strided_slice %188 {offsets = [22, 0], sizes = [2, 25], strides = [1, 1]} : vector<32x25xf32> to vector<2x25xf32>
    %c11_233 = arith.constant 11 : index
    %c0_234 = arith.constant 0 : index
    %c0_235 = arith.constant 0 : index
    %244 = vector.load %arg8[%c11_233, %c0_234, %c0_235] : memref<16x25x128xf32, #tpu.memory_space<vmem>>, vector<1x25x128xf32>
    %245 = vector.shape_cast %244 : vector<1x25x128xf32> to vector<25x128xf32>
    %cst_236 = arith.constant dense<0.000000e+00> : vector<2x128xf32>
    %246 = tpu.matmul %243, %245, %cst_236 {dimension_numbers = #tpu.dot_dimension_numbers<[1], [0], [0], [1], [0, 0, 1, 1], [], []>} : vector<2x25xf32>, vector<25x128xf32>, vector<2x128xf32> -> vector<2x128xf32>
    %247 = arith.addf %242, %246 : vector<2x128xf32>
    %248 = vector.extract_strided_slice %188 {offsets = [24, 0], sizes = [2, 25], strides = [1, 1]} : vector<32x25xf32> to vector<2x25xf32>
    %c12_237 = arith.constant 12 : index
    %c0_238 = arith.constant 0 : index
    %c0_239 = arith.constant 0 : index
    %249 = vector.load %arg8[%c12_237, %c0_238, %c0_239] : memref<16x25x128xf32, #tpu.memory_space<vmem>>, vector<1x25x128xf32>
    %250 = vector.shape_cast %249 : vector<1x25x128xf32> to vector<25x128xf32>
    %cst_240 = arith.constant dense<0.000000e+00> : vector<2x128xf32>
    %251 = tpu.matmul %248, %250, %cst_240 {dimension_numbers = #tpu.dot_dimension_numbers<[1], [0], [0], [1], [0, 0, 1, 1], [], []>} : vector<2x25xf32>, vector<25x128xf32>, vector<2x128xf32> -> vector<2x128xf32>
    %252 = arith.addf %247, %251 : vector<2x128xf32>
    %253 = vector.extract_strided_slice %188 {offsets = [26, 0], sizes = [2, 25], strides = [1, 1]} : vector<32x25xf32> to vector<2x25xf32>
    %c13_241 = arith.constant 13 : index
    %c0_242 = arith.constant 0 : index
    %c0_243 = arith.constant 0 : index
    %254 = vector.load %arg8[%c13_241, %c0_242, %c0_243] : memref<16x25x128xf32, #tpu.memory_space<vmem>>, vector<1x25x128xf32>
    %255 = vector.shape_cast %254 : vector<1x25x128xf32> to vector<25x128xf32>
    %cst_244 = arith.constant dense<0.000000e+00> : vector<2x128xf32>
    %256 = tpu.matmul %253, %255, %cst_244 {dimension_numbers = #tpu.dot_dimension_numbers<[1], [0], [0], [1], [0, 0, 1, 1], [], []>} : vector<2x25xf32>, vector<25x128xf32>, vector<2x128xf32> -> vector<2x128xf32>
    %257 = arith.addf %252, %256 : vector<2x128xf32>
    %258 = vector.extract_strided_slice %188 {offsets = [28, 0], sizes = [2, 25], strides = [1, 1]} : vector<32x25xf32> to vector<2x25xf32>
    %c14_245 = arith.constant 14 : index
    %c0_246 = arith.constant 0 : index
    %c0_247 = arith.constant 0 : index
    %259 = vector.load %arg8[%c14_245, %c0_246, %c0_247] : memref<16x25x128xf32, #tpu.memory_space<vmem>>, vector<1x25x128xf32>
    %260 = vector.shape_cast %259 : vector<1x25x128xf32> to vector<25x128xf32>
    %cst_248 = arith.constant dense<0.000000e+00> : vector<2x128xf32>
    %261 = tpu.matmul %258, %260, %cst_248 {dimension_numbers = #tpu.dot_dimension_numbers<[1], [0], [0], [1], [0, 0, 1, 1], [], []>} : vector<2x25xf32>, vector<25x128xf32>, vector<2x128xf32> -> vector<2x128xf32>
    %262 = arith.addf %257, %261 : vector<2x128xf32>
    %263 = vector.extract_strided_slice %188 {offsets = [30, 0], sizes = [2, 25], strides = [1, 1]} : vector<32x25xf32> to vector<2x25xf32>
    %c15_249 = arith.constant 15 : index
    %c0_250 = arith.constant 0 : index
    %c0_251 = arith.constant 0 : index
    %264 = vector.load %arg8[%c15_249, %c0_250, %c0_251] : memref<16x25x128xf32, #tpu.memory_space<vmem>>, vector<1x25x128xf32>
    %265 = vector.shape_cast %264 : vector<1x25x128xf32> to vector<25x128xf32>
    %cst_252 = arith.constant dense<0.000000e+00> : vector<2x128xf32>
    %266 = tpu.matmul %263, %265, %cst_252 {dimension_numbers = #tpu.dot_dimension_numbers<[1], [0], [0], [1], [0, 0, 1, 1], [], []>} : vector<2x25xf32>, vector<25x128xf32>, vector<2x128xf32> -> vector<2x128xf32>
    %267 = arith.addf %262, %266 : vector<2x128xf32>
    %c0_253 = arith.constant 0 : index
    %c0_254 = arith.constant 0 : index
    %268 = vector.load %arg9[%c0_253, %c0_254] : memref<1x128xf32, #tpu.memory_space<vmem>>, vector<1x128xf32>
    %269 = vector.broadcast %268 : vector<1x128xf32> to vector<2x128xf32>
    %270 = arith.addf %267, %269 : vector<2x128xf32>
    %271 = math.tanh %270 : vector<2x128xf32>
    %c0_255 = arith.constant 0 : index
    %c0_256 = arith.constant 0 : index
    %272 = vector.load %arg10[%c0_255, %c0_256] : memref<128x128xf32, #tpu.memory_space<vmem>>, vector<128x128xf32>
    %cst_257 = arith.constant dense<0.000000e+00> : vector<2x128xf32>
    %273 = tpu.matmul %271, %272, %cst_257 {dimension_numbers = #tpu.dot_dimension_numbers<[1], [0], [0], [1], [0, 0, 1, 1], [], []>} : vector<2x128xf32>, vector<128x128xf32>, vector<2x128xf32> -> vector<2x128xf32>
    %c0_258 = arith.constant 0 : index
    %c0_259 = arith.constant 0 : index
    %274 = vector.load %arg11[%c0_258, %c0_259] : memref<1x128xf32, #tpu.memory_space<vmem>>, vector<1x128xf32>
    %275 = vector.broadcast %274 : vector<1x128xf32> to vector<2x128xf32>
    %276 = arith.addf %273, %275 : vector<2x128xf32>
    %277 = math.tanh %276 : vector<2x128xf32>
    %c0_260 = arith.constant 0 : index
    %c0_261 = arith.constant 0 : index
    %278 = vector.load %arg12[%c0_260, %c0_261] : memref<128x128xf32, #tpu.memory_space<vmem>>, vector<128x128xf32>
    %cst_262 = arith.constant dense<0.000000e+00> : vector<2x128xf32>
    %279 = tpu.matmul %277, %278, %cst_262 {dimension_numbers = #tpu.dot_dimension_numbers<[1], [0], [0], [1], [0, 0, 1, 1], [], []>} : vector<2x128xf32>, vector<128x128xf32>, vector<2x128xf32> -> vector<2x128xf32>
    %c0_263 = arith.constant 0 : index
    %c0_264 = arith.constant 0 : index
    %280 = vector.load %arg13[%c0_263, %c0_264] : memref<1x128xf32, #tpu.memory_space<vmem>>, vector<1x128xf32>
    %281 = vector.broadcast %280 : vector<1x128xf32> to vector<2x128xf32>
    %282 = arith.addf %279, %281 : vector<2x128xf32>
    %283 = math.tanh %282 : vector<2x128xf32>
    %c0_265 = arith.constant 0 : index
    %c0_266 = arith.constant 0 : index
    %284 = vector.load %arg14[%c0_265, %c0_266] : memref<2x128xf32, #tpu.memory_space<vmem>>, vector<2x128xf32>
    tpu.vector_store %arg14[%c0_265, %c0_266], %283 {strides = array<i32>} : memref<2x128xf32, #tpu.memory_space<vmem>>, vector<2x128xf32>,
    return
  }
}

</mosaic_0001>

<llo_original>
// kernel: lenet_forward.1
$region0: #{lenet_forward.1}
  #allocation0 [shape = 'u32[]', space=smem, size = 0x4, offset = 0x4, fixed_abs, tag = 'smem constant byte address 0x4 - core index']
  #allocation1 [shape = 'u32[144,128]{1,0:T(1,128)}', space=vmem, size = 0x12000, scoped, tag = 'internal scratch']
  %s0 = inlined_call_operand.vmem [shape: f32[50,784], index: 0, kind: input, shape index: {}]
  %s1 = inlined_call_operand.vmem [shape: f32[12,50], index: 1, kind: input, shape index: {}]
  %s2 = inlined_call_operand.vmem [shape: f32[12,1], index: 2, kind: input, shape index: {}]
  %s3 = inlined_call_operand.vmem [shape: f32[784,196], index: 3, kind: input, shape index: {}]
  %s4 = inlined_call_operand.vmem [shape: f32[25,196,100], index: 4, kind: input, shape index: {}]
  %s5 = inlined_call_operand.vmem [shape: f32[25,32,12], index: 5, kind: input, shape index: {}]
  %s6 = inlined_call_operand.vmem [shape: f32[32,1], index: 6, kind: input, shape index: {}]
  %s7 = inlined_call_operand.vmem [shape: f32[100,25], index: 7, kind: input, shape index: {}]
  %s8 = inlined_call_operand.vmem [shape: f32[16,25,128], index: 8, kind: input, shape index: {}]
  %s9 = inlined_call_operand.vmem [shape: f32[1,128], index: 9, kind: input, shape index: {}]
  %s10 = inlined_call_operand.vmem [shape: f32[128,128], index: 10, kind: input, shape index: {}]
  %s11 = inlined_call_operand.vmem [shape: f32[1,128], index: 11, kind: input, shape index: {}]
  %s12 = inlined_call_operand.vmem [shape: f32[128,128], index: 12, kind: input, shape index: {}]
  %s13 = inlined_call_operand.vmem [shape: f32[1,128], index: 13, kind: input, shape index: {}]
  %s14 = inlined_call_operand.hbm [shape: f32[2,128], index: 14, kind: output, shape index: {}]
  %s15 = sld [smem:[#allocation0]]
  $region66: #{lenet_forward.1} parent=0
    _
  %s17 = ssub.s32 1, %s15
  %s18 = scalar_select 0, %s17, %s15
  $region1: #{lenet_forward.1} parent=0
    #allocation2 [shape = 'u8[1024]{0}', space=vmem, size = 0x400, scoped, tag = 'output window, operand 0, single buffered']
    #allocation3 [shape = 's32[1]{0}', space=sflag, size = 0x4, scoped, tag = 'scoped memory for lenet_forward.1']
    %19 = vsyncpa [#allocation3], 0
    // Predicated region
    $region2: #{lenet_forward.1} parent=1 // pred_check
      _
    $region3: #{lenet_forward.1} parent=1 // pred_check_branch
      %21 = sbr.rel (0) target = $region5
    $region4: #{lenet_forward.1} parent=1 // pred_region
      _
    $region5: #{lenet_forward.1} parent=1 // pred_fallthru
      _
    // Predicated region
    $region6: #{lenet_forward.1} parent=1 // pred_check
      _
    $region7: #{lenet_forward.1} parent=1 // pred_check_branch
      %23 = sbr.rel (0) target = $region9
    $region8: #{lenet_forward.1} parent=1 // pred_region
      _
    $region9: #{lenet_forward.1} parent=1 // pred_fallthru
      _
    // Predicated region
    $region10: #{lenet_forward.1} parent=1 // pred_check
      _
    $region11: #{lenet_forward.1} parent=1 // pred_check_branch
      %25 = sbr.rel (0) target = $region13
    $region12: #{lenet_forward.1} parent=1 // pred_region
      _
    $region13: #{lenet_forward.1} parent=1 // pred_fallthru
      _
    // Predicated region
    $region14: #{lenet_forward.1} parent=1 // pred_check
      _
    $region15: #{lenet_forward.1} parent=1 // pred_check_branch
      %27 = sbr.rel (0) target = $region17
    $region16: #{lenet_forward.1} parent=1 // pred_region
      _
    $region17: #{lenet_forward.1} parent=1 // pred_fallthru
      _
    // Predicated region
    $region18: #{lenet_forward.1} parent=1 // pred_check
      _
    $region19: #{lenet_forward.1} parent=1 // pred_check_branch
      %29 = sbr.rel (0) target = $region21
    $region20: #{lenet_forward.1} parent=1 // pred_region
      _
    $region21: #{lenet_forward.1} parent=1 // pred_fallthru
      _
    // Predicated region
    $region22: #{lenet_forward.1} parent=1 // pred_check
      _
    $region23: #{lenet_forward.1} parent=1 // pred_check_branch
      %31 = sbr.rel (0) target = $region25
    $region24: #{lenet_forward.1} parent=1 // pred_region
      _
    $region25: #{lenet_forward.1} parent=1 // pred_fallthru
      _
    // Predicated region
    $region26: #{lenet_forward.1} parent=1 // pred_check
      _
    $region27: #{lenet_forward.1} parent=1 // pred_check_branch
      %33 = sbr.rel (0) target = $region29
    $region28: #{lenet_forward.1} parent=1 // pred_region
      _
    $region29: #{lenet_forward.1} parent=1 // pred_fallthru
      _
    // Predicated region
    $region30: #{lenet_forward.1} parent=1 // pred_check
      _
    $region31: #{lenet_forward.1} parent=1 // pred_check_branch
      %35 = sbr.rel (0) target = $region33
    $region32: #{lenet_forward.1} parent=1 // pred_region
      _
    $region33: #{lenet_forward.1} parent=1 // pred_fallthru
      _
    // Predicated region
    $region34: #{lenet_forward.1} parent=1 // pred_check
      _
    $region35: #{lenet_forward.1} parent=1 // pred_check_branch
      %37 = sbr.rel (0) target = $region37
    $region36: #{lenet_forward.1} parent=1 // pred_region
      _
    $region37: #{lenet_forward.1} parent=1 // pred_fallthru
      _
    // Predicated region
    $region38: #{lenet_forward.1} parent=1 // pred_check
      _
    $region39: #{lenet_forward.1} parent=1 // pred_check_branch
      %39 = sbr.rel (0) target = $region41
    $region40: #{lenet_forward.1} parent=1 // pred_region
      _
    $region41: #{lenet_forward.1} parent=1 // pred_fallthru
      _
    // Predicated region
    $region42: #{lenet_forward.1} parent=1 // pred_check
      _
    $region43: #{lenet_forward.1} parent=1 // pred_check_branch
      %41 = sbr.rel (0) target = $region45
    $region44: #{lenet_forward.1} parent=1 // pred_region
      _
    $region45: #{lenet_forward.1} parent=1 // pred_fallthru
      _
    // Predicated region
    $region46: #{lenet_forward.1} parent=1 // pred_check
      _
    $region47: #{lenet_forward.1} parent=1 // pred_check_branch
      %43 = sbr.rel (0) target = $region49
    $region48: #{lenet_forward.1} parent=1 // pred_region
      _
    $region49: #{lenet_forward.1} parent=1 // pred_fallthru
      _
    // Predicated region
    $region50: #{lenet_forward.1} parent=1 // pred_check
      _
    $region51: #{lenet_forward.1} parent=1 // pred_check_branch
      %45 = sbr.rel (0) target = $region53
    $region52: #{lenet_forward.1} parent=1 // pred_region
      _
    $region53: #{lenet_forward.1} parent=1 // pred_fallthru
      _
    // Predicated region
    $region54: #{lenet_forward.1} parent=1 // pred_check
      _
    $region55: #{lenet_forward.1} parent=1 // pred_check_branch
      %47 = sbr.rel (0) target = $region57
    $region56: #{lenet_forward.1} parent=1 // pred_region
      _
    $region57: #{lenet_forward.1} parent=1 // pred_fallthru
      _
    %v48 = vld [vmem:[%s1] sm:$0xff]
    %v49 = vld [vmem:[%s1 + $0x8] sm:$0xf]
    %v50 = vld [vmem:[%s0] sm:$0xff]
    %v51 = vld [vmem:[%s0 + $0x8] sm:$0xff]
    %v52 = vld [vmem:[%s0 + $0x10] sm:$0xff]
    %v53 = vld [vmem:[%s0 + $0x18] sm:$0xff]
    %v54 = vld [vmem:[%s0 + $0x20] sm:$0xff]
    %v55 = vld [vmem:[%s0 + $0x28] sm:$0xff]
    %v56 = vld [vmem:[%s0 + $0x30] sm:$0xff]
    %v57 = vld [vmem:[%s0 + $0x38] sm:$0xff]
    %v58 = vld [vmem:[%s0 + $0x40] sm:$0xff]
    %v59 = vld [vmem:[%s0 + $0x48] sm:$0xff]
    %v60 = vld [vmem:[%s0 + $0x50] sm:$0xff]
    %v61 = vld [vmem:[%s0 + $0x58] sm:$0xff]
    %v62 = vld [vmem:[%s0 + $0x60] sm:$0xff]
    %v63 = vld [vmem:[%s0 + $0x68] sm:$0xff]
    %v64 = vld [vmem:[%s0 + $0x70] sm:$0xff]
    %v65 = vld [vmem:[%s0 + $0x78] sm:$0xff]
    %v66 = vld [vmem:[%s0 + $0x80] sm:$0xff]
    %v67 = vld [vmem:[%s0 + $0x88] sm:$0xff]
    %v68 = vld [vmem:[%s0 + $0x90] sm:$0xff]
    %v69 = vld [vmem:[%s0 + $0x98] sm:$0xff]
    %v70 = vld [vmem:[%s0 + $0xa0] sm:$0xff]
    %v71 = vld [vmem:[%s0 + $0xa8] sm:$0xff]
    %v72 = vld [vmem:[%s0 + $0xb0] sm:$0xff]
    %v73 = vld [vmem:[%s0 + $0xb8] sm:$0xff]
    %v74 = vld [vmem:[%s0 + $0xc0] sm:$0xff]
    %v75 = vld [vmem:[%s0 + $0xc8] sm:$0xff]
    %v76 = vld [vmem:[%s0 + $0xd0] sm:$0xff]
    %v77 = vld [vmem:[%s0 + $0xd8] sm:$0xff]
    %v78 = vld [vmem:[%s0 + $0xe0] sm:$0xff]
    %v79 = vld [vmem:[%s0 + $0xe8] sm:$0xff]
    %v80 = vld [vmem:[%s0 + $0xf0] sm:$0xff]
    %v81 = vld [vmem:[%s0 + $0xf8] sm:$0xff]
    %v82 = vld [vmem:[%s0 + $0x100] sm:$0xff]
    %v83 = vld [vmem:[%s0 + $0x108] sm:$0xff]
    %v84 = vld [vmem:[%s0 + $0x110] sm:$0xff]
    %v85 = vld [vmem:[%s0 + $0x118] sm:$0xff]
    %v86 = vld [vmem:[%s0 + $0x120] sm:$0xff]
    %v87 = vld [vmem:[%s0 + $0x128] sm:$0xff]
    %v88 = vld [vmem:[%s0 + $0x130] sm:$0xff]
    %v89 = vld [vmem:[%s0 + $0x138] sm:$0xff]
    %v90 = vld [vmem:[%s0 + $0x140] sm:$0xff]
    %v91 = vld [vmem:[%s0 + $0x148] sm:$0xff]
    %v92 = vld [vmem:[%s0 + $0x150] sm:$0x3]
    %v93 = vld [vmem:[%s0 + $0x158] sm:$0x3]
    %v94 = vld [vmem:[%s0 + $0x160] sm:$0x3]
    %v95 = vld [vmem:[%s0 + $0x168] sm:$0x3]
    %v96 = vld [vmem:[%s0 + $0x170] sm:$0x3]
    %v97 = vld [vmem:[%s0 + $0x178] sm:$0x3]
    %v98 = vld [vmem:[%s0 + $0x180] sm:$0x3]
    %v99 = vld [vmem:[%s2] sm:$0xff]
    %v100 = vld [vmem:[%s2 + $0x8] sm:$0xf]
    %102 = vset.pattern.permute.xlu0 0
    %103 = vperm.xlu0 %102, %v99
    %v104 = vpop.permute.xlu0 %103
    %107 = vset.pattern.permute.xlu0 0
    %108 = vperm.xlu0 %107, %v100
    %v109 = vpop.permute.xlu0 %108
    %vm111 = vcmask 408576
    %v113 = vsel %vm111, %v48, 0
    %v116 = vsel %vm111, %v49, 0
    %vm118 = vcmask 1041408
    %v120 = vsel %vm118, %v92, 0
    %v123 = vsel %vm118, %v93, 0
    %v126 = vsel %vm118, %v94, 0
    %v129 = vsel %vm118, %v95, 0
    %v132 = vsel %vm118, %v96, 0
    %v135 = vsel %vm118, %v97, 0
    %v138 = vsel %vm118, %v98, 0
    %140 = vmatprep.subr.mxu0 0.0
    %141 = vmatpush1.msra.mxu0 0.0
    %142 = vmatprep.subr.mxu0 0.0
    %143 = vmatpush1.msra.mxu0 0.0
    %144 = vmatprep.subr.mxu0 0.0
    %145 = vmatpush1.msra.mxu0 0.0
    %146 = vmatprep.subr.mxu0 0.0
    %147 = vmatpush1.msra.mxu0 0.0
    %148 = vmatprep.subr.mxu0 0.0
    %149 = vmatpush1.msra.mxu0 0.0
    %150 = vmatprep.subr.mxu0 0.0
    %151 = vmatpush1.msra.mxu0 0.0
    %152 = vmatprep.subr.mxu0 0.0
    %153 = vmatpush1.msra.mxu0 0.0
    %154 = vmatprep.subr.mxu0 0.0
    %155 = vmatpush1.msra.mxu0 0.0
    %156 = vmatprep.subr.mxu0 0.0
    %157 = vmatpush1.msra.mxu0 0.0
    %158 = vmatprep.subr.mxu0 %v123
    %159 = vmatpush1.msra.mxu0 %v120
    %160 = vmatprep.subr.mxu0 %v86
    %161 = vmatpush1.msra.mxu0 %v85
    %162 = vmatprep.subr.mxu0 %v79
    %163 = vmatpush1.msra.mxu0 %v78
    %164 = vmatprep.subr.mxu0 %v72
    %165 = vmatpush1.msra.mxu0 %v71
    %166 = vmatprep.subr.mxu0 %v65
    %167 = vmatpush1.msra.mxu0 %v64
    %168 = vmatprep.subr.mxu0 %v58
    %169 = vmatpush1.msra.mxu0 %v57
    %170 = vmatprep.subr.mxu0 %v51
    %171 = vmatpush1.msra.mxu0 %v50
    %172 = vmatprep.subr.mxu0 0.0
    %173 = vmatpush2.msra.mxu0 0.0
    %174 = vmatprep.subr.mxu0 0.0
    %175 = vmatpush2.msra.mxu0 0.0
    %176 = vmatprep.subr.mxu0 0.0
    %177 = vmatpush2.msra.mxu0 0.0
    %178 = vmatprep.subr.mxu0 0.0
    %179 = vmatpush2.msra.mxu0 0.0
    %180 = vmatprep.subr.mxu0 0.0
    %181 = vmatpush2.msra.mxu0 0.0
    %182 = vmatprep.subr.mxu0 0.0
    %183 = vmatpush2.msra.mxu0 0.0
    %184 = vmatprep.subr.mxu0 0.0
    %185 = vmatpush2.msra.mxu0 0.0
    %186 = vmatprep.subr.mxu0 0.0
    %187 = vmatpush2.msra.mxu0 0.0
    %188 = vmatprep.subr.mxu0 0.0
    %189 = vmatpush2.msra.mxu0 0.0
    %190 = vmatprep.subr.mxu0 0.0
    %191 = vmatpush2.msra.mxu0 0.0
    %192 = vmatprep.subr.mxu0 0.0
    %193 = vmatpush2.msra.mxu0 0.0
    %194 = vmatprep.subr.mxu0 0.0
    %195 = vmatpush2.msra.mxu0 0.0
    %196 = vmatprep.subr.mxu0 0.0
    %197 = vmatpush2.msra.mxu0 0.0
    %198 = vmatprep.subr.mxu0 0.0
    %199 = vmatpush2.msra.mxu0 0.0
    %200 = vmatprep.subr.mxu0 0.0
    %201 = vmatpush2.msra.mxu0 0.0
    %202 = vmatprep.subr.mxu0 0.0
    %203 = vmatpush2.msra.mxu0 0.0
    %204 = vmatprep.mubr.f32.mxu0 0.0
    %205 = vmatmul.mubr.f32.gmra.mxu0 %v113
    %v206 = vpop.f32.mrf.mxu0
    %v207 = vadd.f32 %v104, %v206
    %v208 = vpop.f32.mrf.mxu0
    %v209 = vadd.f32 %v104, %v208
    %210 = vmatprep.mubr.f32.mxu0 0.0
    %211 = vmatmul.mubr.f32.gmra.mxu0 %v116
    %v212 = vpop.f32.mrf.mxu0
    %v213 = vadd.f32 %v109, %v212
    %v214 = vpop.f32.mrf.mxu0
    %v215 = vadd.f32 %v109, %v214
    %216 = vdwg.mxu0
    %217 = vmatprep.subr.mxu0 0.0
    %218 = vmatpush1.msra.mxu0 0.0
    %219 = vmatprep.subr.mxu0 0.0
    %220 = vmatpush1.msra.mxu0 0.0
    %221 = vmatprep.subr.mxu0 0.0
    %222 = vmatpush1.msra.mxu0 0.0
    %223 = vmatprep.subr.mxu0 0.0
    %224 = vmatpush1.msra.mxu0 0.0
    %225 = vmatprep.subr.mxu0 0.0
    %226 = vmatpush1.msra.mxu0 0.0
    %227 = vmatprep.subr.mxu0 0.0
    %228 = vmatpush1.msra.mxu0 0.0
    %229 = vmatprep.subr.mxu0 0.0
    %230 = vmatpush1.msra.mxu0 0.0
    %231 = vmatprep.subr.mxu0 0.0
    %232 = vmatpush1.msra.mxu0 0.0
    %233 = vmatprep.subr.mxu0 0.0
    %234 = vmatpush1.msra.mxu0 0.0
    %235 = vmatprep.subr.mxu0 %v129
    %236 = vmatpush1.msra.mxu0 %v126
    %237 = vmatprep.subr.mxu0 %v88
    %238 = vmatpush1.msra.mxu0 %v87
    %239 = vmatprep.subr.mxu0 %v81
    %240 = vmatpush1.msra.mxu0 %v80
    %241 = vmatprep.subr.mxu0 %v74
    %242 = vmatpush1.msra.mxu0 %v73
    %243 = vmatprep.subr.mxu0 %v67
    %244 = vmatpush1.msra.mxu0 %v66
    %245 = vmatprep.subr.mxu0 %v60
    %246 = vmatpush1.msra.mxu0 %v59
    %247 = vmatprep.subr.mxu0 %v53
    %248 = vmatpush1.msra.mxu0 %v52
    %249 = vmatprep.subr.mxu0 0.0
    %250 = vmatpush2.msra.mxu0 0.0
    %251 = vmatprep.subr.mxu0 0.0
    %252 = vmatpush2.msra.mxu0 0.0
    %253 = vmatprep.subr.mxu0 0.0
    %254 = vmatpush2.msra.mxu0 0.0
    %255 = vmatprep.subr.mxu0 0.0
    %256 = vmatpush2.msra.mxu0 0.0
    %257 = vmatprep.subr.mxu0 0.0
    %258 = vmatpush2.msra.mxu0 0.0
    %259 = vmatprep.subr.mxu0 0.0
    %260 = vmatpush2.msra.mxu0 0.0
    %261 = vmatprep.subr.mxu0 0.0
    %262 = vmatpush2.msra.mxu0 0.0
    %263 = vmatprep.subr.mxu0 0.0
    %264 = vmatpush2.msra.mxu0 0.0
    %265 = vmatprep.subr.mxu0 0.0
    %266 = vmatpush2.msra.mxu0 0.0
    %267 = vmatprep.subr.mxu0 0.0
    %268 = vmatpush2.msra.mxu0 0.0
    %269 = vmatprep.subr.mxu0 0.0
    %270 = vmatpush2.msra.mxu0 0.0
    %271 = vmatprep.subr.mxu0 0.0
    %272 = vmatpush2.msra.mxu0 0.0
    %273 = vmatprep.subr.mxu0 0.0
    %274 = vmatpush2.msra.mxu0 0.0
    %275 = vmatprep.subr.mxu0 0.0
    %276 = vmatpush2.msra.mxu0 0.0
    %277 = vmatprep.subr.mxu0 0.0
    %278 = vmatpush2.msra.mxu0 0.0
    %279 = vmatprep.subr.mxu0 0.0
    %280 = vmatpush2.msra.mxu0 0.0
    %281 = vmatprep.mubr.f32.mxu0 0.0
    %282 = vmatmul.mubr.f32.gmra.mxu0 %v113
    %v283 = vpop.f32.mrf.mxu0
    %v284 = vadd.f32 %v104, %v283
    %v285 = vpop.f32.mrf.mxu0
    %v286 = vadd.f32 %v104, %v285
    %287 = vmatprep.mubr.f32.mxu0 0.0
    %288 = vmatmul.mubr.f32.gmra.mxu0 %v116
    %v289 = vpop.f32.mrf.mxu0
    %v290 = vadd.f32 %v109, %v289
    %v291 = vpop.f32.mrf.mxu0
    %v292 = vadd.f32 %v109, %v291
    %293 = vdwg.mxu0
    %294 = vmatprep.subr.mxu0 0.0
    %295 = vmatpush1.msra.mxu0 0.0
    %296 = vmatprep.subr.mxu0 0.0
    %297 = vmatpush1.msra.mxu0 0.0
    %298 = vmatprep.subr.mxu0 0.0
    %299 = vmatpush1.msra.mxu0 0.0
    %300 = vmatprep.subr.mxu0 0.0
    %301 = vmatpush1.msra.mxu0 0.0
    %302 = vmatprep.subr.mxu0 0.0
    %303 = vmatpush1.msra.mxu0 0.0
    %304 = vmatprep.subr.mxu0 0.0
    %305 = vmatpush1.msra.mxu0 0.0
    %306 = vmatprep.subr.mxu0 0.0
    %307 = vmatpush1.msra.mxu0 0.0
    %308 = vmatprep.subr.mxu0 0.0
    %309 = vmatpush1.msra.mxu0 0.0
    %310 = vmatprep.subr.mxu0 0.0
    %311 = vmatpush1.msra.mxu0 0.0
    %312 = vmatprep.subr.mxu0 %v135
    %313 = vmatpush1.msra.mxu0 %v132
    %314 = vmatprep.subr.mxu0 %v90
    %315 = vmatpush1.msra.mxu0 %v89
    %316 = vmatprep.subr.mxu0 %v83
    %317 = vmatpush1.msra.mxu0 %v82
    %318 = vmatprep.subr.mxu0 %v76
    %319 = vmatpush1.msra.mxu0 %v75
    %320 = vmatprep.subr.mxu0 %v69
    %321 = vmatpush1.msra.mxu0 %v68
    %322 = vmatprep.subr.mxu0 %v62
    %323 = vmatpush1.msra.mxu0 %v61
    %324 = vmatprep.subr.mxu0 %v55
    %325 = vmatpush1.msra.mxu0 %v54
    %326 = vmatprep.subr.mxu0 0.0
    %327 = vmatpush2.msra.mxu0 0.0
    %328 = vmatprep.subr.mxu0 0.0
    %329 = vmatpush2.msra.mxu0 0.0
    %330 = vmatprep.subr.mxu0 0.0
    %331 = vmatpush2.msra.mxu0 0.0
    %332 = vmatprep.subr.mxu0 0.0
    %333 = vmatpush2.msra.mxu0 0.0
    %334 = vmatprep.subr.mxu0 0.0
    %335 = vmatpush2.msra.mxu0 0.0
    %336 = vmatprep.subr.mxu0 0.0
    %337 = vmatpush2.msra.mxu0 0.0
    %338 = vmatprep.subr.mxu0 0.0
    %339 = vmatpush2.msra.mxu0 0.0
    %340 = vmatprep.subr.mxu0 0.0
    %341 = vmatpush2.msra.mxu0 0.0
    %342 = vmatprep.subr.mxu0 0.0
    %343 = vmatpush2.msra.mxu0 0.0
    %344 = vmatprep.subr.mxu0 0.0
    %345 = vmatpush2.msra.mxu0 0.0
    %346 = vmatprep.subr.mxu0 0.0
    %347 = vmatpush2.msra.mxu0 0.0
    %348 = vmatprep.subr.mxu0 0.0
    %349 = vmatpush2.msra.mxu0 0.0
    %350 = vmatprep.subr.mxu0 0.0
    %351 = vmatpush2.msra.mxu0 0.0
    %352 = vmatprep.subr.mxu0 0.0
    %353 = vmatpush2.msra.mxu0 0.0
    %354 = vmatprep.subr.mxu0 0.0
    %355 = vmatpush2.msra.mxu0 0.0
    %356 = vmatprep.subr.mxu0 0.0
    %357 = vmatpush2.msra.mxu0 0.0
    %358 = vmatprep.mubr.f32.mxu0 0.0
    %359 = vmatmul.mubr.f32.gmra.mxu0 %v113
    %v360 = vpop.f32.mrf.mxu0
    %v361 = vadd.f32 %v104, %v360
    %v362 = vpop.f32.mrf.mxu0
    %v363 = vadd.f32 %v104, %v362
    %364 = vmatprep.mubr.f32.mxu0 0.0
    %365 = vmatmul.mubr.f32.gmra.mxu0 %v116
    %v366 = vpop.f32.mrf.mxu0
    %v367 = vadd.f32 %v109, %v366
    %v368 = vpop.f32.mrf.mxu0
    %v369 = vadd.f32 %v109, %v368
    %370 = vdwg.mxu0
    %371 = vmatprep.subr.mxu0 0.0
    %372 = vmatpush1.msra.mxu0 0.0
    %373 = vmatprep.subr.mxu0 0.0
    %374 = vmatpush1.msra.mxu0 0.0
    %375 = vmatprep.subr.mxu0 0.0
    %376 = vmatpush1.msra.mxu0 0.0
    %377 = vmatprep.subr.mxu0 0.0
    %378 = vmatpush1.msra.mxu0 0.0
    %379 = vmatprep.subr.mxu0 0.0
    %380 = vmatpush1.msra.mxu0 0.0
    %381 = vmatprep.subr.mxu0 0.0
    %382 = vmatpush1.msra.mxu0 0.0
    %383 = vmatprep.subr.mxu0 0.0
    %384 = vmatpush1.msra.mxu0 0.0
    %385 = vmatprep.subr.mxu0 0.0
    %386 = vmatpush1.msra.mxu0 0.0
    %387 = vmatprep.subr.mxu0 0.0
    %388 = vmatpush1.msra.mxu0 0.0
    %389 = vmatprep.subr.mxu0 0.0
    %390 = vmatpush1.msra.mxu0 %v138
    %391 = vmatprep.subr.mxu0 0.0
    %392 = vmatpush1.msra.mxu0 %v91
    %393 = vmatprep.subr.mxu0 0.0
    %394 = vmatpush1.msra.mxu0 %v84
    %395 = vmatprep.subr.mxu0 0.0
    %396 = vmatpush1.msra.mxu0 %v77
    %397 = vmatprep.subr.mxu0 0.0
    %398 = vmatpush1.msra.mxu0 %v70
    %399 = vmatprep.subr.mxu0 0.0
    %400 = vmatpush1.msra.mxu0 %v63
    %401 = vmatprep.subr.mxu0 0.0
    %402 = vmatpush1.msra.mxu0 %v56
    %403 = vmatprep.subr.mxu0 0.0
    %404 = vmatpush2.msra.mxu0 0.0
    %405 = vmatprep.subr.mxu0 0.0
    %406 = vmatpush2.msra.mxu0 0.0
    %407 = vmatprep.subr.mxu0 0.0
    %408 = vmatpush2.msra.mxu0 0.0
    %409 = vmatprep.subr.mxu0 0.0
    %410 = vmatpush2.msra.mxu0 0.0
    %411 = vmatprep.subr.mxu0 0.0
    %412 = vmatpush2.msra.mxu0 0.0
    %413 = vmatprep.subr.mxu0 0.0
    %414 = vmatpush2.msra.mxu0 0.0
    %415 = vmatprep.subr.mxu0 0.0
    %416 = vmatpush2.msra.mxu0 0.0
    %417 = vmatprep.subr.mxu0 0.0
    %418 = vmatpush2.msra.mxu0 0.0
    %419 = vmatprep.subr.mxu0 0.0
    %420 = vmatpush2.msra.mxu0 0.0
    %421 = vmatprep.subr.mxu0 0.0
    %422 = vmatpush2.msra.mxu0 0.0
    %423 = vmatprep.subr.mxu0 0.0
    %424 = vmatpush2.msra.mxu0 0.0
    %425 = vmatprep.subr.mxu0 0.0
    %426 = vmatpush2.msra.mxu0 0.0
    %427 = vmatprep.subr.mxu0 0.0
    %428 = vmatpush2.msra.mxu0 0.0
    %429 = vmatprep.subr.mxu0 0.0
    %430 = vmatpush2.msra.mxu0 0.0
    %431 = vmatprep.subr.mxu0 0.0
    %432 = vmatpush2.msra.mxu0 0.0
    %433 = vmatprep.subr.mxu0 0.0
    %434 = vmatpush2.msra.mxu0 0.0
    %435 = vmatprep.mubr.f32.mxu0 0.0
    %436 = vmatmul.mubr.f32.gmra.mxu0 %v113
    %v437 = vpop.f32.mrf.mxu0
    %v438 = vadd.f32 %v104, %v437
    %v439 = vpop.f32.mrf.mxu0
    %440 = vmatprep.mubr.f32.mxu0 0.0
    %441 = vmatmul.mubr.f32.gmra.mxu0 %v116
    %v442 = vpop.f32.mrf.mxu0
    %v443 = vadd.f32 %v109, %v442
    %v444 = vpop.f32.mrf.mxu0
    %445 = vdwg.mxu0
    %v446 = vtanh.pop %v207
    %v447 = vtanh.pop %v209
    %v448 = vtanh.pop %v284
    %v449 = vtanh.pop %v286
    %v450 = vtanh.pop %v361
    %v451 = vtanh.pop %v363
    %v452 = vtanh.pop %v438
    %v453 = vtanh.pop %v213
    %v454 = vtanh.pop %v215
    %v455 = vtanh.pop %v290
    %v456 = vtanh.pop %v292
    %v457 = vtanh.pop %v367
    %v458 = vtanh.pop %v369
    %v459 = vtanh.pop %v443
    %v460 = vld [vmem:[%s3] sm:$0xff]
    %v461 = vld [vmem:[%s3 + $0x8] sm:$0xff]
    %v462 = vld [vmem:[%s3 + $0x10] sm:$0xff]
    %v463 = vld [vmem:[%s3 + $0x18] sm:$0xff]
    %v464 = vld [vmem:[%s3 + $0x20] sm:$0xff]
    %v465 = vld [vmem:[%s3 + $0x28] sm:$0xff]
    %v466 = vld [vmem:[%s3 + $0x30] sm:$0xff]
    %v467 = vld [vmem:[%s3 + $0x38] sm:$0xff]
    %v468 = vld [vmem:[%s3 + $0x40] sm:$0xff]
    %v469 = vld [vmem:[%s3 + $0x48] sm:$0xff]
    %v470 = vld [vmem:[%s3 + $0x50] sm:$0xff]
    %v471 = vld [vmem:[%s3 + $0x58] sm:$0xff]
    %v472 = vld [vmem:[%s3 + $0x60] sm:$0xff]
    %v473 = vld [vmem:[%s3 + $0x68] sm:$0xff]
    %v474 = vld [vmem:[%s3 + $0x70] sm:$0xff]
    %v475 = vld [vmem:[%s3 + $0x78] sm:$0xff]
    %v476 = vld [vmem:[%s3 + $0x80] sm:$0xff]
    %v477 = vld [vmem:[%s3 + $0x88] sm:$0xff]
    %v478 = vld [vmem:[%s3 + $0x90] sm:$0xff]
    %v479 = vld [vmem:[%s3 + $0x98] sm:$0xff]
    %v480 = vld [vmem:[%s3 + $0xa0] sm:$0xff]
    %v481 = vld [vmem:[%s3 + $0xa8] sm:$0xff]
    %v482 = vld [vmem:[%s3 + $0xb0] sm:$0xff]
    %v483 = vld [vmem:[%s3 + $0xb8] sm:$0xff]
    %v484 = vld [vmem:[%s3 + $0xc0] sm:$0xff]
    %v485 = vld [vmem:[%s3 + $0xc8] sm:$0xff]
    %v486 = vld [vmem:[%s3 + $0xd0] sm:$0xff]
    %v487 = vld [vmem:[%s3 + $0xd8] sm:$0xff]
    %v488 = vld [vmem:[%s3 + $0xe0] sm:$0xff]
    %v489 = vld [vmem:[%s3 + $0xe8] sm:$0xff]
    %v490 = vld [vmem:[%s3 + $0xf0] sm:$0xff]
    %v491 = vld [vmem:[%s3 + $0xf8] sm:$0xff]
    %v492 = vld [vmem:[%s3 + $0x100] sm:$0xff]
    %v493 = vld [vmem:[%s3 + $0x108] sm:$0xff]
    %v494 = vld [vmem:[%s3 + $0x110] sm:$0xff]
    %v495 = vld [vmem:[%s3 + $0x118] sm:$0xff]
    %v496 = vld [vmem:[%s3 + $0x120] sm:$0xff]
    %v497 = vld [vmem:[%s3 + $0x128] sm:$0xff]
    %v498 = vld [vmem:[%s3 + $0x130] sm:$0xff]
    %v499 = vld [vmem:[%s3 + $0x138] sm:$0xff]
    %v500 = vld [vmem:[%s3 + $0x140] sm:$0xff]
    %v501 = vld [vmem:[%s3 + $0x148] sm:$0xff]
    %v502 = vld [vmem:[%s3 + $0x150] sm:$0xff]
    %v503 = vld [vmem:[%s3 + $0x158] sm:$0xff]
    %v504 = vld [vmem:[%s3 + $0x160] sm:$0xff]
    %v505 = vld [vmem:[%s3 + $0x168] sm:$0xff]
    %v506 = vld [vmem:[%s3 + $0x170] sm:$0xff]
    %v507 = vld [vmem:[%s3 + $0x178] sm:$0xff]
    %v508 = vld [vmem:[%s3 + $0x180] sm:$0xff]
    %v509 = vld [vmem:[%s3 + $0x188] sm:$0xff]
    %v510 = vld [vmem:[%s3 + $0x190] sm:$0xff]
    %v511 = vld [vmem:[%s3 + $0x198] sm:$0xff]
    %v512 = vld [vmem:[%s3 + $0x1a0] sm:$0xff]
    %v513 = vld [vmem:[%s3 + $0x1a8] sm:$0xff]
    %v514 = vld [vmem:[%s3 + $0x1b0] sm:$0xff]
    %v515 = vld [vmem:[%s3 + $0x1b8] sm:$0xff]
    %v516 = vld [vmem:[%s3 + $0x1c0] sm:$0xff]
    %v517 = vld [vmem:[%s3 + $0x1c8] sm:$0xff]
    %v518 = vld [vmem:[%s3 + $0x1d0] sm:$0xff]
    %v519 = vld [vmem:[%s3 + $0x1d8] sm:$0xff]
    %v520 = vld [vmem:[%s3 + $0x1e0] sm:$0xff]
    %v521 = vld [vmem:[%s3 + $0x1e8] sm:$0xff]
    %v522 = vld [vmem:[%s3 + $0x1f0] sm:$0xff]
    %v523 = vld [vmem:[%s3 + $0x1f8] sm:$0xff]
    %v524 = vld [vmem:[%s3 + $0x200] sm:$0xff]
    %v525 = vld [vmem:[%s3 + $0x208] sm:$0xff]
    %v526 = vld [vmem:[%s3 + $0x210] sm:$0xff]
    %v527 = vld [vmem:[%s3 + $0x218] sm:$0xff]
    %v528 = vld [vmem:[%s3 + $0x220] sm:$0xff]
    %v529 = vld [vmem:[%s3 + $0x228] sm:$0xff]
    %v530 = vld [vmem:[%s3 + $0x230] sm:$0xff]
    %v531 = vld [vmem:[%s3 + $0x238] sm:$0xff]
    %v532 = vld [vmem:[%s3 + $0x240] sm:$0xff]
    %v533 = vld [vmem:[%s3 + $0x248] sm:$0xff]
    %v534 = vld [vmem:[%s3 + $0x250] sm:$0xff]
    %v535 = vld [vmem:[%s3 + $0x258] sm:$0xff]
    %v536 = vld [vmem:[%s3 + $0x260] sm:$0xff]
    %v537 = vld [vmem:[%s3 + $0x268] sm:$0xff]
    %v538 = vld [vmem:[%s3 + $0x270] sm:$0xff]
    %v539 = vld [vmem:[%s3 + $0x278] sm:$0xff]
    %v540 = vld [vmem:[%s3 + $0x280] sm:$0xff]
    %v541 = vld [vmem:[%s3 + $0x288] sm:$0xff]
    %v542 = vld [vmem:[%s3 + $0x290] sm:$0xff]
    %v543 = vld [vmem:[%s3 + $0x298] sm:$0xff]
    %v544 = vld [vmem:[%s3 + $0x2a0] sm:$0xff]
    %v545 = vld [vmem:[%s3 + $0x2a8] sm:$0xff]
    %v546 = vld [vmem:[%s3 + $0x2b0] sm:$0xff]
    %v547 = vld [vmem:[%s3 + $0x2b8] sm:$0xff]
    %v548 = vld [vmem:[%s3 + $0x2c0] sm:$0xff]
    %v549 = vld [vmem:[%s3 + $0x2c8] sm:$0xff]
    %v550 = vld [vmem:[%s3 + $0x2d0] sm:$0xff]
    %v551 = vld [vmem:[%s3 + $0x2d8] sm:$0xff]
    %v552 = vld [vmem:[%s3 + $0x2e0] sm:$0xff]
    %v553 = vld [vmem:[%s3 + $0x2e8] sm:$0xff]
    %v554 = vld [vmem:[%s3 + $0x2f0] sm:$0xff]
    %v555 = vld [vmem:[%s3 + $0x2f8] sm:$0xff]
    %v556 = vld [vmem:[%s3 + $0x300] sm:$0xff]
    %v557 = vld [vmem:[%s3 + $0x308] sm:$0xff]
    %v558 = vld [vmem:[%s3 + $0x310] sm:$0xff]
    %v559 = vld [vmem:[%s3 + $0x318] sm:$0xff]
    %v560 = vld [vmem:[%s3 + $0x320] sm:$0xff]
    %v561 = vld [vmem:[%s3 + $0x328] sm:$0xff]
    %v562 = vld [vmem:[%s3 + $0x330] sm:$0xff]
    %v563 = vld [vmem:[%s3 + $0x338] sm:$0xff]
    %v564 = vld [vmem:[%s3 + $0x340] sm:$0xff]
    %v565 = vld [vmem:[%s3 + $0x348] sm:$0xff]
    %v566 = vld [vmem:[%s3 + $0x350] sm:$0xff]
    %v567 = vld [vmem:[%s3 + $0x358] sm:$0xff]
    %v568 = vld [vmem:[%s3 + $0x360] sm:$0xff]
    %v569 = vld [vmem:[%s3 + $0x368] sm:$0xff]
    %v570 = vld [vmem:[%s3 + $0x370] sm:$0xff]
    %v571 = vld [vmem:[%s3 + $0x378] sm:$0xff]
    %v572 = vld [vmem:[%s3 + $0x380] sm:$0xff]
    %v573 = vld [vmem:[%s3 + $0x388] sm:$0xff]
    %v574 = vld [vmem:[%s3 + $0x390] sm:$0xff]
    %v575 = vld [vmem:[%s3 + $0x398] sm:$0xff]
    %v576 = vld [vmem:[%s3 + $0x3a0] sm:$0xff]
    %v577 = vld [vmem:[%s3 + $0x3a8] sm:$0xff]
    %v578 = vld [vmem:[%s3 + $0x3b0] sm:$0xff]
    %v579 = vld [vmem:[%s3 + $0x3b8] sm:$0xff]
    %v580 = vld [vmem:[%s3 + $0x3c0] sm:$0xff]
    %v581 = vld [vmem:[%s3 + $0x3c8] sm:$0xff]
    %v582 = vld [vmem:[%s3 + $0x3d0] sm:$0xff]
    %v583 = vld [vmem:[%s3 + $0x3d8] sm:$0xff]
    %v584 = vld [vmem:[%s3 + $0x3e0] sm:$0xff]
    %v585 = vld [vmem:[%s3 + $0x3e8] sm:$0xff]
    %v586 = vld [vmem:[%s3 + $0x3f0] sm:$0xff]
    %v587 = vld [vmem:[%s3 + $0x3f8] sm:$0xff]
    %v588 = vld [vmem:[%s3 + $0x400] sm:$0xff]
    %v589 = vld [vmem:[%s3 + $0x408] sm:$0xff]
    %v590 = vld [vmem:[%s3 + $0x410] sm:$0xff]
    %v591 = vld [vmem:[%s3 + $0x418] sm:$0xff]
    %v592 = vld [vmem:[%s3 + $0x420] sm:$0xff]
    %v593 = vld [vmem:[%s3 + $0x428] sm:$0xff]
    %v594 = vld [vmem:[%s3 + $0x430] sm:$0xff]
    %v595 = vld [vmem:[%s3 + $0x438] sm:$0xff]
    %v596 = vld [vmem:[%s3 + $0x440] sm:$0xff]
    %v597 = vld [vmem:[%s3 + $0x448] sm:$0xff]
    %v598 = vld [vmem:[%s3 + $0x450] sm:$0xff]
    %v599 = vld [vmem:[%s3 + $0x458] sm:$0xff]
    %v600 = vld [vmem:[%s3 + $0x460] sm:$0xff]
    %v601 = vld [vmem:[%s3 + $0x468] sm:$0xff]
    %v602 = vld [vmem:[%s3 + $0x470] sm:$0xff]
    %v603 = vld [vmem:[%s3 + $0x478] sm:$0xff]
    %v604 = vld [vmem:[%s3 + $0x480] sm:$0xff]
    %v605 = vld [vmem:[%s3 + $0x488] sm:$0xff]
    %v606 = vld [vmem:[%s3 + $0x490] sm:$0xff]
    %v607 = vld [vmem:[%s3 + $0x498] sm:$0xff]
    %v608 = vld [vmem:[%s3 + $0x4a0] sm:$0xff]
    %v609 = vld [vmem:[%s3 + $0x4a8] sm:$0xff]
    %v610 = vld [vmem:[%s3 + $0x4b0] sm:$0xff]
    %v611 = vld [vmem:[%s3 + $0x4b8] sm:$0xff]
    %v612 = vld [vmem:[%s3 + $0x4c0] sm:$0xff]
    %v613 = vld [vmem:[%s3 + $0x4c8] sm:$0xff]
    %v614 = vld [vmem:[%s3 + $0x4d0] sm:$0xff]
    %v615 = vld [vmem:[%s3 + $0x4d8] sm:$0xff]
    %v616 = vld [vmem:[%s3 + $0x4e0] sm:$0xff]
    %v617 = vld [vmem:[%s3 + $0x4e8] sm:$0xff]
    %v618 = vld [vmem:[%s3 + $0x4f0] sm:$0xff]
    %v619 = vld [vmem:[%s3 + $0x4f8] sm:$0xff]
    %v620 = vld [vmem:[%s3 + $0x500] sm:$0xff]
    %v621 = vld [vmem:[%s3 + $0x508] sm:$0xff]
    %v622 = vld [vmem:[%s3 + $0x510] sm:$0xff]
    %v623 = vld [vmem:[%s3 + $0x518] sm:$0xff]
    %v624 = vld [vmem:[%s3 + $0x520] sm:$0xff]
    %v625 = vld [vmem:[%s3 + $0x528] sm:$0xff]
    %v626 = vld [vmem:[%s3 + $0x530] sm:$0xff]
    %v627 = vld [vmem:[%s3 + $0x538] sm:$0xff]
    %v628 = vld [vmem:[%s3 + $0x540] sm:$0xff]
    %v629 = vld [vmem:[%s3 + $0x548] sm:$0xff]
    %v630 = vld [vmem:[%s3 + $0x550] sm:$0xff]
    %v631 = vld [vmem:[%s3 + $0x558] sm:$0xff]
    %v632 = vld [vmem:[%s3 + $0x560] sm:$0xff]
    %v633 = vld [vmem:[%s3 + $0x568] sm:$0xff]
    %v634 = vld [vmem:[%s3 + $0x570] sm:$0xff]
    %v635 = vld [vmem:[%s3 + $0x578] sm:$0xff]
    %v636 = vld [vmem:[%s3 + $0x580] sm:$0xff]
    %v637 = vld [vmem:[%s3 + $0x588] sm:$0xff]
    %v638 = vld [vmem:[%s3 + $0x590] sm:$0xff]
    %v639 = vld [vmem:[%s3 + $0x598] sm:$0xff]
    %v640 = vld [vmem:[%s3 + $0x5a0] sm:$0xff]
    %v641 = vld [vmem:[%s3 + $0x5a8] sm:$0xff]
    %v642 = vld [vmem:[%s3 + $0x5b0] sm:$0xff]
    %v643 = vld [vmem:[%s3 + $0x5b8] sm:$0xff]
    %v644 = vld [vmem:[%s3 + $0x5c0] sm:$0xff]
    %v645 = vld [vmem:[%s3 + $0x5c8] sm:$0xff]
    %v646 = vld [vmem:[%s3 + $0x5d0] sm:$0xff]
    %v647 = vld [vmem:[%s3 + $0x5d8] sm:$0xff]
    %v648 = vld [vmem:[%s3 + $0x5e0] sm:$0xff]
    %v649 = vld [vmem:[%s3 + $0x5e8] sm:$0xff]
    %v650 = vld [vmem:[%s3 + $0x5f0] sm:$0xff]
    %v651 = vld [vmem:[%s3 + $0x5f8] sm:$0xff]
    %v652 = vld [vmem:[%s3 + $0x600] sm:$0xff]
    %v653 = vld [vmem:[%s3 + $0x608] sm:$0xff]
    %v654 = vld [vmem:[%s3 + $0x610] sm:$0xff]
    %v655 = vld [vmem:[%s3 + $0x618] sm:$0xff]
    %vm656 = vcmask 130048
    %v658 = vsel %vm656, %v452, 0
    %v661 = vsel %vm656, %v459, 0
    %663 = vmatprep.subr.mxu0 %v491
    %664 = vmatpush1.msra.mxu0 %v490
    %665 = vmatprep.subr.mxu0 %v489
    %666 = vmatpush1.msra.mxu0 %v488
    %667 = vmatprep.subr.mxu0 %v487
    %668 = vmatpush1.msra.mxu0 %v486
    %669 = vmatprep.subr.mxu0 %v485
    %670 = vmatpush1.msra.mxu0 %v484
    %671 = vmatprep.subr.mxu0 %v483
    %672 = vmatpush1.msra.mxu0 %v482
    %673 = vmatprep.subr.mxu0 %v481
    %674 = vmatpush1.msra.mxu0 %v480
    %675 = vmatprep.subr.mxu0 %v479
    %676 = vmatpush1.msra.mxu0 %v478
    %677 = vmatprep.subr.mxu0 %v477
    %678 = vmatpush1.msra.mxu0 %v476
    %679 = vmatprep.subr.mxu0 %v475
    %680 = vmatpush1.msra.mxu0 %v474
    %681 = vmatprep.subr.mxu0 %v473
    %682 = vmatpush1.msra.mxu0 %v472
    %683 = vmatprep.subr.mxu0 %v471
    %684 = vmatpush1.msra.mxu0 %v470
    %685 = vmatprep.subr.mxu0 %v469
    %686 = vmatpush1.msra.mxu0 %v468
    %687 = vmatprep.subr.mxu0 %v467
    %688 = vmatpush1.msra.mxu0 %v466
    %689 = vmatprep.subr.mxu0 %v465
    %690 = vmatpush1.msra.mxu0 %v464
    %691 = vmatprep.subr.mxu0 %v463
    %692 = vmatpush1.msra.mxu0 %v462
    %693 = vmatprep.subr.mxu0 %v461
    %694 = vmatpush1.msra.mxu0 %v460
    %695 = vmatprep.subr.mxu0 %v523
    %696 = vmatpush2.msra.mxu0 %v522
    %697 = vmatprep.subr.mxu0 %v521
    %698 = vmatpush2.msra.mxu0 %v520
    %699 = vmatprep.subr.mxu0 %v519
    %700 = vmatpush2.msra.mxu0 %v518
    %701 = vmatprep.subr.mxu0 %v517
    %702 = vmatpush2.msra.mxu0 %v516
    %703 = vmatprep.subr.mxu0 %v515
    %704 = vmatpush2.msra.mxu0 %v514
    %705 = vmatprep.subr.mxu0 %v513
    %706 = vmatpush2.msra.mxu0 %v512
    %707 = vmatprep.subr.mxu0 %v511
    %708 = vmatpush2.msra.mxu0 %v510
    %709 = vmatprep.subr.mxu0 %v509
    %710 = vmatpush2.msra.mxu0 %v508
    %711 = vmatprep.subr.mxu0 %v507
    %712 = vmatpush2.msra.mxu0 %v506
    %713 = vmatprep.subr.mxu0 %v505
    %714 = vmatpush2.msra.mxu0 %v504
    %715 = vmatprep.subr.mxu0 %v503
    %716 = vmatpush2.msra.mxu0 %v502
    %717 = vmatprep.subr.mxu0 %v501
    %718 = vmatpush2.msra.mxu0 %v500
    %719 = vmatprep.subr.mxu0 %v499
    %720 = vmatpush2.msra.mxu0 %v498
    %721 = vmatprep.subr.mxu0 %v497
    %722 = vmatpush2.msra.mxu0 %v496
    %723 = vmatprep.subr.mxu0 %v495
    %724 = vmatpush2.msra.mxu0 %v494
    %725 = vmatprep.subr.mxu0 %v493
    %726 = vmatpush2.msra.mxu0 %v492
    %727 = vmatprep.mubr.f32.mxu0 %v447
    %728 = vmatmul.mubr.f32.gmra.mxu0 %v446
    %v729 = vpop.f32.mrf.mxu0
    %v730 = vadd.f32 0.0, %v729
    %v731 = vpop.f32.mrf.mxu0
    %v732 = vadd.f32 0.0, %v731
    %733 = vmatprep.mubr.f32.mxu0 %v454
    %734 = vmatmul.mubr.f32.gmra.mxu0 %v453
    %v735 = vpop.f32.mrf.mxu0
    %v736 = vadd.f32 0.0, %v735
    %v737 = vpop.f32.mrf.mxu0
    %v738 = vadd.f32 0.0, %v737
    %739 = vdwg.mxu0
    %740 = vmatprep.subr.mxu0 %v555
    %741 = vmatpush1.msra.mxu0 %v554
    %742 = vmatprep.subr.mxu0 %v553
    %743 = vmatpush1.msra.mxu0 %v552
    %744 = vmatprep.subr.mxu0 %v551
    %745 = vmatpush1.msra.mxu0 %v550
    %746 = vmatprep.subr.mxu0 %v549
    %747 = vmatpush1.msra.mxu0 %v548
    %748 = vmatprep.subr.mxu0 %v547
    %749 = vmatpush1.msra.mxu0 %v546
    %750 = vmatprep.subr.mxu0 %v545
    %751 = vmatpush1.msra.mxu0 %v544
    %752 = vmatprep.subr.mxu0 %v543
    %753 = vmatpush1.msra.mxu0 %v542
    %754 = vmatprep.subr.mxu0 %v541
    %755 = vmatpush1.msra.mxu0 %v540
    %756 = vmatprep.subr.mxu0 %v539
    %757 = vmatpush1.msra.mxu0 %v538
    %758 = vmatprep.subr.mxu0 %v537
    %759 = vmatpush1.msra.mxu0 %v536
    %760 = vmatprep.subr.mxu0 %v535
    %761 = vmatpush1.msra.mxu0 %v534
    %762 = vmatprep.subr.mxu0 %v533
    %763 = vmatpush1.msra.mxu0 %v532
    %764 = vmatprep.subr.mxu0 %v531
    %765 = vmatpush1.msra.mxu0 %v530
    %766 = vmatprep.subr.mxu0 %v529
    %767 = vmatpush1.msra.mxu0 %v528
    %768 = vmatprep.subr.mxu0 %v527
    %769 = vmatpush1.msra.mxu0 %v526
    %770 = vmatprep.subr.mxu0 %v525
    %771 = vmatpush1.msra.mxu0 %v524
    %772 = vmatprep.subr.mxu0 %v587
    %773 = vmatpush2.msra.mxu0 %v586
    %774 = vmatprep.subr.mxu0 %v585
    %775 = vmatpush2.msra.mxu0 %v584
    %776 = vmatprep.subr.mxu0 %v583
    %777 = vmatpush2.msra.mxu0 %v582
    %778 = vmatprep.subr.mxu0 %v581
    %779 = vmatpush2.msra.mxu0 %v580
    %780 = vmatprep.subr.mxu0 %v579
    %781 = vmatpush2.msra.mxu0 %v578
    %782 = vmatprep.subr.mxu0 %v577
    %783 = vmatpush2.msra.mxu0 %v576
    %784 = vmatprep.subr.mxu0 %v575
    %785 = vmatpush2.msra.mxu0 %v574
    %786 = vmatprep.subr.mxu0 %v573
    %787 = vmatpush2.msra.mxu0 %v572
    %788 = vmatprep.subr.mxu0 %v571
    %789 = vmatpush2.msra.mxu0 %v570
    %790 = vmatprep.subr.mxu0 %v569
    %791 = vmatpush2.msra.mxu0 %v568
    %792 = vmatprep.subr.mxu0 %v567
    %793 = vmatpush2.msra.mxu0 %v566
    %794 = vmatprep.subr.mxu0 %v565
    %795 = vmatpush2.msra.mxu0 %v564
    %796 = vmatprep.subr.mxu0 %v563
    %797 = vmatpush2.msra.mxu0 %v562
    %798 = vmatprep.subr.mxu0 %v561
    %799 = vmatpush2.msra.mxu0 %v560
    %800 = vmatprep.subr.mxu0 %v559
    %801 = vmatpush2.msra.mxu0 %v558
    %802 = vmatprep.subr.mxu0 %v557
    %803 = vmatpush2.msra.mxu0 %v556
    %804 = vmatprep.mubr.f32.mxu0 %v449
    %805 = vmatmul.mubr.f32.gmra.mxu0 %v448
    %v806 = vpop.f32.mrf.mxu0
    %v807 = vadd.f32 %v730, %v806
    %v808 = vpop.f32.mrf.mxu0
    %v809 = vadd.f32 %v732, %v808
    %810 = vmatprep.mubr.f32.mxu0 %v456
    %811 = vmatmul.mubr.f32.gmra.mxu0 %v455
    %v812 = vpop.f32.mrf.mxu0
    %v813 = vadd.f32 %v736, %v812
    %v814 = vpop.f32.mrf.mxu0
    %v815 = vadd.f32 %v738, %v814
    %816 = vdwg.mxu0
    %817 = vmatprep.subr.mxu0 %v619
    %818 = vmatpush1.msra.mxu0 %v618
    %819 = vmatprep.subr.mxu0 %v617
    %820 = vmatpush1.msra.mxu0 %v616
    %821 = vmatprep.subr.mxu0 %v615
    %822 = vmatpush1.msra.mxu0 %v614
    %823 = vmatprep.subr.mxu0 %v613
    %824 = vmatpush1.msra.mxu0 %v612
    %825 = vmatprep.subr.mxu0 %v611
    %826 = vmatpush1.msra.mxu0 %v610
    %827 = vmatprep.subr.mxu0 %v609
    %828 = vmatpush1.msra.mxu0 %v608
    %829 = vmatprep.subr.mxu0 %v607
    %830 = vmatpush1.msra.mxu0 %v606
    %831 = vmatprep.subr.mxu0 %v605
    %832 = vmatpush1.msra.mxu0 %v604
    %833 = vmatprep.subr.mxu0 %v603
    %834 = vmatpush1.msra.mxu0 %v602
    %835 = vmatprep.subr.mxu0 %v601
    %836 = vmatpush1.msra.mxu0 %v600
    %837 = vmatprep.subr.mxu0 %v599
    %838 = vmatpush1.msra.mxu0 %v598
    %839 = vmatprep.subr.mxu0 %v597
    %840 = vmatpush1.msra.mxu0 %v596
    %841 = vmatprep.subr.mxu0 %v595
    %842 = vmatpush1.msra.mxu0 %v594
    %843 = vmatprep.subr.mxu0 %v593
    %844 = vmatpush1.msra.mxu0 %v592
    %845 = vmatprep.subr.mxu0 %v591
    %846 = vmatpush1.msra.mxu0 %v590
    %847 = vmatprep.subr.mxu0 %v589
    %848 = vmatpush1.msra.mxu0 %v588
    %849 = vmatprep.subr.mxu0 %v651
    %850 = vmatpush2.msra.mxu0 %v650
    %851 = vmatprep.subr.mxu0 %v649
    %852 = vmatpush2.msra.mxu0 %v648
    %853 = vmatprep.subr.mxu0 %v647
    %854 = vmatpush2.msra.mxu0 %v646
    %855 = vmatprep.subr.mxu0 %v645
    %856 = vmatpush2.msra.mxu0 %v644
    %857 = vmatprep.subr.mxu0 %v643
    %858 = vmatpush2.msra.mxu0 %v642
    %859 = vmatprep.subr.mxu0 %v641
    %860 = vmatpush2.msra.mxu0 %v640
    %861 = vmatprep.subr.mxu0 %v639
    %862 = vmatpush2.msra.mxu0 %v638
    %863 = vmatprep.subr.mxu0 %v637
    %864 = vmatpush2.msra.mxu0 %v636
    %865 = vmatprep.subr.mxu0 %v635
    %866 = vmatpush2.msra.mxu0 %v634
    %867 = vmatprep.subr.mxu0 %v633
    %868 = vmatpush2.msra.mxu0 %v632
    %869 = vmatprep.subr.mxu0 %v631
    %870 = vmatpush2.msra.mxu0 %v630
    %871 = vmatprep.subr.mxu0 %v629
    %872 = vmatpush2.msra.mxu0 %v628
    %873 = vmatprep.subr.mxu0 %v627
    %874 = vmatpush2.msra.mxu0 %v626
    %875 = vmatprep.subr.mxu0 %v625
    %876 = vmatpush2.msra.mxu0 %v624
    %877 = vmatprep.subr.mxu0 %v623
    %878 = vmatpush2.msra.mxu0 %v622
    %879 = vmatprep.subr.mxu0 %v621
    %880 = vmatpush2.msra.mxu0 %v620
    %881 = vmatprep.mubr.f32.mxu0 %v451
    %882 = vmatmul.mubr.f32.gmra.mxu0 %v450
    %v883 = vpop.f32.mrf.mxu0
    %v884 = vadd.f32 %v807, %v883
    %v885 = vpop.f32.mrf.mxu0
    %v886 = vadd.f32 %v809, %v885
    %887 = vmatprep.mubr.f32.mxu0 %v458
    %888 = vmatmul.mubr.f32.gmra.mxu0 %v457
    %v889 = vpop.f32.mrf.mxu0
    %v890 = vadd.f32 %v813, %v889
    %v891 = vpop.f32.mrf.mxu0
    %v892 = vadd.f32 %v815, %v891
    %893 = vdwg.mxu0
    %894 = vmatprep.subr.mxu0 0.0
    %895 = vmatpush1.msra.mxu0 0.0
    %896 = vmatprep.subr.mxu0 0.0
    %897 = vmatpush1.msra.mxu0 0.0
    %898 = vmatprep.subr.mxu0 0.0
    %899 = vmatpush1.msra.mxu0 0.0
    %900 = vmatprep.subr.mxu0 0.0
    %901 = vmatpush1.msra.mxu0 0.0
    %902 = vmatprep.subr.mxu0 0.0
    %903 = vmatpush1.msra.mxu0 0.0
    %904 = vmatprep.subr.mxu0 0.0
    %905 = vmatpush1.msra.mxu0 0.0
    %906 = vmatprep.subr.mxu0 0.0
    %907 = vmatpush1.msra.mxu0 0.0
    %908 = vmatprep.subr.mxu0 0.0
    %909 = vmatpush1.msra.mxu0 0.0
    %910 = vmatprep.subr.mxu0 0.0
    %911 = vmatpush1.msra.mxu0 0.0
    %912 = vmatprep.subr.mxu0 0.0
    %913 = vmatpush1.msra.mxu0 0.0
    %914 = vmatprep.subr.mxu0 0.0
    %915 = vmatpush1.msra.mxu0 0.0
    %916 = vmatprep.subr.mxu0 0.0
    %917 = vmatpush1.msra.mxu0 0.0
    %918 = vmatprep.subr.mxu0 0.0
    %919 = vmatpush1.msra.mxu0 0.0
    %920 = vmatprep.subr.mxu0 0.0
    %921 = vmatpush1.msra.mxu0 0.0
    %922 = vmatprep.subr.mxu0 %v655
    %923 = vmatpush1.msra.mxu0 %v654
    %924 = vmatprep.subr.mxu0 %v653
    %925 = vmatpush1.msra.mxu0 %v652
    %926 = vmatprep.subr.mxu0 0.0
    %927 = vmatpush2.msra.mxu0 0.0
    %928 = vmatprep.subr.mxu0 0.0
    %929 = vmatpush2.msra.mxu0 0.0
    %930 = vmatprep.subr.mxu0 0.0
    %931 = vmatpush2.msra.mxu0 0.0
    %932 = vmatprep.subr.mxu0 0.0
    %933 = vmatpush2.msra.mxu0 0.0
    %934 = vmatprep.subr.mxu0 0.0
    %935 = vmatpush2.msra.mxu0 0.0
    %936 = vmatprep.subr.mxu0 0.0
    %937 = vmatpush2.msra.mxu0 0.0
    %938 = vmatprep.subr.mxu0 0.0
    %939 = vmatpush2.msra.mxu0 0.0
    %940 = vmatprep.subr.mxu0 0.0
    %941 = vmatpush2.msra.mxu0 0.0
    %942 = vmatprep.subr.mxu0 0.0
    %943 = vmatpush2.msra.mxu0 0.0
    %944 = vmatprep.subr.mxu0 0.0
    %945 = vmatpush2.msra.mxu0 0.0
    %946 = vmatprep.subr.mxu0 0.0
    %947 = vmatpush2.msra.mxu0 0.0
    %948 = vmatprep.subr.mxu0 0.0
    %949 = vmatpush2.msra.mxu0 0.0
    %950 = vmatprep.subr.mxu0 0.0
    %951 = vmatpush2.msra.mxu0 0.0
    %952 = vmatprep.subr.mxu0 0.0
    %953 = vmatpush2.msra.mxu0 0.0
    %954 = vmatprep.subr.mxu0 0.0
    %955 = vmatpush2.msra.mxu0 0.0
    %956 = vmatprep.subr.mxu0 0.0
    %957 = vmatpush2.msra.mxu0 0.0
    %958 = vmatprep.mubr.f32.mxu0 0.0
    %959 = vmatmul.mubr.f32.gmra.mxu0 %v658
    %v960 = vpop.f32.mrf.mxu0
    %v961 = vadd.f32 %v884, %v960
    %v962 = vpop.f32.mrf.mxu0
    %v963 = vadd.f32 %v886, %v962
    %964 = vmatprep.mubr.f32.mxu0 0.0
    %965 = vmatmul.mubr.f32.gmra.mxu0 %v661
    %v966 = vpop.f32.mrf.mxu0
    %v967 = vadd.f32 %v890, %v966
    %v968 = vpop.f32.mrf.mxu0
    %v969 = vadd.f32 %v892, %v968
    %970 = vdwg.mxu0
    %v971 = vld [vmem:[%s4] sm:$0xff]
    %v972 = vld [vmem:[%s4 + $0x8] sm:$0xff]
    %v973 = vld [vmem:[%s4 + $0x10] sm:$0xff]
    %v974 = vld [vmem:[%s4 + $0x18] sm:$0xff]
    %v975 = vld [vmem:[%s4 + $0x20] sm:$0xff]
    %v976 = vld [vmem:[%s4 + $0x28] sm:$0xff]
    %v977 = vld [vmem:[%s4 + $0x30] sm:$0xff]
    %v978 = vld [vmem:[%s4 + $0x38] sm:$0xff]
    %v979 = vld [vmem:[%s4 + $0x40] sm:$0xff]
    %v980 = vld [vmem:[%s4 + $0x48] sm:$0xff]
    %v981 = vld [vmem:[%s4 + $0x50] sm:$0xff]
    %v982 = vld [vmem:[%s4 + $0x58] sm:$0xff]
    %v983 = vld [vmem:[%s4 + $0x60] sm:$0xff]
    %v984 = vld [vmem:[%s4 + $0x68] sm:$0xff]
    %v985 = vld [vmem:[%s4 + $0x70] sm:$0xff]
    %v986 = vld [vmem:[%s4 + $0x78] sm:$0xff]
    %v987 = vld [vmem:[%s4 + $0x80] sm:$0xff]
    %v988 = vld [vmem:[%s4 + $0x88] sm:$0xff]
    %v989 = vld [vmem:[%s4 + $0x90] sm:$0xff]
    %v990 = vld [vmem:[%s4 + $0x98] sm:$0xff]
    %v991 = vld [vmem:[%s4 + $0xa0] sm:$0xff]
    %v992 = vld [vmem:[%s4 + $0xa8] sm:$0xff]
    %v993 = vld [vmem:[%s4 + $0xb0] sm:$0xff]
    %v994 = vld [vmem:[%s4 + $0xb8] sm:$0xff]
    %v995 = vld [vmem:[%s4 + $0xc0] sm:$0xf]
    %vm996 = vcmask 556032
    %v998 = vsel %vm996, %v963, 0
    %v1001 = vsel %vm996, %v969, 0
    %vm1003 = vcmask 1043456
    %v1005 = vsel %vm1003, %v995, 0
    %1007 = vmatprep.subr.mxu0 0.0
    %1008 = vmatpush1.msra.mxu0 %v986
    %1009 = vmatprep.subr.mxu0 0.0
    %1010 = vmatpush1.msra.mxu0 %v985
    %1011 = vmatprep.subr.mxu0 0.0
    %1012 = vmatpush1.msra.mxu0 %v984
    %1013 = vmatprep.subr.mxu0 0.0
    %1014 = vmatpush1.msra.mxu0 %v983
    %1015 = vmatprep.subr.mxu0 0.0
    %1016 = vmatpush1.msra.mxu0 %v982
    %1017 = vmatprep.subr.mxu0 0.0
    %1018 = vmatpush1.msra.mxu0 %v981
    %1019 = vmatprep.subr.mxu0 0.0
    %1020 = vmatpush1.msra.mxu0 %v980
    %1021 = vmatprep.subr.mxu0 0.0
    %1022 = vmatpush1.msra.mxu0 %v979
    %1023 = vmatprep.subr.mxu0 0.0
    %1024 = vmatpush1.msra.mxu0 %v978
    %1025 = vmatprep.subr.mxu0 0.0
    %1026 = vmatpush1.msra.mxu0 %v977
    %1027 = vmatprep.subr.mxu0 0.0
    %1028 = vmatpush1.msra.mxu0 %v976
    %1029 = vmatprep.subr.mxu0 0.0
    %1030 = vmatpush1.msra.mxu0 %v975
    %1031 = vmatprep.subr.mxu0 0.0
    %1032 = vmatpush1.msra.mxu0 %v974
    %1033 = vmatprep.subr.mxu0 0.0
    %1034 = vmatpush1.msra.mxu0 %v973
    %1035 = vmatprep.subr.mxu0 0.0
    %1036 = vmatpush1.msra.mxu0 %v972
    %1037 = vmatprep.subr.mxu0 0.0
    %1038 = vmatpush1.msra.mxu0 %v971
    %1039 = vmatprep.subr.mxu0 0.0
    %1040 = vmatpush2.msra.mxu0 0.0
    %1041 = vmatprep.subr.mxu0 0.0
    %1042 = vmatpush2.msra.mxu0 0.0
    %1043 = vmatprep.subr.mxu0 0.0
    %1044 = vmatpush2.msra.mxu0 0.0
    %1045 = vmatprep.subr.mxu0 0.0
    %1046 = vmatpush2.msra.mxu0 0.0
    %1047 = vmatprep.subr.mxu0 0.0
    %1048 = vmatpush2.msra.mxu0 0.0
    %1049 = vmatprep.subr.mxu0 0.0
    %1050 = vmatpush2.msra.mxu0 0.0
    %1051 = vmatprep.subr.mxu0 0.0
    %1052 = vmatpush2.msra.mxu0 0.0
    %1053 = vmatprep.subr.mxu0 0.0
    %1054 = vmatpush2.msra.mxu0 %v1005
    %1055 = vmatprep.subr.mxu0 0.0
    %1056 = vmatpush2.msra.mxu0 %v994
    %1057 = vmatprep.subr.mxu0 0.0
    %1058 = vmatpush2.msra.mxu0 %v993
    %1059 = vmatprep.subr.mxu0 0.0
    %1060 = vmatpush2.msra.mxu0 %v992
    %1061 = vmatprep.subr.mxu0 0.0
    %1062 = vmatpush2.msra.mxu0 %v991
    %1063 = vmatprep.subr.mxu0 0.0
    %1064 = vmatpush2.msra.mxu0 %v990
    %1065 = vmatprep.subr.mxu0 0.0
    %1066 = vmatpush2.msra.mxu0 %v989
    %1067 = vmatprep.subr.mxu0 0.0
    %1068 = vmatpush2.msra.mxu0 %v988
    %1069 = vmatprep.subr.mxu0 0.0
    %1070 = vmatpush2.msra.mxu0 %v987
    %1071 = vmatprep.mubr.f32.mxu0 %v998
    %1072 = vmatmul.mubr.f32.gmra.mxu0 %v961
    %v1073 = vpop.f32.mrf.mxu0
    %v1074 = vadd.f32 0.0, %v1073
    %v1075 = vpop.f32.mrf.mxu0
    %1076 = vmatprep.mubr.f32.mxu0 %v1001
    %1077 = vmatmul.mubr.f32.gmra.mxu0 %v967
    %v1078 = vpop.f32.mrf.mxu0
    %v1079 = vadd.f32 0.0, %v1078
    %v1080 = vpop.f32.mrf.mxu0
    %1081 = vdwg.mxu0
    %v1082 = vld [vmem:[%s5] sm:$0xff]
    %v1083 = vld [vmem:[%s5 + $0x8] sm:$0xff]
    %v1084 = vld [vmem:[%s5 + $0x10] sm:$0xff]
    %v1085 = vld [vmem:[%s5 + $0x18] sm:$0xff]
    %s1086 = scalar_lea.vmem %s4, 200
    %v1087 = vld [vmem:[%s1086] sm:$0xff]
    %v1088 = vld [vmem:[%s1086 + $0x8] sm:$0xff]
    %v1089 = vld [vmem:[%s1086 + $0x10] sm:$0xff]
    %v1090 = vld [vmem:[%s1086 + $0x18] sm:$0xff]
    %v1091 = vld [vmem:[%s1086 + $0x20] sm:$0xff]
    %v1092 = vld [vmem:[%s1086 + $0x28] sm:$0xff]
    %v1093 = vld [vmem:[%s1086 + $0x30] sm:$0xff]
    %v1094 = vld [vmem:[%s1086 + $0x38] sm:$0xff]
    %v1095 = vld [vmem:[%s1086 + $0x40] sm:$0xff]
    %v1096 = vld [vmem:[%s1086 + $0x48] sm:$0xff]
    %v1097 = vld [vmem:[%s1086 + $0x50] sm:$0xff]
    %v1098 = vld [vmem:[%s1086 + $0x58] sm:$0xff]
    %v1099 = vld [vmem:[%s1086 + $0x60] sm:$0xff]
    %v1100 = vld [vmem:[%s1086 + $0x68] sm:$0xff]
    %v1101 = vld [vmem:[%s1086 + $0x70] sm:$0xff]
    %v1102 = vld [vmem:[%s1086 + $0x78] sm:$0xff]
    %v1103 = vld [vmem:[%s1086 + $0x80] sm:$0xff]
    %v1104 = vld [vmem:[%s1086 + $0x88] sm:$0xff]
    %v1105 = vld [vmem:[%s1086 + $0x90] sm:$0xff]
    %v1106 = vld [vmem:[%s1086 + $0x98] sm:$0xff]
    %v1107 = vld [vmem:[%s1086 + $0xa0] sm:$0xff]
    %v1108 = vld [vmem:[%s1086 + $0xa8] sm:$0xff]
    %v1109 = vld [vmem:[%s1086 + $0xb0] sm:$0xff]
    %v1110 = vld [vmem:[%s1086 + $0xb8] sm:$0xff]
    %v1111 = vld [vmem:[%s1086 + $0xc0] sm:$0xf]
    %v1113 = vsel %vm1003, %v1111, 0
    %1115 = vmatprep.subr.mxu0 0.0
    %1116 = vmatpush1.msra.mxu0 %v1102
    %1117 = vmatprep.subr.mxu0 0.0
    %1118 = vmatpush1.msra.mxu0 %v1101
    %1119 = vmatprep.subr.mxu0 0.0
    %1120 = vmatpush1.msra.mxu0 %v1100
    %1121 = vmatprep.subr.mxu0 0.0
    %1122 = vmatpush1.msra.mxu0 %v1099
    %1123 = vmatprep.subr.mxu0 0.0
    %1124 = vmatpush1.msra.mxu0 %v1098
    %1125 = vmatprep.subr.mxu0 0.0
    %1126 = vmatpush1.msra.mxu0 %v1097
    %1127 = vmatprep.subr.mxu0 0.0
    %1128 = vmatpush1.msra.mxu0 %v1096
    %1129 = vmatprep.subr.mxu0 0.0
    %1130 = vmatpush1.msra.mxu0 %v1095
    %1131 = vmatprep.subr.mxu0 0.0
    %1132 = vmatpush1.msra.mxu0 %v1094
    %1133 = vmatprep.subr.mxu0 0.0
    %1134 = vmatpush1.msra.mxu0 %v1093
    %1135 = vmatprep.subr.mxu0 0.0
    %1136 = vmatpush1.msra.mxu0 %v1092
    %1137 = vmatprep.subr.mxu0 0.0
    %1138 = vmatpush1.msra.mxu0 %v1091
    %1139 = vmatprep.subr.mxu0 0.0
    %1140 = vmatpush1.msra.mxu0 %v1090
    %1141 = vmatprep.subr.mxu0 0.0
    %1142 = vmatpush1.msra.mxu0 %v1089
    %1143 = vmatprep.subr.mxu0 0.0
    %1144 = vmatpush1.msra.mxu0 %v1088
    %1145 = vmatprep.subr.mxu0 0.0
    %1146 = vmatpush1.msra.mxu0 %v1087
    %1147 = vmatprep.subr.mxu0 0.0
    %1148 = vmatpush2.msra.mxu0 0.0
    %1149 = vmatprep.subr.mxu0 0.0
    %1150 = vmatpush2.msra.mxu0 0.0
    %1151 = vmatprep.subr.mxu0 0.0
    %1152 = vmatpush2.msra.mxu0 0.0
    %1153 = vmatprep.subr.mxu0 0.0
    %1154 = vmatpush2.msra.mxu0 0.0
    %1155 = vmatprep.subr.mxu0 0.0
    %1156 = vmatpush2.msra.mxu0 0.0
    %1157 = vmatprep.subr.mxu0 0.0
    %1158 = vmatpush2.msra.mxu0 0.0
    %1159 = vmatprep.subr.mxu0 0.0
    %1160 = vmatpush2.msra.mxu0 0.0
    %1161 = vmatprep.subr.mxu0 0.0
    %1162 = vmatpush2.msra.mxu0 %v1113
    %1163 = vmatprep.subr.mxu0 0.0
    %1164 = vmatpush2.msra.mxu0 %v1110
    %1165 = vmatprep.subr.mxu0 0.0
    %1166 = vmatpush2.msra.mxu0 %v1109
    %1167 = vmatprep.subr.mxu0 0.0
    %1168 = vmatpush2.msra.mxu0 %v1108
    %1169 = vmatprep.subr.mxu0 0.0
    %1170 = vmatpush2.msra.mxu0 %v1107
    %1171 = vmatprep.subr.mxu0 0.0
    %1172 = vmatpush2.msra.mxu0 %v1106
    %1173 = vmatprep.subr.mxu0 0.0
    %1174 = vmatpush2.msra.mxu0 %v1105
    %1175 = vmatprep.subr.mxu0 0.0
    %1176 = vmatpush2.msra.mxu0 %v1104
    %1177 = vmatprep.subr.mxu0 0.0
    %1178 = vmatpush2.msra.mxu0 %v1103
    %1179 = vmatprep.mubr.f32.mxu0 %v998
    %1180 = vmatmul.mubr.f32.gmra.mxu0 %v961
    %v1181 = vpop.f32.mrf.mxu0
    %v1182 = vadd.f32 0.0, %v1181
    %v1183 = vpop.f32.mrf.mxu0
    %1184 = vmatprep.mubr.f32.mxu0 %v1001
    %1185 = vmatmul.mubr.f32.gmra.mxu0 %v967
    %v1186 = vpop.f32.mrf.mxu0
    %v1187 = vadd.f32 0.0, %v1186
    %v1188 = vpop.f32.mrf.mxu0
    %1189 = vdwg.mxu0
    %s1190 = scalar_lea.vmem %s5, 32
    %v1191 = vld [vmem:[%s1190] sm:$0xff]
    %v1192 = vld [vmem:[%s1190 + $0x8] sm:$0xff]
    %v1193 = vld [vmem:[%s1190 + $0x10] sm:$0xff]
    %v1194 = vld [vmem:[%s1190 + $0x18] sm:$0xff]
    %vm1195 = vcmask 97280
    %v1197 = vsel %vm1195, %v1191, 0
    %v1200 = vsel %vm1195, %v1192, 0
    %v1203 = vsel %vm1195, %v1193, 0
    %v1206 = vsel %vm1195, %v1194, 0
    %v1209 = vsel %vm1003, %v1187, 0
    %1211 = vmatprep.subr.mxu0 0.0
    %1212 = vmatpush1.msra.mxu0 0.0
    %1213 = vmatprep.subr.mxu0 0.0
    %1214 = vmatpush1.msra.mxu0 0.0
    %1215 = vmatprep.subr.mxu0 0.0
    %1216 = vmatpush1.msra.mxu0 0.0
    %1217 = vmatprep.subr.mxu0 0.0
    %1218 = vmatpush1.msra.mxu0 0.0
    %1219 = vmatprep.subr.mxu0 0.0
    %1220 = vmatpush1.msra.mxu0 0.0
    %1221 = vmatprep.subr.mxu0 0.0
    %1222 = vmatpush1.msra.mxu0 0.0
    %1223 = vmatprep.subr.mxu0 0.0
    %1224 = vmatpush1.msra.mxu0 0.0
    %1225 = vmatprep.subr.mxu0 0.0
    %1226 = vmatpush1.msra.mxu0 0.0
    %1227 = vmatprep.subr.mxu0 0.0
    %1228 = vmatpush1.msra.mxu0 0.0
    %1229 = vmatprep.subr.mxu0 0.0
    %1230 = vmatpush1.msra.mxu0 0.0
    %1231 = vmatprep.subr.mxu0 0.0
    %1232 = vmatpush1.msra.mxu0 0.0
    %1233 = vmatprep.subr.mxu0 0.0
    %1234 = vmatpush1.msra.mxu0 0.0
    %1235 = vmatprep.subr.mxu0 0.0
    %1236 = vmatpush1.msra.mxu0 0.0
    %1237 = vmatprep.subr.mxu0 0.0
    %1238 = vmatpush1.msra.mxu0 0.0
    %1239 = vmatprep.subr.mxu0 0.0
    %1240 = vmatpush1.msra.mxu0 %v1209
    %1241 = vmatprep.subr.mxu0 0.0
    %1242 = vmatpush1.msra.mxu0 %v1182
    %1243 = vmatprep.subr.mxu0 0.0
    %1244 = vmatpush2.msra.mxu0 0.0
    %1245 = vmatprep.subr.mxu0 0.0
    %1246 = vmatpush2.msra.mxu0 0.0
    %1247 = vmatprep.subr.mxu0 0.0
    %1248 = vmatpush2.msra.mxu0 0.0
    %1249 = vmatprep.subr.mxu0 0.0
    %1250 = vmatpush2.msra.mxu0 0.0
    %1251 = vmatprep.subr.mxu0 0.0
    %1252 = vmatpush2.msra.mxu0 0.0
    %1253 = vmatprep.subr.mxu0 0.0
    %1254 = vmatpush2.msra.mxu0 0.0
    %1255 = vmatprep.subr.mxu0 0.0
    %1256 = vmatpush2.msra.mxu0 0.0
    %1257 = vmatprep.subr.mxu0 0.0
    %1258 = vmatpush2.msra.mxu0 0.0
    %1259 = vmatprep.subr.mxu0 0.0
    %1260 = vmatpush2.msra.mxu0 0.0
    %1261 = vmatprep.subr.mxu0 0.0
    %1262 = vmatpush2.msra.mxu0 0.0
    %1263 = vmatprep.subr.mxu0 0.0
    %1264 = vmatpush2.msra.mxu0 0.0
    %1265 = vmatprep.subr.mxu0 0.0
    %1266 = vmatpush2.msra.mxu0 0.0
    %1267 = vmatprep.subr.mxu0 0.0
    %1268 = vmatpush2.msra.mxu0 0.0
    %1269 = vmatprep.subr.mxu0 0.0
    %1270 = vmatpush2.msra.mxu0 0.0
    %1271 = vmatprep.subr.mxu0 0.0
    %1272 = vmatpush2.msra.mxu0 0.0
    %1273 = vmatprep.subr.mxu0 0.0
    %1274 = vmatpush2.msra.mxu0 0.0
    %1275 = vmatprep.mubr.f32.mxu0 0.0
    %1276 = vmatmul.mubr.f32.gmra.mxu0 %v1197
    %v1277 = vpop.f32.mrf.mxu0
    %v1278 = vadd.f32 0.0, %v1277
    %v1279 = vpop.f32.mrf.mxu0
    %1280 = vmatprep.mubr.f32.mxu0 0.0
    %1281 = vmatmul.mubr.f32.gmra.mxu0 %v1200
    %v1282 = vpop.f32.mrf.mxu0
    %v1283 = vadd.f32 0.0, %v1282
    %v1284 = vpop.f32.mrf.mxu0
    %1285 = vmatprep.mubr.f32.mxu0 0.0
    %1286 = vmatmul.mubr.f32.gmra.mxu0 %v1203
    %v1287 = vpop.f32.mrf.mxu0
    %v1288 = vadd.f32 0.0, %v1287
    %v1289 = vpop.f32.mrf.mxu0
    %1290 = vmatprep.mubr.f32.mxu0 0.0
    %1291 = vmatmul.mubr.f32.gmra.mxu0 %v1206
    %v1292 = vpop.f32.mrf.mxu0
    %v1293 = vadd.f32 0.0, %v1292
    %v1294 = vpop.f32.mrf.mxu0
    %1295 = vdwg.mxu0
    %v1297 = vsel %vm1195, %v1082, 0
    %v1300 = vsel %vm1195, %v1083, 0
    %v1303 = vsel %vm1195, %v1084, 0
    %v1306 = vsel %vm1195, %v1085, 0
    %v1309 = vsel %vm1003, %v1079, 0
    %1311 = vmatprep.subr.mxu0 0.0
    %1312 = vmatpush1.msra.mxu0 0.0
    %1313 = vmatprep.subr.mxu0 0.0
    %1314 = vmatpush1.msra.mxu0 0.0
    %1315 = vmatprep.subr.mxu0 0.0
    %1316 = vmatpush1.msra.mxu0 0.0
    %1317 = vmatprep.subr.mxu0 0.0
    %1318 = vmatpush1.msra.mxu0 0.0
    %1319 = vmatprep.subr.mxu0 0.0
    %1320 = vmatpush1.msra.mxu0 0.0
    %1321 = vmatprep.subr.mxu0 0.0
    %1322 = vmatpush1.msra.mxu0 0.0
    %1323 = vmatprep.subr.mxu0 0.0
    %1324 = vmatpush1.msra.mxu0 0.0
    %1325 = vmatprep.subr.mxu0 0.0
    %1326 = vmatpush1.msra.mxu0 0.0
    %1327 = vmatprep.subr.mxu0 0.0
    %1328 = vmatpush1.msra.mxu0 0.0
    %1329 = vmatprep.subr.mxu0 0.0
    %1330 = vmatpush1.msra.mxu0 0.0
    %1331 = vmatprep.subr.mxu0 0.0
    %1332 = vmatpush1.msra.mxu0 0.0
    %1333 = vmatprep.subr.mxu0 0.0
    %1334 = vmatpush1.msra.mxu0 0.0
    %1335 = vmatprep.subr.mxu0 0.0
    %1336 = vmatpush1.msra.mxu0 0.0
    %1337 = vmatprep.subr.mxu0 0.0
    %1338 = vmatpush1.msra.mxu0 0.0
    %1339 = vmatprep.subr.mxu0 0.0
    %1340 = vmatpush1.msra.mxu0 %v1309
    %1341 = vmatprep.subr.mxu0 0.0
    %1342 = vmatpush1.msra.mxu0 %v1074
    %1343 = vmatprep.subr.mxu0 0.0
    %1344 = vmatpush2.msra.mxu0 0.0
    %1345 = vmatprep.subr.mxu0 0.0
    %1346 = vmatpush2.msra.mxu0 0.0
    %1347 = vmatprep.subr.mxu0 0.0
    %1348 = vmatpush2.msra.mxu0 0.0
    %1349 = vmatprep.subr.mxu0 0.0
    %1350 = vmatpush2.msra.mxu0 0.0
    %1351 = vmatprep.subr.mxu0 0.0
    %1352 = vmatpush2.msra.mxu0 0.0
    %1353 = vmatprep.subr.mxu0 0.0
    %1354 = vmatpush2.msra.mxu0 0.0
    %1355 = vmatprep.subr.mxu0 0.0
    %1356 = vmatpush2.msra.mxu0 0.0
    %1357 = vmatprep.subr.mxu0 0.0
    %1358 = vmatpush2.msra.mxu0 0.0
    %1359 = vmatprep.subr.mxu0 0.0
    %1360 = vmatpush2.msra.mxu0 0.0
    %1361 = vmatprep.subr.mxu0 0.0
    %1362 = vmatpush2.msra.mxu0 0.0
    %1363 = vmatprep.subr.mxu0 0.0
    %1364 = vmatpush2.msra.mxu0 0.0
    %1365 = vmatprep.subr.mxu0 0.0
    %1366 = vmatpush2.msra.mxu0 0.0
    %1367 = vmatprep.subr.mxu0 0.0
    %1368 = vmatpush2.msra.mxu0 0.0
    %1369 = vmatprep.subr.mxu0 0.0
    %1370 = vmatpush2.msra.mxu0 0.0
    %1371 = vmatprep.subr.mxu0 0.0
    %1372 = vmatpush2.msra.mxu0 0.0
    %1373 = vmatprep.subr.mxu0 0.0
    %1374 = vmatpush2.msra.mxu0 0.0
    %1375 = vmatprep.mubr.f32.mxu0 0.0
    %1376 = vmatmul.mubr.f32.gmra.mxu0 %v1297
    %v1377 = vpop.f32.mrf.mxu0
    %v1378 = vadd.f32 %v1278, %v1377
    %v1379 = vpop.f32.mrf.mxu0
    %1380 = vmatprep.mubr.f32.mxu0 0.0
    %1381 = vmatmul.mubr.f32.gmra.mxu0 %v1300
    %v1382 = vpop.f32.mrf.mxu0
    %v1383 = vadd.f32 %v1283, %v1382
    %v1384 = vpop.f32.mrf.mxu0
    %1385 = vmatprep.mubr.f32.mxu0 0.0
    %1386 = vmatmul.mubr.f32.gmra.mxu0 %v1303
    %v1387 = vpop.f32.mrf.mxu0
    %v1388 = vadd.f32 %v1288, %v1387
    %v1389 = vpop.f32.mrf.mxu0
    %1390 = vmatprep.mubr.f32.mxu0 0.0
    %1391 = vmatmul.mubr.f32.gmra.mxu0 %v1306
    %v1392 = vpop.f32.mrf.mxu0
    %v1393 = vadd.f32 %v1293, %v1392
    %v1394 = vpop.f32.mrf.mxu0
    %1395 = vdwg.mxu0
    %s1396 = scalar_lea.vmem %s4, 400
    %v1397 = vld [vmem:[%s1396] sm:$0xff]
    %v1398 = vld [vmem:[%s1396 + $0x8] sm:$0xff]
    %v1399 = vld [vmem:[%s1396 + $0x10] sm:$0xff]
    %v1400 = vld [vmem:[%s1396 + $0x18] sm:$0xff]
    %v1401 = vld [vmem:[%s1396 + $0x20] sm:$0xff]
    %v1402 = vld [vmem:[%s1396 + $0x28] sm:$0xff]
    %v1403 = vld [vmem:[%s1396 + $0x30] sm:$0xff]
    %v1404 = vld [vmem:[%s1396 + $0x38] sm:$0xff]
    %v1405 = vld [vmem:[%s1396 + $0x40] sm:$0xff]
    %v1406 = vld [vmem:[%s1396 + $0x48] sm:$0xff]
    %v1407 = vld [vmem:[%s1396 + $0x50] sm:$0xff]
    %v1408 = vld [vmem:[%s1396 + $0x58] sm:$0xff]
    %v1409 = vld [vmem:[%s1396 + $0x60] sm:$0xff]
    %v1410 = vld [vmem:[%s1396 + $0x68] sm:$0xff]
    %v1411 = vld [vmem:[%s1396 + $0x70] sm:$0xff]
    %v1412 = vld [vmem:[%s1396 + $0x78] sm:$0xff]
    %v1413 = vld [vmem:[%s1396 + $0x80] sm:$0xff]
    %v1414 = vld [vmem:[%s1396 + $0x88] sm:$0xff]
    %v1415 = vld [vmem:[%s1396 + $0x90] sm:$0xff]
    %v1416 = vld [vmem:[%s1396 + $0x98] sm:$0xff]
    %v1417 = vld [vmem:[%s1396 + $0xa0] sm:$0xff]
    %v1418 = vld [vmem:[%s1396 + $0xa8] sm:$0xff]
    %v1419 = vld [vmem:[%s1396 + $0xb0] sm:$0xff]
    %v1420 = vld [vmem:[%s1396 + $0xb8] sm:$0xff]
    %v1421 = vld [vmem:[%s1396 + $0xc0] sm:$0xf]
    %v1423 = vsel %vm1003, %v1421, 0
    %1425 = vmatprep.subr.mxu0 0.0
    %1426 = vmatpush1.msra.mxu0 %v1412
    %1427 = vmatprep.subr.mxu0 0.0
    %1428 = vmatpush1.msra.mxu0 %v1411
    %1429 = vmatprep.subr.mxu0 0.0
    %1430 = vmatpush1.msra.mxu0 %v1410
    %1431 = vmatprep.subr.mxu0 0.0
    %1432 = vmatpush1.msra.mxu0 %v1409
    %1433 = vmatprep.subr.mxu0 0.0
    %1434 = vmatpush1.msra.mxu0 %v1408
    %1435 = vmatprep.subr.mxu0 0.0
    %1436 = vmatpush1.msra.mxu0 %v1407
    %1437 = vmatprep.subr.mxu0 0.0
    %1438 = vmatpush1.msra.mxu0 %v1406
    %1439 = vmatprep.subr.mxu0 0.0
    %1440 = vmatpush1.msra.mxu0 %v1405
    %1441 = vmatprep.subr.mxu0 0.0
    %1442 = vmatpush1.msra.mxu0 %v1404
    %1443 = vmatprep.subr.mxu0 0.0
    %1444 = vmatpush1.msra.mxu0 %v1403
    %1445 = vmatprep.subr.mxu0 0.0
    %1446 = vmatpush1.msra.mxu0 %v1402
    %1447 = vmatprep.subr.mxu0 0.0
    %1448 = vmatpush1.msra.mxu0 %v1401
    %1449 = vmatprep.subr.mxu0 0.0
    %1450 = vmatpush1.msra.mxu0 %v1400
    %1451 = vmatprep.subr.mxu0 0.0
    %1452 = vmatpush1.msra.mxu0 %v1399
    %1453 = vmatprep.subr.mxu0 0.0
    %1454 = vmatpush1.msra.mxu0 %v1398
    %1455 = vmatprep.subr.mxu0 0.0
    %1456 = vmatpush1.msra.mxu0 %v1397
    %1457 = vmatprep.subr.mxu0 0.0
    %1458 = vmatpush2.msra.mxu0 0.0
    %1459 = vmatprep.subr.mxu0 0.0
    %1460 = vmatpush2.msra.mxu0 0.0
    %1461 = vmatprep.subr.mxu0 0.0
    %1462 = vmatpush2.msra.mxu0 0.0
    %1463 = vmatprep.subr.mxu0 0.0
    %1464 = vmatpush2.msra.mxu0 0.0
    %1465 = vmatprep.subr.mxu0 0.0
    %1466 = vmatpush2.msra.mxu0 0.0
    %1467 = vmatprep.subr.mxu0 0.0
    %1468 = vmatpush2.msra.mxu0 0.0
    %1469 = vmatprep.subr.mxu0 0.0
    %1470 = vmatpush2.msra.mxu0 0.0
    %1471 = vmatprep.subr.mxu0 0.0
    %1472 = vmatpush2.msra.mxu0 %v1423
    %1473 = vmatprep.subr.mxu0 0.0
    %1474 = vmatpush2.msra.mxu0 %v1420
    %1475 = vmatprep.subr.mxu0 0.0
    %1476 = vmatpush2.msra.mxu0 %v1419
    %1477 = vmatprep.subr.mxu0 0.0
    %1478 = vmatpush2.msra.mxu0 %v1418
    %1479 = vmatprep.subr.mxu0 0.0
    %1480 = vmatpush2.msra.mxu0 %v1417
    %1481 = vmatprep.subr.mxu0 0.0
    %1482 = vmatpush2.msra.mxu0 %v1416
    %1483 = vmatprep.subr.mxu0 0.0
    %1484 = vmatpush2.msra.mxu0 %v1415
    %1485 = vmatprep.subr.mxu0 0.0
    %1486 = vmatpush2.msra.mxu0 %v1414
    %1487 = vmatprep.subr.mxu0 0.0
    %1488 = vmatpush2.msra.mxu0 %v1413
    %1489 = vmatprep.mubr.f32.mxu0 %v998
    %1490 = vmatmul.mubr.f32.gmra.mxu0 %v961
    %v1491 = vpop.f32.mrf.mxu0
    %v1492 = vadd.f32 0.0, %v1491
    %v1493 = vpop.f32.mrf.mxu0
    %1494 = vmatprep.mubr.f32.mxu0 %v1001
    %1495 = vmatmul.mubr.f32.gmra.mxu0 %v967
    %v1496 = vpop.f32.mrf.mxu0
    %v1497 = vadd.f32 0.0, %v1496
    %v1498 = vpop.f32.mrf.mxu0
    %1499 = vdwg.mxu0
    %s1500 = scalar_lea.vmem %s5, 64
    %v1501 = vld [vmem:[%s1500] sm:$0xff]
    %v1502 = vld [vmem:[%s1500 + $0x8] sm:$0xff]
    %v1503 = vld [vmem:[%s1500 + $0x10] sm:$0xff]
    %v1504 = vld [vmem:[%s1500 + $0x18] sm:$0xff]
    %v1506 = vsel %vm1195, %v1501, 0
    %v1509 = vsel %vm1195, %v1502, 0
    %v1512 = vsel %vm1195, %v1503, 0
    %v1515 = vsel %vm1195, %v1504, 0
    %v1518 = vsel %vm1003, %v1497, 0
    %1520 = vmatprep.subr.mxu0 0.0
    %1521 = vmatpush1.msra.mxu0 0.0
    %1522 = vmatprep.subr.mxu0 0.0
    %1523 = vmatpush1.msra.mxu0 0.0
    %1524 = vmatprep.subr.mxu0 0.0
    %1525 = vmatpush1.msra.mxu0 0.0
    %1526 = vmatprep.subr.mxu0 0.0
    %1527 = vmatpush1.msra.mxu0 0.0
    %1528 = vmatprep.subr.mxu0 0.0
    %1529 = vmatpush1.msra.mxu0 0.0
    %1530 = vmatprep.subr.mxu0 0.0
    %1531 = vmatpush1.msra.mxu0 0.0
    %1532 = vmatprep.subr.mxu0 0.0
    %1533 = vmatpush1.msra.mxu0 0.0
    %1534 = vmatprep.subr.mxu0 0.0
    %1535 = vmatpush1.msra.mxu0 0.0
    %1536 = vmatprep.subr.mxu0 0.0
    %1537 = vmatpush1.msra.mxu0 0.0
    %1538 = vmatprep.subr.mxu0 0.0
    %1539 = vmatpush1.msra.mxu0 0.0
    %1540 = vmatprep.subr.mxu0 0.0
    %1541 = vmatpush1.msra.mxu0 0.0
    %1542 = vmatprep.subr.mxu0 0.0
    %1543 = vmatpush1.msra.mxu0 0.0
    %1544 = vmatprep.subr.mxu0 0.0
    %1545 = vmatpush1.msra.mxu0 0.0
    %1546 = vmatprep.subr.mxu0 0.0
    %1547 = vmatpush1.msra.mxu0 0.0
    %1548 = vmatprep.subr.mxu0 0.0
    %1549 = vmatpush1.msra.mxu0 %v1518
    %1550 = vmatprep.subr.mxu0 0.0
    %1551 = vmatpush1.msra.mxu0 %v1492
    %1552 = vmatprep.subr.mxu0 0.0
    %1553 = vmatpush2.msra.mxu0 0.0
    %1554 = vmatprep.subr.mxu0 0.0
    %1555 = vmatpush2.msra.mxu0 0.0
    %1556 = vmatprep.subr.mxu0 0.0
    %1557 = vmatpush2.msra.mxu0 0.0
    %1558 = vmatprep.subr.mxu0 0.0
    %1559 = vmatpush2.msra.mxu0 0.0
    %1560 = vmatprep.subr.mxu0 0.0
    %1561 = vmatpush2.msra.mxu0 0.0
    %1562 = vmatprep.subr.mxu0 0.0
    %1563 = vmatpush2.msra.mxu0 0.0
    %1564 = vmatprep.subr.mxu0 0.0
    %1565 = vmatpush2.msra.mxu0 0.0
    %1566 = vmatprep.subr.mxu0 0.0
    %1567 = vmatpush2.msra.mxu0 0.0
    %1568 = vmatprep.subr.mxu0 0.0
    %1569 = vmatpush2.msra.mxu0 0.0
    %1570 = vmatprep.subr.mxu0 0.0
    %1571 = vmatpush2.msra.mxu0 0.0
    %1572 = vmatprep.subr.mxu0 0.0
    %1573 = vmatpush2.msra.mxu0 0.0
    %1574 = vmatprep.subr.mxu0 0.0
    %1575 = vmatpush2.msra.mxu0 0.0
    %1576 = vmatprep.subr.mxu0 0.0
    %1577 = vmatpush2.msra.mxu0 0.0
    %1578 = vmatprep.subr.mxu0 0.0
    %1579 = vmatpush2.msra.mxu0 0.0
    %1580 = vmatprep.subr.mxu0 0.0
    %1581 = vmatpush2.msra.mxu0 0.0
    %1582 = vmatprep.subr.mxu0 0.0
    %1583 = vmatpush2.msra.mxu0 0.0
    %1584 = vmatprep.mubr.f32.mxu0 0.0
    %1585 = vmatmul.mubr.f32.gmra.mxu0 %v1506
    %v1586 = vpop.f32.mrf.mxu0
    %v1587 = vadd.f32 0.0, %v1586
    %v1588 = vpop.f32.mrf.mxu0
    %1589 = vmatprep.mubr.f32.mxu0 0.0
    %1590 = vmatmul.mubr.f32.gmra.mxu0 %v1509
    %v1591 = vpop.f32.mrf.mxu0
    %v1592 = vadd.f32 0.0, %v1591
    %v1593 = vpop.f32.mrf.mxu0
    %1594 = vmatprep.mubr.f32.mxu0 0.0
    %1595 = vmatmul.mubr.f32.gmra.mxu0 %v1512
    %v1596 = vpop.f32.mrf.mxu0
    %v1597 = vadd.f32 0.0, %v1596
    %v1598 = vpop.f32.mrf.mxu0
    %1599 = vmatprep.mubr.f32.mxu0 0.0
    %1600 = vmatmul.mubr.f32.gmra.mxu0 %v1515
    %v1601 = vpop.f32.mrf.mxu0
    %v1602 = vadd.f32 0.0, %v1601
    %v1603 = vpop.f32.mrf.mxu0
    %1604 = vdwg.mxu0
    %v1605 = vadd.f32 %v1378, %v1587
    %v1606 = vadd.f32 %v1383, %v1592
    %v1607 = vadd.f32 %v1388, %v1597
    %v1608 = vadd.f32 %v1393, %v1602
    %s1609 = scalar_lea.vmem %s4, 600
    %v1610 = vld [vmem:[%s1609] sm:$0xff]
    %v1611 = vld [vmem:[%s1609 + $0x8] sm:$0xff]
    %v1612 = vld [vmem:[%s1609 + $0x10] sm:$0xff]
    %v1613 = vld [vmem:[%s1609 + $0x18] sm:$0xff]
    %v1614 = vld [vmem:[%s1609 + $0x20] sm:$0xff]
    %v1615 = vld [vmem:[%s1609 + $0x28] sm:$0xff]
    %v1616 = vld [vmem:[%s1609 + $0x30] sm:$0xff]
    %v1617 = vld [vmem:[%s1609 + $0x38] sm:$0xff]
    %v1618 = vld [vmem:[%s1609 + $0x40] sm:$0xff]
    %v1619 = vld [vmem:[%s1609 + $0x48] sm:$0xff]
    %v1620 = vld [vmem:[%s1609 + $0x50] sm:$0xff]
    %v1621 = vld [vmem:[%s1609 + $0x58] sm:$0xff]
    %v1622 = vld [vmem:[%s1609 + $0x60] sm:$0xff]
    %v1623 = vld [vmem:[%s1609 + $0x68] sm:$0xff]
    %v1624 = vld [vmem:[%s1609 + $0x70] sm:$0xff]
    %v1625 = vld [vmem:[%s1609 + $0x78] sm:$0xff]
    %v1626 = vld [vmem:[%s1609 + $0x80] sm:$0xff]
    %v1627 = vld [vmem:[%s1609 + $0x88] sm:$0xff]
    %v1628 = vld [vmem:[%s1609 + $0x90] sm:$0xff]
    %v1629 = vld [vmem:[%s1609 + $0x98] sm:$0xff]
    %v1630 = vld [vmem:[%s1609 + $0xa0] sm:$0xff]
    %v1631 = vld [vmem:[%s1609 + $0xa8] sm:$0xff]
    %v1632 = vld [vmem:[%s1609 + $0xb0] sm:$0xff]
    %v1633 = vld [vmem:[%s1609 + $0xb8] sm:$0xff]
    %v1634 = vld [vmem:[%s1609 + $0xc0] sm:$0xf]
    %v1636 = vsel %vm1003, %v1634, 0
    %1638 = vmatprep.subr.mxu0 0.0
    %1639 = vmatpush1.msra.mxu0 %v1625
    %1640 = vmatprep.subr.mxu0 0.0
    %1641 = vmatpush1.msra.mxu0 %v1624
    %1642 = vmatprep.subr.mxu0 0.0
    %1643 = vmatpush1.msra.mxu0 %v1623
    %1644 = vmatprep.subr.mxu0 0.0
    %1645 = vmatpush1.msra.mxu0 %v1622
    %1646 = vmatprep.subr.mxu0 0.0
    %1647 = vmatpush1.msra.mxu0 %v1621
    %1648 = vmatprep.subr.mxu0 0.0
    %1649 = vmatpush1.msra.mxu0 %v1620
    %1650 = vmatprep.subr.mxu0 0.0
    %1651 = vmatpush1.msra.mxu0 %v1619
    %1652 = vmatprep.subr.mxu0 0.0
    %1653 = vmatpush1.msra.mxu0 %v1618
    %1654 = vmatprep.subr.mxu0 0.0
    %1655 = vmatpush1.msra.mxu0 %v1617
    %1656 = vmatprep.subr.mxu0 0.0
    %1657 = vmatpush1.msra.mxu0 %v1616
    %1658 = vmatprep.subr.mxu0 0.0
    %1659 = vmatpush1.msra.mxu0 %v1615
    %1660 = vmatprep.subr.mxu0 0.0
    %1661 = vmatpush1.msra.mxu0 %v1614
    %1662 = vmatprep.subr.mxu0 0.0
    %1663 = vmatpush1.msra.mxu0 %v1613
    %1664 = vmatprep.subr.mxu0 0.0
    %1665 = vmatpush1.msra.mxu0 %v1612
    %1666 = vmatprep.subr.mxu0 0.0
    %1667 = vmatpush1.msra.mxu0 %v1611
    %1668 = vmatprep.subr.mxu0 0.0
    %1669 = vmatpush1.msra.mxu0 %v1610
    %1670 = vmatprep.subr.mxu0 0.0
    %1671 = vmatpush2.msra.mxu0 0.0
    %1672 = vmatprep.subr.mxu0 0.0
    %1673 = vmatpush2.msra.mxu0 0.0
    %1674 = vmatprep.subr.mxu0 0.0
    %1675 = vmatpush2.msra.mxu0 0.0
    %1676 = vmatprep.subr.mxu0 0.0
    %1677 = vmatpush2.msra.mxu0 0.0
    %1678 = vmatprep.subr.mxu0 0.0
    %1679 = vmatpush2.msra.mxu0 0.0
    %1680 = vmatprep.subr.mxu0 0.0
    %1681 = vmatpush2.msra.mxu0 0.0
    %1682 = vmatprep.subr.mxu0 0.0
    %1683 = vmatpush2.msra.mxu0 0.0
    %1684 = vmatprep.subr.mxu0 0.0
    %1685 = vmatpush2.msra.mxu0 %v1636
    %1686 = vmatprep.subr.mxu0 0.0
    %1687 = vmatpush2.msra.mxu0 %v1633
    %1688 = vmatprep.subr.mxu0 0.0
    %1689 = vmatpush2.msra.mxu0 %v1632
    %1690 = vmatprep.subr.mxu0 0.0
    %1691 = vmatpush2.msra.mxu0 %v1631
    %1692 = vmatprep.subr.mxu0 0.0
    %1693 = vmatpush2.msra.mxu0 %v1630
    %1694 = vmatprep.subr.mxu0 0.0
    %1695 = vmatpush2.msra.mxu0 %v1629
    %1696 = vmatprep.subr.mxu0 0.0
    %1697 = vmatpush2.msra.mxu0 %v1628
    %1698 = vmatprep.subr.mxu0 0.0
    %1699 = vmatpush2.msra.mxu0 %v1627
    %1700 = vmatprep.subr.mxu0 0.0
    %1701 = vmatpush2.msra.mxu0 %v1626
    %1702 = vmatprep.mubr.f32.mxu0 %v998
    %1703 = vmatmul.mubr.f32.gmra.mxu0 %v961
    %v1704 = vpop.f32.mrf.mxu0
    %v1705 = vadd.f32 0.0, %v1704
    %v1706 = vpop.f32.mrf.mxu0
    %1707 = vmatprep.mubr.f32.mxu0 %v1001
    %1708 = vmatmul.mubr.f32.gmra.mxu0 %v967
    %v1709 = vpop.f32.mrf.mxu0
    %v1710 = vadd.f32 0.0, %v1709
    %v1711 = vpop.f32.mrf.mxu0
    %1712 = vdwg.mxu0
    %s1713 = scalar_lea.vmem %s5, 96
    %v1714 = vld [vmem:[%s1713] sm:$0xff]
    %v1715 = vld [vmem:[%s1713 + $0x8] sm:$0xff]
    %v1716 = vld [vmem:[%s1713 + $0x10] sm:$0xff]
    %v1717 = vld [vmem:[%s1713 + $0x18] sm:$0xff]
    %v1719 = vsel %vm1195, %v1714, 0
    %v1722 = vsel %vm1195, %v1715, 0
    %v1725 = vsel %vm1195, %v1716, 0
    %v1728 = vsel %vm1195, %v1717, 0
    %v1731 = vsel %vm1003, %v1710, 0
    %1733 = vmatprep.subr.mxu0 0.0
    %1734 = vmatpush1.msra.mxu0 0.0
    %1735 = vmatprep.subr.mxu0 0.0
    %1736 = vmatpush1.msra.mxu0 0.0
    %1737 = vmatprep.subr.mxu0 0.0
    %1738 = vmatpush1.msra.mxu0 0.0
    %1739 = vmatprep.subr.mxu0 0.0
    %1740 = vmatpush1.msra.mxu0 0.0
    %1741 = vmatprep.subr.mxu0 0.0
    %1742 = vmatpush1.msra.mxu0 0.0
    %1743 = vmatprep.subr.mxu0 0.0
    %1744 = vmatpush1.msra.mxu0 0.0
    %1745 = vmatprep.subr.mxu0 0.0
    %1746 = vmatpush1.msra.mxu0 0.0
    %1747 = vmatprep.subr.mxu0 0.0
    %1748 = vmatpush1.msra.mxu0 0.0
    %1749 = vmatprep.subr.mxu0 0.0
    %1750 = vmatpush1.msra.mxu0 0.0
    %1751 = vmatprep.subr.mxu0 0.0
    %1752 = vmatpush1.msra.mxu0 0.0
    %1753 = vmatprep.subr.mxu0 0.0
    %1754 = vmatpush1.msra.mxu0 0.0
    %1755 = vmatprep.subr.mxu0 0.0
    %1756 = vmatpush1.msra.mxu0 0.0
    %1757 = vmatprep.subr.mxu0 0.0
    %1758 = vmatpush1.msra.mxu0 0.0
    %1759 = vmatprep.subr.mxu0 0.0
    %1760 = vmatpush1.msra.mxu0 0.0
    %1761 = vmatprep.subr.mxu0 0.0
    %1762 = vmatpush1.msra.mxu0 %v1731
    %1763 = vmatprep.subr.mxu0 0.0
    %1764 = vmatpush1.msra.mxu0 %v1705
    %1765 = vmatprep.subr.mxu0 0.0
    %1766 = vmatpush2.msra.mxu0 0.0
    %1767 = vmatprep.subr.mxu0 0.0
    %1768 = vmatpush2.msra.mxu0 0.0
    %1769 = vmatprep.subr.mxu0 0.0
    %1770 = vmatpush2.msra.mxu0 0.0
    %1771 = vmatprep.subr.mxu0 0.0
    %1772 = vmatpush2.msra.mxu0 0.0
    %1773 = vmatprep.subr.mxu0 0.0
    %1774 = vmatpush2.msra.mxu0 0.0
    %1775 = vmatprep.subr.mxu0 0.0
    %1776 = vmatpush2.msra.mxu0 0.0
    %1777 = vmatprep.subr.mxu0 0.0
    %1778 = vmatpush2.msra.mxu0 0.0
    %1779 = vmatprep.subr.mxu0 0.0
    %1780 = vmatpush2.msra.mxu0 0.0
    %1781 = vmatprep.subr.mxu0 0.0
    %1782 = vmatpush2.msra.mxu0 0.0
    %1783 = vmatprep.subr.mxu0 0.0
    %1784 = vmatpush2.msra.mxu0 0.0
    %1785 = vmatprep.subr.mxu0 0.0
    %1786 = vmatpush2.msra.mxu0 0.0
    %1787 = vmatprep.subr.mxu0 0.0
    %1788 = vmatpush2.msra.mxu0 0.0
    %1789 = vmatprep.subr.mxu0 0.0
    %1790 = vmatpush2.msra.mxu0 0.0
    %1791 = vmatprep.subr.mxu0 0.0
    %1792 = vmatpush2.msra.mxu0 0.0
    %1793 = vmatprep.subr.mxu0 0.0
    %1794 = vmatpush2.msra.mxu0 0.0
    %1795 = vmatprep.subr.mxu0 0.0
    %1796 = vmatpush2.msra.mxu0 0.0
    %1797 = vmatprep.mubr.f32.mxu0 0.0
    %1798 = vmatmul.mubr.f32.gmra.mxu0 %v1719
    %v1799 = vpop.f32.mrf.mxu0
    %v1800 = vadd.f32 0.0, %v1799
    %v1801 = vpop.f32.mrf.mxu0
    %1802 = vmatprep.mubr.f32.mxu0 0.0
    %1803 = vmatmul.mubr.f32.gmra.mxu0 %v1722
    %v1804 = vpop.f32.mrf.mxu0
    %v1805 = vadd.f32 0.0, %v1804
    %v1806 = vpop.f32.mrf.mxu0
    %1807 = vmatprep.mubr.f32.mxu0 0.0
    %1808 = vmatmul.mubr.f32.gmra.mxu0 %v1725
    %v1809 = vpop.f32.mrf.mxu0
    %v1810 = vadd.f32 0.0, %v1809
    %v1811 = vpop.f32.mrf.mxu0
    %1812 = vmatprep.mubr.f32.mxu0 0.0
    %1813 = vmatmul.mubr.f32.gmra.mxu0 %v1728
    %v1814 = vpop.f32.mrf.mxu0
    %v1815 = vadd.f32 0.0, %v1814
    %v1816 = vpop.f32.mrf.mxu0
    %1817 = vdwg.mxu0
    %v1818 = vadd.f32 %v1605, %v1800
    %v1819 = vadd.f32 %v1606, %v1805
    %v1820 = vadd.f32 %v1607, %v1810
    %v1821 = vadd.f32 %v1608, %v1815
    %s1822 = scalar_lea.vmem %s4, 800
    %v1823 = vld [vmem:[%s1822] sm:$0xff]
    %v1824 = vld [vmem:[%s1822 + $0x8] sm:$0xff]
    %v1825 = vld [vmem:[%s1822 + $0x10] sm:$0xff]
    %v1826 = vld [vmem:[%s1822 + $0x18] sm:$0xff]
    %v1827 = vld [vmem:[%s1822 + $0x20] sm:$0xff]
    %v1828 = vld [vmem:[%s1822 + $0x28] sm:$0xff]
    %v1829 = vld [vmem:[%s1822 + $0x30] sm:$0xff]
    %v1830 = vld [vmem:[%s1822 + $0x38] sm:$0xff]
    %v1831 = vld [vmem:[%s1822 + $0x40] sm:$0xff]
    %v1832 = vld [vmem:[%s1822 + $0x48] sm:$0xff]
    %v1833 = vld [vmem:[%s1822 + $0x50] sm:$0xff]
    %v1834 = vld [vmem:[%s1822 + $0x58] sm:$0xff]
    %v1835 = vld [vmem:[%s1822 + $0x60] sm:$0xff]
    %v1836 = vld [vmem:[%s1822 + $0x68] sm:$0xff]
    %v1837 = vld [vmem:[%s1822 + $0x70] sm:$0xff]
    %v1838 = vld [vmem:[%s1822 + $0x78] sm:$0xff]
    %v1839 = vld [vmem:[%s1822 + $0x80] sm:$0xff]
    %v1840 = vld [vmem:[%s1822 + $0x88] sm:$0xff]
    %v1841 = vld [vmem:[%s1822 + $0x90] sm:$0xff]
    %v1842 = vld [vmem:[%s1822 + $0x98] sm:$0xff]
    %v1843 = vld [vmem:[%s1822 + $0xa0] sm:$0xff]
    %v1844 = vld [vmem:[%s1822 + $0xa8] sm:$0xff]
    %v1845 = vld [vmem:[%s1822 + $0xb0] sm:$0xff]
    %v1846 = vld [vmem:[%s1822 + $0xb8] sm:$0xff]
    %v1847 = vld [vmem:[%s1822 + $0xc0] sm:$0xf]
    %v1849 = vsel %vm1003, %v1847, 0
    %1851 = vmatprep.subr.mxu0 0.0
    %1852 = vmatpush1.msra.mxu0 %v1838
    %1853 = vmatprep.subr.mxu0 0.0
    %1854 = vmatpush1.msra.mxu0 %v1837
    %1855 = vmatprep.subr.mxu0 0.0
    %1856 = vmatpush1.msra.mxu0 %v1836
    %1857 = vmatprep.subr.mxu0 0.0
    %1858 = vmatpush1.msra.mxu0 %v1835
    %1859 = vmatprep.subr.mxu0 0.0
    %1860 = vmatpush1.msra.mxu0 %v1834
    %1861 = vmatprep.subr.mxu0 0.0
    %1862 = vmatpush1.msra.mxu0 %v1833
    %1863 = vmatprep.subr.mxu0 0.0
    %1864 = vmatpush1.msra.mxu0 %v1832
    %1865 = vmatprep.subr.mxu0 0.0
    %1866 = vmatpush1.msra.mxu0 %v1831
    %1867 = vmatprep.subr.mxu0 0.0
    %1868 = vmatpush1.msra.mxu0 %v1830
    %1869 = vmatprep.subr.mxu0 0.0
    %1870 = vmatpush1.msra.mxu0 %v1829
    %1871 = vmatprep.subr.mxu0 0.0
    %1872 = vmatpush1.msra.mxu0 %v1828
    %1873 = vmatprep.subr.mxu0 0.0
    %1874 = vmatpush1.msra.mxu0 %v1827
    %1875 = vmatprep.subr.mxu0 0.0
    %1876 = vmatpush1.msra.mxu0 %v1826
    %1877 = vmatprep.subr.mxu0 0.0
    %1878 = vmatpush1.msra.mxu0 %v1825
    %1879 = vmatprep.subr.mxu0 0.0
    %1880 = vmatpush1.msra.mxu0 %v1824
    %1881 = vmatprep.subr.mxu0 0.0
    %1882 = vmatpush1.msra.mxu0 %v1823
    %1883 = vmatprep.subr.mxu0 0.0
    %1884 = vmatpush2.msra.mxu0 0.0
    %1885 = vmatprep.subr.mxu0 0.0
    %1886 = vmatpush2.msra.mxu0 0.0
    %1887 = vmatprep.subr.mxu0 0.0
    %1888 = vmatpush2.msra.mxu0 0.0
    %1889 = vmatprep.subr.mxu0 0.0
    %1890 = vmatpush2.msra.mxu0 0.0
    %1891 = vmatprep.subr.mxu0 0.0
    %1892 = vmatpush2.msra.mxu0 0.0
    %1893 = vmatprep.subr.mxu0 0.0
    %1894 = vmatpush2.msra.mxu0 0.0
    %1895 = vmatprep.subr.mxu0 0.0
    %1896 = vmatpush2.msra.mxu0 0.0
    %1897 = vmatprep.subr.mxu0 0.0
    %1898 = vmatpush2.msra.mxu0 %v1849
    %1899 = vmatprep.subr.mxu0 0.0
    %1900 = vmatpush2.msra.mxu0 %v1846
    %1901 = vmatprep.subr.mxu0 0.0
    %1902 = vmatpush2.msra.mxu0 %v1845
    %1903 = vmatprep.subr.mxu0 0.0
    %1904 = vmatpush2.msra.mxu0 %v1844
    %1905 = vmatprep.subr.mxu0 0.0
    %1906 = vmatpush2.msra.mxu0 %v1843
    %1907 = vmatprep.subr.mxu0 0.0
    %1908 = vmatpush2.msra.mxu0 %v1842
    %1909 = vmatprep.subr.mxu0 0.0
    %1910 = vmatpush2.msra.mxu0 %v1841
    %1911 = vmatprep.subr.mxu0 0.0
    %1912 = vmatpush2.msra.mxu0 %v1840
    %1913 = vmatprep.subr.mxu0 0.0
    %1914 = vmatpush2.msra.mxu0 %v1839
    %1915 = vmatprep.mubr.f32.mxu0 %v998
    %1916 = vmatmul.mubr.f32.gmra.mxu0 %v961
    %v1917 = vpop.f32.mrf.mxu0
    %v1918 = vadd.f32 0.0, %v1917
    %v1919 = vpop.f32.mrf.mxu0
    %1920 = vmatprep.mubr.f32.mxu0 %v1001
    %1921 = vmatmul.mubr.f32.gmra.mxu0 %v967
    %v1922 = vpop.f32.mrf.mxu0
    %v1923 = vadd.f32 0.0, %v1922
    %v1924 = vpop.f32.mrf.mxu0
    %1925 = vdwg.mxu0
    %s1926 = scalar_lea.vmem %s5, 128
    %v1927 = vld [vmem:[%s1926] sm:$0xff]
    %v1928 = vld [vmem:[%s1926 + $0x8] sm:$0xff]
    %v1929 = vld [vmem:[%s1926 + $0x10] sm:$0xff]
    %v1930 = vld [vmem:[%s1926 + $0x18] sm:$0xff]
    %v1932 = vsel %vm1195, %v1927, 0
    %v1935 = vsel %vm1195, %v1928, 0
    %v1938 = vsel %vm1195, %v1929, 0
    %v1941 = vsel %vm1195, %v1930, 0
    %v1944 = vsel %vm1003, %v1923, 0
    %1946 = vmatprep.subr.mxu0 0.0
    %1947 = vmatpush1.msra.mxu0 0.0
    %1948 = vmatprep.subr.mxu0 0.0
    %1949 = vmatpush1.msra.mxu0 0.0
    %1950 = vmatprep.subr.mxu0 0.0
    %1951 = vmatpush1.msra.mxu0 0.0
    %1952 = vmatprep.subr.mxu0 0.0
    %1953 = vmatpush1.msra.mxu0 0.0
    %1954 = vmatprep.subr.mxu0 0.0
    %1955 = vmatpush1.msra.mxu0 0.0
    %1956 = vmatprep.subr.mxu0 0.0
    %1957 = vmatpush1.msra.mxu0 0.0
    %1958 = vmatprep.subr.mxu0 0.0
    %1959 = vmatpush1.msra.mxu0 0.0
    %1960 = vmatprep.subr.mxu0 0.0
    %1961 = vmatpush1.msra.mxu0 0.0
    %1962 = vmatprep.subr.mxu0 0.0
    %1963 = vmatpush1.msra.mxu0 0.0
    %1964 = vmatprep.subr.mxu0 0.0
    %1965 = vmatpush1.msra.mxu0 0.0
    %1966 = vmatprep.subr.mxu0 0.0
    %1967 = vmatpush1.msra.mxu0 0.0
    %1968 = vmatprep.subr.mxu0 0.0
    %1969 = vmatpush1.msra.mxu0 0.0
    %1970 = vmatprep.subr.mxu0 0.0
    %1971 = vmatpush1.msra.mxu0 0.0
    %1972 = vmatprep.subr.mxu0 0.0
    %1973 = vmatpush1.msra.mxu0 0.0
    %1974 = vmatprep.subr.mxu0 0.0
    %1975 = vmatpush1.msra.mxu0 %v1944
    %1976 = vmatprep.subr.mxu0 0.0
    %1977 = vmatpush1.msra.mxu0 %v1918
    %1978 = vmatprep.subr.mxu0 0.0
    %1979 = vmatpush2.msra.mxu0 0.0
    %1980 = vmatprep.subr.mxu0 0.0
    %1981 = vmatpush2.msra.mxu0 0.0
    %1982 = vmatprep.subr.mxu0 0.0
    %1983 = vmatpush2.msra.mxu0 0.0
    %1984 = vmatprep.subr.mxu0 0.0
    %1985 = vmatpush2.msra.mxu0 0.0
    %1986 = vmatprep.subr.mxu0 0.0
    %1987 = vmatpush2.msra.mxu0 0.0
    %1988 = vmatprep.subr.mxu0 0.0
    %1989 = vmatpush2.msra.mxu0 0.0
    %1990 = vmatprep.subr.mxu0 0.0
    %1991 = vmatpush2.msra.mxu0 0.0
    %1992 = vmatprep.subr.mxu0 0.0
    %1993 = vmatpush2.msra.mxu0 0.0
    %1994 = vmatprep.subr.mxu0 0.0
    %1995 = vmatpush2.msra.mxu0 0.0
    %1996 = vmatprep.subr.mxu0 0.0
    %1997 = vmatpush2.msra.mxu0 0.0
    %1998 = vmatprep.subr.mxu0 0.0
    %1999 = vmatpush2.msra.mxu0 0.0
    %2000 = vmatprep.subr.mxu0 0.0
    %2001 = vmatpush2.msra.mxu0 0.0
    %2002 = vmatprep.subr.mxu0 0.0
    %2003 = vmatpush2.msra.mxu0 0.0
    %2004 = vmatprep.subr.mxu0 0.0
    %2005 = vmatpush2.msra.mxu0 0.0
    %2006 = vmatprep.subr.mxu0 0.0
    %2007 = vmatpush2.msra.mxu0 0.0
    %2008 = vmatprep.subr.mxu0 0.0
    %2009 = vmatpush2.msra.mxu0 0.0
    %2010 = vmatprep.mubr.f32.mxu0 0.0
    %2011 = vmatmul.mubr.f32.gmra.mxu0 %v1932
    %v2012 = vpop.f32.mrf.mxu0
    %v2013 = vadd.f32 0.0, %v2012
    %v2014 = vpop.f32.mrf.mxu0
    %2015 = vmatprep.mubr.f32.mxu0 0.0
    %2016 = vmatmul.mubr.f32.gmra.mxu0 %v1935
    %v2017 = vpop.f32.mrf.mxu0
    %v2018 = vadd.f32 0.0, %v2017
    %v2019 = vpop.f32.mrf.mxu0
    %2020 = vmatprep.mubr.f32.mxu0 0.0
    %2021 = vmatmul.mubr.f32.gmra.mxu0 %v1938
    %v2022 = vpop.f32.mrf.mxu0
    %v2023 = vadd.f32 0.0, %v2022
    %v2024 = vpop.f32.mrf.mxu0
    %2025 = vmatprep.mubr.f32.mxu0 0.0
    %2026 = vmatmul.mubr.f32.gmra.mxu0 %v1941
    %v2027 = vpop.f32.mrf.mxu0
    %v2028 = vadd.f32 0.0, %v2027
    %v2029 = vpop.f32.mrf.mxu0
    %2030 = vdwg.mxu0
    %v2031 = vadd.f32 %v1818, %v2013
    %v2032 = vadd.f32 %v1819, %v2018
    %v2033 = vadd.f32 %v1820, %v2023
    %v2034 = vadd.f32 %v1821, %v2028
    %s2035 = scalar_lea.vmem %s4, 1000
    %v2036 = vld [vmem:[%s2035] sm:$0xff]
    %v2037 = vld [vmem:[%s2035 + $0x8] sm:$0xff]
    %v2038 = vld [vmem:[%s2035 + $0x10] sm:$0xff]
    %v2039 = vld [vmem:[%s2035 + $0x18] sm:$0xff]
    %v2040 = vld [vmem:[%s2035 + $0x20] sm:$0xff]
    %v2041 = vld [vmem:[%s2035 + $0x28] sm:$0xff]
    %v2042 = vld [vmem:[%s2035 + $0x30] sm:$0xff]
    %v2043 = vld [vmem:[%s2035 + $0x38] sm:$0xff]
    %v2044 = vld [vmem:[%s2035 + $0x40] sm:$0xff]
    %v2045 = vld [vmem:[%s2035 + $0x48] sm:$0xff]
    %v2046 = vld [vmem:[%s2035 + $0x50] sm:$0xff]
    %v2047 = vld [vmem:[%s2035 + $0x58] sm:$0xff]
    %v2048 = vld [vmem:[%s2035 + $0x60] sm:$0xff]
    %v2049 = vld [vmem:[%s2035 + $0x68] sm:$0xff]
    %v2050 = vld [vmem:[%s2035 + $0x70] sm:$0xff]
    %v2051 = vld [vmem:[%s2035 + $0x78] sm:$0xff]
    %v2052 = vld [vmem:[%s2035 + $0x80] sm:$0xff]
    %v2053 = vld [vmem:[%s2035 + $0x88] sm:$0xff]
    %v2054 = vld [vmem:[%s2035 + $0x90] sm:$0xff]
    %v2055 = vld [vmem:[%s2035 + $0x98] sm:$0xff]
    %v2056 = vld [vmem:[%s2035 + $0xa0] sm:$0xff]
    %v2057 = vld [vmem:[%s2035 + $0xa8] sm:$0xff]
    %v2058 = vld [vmem:[%s2035 + $0xb0] sm:$0xff]
    %v2059 = vld [vmem:[%s2035 + $0xb8] sm:$0xff]
    %v2060 = vld [vmem:[%s2035 + $0xc0] sm:$0xf]
    %v2062 = vsel %vm1003, %v2060, 0
    %2064 = vmatprep.subr.mxu0 0.0
    %2065 = vmatpush1.msra.mxu0 %v2051
    %2066 = vmatprep.subr.mxu0 0.0
    %2067 = vmatpush1.msra.mxu0 %v2050
    %2068 = vmatprep.subr.mxu0 0.0
    %2069 = vmatpush1.msra.mxu0 %v2049
    %2070 = vmatprep.subr.mxu0 0.0
    %2071 = vmatpush1.msra.mxu0 %v2048
    %2072 = vmatprep.subr.mxu0 0.0
    %2073 = vmatpush1.msra.mxu0 %v2047
    %2074 = vmatprep.subr.mxu0 0.0
    %2075 = vmatpush1.msra.mxu0 %v2046
    %2076 = vmatprep.subr.mxu0 0.0
    %2077 = vmatpush1.msra.mxu0 %v2045
    %2078 = vmatprep.subr.mxu0 0.0
    %2079 = vmatpush1.msra.mxu0 %v2044
    %2080 = vmatprep.subr.mxu0 0.0
    %2081 = vmatpush1.msra.mxu0 %v2043
    %2082 = vmatprep.subr.mxu0 0.0
    %2083 = vmatpush1.msra.mxu0 %v2042
    %2084 = vmatprep.subr.mxu0 0.0
    %2085 = vmatpush1.msra.mxu0 %v2041
    %2086 = vmatprep.subr.mxu0 0.0
    %2087 = vmatpush1.msra.mxu0 %v2040
    %2088 = vmatprep.subr.mxu0 0.0
    %2089 = vmatpush1.msra.mxu0 %v2039
    %2090 = vmatprep.subr.mxu0 0.0
    %2091 = vmatpush1.msra.mxu0 %v2038
    %2092 = vmatprep.subr.mxu0 0.0
    %2093 = vmatpush1.msra.mxu0 %v2037
    %2094 = vmatprep.subr.mxu0 0.0
    %2095 = vmatpush1.msra.mxu0 %v2036
    %2096 = vmatprep.subr.mxu0 0.0
    %2097 = vmatpush2.msra.mxu0 0.0
    %2098 = vmatprep.subr.mxu0 0.0
    %2099 = vmatpush2.msra.mxu0 0.0
    %2100 = vmatprep.subr.mxu0 0.0
    %2101 = vmatpush2.msra.mxu0 0.0
    %2102 = vmatprep.subr.mxu0 0.0
    %2103 = vmatpush2.msra.mxu0 0.0
    %2104 = vmatprep.subr.mxu0 0.0
    %2105 = vmatpush2.msra.mxu0 0.0
    %2106 = vmatprep.subr.mxu0 0.0
    %2107 = vmatpush2.msra.mxu0 0.0
    %2108 = vmatprep.subr.mxu0 0.0
    %2109 = vmatpush2.msra.mxu0 0.0
    %2110 = vmatprep.subr.mxu0 0.0
    %2111 = vmatpush2.msra.mxu0 %v2062
    %2112 = vmatprep.subr.mxu0 0.0
    %2113 = vmatpush2.msra.mxu0 %v2059
    %2114 = vmatprep.subr.mxu0 0.0
    %2115 = vmatpush2.msra.mxu0 %v2058
    %2116 = vmatprep.subr.mxu0 0.0
    %2117 = vmatpush2.msra.mxu0 %v2057
    %2118 = vmatprep.subr.mxu0 0.0
    %2119 = vmatpush2.msra.mxu0 %v2056
    %2120 = vmatprep.subr.mxu0 0.0
    %2121 = vmatpush2.msra.mxu0 %v2055
    %2122 = vmatprep.subr.mxu0 0.0
    %2123 = vmatpush2.msra.mxu0 %v2054
    %2124 = vmatprep.subr.mxu0 0.0
    %2125 = vmatpush2.msra.mxu0 %v2053
    %2126 = vmatprep.subr.mxu0 0.0
    %2127 = vmatpush2.msra.mxu0 %v2052
    %2128 = vmatprep.mubr.f32.mxu0 %v998
    %2129 = vmatmul.mubr.f32.gmra.mxu0 %v961
    %v2130 = vpop.f32.mrf.mxu0
    %v2131 = vadd.f32 0.0, %v2130
    %v2132 = vpop.f32.mrf.mxu0
    %2133 = vmatprep.mubr.f32.mxu0 %v1001
    %2134 = vmatmul.mubr.f32.gmra.mxu0 %v967
    %v2135 = vpop.f32.mrf.mxu0
    %v2136 = vadd.f32 0.0, %v2135
    %v2137 = vpop.f32.mrf.mxu0
    %2138 = vdwg.mxu0
    %s2139 = scalar_lea.vmem %s5, 160
    %v2140 = vld [vmem:[%s2139] sm:$0xff]
    %v2141 = vld [vmem:[%s2139 + $0x8] sm:$0xff]
    %v2142 = vld [vmem:[%s2139 + $0x10] sm:$0xff]
    %v2143 = vld [vmem:[%s2139 + $0x18] sm:$0xff]
    %v2145 = vsel %vm1195, %v2140, 0
    %v2148 = vsel %vm1195, %v2141, 0
    %v2151 = vsel %vm1195, %v2142, 0
    %v2154 = vsel %vm1195, %v2143, 0
    %v2157 = vsel %vm1003, %v2136, 0
    %2159 = vmatprep.subr.mxu0 0.0
    %2160 = vmatpush1.msra.mxu0 0.0
    %2161 = vmatprep.subr.mxu0 0.0
    %2162 = vmatpush1.msra.mxu0 0.0
    %2163 = vmatprep.subr.mxu0 0.0
    %2164 = vmatpush1.msra.mxu0 0.0
    %2165 = vmatprep.subr.mxu0 0.0
    %2166 = vmatpush1.msra.mxu0 0.0
    %2167 = vmatprep.subr.mxu0 0.0
    %2168 = vmatpush1.msra.mxu0 0.0
    %2169 = vmatprep.subr.mxu0 0.0
    %2170 = vmatpush1.msra.mxu0 0.0
    %2171 = vmatprep.subr.mxu0 0.0
    %2172 = vmatpush1.msra.mxu0 0.0
    %2173 = vmatprep.subr.mxu0 0.0
    %2174 = vmatpush1.msra.mxu0 0.0
    %2175 = vmatprep.subr.mxu0 0.0
    %2176 = vmatpush1.msra.mxu0 0.0
    %2177 = vmatprep.subr.mxu0 0.0
    %2178 = vmatpush1.msra.mxu0 0.0
    %2179 = vmatprep.subr.mxu0 0.0
    %2180 = vmatpush1.msra.mxu0 0.0
    %2181 = vmatprep.subr.mxu0 0.0
    %2182 = vmatpush1.msra.mxu0 0.0
    %2183 = vmatprep.subr.mxu0 0.0
    %2184 = vmatpush1.msra.mxu0 0.0
    %2185 = vmatprep.subr.mxu0 0.0
    %2186 = vmatpush1.msra.mxu0 0.0
    %2187 = vmatprep.subr.mxu0 0.0
    %2188 = vmatpush1.msra.mxu0 %v2157
    %2189 = vmatprep.subr.mxu0 0.0
    %2190 = vmatpush1.msra.mxu0 %v2131
    %2191 = vmatprep.subr.mxu0 0.0
    %2192 = vmatpush2.msra.mxu0 0.0
    %2193 = vmatprep.subr.mxu0 0.0
    %2194 = vmatpush2.msra.mxu0 0.0
    %2195 = vmatprep.subr.mxu0 0.0
    %2196 = vmatpush2.msra.mxu0 0.0
    %2197 = vmatprep.subr.mxu0 0.0
    %2198 = vmatpush2.msra.mxu0 0.0
    %2199 = vmatprep.subr.mxu0 0.0
    %2200 = vmatpush2.msra.mxu0 0.0
    %2201 = vmatprep.subr.mxu0 0.0
    %2202 = vmatpush2.msra.mxu0 0.0
    %2203 = vmatprep.subr.mxu0 0.0
    %2204 = vmatpush2.msra.mxu0 0.0
    %2205 = vmatprep.subr.mxu0 0.0
    %2206 = vmatpush2.msra.mxu0 0.0
    %2207 = vmatprep.subr.mxu0 0.0
    %2208 = vmatpush2.msra.mxu0 0.0
    %2209 = vmatprep.subr.mxu0 0.0
    %2210 = vmatpush2.msra.mxu0 0.0
    %2211 = vmatprep.subr.mxu0 0.0
    %2212 = vmatpush2.msra.mxu0 0.0
    %2213 = vmatprep.subr.mxu0 0.0
    %2214 = vmatpush2.msra.mxu0 0.0
    %2215 = vmatprep.subr.mxu0 0.0
    %2216 = vmatpush2.msra.mxu0 0.0
    %2217 = vmatprep.subr.mxu0 0.0
    %2218 = vmatpush2.msra.mxu0 0.0
    %2219 = vmatprep.subr.mxu0 0.0
    %2220 = vmatpush2.msra.mxu0 0.0
    %2221 = vmatprep.subr.mxu0 0.0
    %2222 = vmatpush2.msra.mxu0 0.0
    %2223 = vmatprep.mubr.f32.mxu0 0.0
    %2224 = vmatmul.mubr.f32.gmra.mxu0 %v2145
    %v2225 = vpop.f32.mrf.mxu0
    %v2226 = vadd.f32 0.0, %v2225
    %v2227 = vpop.f32.mrf.mxu0
    %2228 = vmatprep.mubr.f32.mxu0 0.0
    %2229 = vmatmul.mubr.f32.gmra.mxu0 %v2148
    %v2230 = vpop.f32.mrf.mxu0
    %v2231 = vadd.f32 0.0, %v2230
    %v2232 = vpop.f32.mrf.mxu0
    %2233 = vmatprep.mubr.f32.mxu0 0.0
    %2234 = vmatmul.mubr.f32.gmra.mxu0 %v2151
    %v2235 = vpop.f32.mrf.mxu0
    %v2236 = vadd.f32 0.0, %v2235
    %v2237 = vpop.f32.mrf.mxu0
    %2238 = vmatprep.mubr.f32.mxu0 0.0
    %2239 = vmatmul.mubr.f32.gmra.mxu0 %v2154
    %v2240 = vpop.f32.mrf.mxu0
    %v2241 = vadd.f32 0.0, %v2240
    %v2242 = vpop.f32.mrf.mxu0
    %2243 = vdwg.mxu0
    %v2244 = vadd.f32 %v2031, %v2226
    %v2245 = vadd.f32 %v2032, %v2231
    %v2246 = vadd.f32 %v2033, %v2236
    %v2247 = vadd.f32 %v2034, %v2241
    %s2248 = scalar_lea.vmem %s4, 1200
    %v2249 = vld [vmem:[%s2248] sm:$0xff]
    %v2250 = vld [vmem:[%s2248 + $0x8] sm:$0xff]
    %v2251 = vld [vmem:[%s2248 + $0x10] sm:$0xff]
    %v2252 = vld [vmem:[%s2248 + $0x18] sm:$0xff]
    %v2253 = vld [vmem:[%s2248 + $0x20] sm:$0xff]
    %v2254 = vld [vmem:[%s2248 + $0x28] sm:$0xff]
    %v2255 = vld [vmem:[%s2248 + $0x30] sm:$0xff]
    %v2256 = vld [vmem:[%s2248 + $0x38] sm:$0xff]
    %v2257 = vld [vmem:[%s2248 + $0x40] sm:$0xff]
    %v2258 = vld [vmem:[%s2248 + $0x48] sm:$0xff]
    %v2259 = vld [vmem:[%s2248 + $0x50] sm:$0xff]
    %v2260 = vld [vmem:[%s2248 + $0x58] sm:$0xff]
    %v2261 = vld [vmem:[%s2248 + $0x60] sm:$0xff]
    %v2262 = vld [vmem:[%s2248 + $0x68] sm:$0xff]
    %v2263 = vld [vmem:[%s2248 + $0x70] sm:$0xff]
    %v2264 = vld [vmem:[%s2248 + $0x78] sm:$0xff]
    %v2265 = vld [vmem:[%s2248 + $0x80] sm:$0xff]
    %v2266 = vld [vmem:[%s2248 + $0x88] sm:$0xff]
    %v2267 = vld [vmem:[%s2248 + $0x90] sm:$0xff]
    %v2268 = vld [vmem:[%s2248 + $0x98] sm:$0xff]
    %v2269 = vld [vmem:[%s2248 + $0xa0] sm:$0xff]
    %v2270 = vld [vmem:[%s2248 + $0xa8] sm:$0xff]
    %v2271 = vld [vmem:[%s2248 + $0xb0] sm:$0xff]
    %v2272 = vld [vmem:[%s2248 + $0xb8] sm:$0xff]
    %v2273 = vld [vmem:[%s2248 + $0xc0] sm:$0xf]
    %v2275 = vsel %vm1003, %v2273, 0
    %2277 = vmatprep.subr.mxu0 0.0
    %2278 = vmatpush1.msra.mxu0 %v2264
    %2279 = vmatprep.subr.mxu0 0.0
    %2280 = vmatpush1.msra.mxu0 %v2263
    %2281 = vmatprep.subr.mxu0 0.0
    %2282 = vmatpush1.msra.mxu0 %v2262
    %2283 = vmatprep.subr.mxu0 0.0
    %2284 = vmatpush1.msra.mxu0 %v2261
    %2285 = vmatprep.subr.mxu0 0.0
    %2286 = vmatpush1.msra.mxu0 %v2260
    %2287 = vmatprep.subr.mxu0 0.0
    %2288 = vmatpush1.msra.mxu0 %v2259
    %2289 = vmatprep.subr.mxu0 0.0
    %2290 = vmatpush1.msra.mxu0 %v2258
    %2291 = vmatprep.subr.mxu0 0.0
    %2292 = vmatpush1.msra.mxu0 %v2257
    %2293 = vmatprep.subr.mxu0 0.0
    %2294 = vmatpush1.msra.mxu0 %v2256
    %2295 = vmatprep.subr.mxu0 0.0
    %2296 = vmatpush1.msra.mxu0 %v2255
    %2297 = vmatprep.subr.mxu0 0.0
    %2298 = vmatpush1.msra.mxu0 %v2254
    %2299 = vmatprep.subr.mxu0 0.0
    %2300 = vmatpush1.msra.mxu0 %v2253
    %2301 = vmatprep.subr.mxu0 0.0
    %2302 = vmatpush1.msra.mxu0 %v2252
    %2303 = vmatprep.subr.mxu0 0.0
    %2304 = vmatpush1.msra.mxu0 %v2251
    %2305 = vmatprep.subr.mxu0 0.0
    %2306 = vmatpush1.msra.mxu0 %v2250
    %2307 = vmatprep.subr.mxu0 0.0
    %2308 = vmatpush1.msra.mxu0 %v2249
    %2309 = vmatprep.subr.mxu0 0.0
    %2310 = vmatpush2.msra.mxu0 0.0
    %2311 = vmatprep.subr.mxu0 0.0
    %2312 = vmatpush2.msra.mxu0 0.0
    %2313 = vmatprep.subr.mxu0 0.0
    %2314 = vmatpush2.msra.mxu0 0.0
    %2315 = vmatprep.subr.mxu0 0.0
    %2316 = vmatpush2.msra.mxu0 0.0
    %2317 = vmatprep.subr.mxu0 0.0
    %2318 = vmatpush2.msra.mxu0 0.0
    %2319 = vmatprep.subr.mxu0 0.0
    %2320 = vmatpush2.msra.mxu0 0.0
    %2321 = vmatprep.subr.mxu0 0.0
    %2322 = vmatpush2.msra.mxu0 0.0
    %2323 = vmatprep.subr.mxu0 0.0
    %2324 = vmatpush2.msra.mxu0 %v2275
    %2325 = vmatprep.subr.mxu0 0.0
    %2326 = vmatpush2.msra.mxu0 %v2272
    %2327 = vmatprep.subr.mxu0 0.0
    %2328 = vmatpush2.msra.mxu0 %v2271
    %2329 = vmatprep.subr.mxu0 0.0
    %2330 = vmatpush2.msra.mxu0 %v2270
    %2331 = vmatprep.subr.mxu0 0.0
    %2332 = vmatpush2.msra.mxu0 %v2269
    %2333 = vmatprep.subr.mxu0 0.0
    %2334 = vmatpush2.msra.mxu0 %v2268
    %2335 = vmatprep.subr.mxu0 0.0
    %2336 = vmatpush2.msra.mxu0 %v2267
    %2337 = vmatprep.subr.mxu0 0.0
    %2338 = vmatpush2.msra.mxu0 %v2266
    %2339 = vmatprep.subr.mxu0 0.0
    %2340 = vmatpush2.msra.mxu0 %v2265
    %2341 = vmatprep.mubr.f32.mxu0 %v998
    %2342 = vmatmul.mubr.f32.gmra.mxu0 %v961
    %v2343 = vpop.f32.mrf.mxu0
    %v2344 = vadd.f32 0.0, %v2343
    %v2345 = vpop.f32.mrf.mxu0
    %2346 = vmatprep.mubr.f32.mxu0 %v1001
    %2347 = vmatmul.mubr.f32.gmra.mxu0 %v967
    %v2348 = vpop.f32.mrf.mxu0
    %v2349 = vadd.f32 0.0, %v2348
    %v2350 = vpop.f32.mrf.mxu0
    %2351 = vdwg.mxu0
    %s2352 = scalar_lea.vmem %s5, 192
    %v2353 = vld [vmem:[%s2352] sm:$0xff]
    %v2354 = vld [vmem:[%s2352 + $0x8] sm:$0xff]
    %v2355 = vld [vmem:[%s2352 + $0x10] sm:$0xff]
    %v2356 = vld [vmem:[%s2352 + $0x18] sm:$0xff]
    %v2358 = vsel %vm1195, %v2353, 0
    %v2361 = vsel %vm1195, %v2354, 0
    %v2364 = vsel %vm1195, %v2355, 0
    %v2367 = vsel %vm1195, %v2356, 0
    %v2370 = vsel %vm1003, %v2349, 0
    %2372 = vmatprep.subr.mxu0 0.0
    %2373 = vmatpush1.msra.mxu0 0.0
    %2374 = vmatprep.subr.mxu0 0.0
    %2375 = vmatpush1.msra.mxu0 0.0
    %2376 = vmatprep.subr.mxu0 0.0
    %2377 = vmatpush1.msra.mxu0 0.0
    %2378 = vmatprep.subr.mxu0 0.0
    %2379 = vmatpush1.msra.mxu0 0.0
    %2380 = vmatprep.subr.mxu0 0.0
    %2381 = vmatpush1.msra.mxu0 0.0
    %2382 = vmatprep.subr.mxu0 0.0
    %2383 = vmatpush1.msra.mxu0 0.0
    %2384 = vmatprep.subr.mxu0 0.0
    %2385 = vmatpush1.msra.mxu0 0.0
    %2386 = vmatprep.subr.mxu0 0.0
    %2387 = vmatpush1.msra.mxu0 0.0
    %2388 = vmatprep.subr.mxu0 0.0
    %2389 = vmatpush1.msra.mxu0 0.0
    %2390 = vmatprep.subr.mxu0 0.0
    %2391 = vmatpush1.msra.mxu0 0.0
    %2392 = vmatprep.subr.mxu0 0.0
    %2393 = vmatpush1.msra.mxu0 0.0
    %2394 = vmatprep.subr.mxu0 0.0
    %2395 = vmatpush1.msra.mxu0 0.0
    %2396 = vmatprep.subr.mxu0 0.0
    %2397 = vmatpush1.msra.mxu0 0.0
    %2398 = vmatprep.subr.mxu0 0.0
    %2399 = vmatpush1.msra.mxu0 0.0
    %2400 = vmatprep.subr.mxu0 0.0
    %2401 = vmatpush1.msra.mxu0 %v2370
    %2402 = vmatprep.subr.mxu0 0.0
    %2403 = vmatpush1.msra.mxu0 %v2344
    %2404 = vmatprep.subr.mxu0 0.0
    %2405 = vmatpush2.msra.mxu0 0.0
    %2406 = vmatprep.subr.mxu0 0.0
    %2407 = vmatpush2.msra.mxu0 0.0
    %2408 = vmatprep.subr.mxu0 0.0
    %2409 = vmatpush2.msra.mxu0 0.0
    %2410 = vmatprep.subr.mxu0 0.0
    %2411 = vmatpush2.msra.mxu0 0.0
    %2412 = vmatprep.subr.mxu0 0.0
    %2413 = vmatpush2.msra.mxu0 0.0
    %2414 = vmatprep.subr.mxu0 0.0
    %2415 = vmatpush2.msra.mxu0 0.0
    %2416 = vmatprep.subr.mxu0 0.0
    %2417 = vmatpush2.msra.mxu0 0.0
    %2418 = vmatprep.subr.mxu0 0.0
    %2419 = vmatpush2.msra.mxu0 0.0
    %2420 = vmatprep.subr.mxu0 0.0
    %2421 = vmatpush2.msra.mxu0 0.0
    %2422 = vmatprep.subr.mxu0 0.0
    %2423 = vmatpush2.msra.mxu0 0.0
    %2424 = vmatprep.subr.mxu0 0.0
    %2425 = vmatpush2.msra.mxu0 0.0
    %2426 = vmatprep.subr.mxu0 0.0
    %2427 = vmatpush2.msra.mxu0 0.0
    %2428 = vmatprep.subr.mxu0 0.0
    %2429 = vmatpush2.msra.mxu0 0.0
    %2430 = vmatprep.subr.mxu0 0.0
    %2431 = vmatpush2.msra.mxu0 0.0
    %2432 = vmatprep.subr.mxu0 0.0
    %2433 = vmatpush2.msra.mxu0 0.0
    %2434 = vmatprep.subr.mxu0 0.0
    %2435 = vmatpush2.msra.mxu0 0.0
    %2436 = vmatprep.mubr.f32.mxu0 0.0
    %2437 = vmatmul.mubr.f32.gmra.mxu0 %v2358
    %v2438 = vpop.f32.mrf.mxu0
    %v2439 = vadd.f32 0.0, %v2438
    %v2440 = vpop.f32.mrf.mxu0
    %2441 = vmatprep.mubr.f32.mxu0 0.0
    %2442 = vmatmul.mubr.f32.gmra.mxu0 %v2361
    %v2443 = vpop.f32.mrf.mxu0
    %v2444 = vadd.f32 0.0, %v2443
    %v2445 = vpop.f32.mrf.mxu0
    %2446 = vmatprep.mubr.f32.mxu0 0.0
    %2447 = vmatmul.mubr.f32.gmra.mxu0 %v2364
    %v2448 = vpop.f32.mrf.mxu0
    %v2449 = vadd.f32 0.0, %v2448
    %v2450 = vpop.f32.mrf.mxu0
    %2451 = vmatprep.mubr.f32.mxu0 0.0
    %2452 = vmatmul.mubr.f32.gmra.mxu0 %v2367
    %v2453 = vpop.f32.mrf.mxu0
    %v2454 = vadd.f32 0.0, %v2453
    %v2455 = vpop.f32.mrf.mxu0
    %2456 = vdwg.mxu0
    %v2457 = vadd.f32 %v2244, %v2439
    %v2458 = vadd.f32 %v2245, %v2444
    %v2459 = vadd.f32 %v2246, %v2449
    %v2460 = vadd.f32 %v2247, %v2454
    %s2461 = scalar_lea.vmem %s4, 1400
    %v2462 = vld [vmem:[%s2461] sm:$0xff]
    %v2463 = vld [vmem:[%s2461 + $0x8] sm:$0xff]
    %v2464 = vld [vmem:[%s2461 + $0x10] sm:$0xff]
    %v2465 = vld [vmem:[%s2461 + $0x18] sm:$0xff]
    %v2466 = vld [vmem:[%s2461 + $0x20] sm:$0xff]
    %v2467 = vld [vmem:[%s2461 + $0x28] sm:$0xff]
    %v2468 = vld [vmem:[%s2461 + $0x30] sm:$0xff]
    %v2469 = vld [vmem:[%s2461 + $0x38] sm:$0xff]
    %v2470 = vld [vmem:[%s2461 + $0x40] sm:$0xff]
    %v2471 = vld [vmem:[%s2461 + $0x48] sm:$0xff]
    %v2472 = vld [vmem:[%s2461 + $0x50] sm:$0xff]
    %v2473 = vld [vmem:[%s2461 + $0x58] sm:$0xff]
    %v2474 = vld [vmem:[%s2461 + $0x60] sm:$0xff]
    %v2475 = vld [vmem:[%s2461 + $0x68] sm:$0xff]
    %v2476 = vld [vmem:[%s2461 + $0x70] sm:$0xff]
    %v2477 = vld [vmem:[%s2461 + $0x78] sm:$0xff]
    %v2478 = vld [vmem:[%s2461 + $0x80] sm:$0xff]
    %v2479 = vld [vmem:[%s2461 + $0x88] sm:$0xff]
    %v2480 = vld [vmem:[%s2461 + $0x90] sm:$0xff]
    %v2481 = vld [vmem:[%s2461 + $0x98] sm:$0xff]
    %v2482 = vld [vmem:[%s2461 + $0xa0] sm:$0xff]
    %v2483 = vld [vmem:[%s2461 + $0xa8] sm:$0xff]
    %v2484 = vld [vmem:[%s2461 + $0xb0] sm:$0xff]
    %v2485 = vld [vmem:[%s2461 + $0xb8] sm:$0xff]
    %v2486 = vld [vmem:[%s2461 + $0xc0] sm:$0xf]
    %v2488 = vsel %vm1003, %v2486, 0
    %2490 = vmatprep.subr.mxu0 0.0
    %2491 = vmatpush1.msra.mxu0 %v2477
    %2492 = vmatprep.subr.mxu0 0.0
    %2493 = vmatpush1.msra.mxu0 %v2476
    %2494 = vmatprep.subr.mxu0 0.0
    %2495 = vmatpush1.msra.mxu0 %v2475
    %2496 = vmatprep.subr.mxu0 0.0
    %2497 = vmatpush1.msra.mxu0 %v2474
    %2498 = vmatprep.subr.mxu0 0.0
    %2499 = vmatpush1.msra.mxu0 %v2473
    %2500 = vmatprep.subr.mxu0 0.0
    %2501 = vmatpush1.msra.mxu0 %v2472
    %2502 = vmatprep.subr.mxu0 0.0
    %2503 = vmatpush1.msra.mxu0 %v2471
    %2504 = vmatprep.subr.mxu0 0.0
    %2505 = vmatpush1.msra.mxu0 %v2470
    %2506 = vmatprep.subr.mxu0 0.0
    %2507 = vmatpush1.msra.mxu0 %v2469
    %2508 = vmatprep.subr.mxu0 0.0
    %2509 = vmatpush1.msra.mxu0 %v2468
    %2510 = vmatprep.subr.mxu0 0.0
    %2511 = vmatpush1.msra.mxu0 %v2467
    %2512 = vmatprep.subr.mxu0 0.0
    %2513 = vmatpush1.msra.mxu0 %v2466
    %2514 = vmatprep.subr.mxu0 0.0
    %2515 = vmatpush1.msra.mxu0 %v2465
    %2516 = vmatprep.subr.mxu0 0.0
    %2517 = vmatpush1.msra.mxu0 %v2464
    %2518 = vmatprep.subr.mxu0 0.0
    %2519 = vmatpush1.msra.mxu0 %v2463
    %2520 = vmatprep.subr.mxu0 0.0
    %2521 = vmatpush1.msra.mxu0 %v2462
    %2522 = vmatprep.subr.mxu0 0.0
    %2523 = vmatpush2.msra.mxu0 0.0
    %2524 = vmatprep.subr.mxu0 0.0
    %2525 = vmatpush2.msra.mxu0 0.0
    %2526 = vmatprep.subr.mxu0 0.0
    %2527 = vmatpush2.msra.mxu0 0.0
    %2528 = vmatprep.subr.mxu0 0.0
    %2529 = vmatpush2.msra.mxu0 0.0
    %2530 = vmatprep.subr.mxu0 0.0
    %2531 = vmatpush2.msra.mxu0 0.0
    %2532 = vmatprep.subr.mxu0 0.0
    %2533 = vmatpush2.msra.mxu0 0.0
    %2534 = vmatprep.subr.mxu0 0.0
    %2535 = vmatpush2.msra.mxu0 0.0
    %2536 = vmatprep.subr.mxu0 0.0
    %2537 = vmatpush2.msra.mxu0 %v2488
    %2538 = vmatprep.subr.mxu0 0.0
    %2539 = vmatpush2.msra.mxu0 %v2485
    %2540 = vmatprep.subr.mxu0 0.0
    %2541 = vmatpush2.msra.mxu0 %v2484
    %2542 = vmatprep.subr.mxu0 0.0
    %2543 = vmatpush2.msra.mxu0 %v2483
    %2544 = vmatprep.subr.mxu0 0.0
    %2545 = vmatpush2.msra.mxu0 %v2482
    %2546 = vmatprep.subr.mxu0 0.0
    %2547 = vmatpush2.msra.mxu0 %v2481
    %2548 = vmatprep.subr.mxu0 0.0
    %2549 = vmatpush2.msra.mxu0 %v2480
    %2550 = vmatprep.subr.mxu0 0.0
    %2551 = vmatpush2.msra.mxu0 %v2479
    %2552 = vmatprep.subr.mxu0 0.0
    %2553 = vmatpush2.msra.mxu0 %v2478
    %2554 = vmatprep.mubr.f32.mxu0 %v998
    %2555 = vmatmul.mubr.f32.gmra.mxu0 %v961
    %v2556 = vpop.f32.mrf.mxu0
    %v2557 = vadd.f32 0.0, %v2556
    %v2558 = vpop.f32.mrf.mxu0
    %2559 = vmatprep.mubr.f32.mxu0 %v1001
    %2560 = vmatmul.mubr.f32.gmra.mxu0 %v967
    %v2561 = vpop.f32.mrf.mxu0
    %v2562 = vadd.f32 0.0, %v2561
    %v2563 = vpop.f32.mrf.mxu0
    %2564 = vdwg.mxu0
    %s2565 = scalar_lea.vmem %s5, 224
    %v2566 = vld [vmem:[%s2565] sm:$0xff]
    %v2567 = vld [vmem:[%s2565 + $0x8] sm:$0xff]
    %v2568 = vld [vmem:[%s2565 + $0x10] sm:$0xff]
    %v2569 = vld [vmem:[%s2565 + $0x18] sm:$0xff]
    %v2571 = vsel %vm1195, %v2566, 0
    %v2574 = vsel %vm1195, %v2567, 0
    %v2577 = vsel %vm1195, %v2568, 0
    %v2580 = vsel %vm1195, %v2569, 0
    %v2583 = vsel %vm1003, %v2562, 0
    %2585 = vmatprep.subr.mxu0 0.0
    %2586 = vmatpush1.msra.mxu0 0.0
    %2587 = vmatprep.subr.mxu0 0.0
    %2588 = vmatpush1.msra.mxu0 0.0
    %2589 = vmatprep.subr.mxu0 0.0
    %2590 = vmatpush1.msra.mxu0 0.0
    %2591 = vmatprep.subr.mxu0 0.0
    %2592 = vmatpush1.msra.mxu0 0.0
    %2593 = vmatprep.subr.mxu0 0.0
    %2594 = vmatpush1.msra.mxu0 0.0
    %2595 = vmatprep.subr.mxu0 0.0
    %2596 = vmatpush1.msra.mxu0 0.0
    %2597 = vmatprep.subr.mxu0 0.0
    %2598 = vmatpush1.msra.mxu0 0.0
    %2599 = vmatprep.subr.mxu0 0.0
    %2600 = vmatpush1.msra.mxu0 0.0
    %2601 = vmatprep.subr.mxu0 0.0
    %2602 = vmatpush1.msra.mxu0 0.0
    %2603 = vmatprep.subr.mxu0 0.0
    %2604 = vmatpush1.msra.mxu0 0.0
    %2605 = vmatprep.subr.mxu0 0.0
    %2606 = vmatpush1.msra.mxu0 0.0
    %2607 = vmatprep.subr.mxu0 0.0
    %2608 = vmatpush1.msra.mxu0 0.0
    %2609 = vmatprep.subr.mxu0 0.0
    %2610 = vmatpush1.msra.mxu0 0.0
    %2611 = vmatprep.subr.mxu0 0.0
    %2612 = vmatpush1.msra.mxu0 0.0
    %2613 = vmatprep.subr.mxu0 0.0
    %2614 = vmatpush1.msra.mxu0 %v2583
    %2615 = vmatprep.subr.mxu0 0.0
    %2616 = vmatpush1.msra.mxu0 %v2557
    %2617 = vmatprep.subr.mxu0 0.0
    %2618 = vmatpush2.msra.mxu0 0.0
    %2619 = vmatprep.subr.mxu0 0.0
    %2620 = vmatpush2.msra.mxu0 0.0
    %2621 = vmatprep.subr.mxu0 0.0
    %2622 = vmatpush2.msra.mxu0 0.0
    %2623 = vmatprep.subr.mxu0 0.0
    %2624 = vmatpush2.msra.mxu0 0.0
    %2625 = vmatprep.subr.mxu0 0.0
    %2626 = vmatpush2.msra.mxu0 0.0
    %2627 = vmatprep.subr.mxu0 0.0
    %2628 = vmatpush2.msra.mxu0 0.0
    %2629 = vmatprep.subr.mxu0 0.0
    %2630 = vmatpush2.msra.mxu0 0.0
    %2631 = vmatprep.subr.mxu0 0.0
    %2632 = vmatpush2.msra.mxu0 0.0
    %2633 = vmatprep.subr.mxu0 0.0
    %2634 = vmatpush2.msra.mxu0 0.0
    %2635 = vmatprep.subr.mxu0 0.0
    %2636 = vmatpush2.msra.mxu0 0.0
    %2637 = vmatprep.subr.mxu0 0.0
    %2638 = vmatpush2.msra.mxu0 0.0
    %2639 = vmatprep.subr.mxu0 0.0
    %2640 = vmatpush2.msra.mxu0 0.0
    %2641 = vmatprep.subr.mxu0 0.0
    %2642 = vmatpush2.msra.mxu0 0.0
    %2643 = vmatprep.subr.mxu0 0.0
    %2644 = vmatpush2.msra.mxu0 0.0
    %2645 = vmatprep.subr.mxu0 0.0
    %2646 = vmatpush2.msra.mxu0 0.0
    %2647 = vmatprep.subr.mxu0 0.0
    %2648 = vmatpush2.msra.mxu0 0.0
    %2649 = vmatprep.mubr.f32.mxu0 0.0
    %2650 = vmatmul.mubr.f32.gmra.mxu0 %v2571
    %v2651 = vpop.f32.mrf.mxu0
    %v2652 = vadd.f32 0.0, %v2651
    %v2653 = vpop.f32.mrf.mxu0
    %2654 = vmatprep.mubr.f32.mxu0 0.0
    %2655 = vmatmul.mubr.f32.gmra.mxu0 %v2574
    %v2656 = vpop.f32.mrf.mxu0
    %v2657 = vadd.f32 0.0, %v2656
    %v2658 = vpop.f32.mrf.mxu0
    %2659 = vmatprep.mubr.f32.mxu0 0.0
    %2660 = vmatmul.mubr.f32.gmra.mxu0 %v2577
    %v2661 = vpop.f32.mrf.mxu0
    %v2662 = vadd.f32 0.0, %v2661
    %v2663 = vpop.f32.mrf.mxu0
    %2664 = vmatprep.mubr.f32.mxu0 0.0
    %2665 = vmatmul.mubr.f32.gmra.mxu0 %v2580
    %v2666 = vpop.f32.mrf.mxu0
    %v2667 = vadd.f32 0.0, %v2666
    %v2668 = vpop.f32.mrf.mxu0
    %2669 = vdwg.mxu0
    %v2670 = vadd.f32 %v2457, %v2652
    %v2671 = vadd.f32 %v2458, %v2657
    %v2672 = vadd.f32 %v2459, %v2662
    %v2673 = vadd.f32 %v2460, %v2667
    %s2674 = scalar_lea.vmem %s4, 1600
    %v2675 = vld [vmem:[%s2674] sm:$0xff]
    %v2676 = vld [vmem:[%s2674 + $0x8] sm:$0xff]
    %v2677 = vld [vmem:[%s2674 + $0x10] sm:$0xff]
    %v2678 = vld [vmem:[%s2674 + $0x18] sm:$0xff]
    %v2679 = vld [vmem:[%s2674 + $0x20] sm:$0xff]
    %v2680 = vld [vmem:[%s2674 + $0x28] sm:$0xff]
    %v2681 = vld [vmem:[%s2674 + $0x30] sm:$0xff]
    %v2682 = vld [vmem:[%s2674 + $0x38] sm:$0xff]
    %v2683 = vld [vmem:[%s2674 + $0x40] sm:$0xff]
    %v2684 = vld [vmem:[%s2674 + $0x48] sm:$0xff]
    %v2685 = vld [vmem:[%s2674 + $0x50] sm:$0xff]
    %v2686 = vld [vmem:[%s2674 + $0x58] sm:$0xff]
    %v2687 = vld [vmem:[%s2674 + $0x60] sm:$0xff]
    %v2688 = vld [vmem:[%s2674 + $0x68] sm:$0xff]
    %v2689 = vld [vmem:[%s2674 + $0x70] sm:$0xff]
    %v2690 = vld [vmem:[%s2674 + $0x78] sm:$0xff]
    %v2691 = vld [vmem:[%s2674 + $0x80] sm:$0xff]
    %v2692 = vld [vmem:[%s2674 + $0x88] sm:$0xff]
    %v2693 = vld [vmem:[%s2674 + $0x90] sm:$0xff]
    %v2694 = vld [vmem:[%s2674 + $0x98] sm:$0xff]
    %v2695 = vld [vmem:[%s2674 + $0xa0] sm:$0xff]
    %v2696 = vld [vmem:[%s2674 + $0xa8] sm:$0xff]
    %v2697 = vld [vmem:[%s2674 + $0xb0] sm:$0xff]
    %v2698 = vld [vmem:[%s2674 + $0xb8] sm:$0xff]
    %v2699 = vld [vmem:[%s2674 + $0xc0] sm:$0xf]
    %v2701 = vsel %vm1003, %v2699, 0
    %2703 = vmatprep.subr.mxu0 0.0
    %2704 = vmatpush1.msra.mxu0 %v2690
    %2705 = vmatprep.subr.mxu0 0.0
    %2706 = vmatpush1.msra.mxu0 %v2689
    %2707 = vmatprep.subr.mxu0 0.0
    %2708 = vmatpush1.msra.mxu0 %v2688
    %2709 = vmatprep.subr.mxu0 0.0
    %2710 = vmatpush1.msra.mxu0 %v2687
    %2711 = vmatprep.subr.mxu0 0.0
    %2712 = vmatpush1.msra.mxu0 %v2686
    %2713 = vmatprep.subr.mxu0 0.0
    %2714 = vmatpush1.msra.mxu0 %v2685
    %2715 = vmatprep.subr.mxu0 0.0
    %2716 = vmatpush1.msra.mxu0 %v2684
    %2717 = vmatprep.subr.mxu0 0.0
    %2718 = vmatpush1.msra.mxu0 %v2683
    %2719 = vmatprep.subr.mxu0 0.0
    %2720 = vmatpush1.msra.mxu0 %v2682
    %2721 = vmatprep.subr.mxu0 0.0
    %2722 = vmatpush1.msra.mxu0 %v2681
    %2723 = vmatprep.subr.mxu0 0.0
    %2724 = vmatpush1.msra.mxu0 %v2680
    %2725 = vmatprep.subr.mxu0 0.0
    %2726 = vmatpush1.msra.mxu0 %v2679
    %2727 = vmatprep.subr.mxu0 0.0
    %2728 = vmatpush1.msra.mxu0 %v2678
    %2729 = vmatprep.subr.mxu0 0.0
    %2730 = vmatpush1.msra.mxu0 %v2677
    %2731 = vmatprep.subr.mxu0 0.0
    %2732 = vmatpush1.msra.mxu0 %v2676
    %2733 = vmatprep.subr.mxu0 0.0
    %2734 = vmatpush1.msra.mxu0 %v2675
    %2735 = vmatprep.subr.mxu0 0.0
    %2736 = vmatpush2.msra.mxu0 0.0
    %2737 = vmatprep.subr.mxu0 0.0
    %2738 = vmatpush2.msra.mxu0 0.0
    %2739 = vmatprep.subr.mxu0 0.0
    %2740 = vmatpush2.msra.mxu0 0.0
    %2741 = vmatprep.subr.mxu0 0.0
    %2742 = vmatpush2.msra.mxu0 0.0
    %2743 = vmatprep.subr.mxu0 0.0
    %2744 = vmatpush2.msra.mxu0 0.0
    %2745 = vmatprep.subr.mxu0 0.0
    %2746 = vmatpush2.msra.mxu0 0.0
    %2747 = vmatprep.subr.mxu0 0.0
    %2748 = vmatpush2.msra.mxu0 0.0
    %2749 = vmatprep.subr.mxu0 0.0
    %2750 = vmatpush2.msra.mxu0 %v2701
    %2751 = vmatprep.subr.mxu0 0.0
    %2752 = vmatpush2.msra.mxu0 %v2698
    %2753 = vmatprep.subr.mxu0 0.0
    %2754 = vmatpush2.msra.mxu0 %v2697
    %2755 = vmatprep.subr.mxu0 0.0
    %2756 = vmatpush2.msra.mxu0 %v2696
    %2757 = vmatprep.subr.mxu0 0.0
    %2758 = vmatpush2.msra.mxu0 %v2695
    %2759 = vmatprep.subr.mxu0 0.0
    %2760 = vmatpush2.msra.mxu0 %v2694
    %2761 = vmatprep.subr.mxu0 0.0
    %2762 = vmatpush2.msra.mxu0 %v2693
    %2763 = vmatprep.subr.mxu0 0.0
    %2764 = vmatpush2.msra.mxu0 %v2692
    %2765 = vmatprep.subr.mxu0 0.0
    %2766 = vmatpush2.msra.mxu0 %v2691
    %2767 = vmatprep.mubr.f32.mxu0 %v998
    %2768 = vmatmul.mubr.f32.gmra.mxu0 %v961
    %v2769 = vpop.f32.mrf.mxu0
    %v2770 = vadd.f32 0.0, %v2769
    %v2771 = vpop.f32.mrf.mxu0
    %2772 = vmatprep.mubr.f32.mxu0 %v1001
    %2773 = vmatmul.mubr.f32.gmra.mxu0 %v967
    %v2774 = vpop.f32.mrf.mxu0
    %v2775 = vadd.f32 0.0, %v2774
    %v2776 = vpop.f32.mrf.mxu0
    %2777 = vdwg.mxu0
    %s2778 = scalar_lea.vmem %s5, 256
    %v2779 = vld [vmem:[%s2778] sm:$0xff]
    %v2780 = vld [vmem:[%s2778 + $0x8] sm:$0xff]
    %v2781 = vld [vmem:[%s2778 + $0x10] sm:$0xff]
    %v2782 = vld [vmem:[%s2778 + $0x18] sm:$0xff]
    %v2784 = vsel %vm1195, %v2779, 0
    %v2787 = vsel %vm1195, %v2780, 0
    %v2790 = vsel %vm1195, %v2781, 0
    %v2793 = vsel %vm1195, %v2782, 0
    %v2796 = vsel %vm1003, %v2775, 0
    %2798 = vmatprep.subr.mxu0 0.0
    %2799 = vmatpush1.msra.mxu0 0.0
    %2800 = vmatprep.subr.mxu0 0.0
    %2801 = vmatpush1.msra.mxu0 0.0
    %2802 = vmatprep.subr.mxu0 0.0
    %2803 = vmatpush1.msra.mxu0 0.0
    %2804 = vmatprep.subr.mxu0 0.0
    %2805 = vmatpush1.msra.mxu0 0.0
    %2806 = vmatprep.subr.mxu0 0.0
    %2807 = vmatpush1.msra.mxu0 0.0
    %2808 = vmatprep.subr.mxu0 0.0
    %2809 = vmatpush1.msra.mxu0 0.0
    %2810 = vmatprep.subr.mxu0 0.0
    %2811 = vmatpush1.msra.mxu0 0.0
    %2812 = vmatprep.subr.mxu0 0.0
    %2813 = vmatpush1.msra.mxu0 0.0
    %2814 = vmatprep.subr.mxu0 0.0
    %2815 = vmatpush1.msra.mxu0 0.0
    %2816 = vmatprep.subr.mxu0 0.0
    %2817 = vmatpush1.msra.mxu0 0.0
    %2818 = vmatprep.subr.mxu0 0.0
    %2819 = vmatpush1.msra.mxu0 0.0
    %2820 = vmatprep.subr.mxu0 0.0
    %2821 = vmatpush1.msra.mxu0 0.0
    %2822 = vmatprep.subr.mxu0 0.0
    %2823 = vmatpush1.msra.mxu0 0.0
    %2824 = vmatprep.subr.mxu0 0.0
    %2825 = vmatpush1.msra.mxu0 0.0
    %2826 = vmatprep.subr.mxu0 0.0
    %2827 = vmatpush1.msra.mxu0 %v2796
    %2828 = vmatprep.subr.mxu0 0.0
    %2829 = vmatpush1.msra.mxu0 %v2770
    %2830 = vmatprep.subr.mxu0 0.0
    %2831 = vmatpush2.msra.mxu0 0.0
    %2832 = vmatprep.subr.mxu0 0.0
    %2833 = vmatpush2.msra.mxu0 0.0
    %2834 = vmatprep.subr.mxu0 0.0
    %2835 = vmatpush2.msra.mxu0 0.0
    %2836 = vmatprep.subr.mxu0 0.0
    %2837 = vmatpush2.msra.mxu0 0.0
    %2838 = vmatprep.subr.mxu0 0.0
    %2839 = vmatpush2.msra.mxu0 0.0
    %2840 = vmatprep.subr.mxu0 0.0
    %2841 = vmatpush2.msra.mxu0 0.0
    %2842 = vmatprep.subr.mxu0 0.0
    %2843 = vmatpush2.msra.mxu0 0.0
    %2844 = vmatprep.subr.mxu0 0.0
    %2845 = vmatpush2.msra.mxu0 0.0
    %2846 = vmatprep.subr.mxu0 0.0
    %2847 = vmatpush2.msra.mxu0 0.0
    %2848 = vmatprep.subr.mxu0 0.0
    %2849 = vmatpush2.msra.mxu0 0.0
    %2850 = vmatprep.subr.mxu0 0.0
    %2851 = vmatpush2.msra.mxu0 0.0
    %2852 = vmatprep.subr.mxu0 0.0
    %2853 = vmatpush2.msra.mxu0 0.0
    %2854 = vmatprep.subr.mxu0 0.0
    %2855 = vmatpush2.msra.mxu0 0.0
    %2856 = vmatprep.subr.mxu0 0.0
    %2857 = vmatpush2.msra.mxu0 0.0
    %2858 = vmatprep.subr.mxu0 0.0
    %2859 = vmatpush2.msra.mxu0 0.0
    %2860 = vmatprep.subr.mxu0 0.0
    %2861 = vmatpush2.msra.mxu0 0.0
    %2862 = vmatprep.mubr.f32.mxu0 0.0
    %2863 = vmatmul.mubr.f32.gmra.mxu0 %v2784
    %v2864 = vpop.f32.mrf.mxu0
    %v2865 = vadd.f32 0.0, %v2864
    %v2866 = vpop.f32.mrf.mxu0
    %2867 = vmatprep.mubr.f32.mxu0 0.0
    %2868 = vmatmul.mubr.f32.gmra.mxu0 %v2787
    %v2869 = vpop.f32.mrf.mxu0
    %v2870 = vadd.f32 0.0, %v2869
    %v2871 = vpop.f32.mrf.mxu0
    %2872 = vmatprep.mubr.f32.mxu0 0.0
    %2873 = vmatmul.mubr.f32.gmra.mxu0 %v2790
    %v2874 = vpop.f32.mrf.mxu0
    %v2875 = vadd.f32 0.0, %v2874
    %v2876 = vpop.f32.mrf.mxu0
    %2877 = vmatprep.mubr.f32.mxu0 0.0
    %2878 = vmatmul.mubr.f32.gmra.mxu0 %v2793
    %v2879 = vpop.f32.mrf.mxu0
    %v2880 = vadd.f32 0.0, %v2879
    %v2881 = vpop.f32.mrf.mxu0
    %2882 = vdwg.mxu0
    %v2883 = vadd.f32 %v2670, %v2865
    %v2884 = vadd.f32 %v2671, %v2870
    %v2885 = vadd.f32 %v2672, %v2875
    %v2886 = vadd.f32 %v2673, %v2880
    %s2887 = scalar_lea.vmem %s4, 1800
    %v2888 = vld [vmem:[%s2887] sm:$0xff]
    %v2889 = vld [vmem:[%s2887 + $0x8] sm:$0xff]
    %v2890 = vld [vmem:[%s2887 + $0x10] sm:$0xff]
    %v2891 = vld [vmem:[%s2887 + $0x18] sm:$0xff]
    %v2892 = vld [vmem:[%s2887 + $0x20] sm:$0xff]
    %v2893 = vld [vmem:[%s2887 + $0x28] sm:$0xff]
    %v2894 = vld [vmem:[%s2887 + $0x30] sm:$0xff]
    %v2895 = vld [vmem:[%s2887 + $0x38] sm:$0xff]
    %v2896 = vld [vmem:[%s2887 + $0x40] sm:$0xff]
    %v2897 = vld [vmem:[%s2887 + $0x48] sm:$0xff]
    %v2898 = vld [vmem:[%s2887 + $0x50] sm:$0xff]
    %v2899 = vld [vmem:[%s2887 + $0x58] sm:$0xff]
    %v2900 = vld [vmem:[%s2887 + $0x60] sm:$0xff]
    %v2901 = vld [vmem:[%s2887 + $0x68] sm:$0xff]
    %v2902 = vld [vmem:[%s2887 + $0x70] sm:$0xff]
    %v2903 = vld [vmem:[%s2887 + $0x78] sm:$0xff]
    %v2904 = vld [vmem:[%s2887 + $0x80] sm:$0xff]
    %v2905 = vld [vmem:[%s2887 + $0x88] sm:$0xff]
    %v2906 = vld [vmem:[%s2887 + $0x90] sm:$0xff]
    %v2907 = vld [vmem:[%s2887 + $0x98] sm:$0xff]
    %v2908 = vld [vmem:[%s2887 + $0xa0] sm:$0xff]
    %v2909 = vld [vmem:[%s2887 + $0xa8] sm:$0xff]
    %v2910 = vld [vmem:[%s2887 + $0xb0] sm:$0xff]
    %v2911 = vld [vmem:[%s2887 + $0xb8] sm:$0xff]
    %v2912 = vld [vmem:[%s2887 + $0xc0] sm:$0xf]
    %v2914 = vsel %vm1003, %v2912, 0
    %2916 = vmatprep.subr.mxu0 0.0
    %2917 = vmatpush1.msra.mxu0 %v2903
    %2918 = vmatprep.subr.mxu0 0.0
    %2919 = vmatpush1.msra.mxu0 %v2902
    %2920 = vmatprep.subr.mxu0 0.0
    %2921 = vmatpush1.msra.mxu0 %v2901
    %2922 = vmatprep.subr.mxu0 0.0
    %2923 = vmatpush1.msra.mxu0 %v2900
    %2924 = vmatprep.subr.mxu0 0.0
    %2925 = vmatpush1.msra.mxu0 %v2899
    %2926 = vmatprep.subr.mxu0 0.0
    %2927 = vmatpush1.msra.mxu0 %v2898
    %2928 = vmatprep.subr.mxu0 0.0
    %2929 = vmatpush1.msra.mxu0 %v2897
    %2930 = vmatprep.subr.mxu0 0.0
    %2931 = vmatpush1.msra.mxu0 %v2896
    %2932 = vmatprep.subr.mxu0 0.0
    %2933 = vmatpush1.msra.mxu0 %v2895
    %2934 = vmatprep.subr.mxu0 0.0
    %2935 = vmatpush1.msra.mxu0 %v2894
    %2936 = vmatprep.subr.mxu0 0.0
    %2937 = vmatpush1.msra.mxu0 %v2893
    %2938 = vmatprep.subr.mxu0 0.0
    %2939 = vmatpush1.msra.mxu0 %v2892
    %2940 = vmatprep.subr.mxu0 0.0
    %2941 = vmatpush1.msra.mxu0 %v2891
    %2942 = vmatprep.subr.mxu0 0.0
    %2943 = vmatpush1.msra.mxu0 %v2890
    %2944 = vmatprep.subr.mxu0 0.0
    %2945 = vmatpush1.msra.mxu0 %v2889
    %2946 = vmatprep.subr.mxu0 0.0
    %2947 = vmatpush1.msra.mxu0 %v2888
    %2948 = vmatprep.subr.mxu0 0.0
    %2949 = vmatpush2.msra.mxu0 0.0
    %2950 = vmatprep.subr.mxu0 0.0
    %2951 = vmatpush2.msra.mxu0 0.0
    %2952 = vmatprep.subr.mxu0 0.0
    %2953 = vmatpush2.msra.mxu0 0.0
    %2954 = vmatprep.subr.mxu0 0.0
    %2955 = vmatpush2.msra.mxu0 0.0
    %2956 = vmatprep.subr.mxu0 0.0
    %2957 = vmatpush2.msra.mxu0 0.0
    %2958 = vmatprep.subr.mxu0 0.0
    %2959 = vmatpush2.msra.mxu0 0.0
    %2960 = vmatprep.subr.mxu0 0.0
    %2961 = vmatpush2.msra.mxu0 0.0
    %2962 = vmatprep.subr.mxu0 0.0
    %2963 = vmatpush2.msra.mxu0 %v2914
    %2964 = vmatprep.subr.mxu0 0.0
    %2965 = vmatpush2.msra.mxu0 %v2911
    %2966 = vmatprep.subr.mxu0 0.0
    %2967 = vmatpush2.msra.mxu0 %v2910
    %2968 = vmatprep.subr.mxu0 0.0
    %2969 = vmatpush2.msra.mxu0 %v2909
    %2970 = vmatprep.subr.mxu0 0.0
    %2971 = vmatpush2.msra.mxu0 %v2908
    %2972 = vmatprep.subr.mxu0 0.0
    %2973 = vmatpush2.msra.mxu0 %v2907
    %2974 = vmatprep.subr.mxu0 0.0
    %2975 = vmatpush2.msra.mxu0 %v2906
    %2976 = vmatprep.subr.mxu0 0.0
    %2977 = vmatpush2.msra.mxu0 %v2905
    %2978 = vmatprep.subr.mxu0 0.0
    %2979 = vmatpush2.msra.mxu0 %v2904
    %2980 = vmatprep.mubr.f32.mxu0 %v998
    %2981 = vmatmul.mubr.f32.gmra.mxu0 %v961
    %v2982 = vpop.f32.mrf.mxu0
    %v2983 = vadd.f32 0.0, %v2982
    %v2984 = vpop.f32.mrf.mxu0
    %2985 = vmatprep.mubr.f32.mxu0 %v1001
    %2986 = vmatmul.mubr.f32.gmra.mxu0 %v967
    %v2987 = vpop.f32.mrf.mxu0
    %v2988 = vadd.f32 0.0, %v2987
    %v2989 = vpop.f32.mrf.mxu0
    %2990 = vdwg.mxu0
    %s2991 = scalar_lea.vmem %s5, 288
    %v2992 = vld [vmem:[%s2991] sm:$0xff]
    %v2993 = vld [vmem:[%s2991 + $0x8] sm:$0xff]
    %v2994 = vld [vmem:[%s2991 + $0x10] sm:$0xff]
    %v2995 = vld [vmem:[%s2991 + $0x18] sm:$0xff]
    %v2997 = vsel %vm1195, %v2992, 0
    %v3000 = vsel %vm1195, %v2993, 0
    %v3003 = vsel %vm1195, %v2994, 0
    %v3006 = vsel %vm1195, %v2995, 0
    %v3009 = vsel %vm1003, %v2988, 0
    %3011 = vmatprep.subr.mxu0 0.0
    %3012 = vmatpush1.msra.mxu0 0.0
    %3013 = vmatprep.subr.mxu0 0.0
    %3014 = vmatpush1.msra.mxu0 0.0
    %3015 = vmatprep.subr.mxu0 0.0
    %3016 = vmatpush1.msra.mxu0 0.0
    %3017 = vmatprep.subr.mxu0 0.0
    %3018 = vmatpush1.msra.mxu0 0.0
    %3019 = vmatprep.subr.mxu0 0.0
    %3020 = vmatpush1.msra.mxu0 0.0
    %3021 = vmatprep.subr.mxu0 0.0
    %3022 = vmatpush1.msra.mxu0 0.0
    %3023 = vmatprep.subr.mxu0 0.0
    %3024 = vmatpush1.msra.mxu0 0.0
    %3025 = vmatprep.subr.mxu0 0.0
    %3026 = vmatpush1.msra.mxu0 0.0
    %3027 = vmatprep.subr.mxu0 0.0
    %3028 = vmatpush1.msra.mxu0 0.0
    %3029 = vmatprep.subr.mxu0 0.0
    %3030 = vmatpush1.msra.mxu0 0.0
    %3031 = vmatprep.subr.mxu0 0.0
    %3032 = vmatpush1.msra.mxu0 0.0
    %3033 = vmatprep.subr.mxu0 0.0
    %3034 = vmatpush1.msra.mxu0 0.0
    %3035 = vmatprep.subr.mxu0 0.0
    %3036 = vmatpush1.msra.mxu0 0.0
    %3037 = vmatprep.subr.mxu0 0.0
    %3038 = vmatpush1.msra.mxu0 0.0
    %3039 = vmatprep.subr.mxu0 0.0
    %3040 = vmatpush1.msra.mxu0 %v3009
    %3041 = vmatprep.subr.mxu0 0.0
    %3042 = vmatpush1.msra.mxu0 %v2983
    %3043 = vmatprep.subr.mxu0 0.0
    %3044 = vmatpush2.msra.mxu0 0.0
    %3045 = vmatprep.subr.mxu0 0.0
    %3046 = vmatpush2.msra.mxu0 0.0
    %3047 = vmatprep.subr.mxu0 0.0
    %3048 = vmatpush2.msra.mxu0 0.0
    %3049 = vmatprep.subr.mxu0 0.0
    %3050 = vmatpush2.msra.mxu0 0.0
    %3051 = vmatprep.subr.mxu0 0.0
    %3052 = vmatpush2.msra.mxu0 0.0
    %3053 = vmatprep.subr.mxu0 0.0
    %3054 = vmatpush2.msra.mxu0 0.0
    %3055 = vmatprep.subr.mxu0 0.0
    %3056 = vmatpush2.msra.mxu0 0.0
    %3057 = vmatprep.subr.mxu0 0.0
    %3058 = vmatpush2.msra.mxu0 0.0
    %3059 = vmatprep.subr.mxu0 0.0
    %3060 = vmatpush2.msra.mxu0 0.0
    %3061 = vmatprep.subr.mxu0 0.0
    %3062 = vmatpush2.msra.mxu0 0.0
    %3063 = vmatprep.subr.mxu0 0.0
    %3064 = vmatpush2.msra.mxu0 0.0
    %3065 = vmatprep.subr.mxu0 0.0
    %3066 = vmatpush2.msra.mxu0 0.0
    %3067 = vmatprep.subr.mxu0 0.0
    %3068 = vmatpush2.msra.mxu0 0.0
    %3069 = vmatprep.subr.mxu0 0.0
    %3070 = vmatpush2.msra.mxu0 0.0
    %3071 = vmatprep.subr.mxu0 0.0
    %3072 = vmatpush2.msra.mxu0 0.0
    %3073 = vmatprep.subr.mxu0 0.0
    %3074 = vmatpush2.msra.mxu0 0.0
    %3075 = vmatprep.mubr.f32.mxu0 0.0
    %3076 = vmatmul.mubr.f32.gmra.mxu0 %v2997
    %v3077 = vpop.f32.mrf.mxu0
    %v3078 = vadd.f32 0.0, %v3077
    %v3079 = vpop.f32.mrf.mxu0
    %3080 = vmatprep.mubr.f32.mxu0 0.0
    %3081 = vmatmul.mubr.f32.gmra.mxu0 %v3000
    %v3082 = vpop.f32.mrf.mxu0
    %v3083 = vadd.f32 0.0, %v3082
    %v3084 = vpop.f32.mrf.mxu0
    %3085 = vmatprep.mubr.f32.mxu0 0.0
    %3086 = vmatmul.mubr.f32.gmra.mxu0 %v3003
    %v3087 = vpop.f32.mrf.mxu0
    %v3088 = vadd.f32 0.0, %v3087
    %v3089 = vpop.f32.mrf.mxu0
    %3090 = vmatprep.mubr.f32.mxu0 0.0
    %3091 = vmatmul.mubr.f32.gmra.mxu0 %v3006
    %v3092 = vpop.f32.mrf.mxu0
    %v3093 = vadd.f32 0.0, %v3092
    %v3094 = vpop.f32.mrf.mxu0
    %3095 = vdwg.mxu0
    %v3096 = vadd.f32 %v2883, %v3078
    %v3097 = vadd.f32 %v2884, %v3083
    %v3098 = vadd.f32 %v2885, %v3088
    %v3099 = vadd.f32 %v2886, %v3093
    %s3100 = scalar_lea.vmem %s4, 2000
    %v3101 = vld [vmem:[%s3100] sm:$0xff]
    %v3102 = vld [vmem:[%s3100 + $0x8] sm:$0xff]
    %v3103 = vld [vmem:[%s3100 + $0x10] sm:$0xff]
    %v3104 = vld [vmem:[%s3100 + $0x18] sm:$0xff]
    %v3105 = vld [vmem:[%s3100 + $0x20] sm:$0xff]
    %v3106 = vld [vmem:[%s3100 + $0x28] sm:$0xff]
    %v3107 = vld [vmem:[%s3100 + $0x30] sm:$0xff]
    %v3108 = vld [vmem:[%s3100 + $0x38] sm:$0xff]
    %v3109 = vld [vmem:[%s3100 + $0x40] sm:$0xff]
    %v3110 = vld [vmem:[%s3100 + $0x48] sm:$0xff]
    %v3111 = vld [vmem:[%s3100 + $0x50] sm:$0xff]
    %v3112 = vld [vmem:[%s3100 + $0x58] sm:$0xff]
    %v3113 = vld [vmem:[%s3100 + $0x60] sm:$0xff]
    %v3114 = vld [vmem:[%s3100 + $0x68] sm:$0xff]
    %v3115 = vld [vmem:[%s3100 + $0x70] sm:$0xff]
    %v3116 = vld [vmem:[%s3100 + $0x78] sm:$0xff]
    %v3117 = vld [vmem:[%s3100 + $0x80] sm:$0xff]
    %v3118 = vld [vmem:[%s3100 + $0x88] sm:$0xff]
    %v3119 = vld [vmem:[%s3100 + $0x90] sm:$0xff]
    %v3120 = vld [vmem:[%s3100 + $0x98] sm:$0xff]
    %v3121 = vld [vmem:[%s3100 + $0xa0] sm:$0xff]
    %v3122 = vld [vmem:[%s3100 + $0xa8] sm:$0xff]
    %v3123 = vld [vmem:[%s3100 + $0xb0] sm:$0xff]
    %v3124 = vld [vmem:[%s3100 + $0xb8] sm:$0xff]
    %v3125 = vld [vmem:[%s3100 + $0xc0] sm:$0xf]
    %v3127 = vsel %vm1003, %v3125, 0
    %3129 = vmatprep.subr.mxu0 0.0
    %3130 = vmatpush1.msra.mxu0 %v3116
    %3131 = vmatprep.subr.mxu0 0.0
    %3132 = vmatpush1.msra.mxu0 %v3115
    %3133 = vmatprep.subr.mxu0 0.0
    %3134 = vmatpush1.msra.mxu0 %v3114
    %3135 = vmatprep.subr.mxu0 0.0
    %3136 = vmatpush1.msra.mxu0 %v3113
    %3137 = vmatprep.subr.mxu0 0.0
    %3138 = vmatpush1.msra.mxu0 %v3112
    %3139 = vmatprep.subr.mxu0 0.0
    %3140 = vmatpush1.msra.mxu0 %v3111
    %3141 = vmatprep.subr.mxu0 0.0
    %3142 = vmatpush1.msra.mxu0 %v3110
    %3143 = vmatprep.subr.mxu0 0.0
    %3144 = vmatpush1.msra.mxu0 %v3109
    %3145 = vmatprep.subr.mxu0 0.0
    %3146 = vmatpush1.msra.mxu0 %v3108
    %3147 = vmatprep.subr.mxu0 0.0
    %3148 = vmatpush1.msra.mxu0 %v3107
    %3149 = vmatprep.subr.mxu0 0.0
    %3150 = vmatpush1.msra.mxu0 %v3106
    %3151 = vmatprep.subr.mxu0 0.0
    %3152 = vmatpush1.msra.mxu0 %v3105
    %3153 = vmatprep.subr.mxu0 0.0
    %3154 = vmatpush1.msra.mxu0 %v3104
    %3155 = vmatprep.subr.mxu0 0.0
    %3156 = vmatpush1.msra.mxu0 %v3103
    %3157 = vmatprep.subr.mxu0 0.0
    %3158 = vmatpush1.msra.mxu0 %v3102
    %3159 = vmatprep.subr.mxu0 0.0
    %3160 = vmatpush1.msra.mxu0 %v3101
    %3161 = vmatprep.subr.mxu0 0.0
    %3162 = vmatpush2.msra.mxu0 0.0
    %3163 = vmatprep.subr.mxu0 0.0
    %3164 = vmatpush2.msra.mxu0 0.0
    %3165 = vmatprep.subr.mxu0 0.0
    %3166 = vmatpush2.msra.mxu0 0.0
    %3167 = vmatprep.subr.mxu0 0.0
    %3168 = vmatpush2.msra.mxu0 0.0
    %3169 = vmatprep.subr.mxu0 0.0
    %3170 = vmatpush2.msra.mxu0 0.0
    %3171 = vmatprep.subr.mxu0 0.0
    %3172 = vmatpush2.msra.mxu0 0.0
    %3173 = vmatprep.subr.mxu0 0.0
    %3174 = vmatpush2.msra.mxu0 0.0
    %3175 = vmatprep.subr.mxu0 0.0
    %3176 = vmatpush2.msra.mxu0 %v3127
    %3177 = vmatprep.subr.mxu0 0.0
    %3178 = vmatpush2.msra.mxu0 %v3124
    %3179 = vmatprep.subr.mxu0 0.0
    %3180 = vmatpush2.msra.mxu0 %v3123
    %3181 = vmatprep.subr.mxu0 0.0
    %3182 = vmatpush2.msra.mxu0 %v3122
    %3183 = vmatprep.subr.mxu0 0.0
    %3184 = vmatpush2.msra.mxu0 %v3121
    %3185 = vmatprep.subr.mxu0 0.0
    %3186 = vmatpush2.msra.mxu0 %v3120
    %3187 = vmatprep.subr.mxu0 0.0
    %3188 = vmatpush2.msra.mxu0 %v3119
    %3189 = vmatprep.subr.mxu0 0.0
    %3190 = vmatpush2.msra.mxu0 %v3118
    %3191 = vmatprep.subr.mxu0 0.0
    %3192 = vmatpush2.msra.mxu0 %v3117
    %3193 = vmatprep.mubr.f32.mxu0 %v998
    %3194 = vmatmul.mubr.f32.gmra.mxu0 %v961
    %v3195 = vpop.f32.mrf.mxu0
    %v3196 = vadd.f32 0.0, %v3195
    %v3197 = vpop.f32.mrf.mxu0
    %3198 = vmatprep.mubr.f32.mxu0 %v1001
    %3199 = vmatmul.mubr.f32.gmra.mxu0 %v967
    %v3200 = vpop.f32.mrf.mxu0
    %v3201 = vadd.f32 0.0, %v3200
    %v3202 = vpop.f32.mrf.mxu0
    %3203 = vdwg.mxu0
    %s3204 = scalar_lea.vmem %s5, 320
    %v3205 = vld [vmem:[%s3204] sm:$0xff]
    %v3206 = vld [vmem:[%s3204 + $0x8] sm:$0xff]
    %v3207 = vld [vmem:[%s3204 + $0x10] sm:$0xff]
    %v3208 = vld [vmem:[%s3204 + $0x18] sm:$0xff]
    %v3210 = vsel %vm1195, %v3205, 0
    %v3213 = vsel %vm1195, %v3206, 0
    %v3216 = vsel %vm1195, %v3207, 0
    %v3219 = vsel %vm1195, %v3208, 0
    %v3222 = vsel %vm1003, %v3201, 0
    %3224 = vmatprep.subr.mxu0 0.0
    %3225 = vmatpush1.msra.mxu0 0.0
    %3226 = vmatprep.subr.mxu0 0.0
    %3227 = vmatpush1.msra.mxu0 0.0
    %3228 = vmatprep.subr.mxu0 0.0
    %3229 = vmatpush1.msra.mxu0 0.0
    %3230 = vmatprep.subr.mxu0 0.0
    %3231 = vmatpush1.msra.mxu0 0.0
    %3232 = vmatprep.subr.mxu0 0.0
    %3233 = vmatpush1.msra.mxu0 0.0
    %3234 = vmatprep.subr.mxu0 0.0
    %3235 = vmatpush1.msra.mxu0 0.0
    %3236 = vmatprep.subr.mxu0 0.0
    %3237 = vmatpush1.msra.mxu0 0.0
    %3238 = vmatprep.subr.mxu0 0.0
    %3239 = vmatpush1.msra.mxu0 0.0
    %3240 = vmatprep.subr.mxu0 0.0
    %3241 = vmatpush1.msra.mxu0 0.0
    %3242 = vmatprep.subr.mxu0 0.0
    %3243 = vmatpush1.msra.mxu0 0.0
    %3244 = vmatprep.subr.mxu0 0.0
    %3245 = vmatpush1.msra.mxu0 0.0
    %3246 = vmatprep.subr.mxu0 0.0
    %3247 = vmatpush1.msra.mxu0 0.0
    %3248 = vmatprep.subr.mxu0 0.0
    %3249 = vmatpush1.msra.mxu0 0.0
    %3250 = vmatprep.subr.mxu0 0.0
    %3251 = vmatpush1.msra.mxu0 0.0
    %3252 = vmatprep.subr.mxu0 0.0
    %3253 = vmatpush1.msra.mxu0 %v3222
    %3254 = vmatprep.subr.mxu0 0.0
    %3255 = vmatpush1.msra.mxu0 %v3196
    %3256 = vmatprep.subr.mxu0 0.0
    %3257 = vmatpush2.msra.mxu0 0.0
    %3258 = vmatprep.subr.mxu0 0.0
    %3259 = vmatpush2.msra.mxu0 0.0
    %3260 = vmatprep.subr.mxu0 0.0
    %3261 = vmatpush2.msra.mxu0 0.0
    %3262 = vmatprep.subr.mxu0 0.0
    %3263 = vmatpush2.msra.mxu0 0.0
    %3264 = vmatprep.subr.mxu0 0.0
    %3265 = vmatpush2.msra.mxu0 0.0
    %3266 = vmatprep.subr.mxu0 0.0
    %3267 = vmatpush2.msra.mxu0 0.0
    %3268 = vmatprep.subr.mxu0 0.0
    %3269 = vmatpush2.msra.mxu0 0.0
    %3270 = vmatprep.subr.mxu0 0.0
    %3271 = vmatpush2.msra.mxu0 0.0
    %3272 = vmatprep.subr.mxu0 0.0
    %3273 = vmatpush2.msra.mxu0 0.0
    %3274 = vmatprep.subr.mxu0 0.0
    %3275 = vmatpush2.msra.mxu0 0.0
    %3276 = vmatprep.subr.mxu0 0.0
    %3277 = vmatpush2.msra.mxu0 0.0
    %3278 = vmatprep.subr.mxu0 0.0
    %3279 = vmatpush2.msra.mxu0 0.0
    %3280 = vmatprep.subr.mxu0 0.0
    %3281 = vmatpush2.msra.mxu0 0.0
    %3282 = vmatprep.subr.mxu0 0.0
    %3283 = vmatpush2.msra.mxu0 0.0
    %3284 = vmatprep.subr.mxu0 0.0
    %3285 = vmatpush2.msra.mxu0 0.0
    %3286 = vmatprep.subr.mxu0 0.0
    %3287 = vmatpush2.msra.mxu0 0.0
    %3288 = vmatprep.mubr.f32.mxu0 0.0
    %3289 = vmatmul.mubr.f32.gmra.mxu0 %v3210
    %v3290 = vpop.f32.mrf.mxu0
    %v3291 = vadd.f32 0.0, %v3290
    %v3292 = vpop.f32.mrf.mxu0
    %3293 = vmatprep.mubr.f32.mxu0 0.0
    %3294 = vmatmul.mubr.f32.gmra.mxu0 %v3213
    %v3295 = vpop.f32.mrf.mxu0
    %v3296 = vadd.f32 0.0, %v3295
    %v3297 = vpop.f32.mrf.mxu0
    %3298 = vmatprep.mubr.f32.mxu0 0.0
    %3299 = vmatmul.mubr.f32.gmra.mxu0 %v3216
    %v3300 = vpop.f32.mrf.mxu0
    %v3301 = vadd.f32 0.0, %v3300
    %v3302 = vpop.f32.mrf.mxu0
    %3303 = vmatprep.mubr.f32.mxu0 0.0
    %3304 = vmatmul.mubr.f32.gmra.mxu0 %v3219
    %v3305 = vpop.f32.mrf.mxu0
    %v3306 = vadd.f32 0.0, %v3305
    %v3307 = vpop.f32.mrf.mxu0
    %3308 = vdwg.mxu0
    %v3309 = vadd.f32 %v3096, %v3291
    %v3310 = vadd.f32 %v3097, %v3296
    %v3311 = vadd.f32 %v3098, %v3301
    %v3312 = vadd.f32 %v3099, %v3306
    %s3313 = scalar_lea.vmem %s4, 2200
    %v3314 = vld [vmem:[%s3313] sm:$0xff]
    %v3315 = vld [vmem:[%s3313 + $0x8] sm:$0xff]
    %v3316 = vld [vmem:[%s3313 + $0x10] sm:$0xff]
    %v3317 = vld [vmem:[%s3313 + $0x18] sm:$0xff]
    %v3318 = vld [vmem:[%s3313 + $0x20] sm:$0xff]
    %v3319 = vld [vmem:[%s3313 + $0x28] sm:$0xff]
    %v3320 = vld [vmem:[%s3313 + $0x30] sm:$0xff]
    %v3321 = vld [vmem:[%s3313 + $0x38] sm:$0xff]
    %v3322 = vld [vmem:[%s3313 + $0x40] sm:$0xff]
    %v3323 = vld [vmem:[%s3313 + $0x48] sm:$0xff]
    %v3324 = vld [vmem:[%s3313 + $0x50] sm:$0xff]
    %v3325 = vld [vmem:[%s3313 + $0x58] sm:$0xff]
    %v3326 = vld [vmem:[%s3313 + $0x60] sm:$0xff]
    %v3327 = vld [vmem:[%s3313 + $0x68] sm:$0xff]
    %v3328 = vld [vmem:[%s3313 + $0x70] sm:$0xff]
    %v3329 = vld [vmem:[%s3313 + $0x78] sm:$0xff]
    %v3330 = vld [vmem:[%s3313 + $0x80] sm:$0xff]
    %v3331 = vld [vmem:[%s3313 + $0x88] sm:$0xff]
    %v3332 = vld [vmem:[%s3313 + $0x90] sm:$0xff]
    %v3333 = vld [vmem:[%s3313 + $0x98] sm:$0xff]
    %v3334 = vld [vmem:[%s3313 + $0xa0] sm:$0xff]
    %v3335 = vld [vmem:[%s3313 + $0xa8] sm:$0xff]
    %v3336 = vld [vmem:[%s3313 + $0xb0] sm:$0xff]
    %v3337 = vld [vmem:[%s3313 + $0xb8] sm:$0xff]
    %v3338 = vld [vmem:[%s3313 + $0xc0] sm:$0xf]
    %v3340 = vsel %vm1003, %v3338, 0
    %3342 = vmatprep.subr.mxu0 0.0
    %3343 = vmatpush1.msra.mxu0 %v3329
    %3344 = vmatprep.subr.mxu0 0.0
    %3345 = vmatpush1.msra.mxu0 %v3328
    %3346 = vmatprep.subr.mxu0 0.0
    %3347 = vmatpush1.msra.mxu0 %v3327
    %3348 = vmatprep.subr.mxu0 0.0
    %3349 = vmatpush1.msra.mxu0 %v3326
    %3350 = vmatprep.subr.mxu0 0.0
    %3351 = vmatpush1.msra.mxu0 %v3325
    %3352 = vmatprep.subr.mxu0 0.0
    %3353 = vmatpush1.msra.mxu0 %v3324
    %3354 = vmatprep.subr.mxu0 0.0
    %3355 = vmatpush1.msra.mxu0 %v3323
    %3356 = vmatprep.subr.mxu0 0.0
    %3357 = vmatpush1.msra.mxu0 %v3322
    %3358 = vmatprep.subr.mxu0 0.0
    %3359 = vmatpush1.msra.mxu0 %v3321
    %3360 = vmatprep.subr.mxu0 0.0
    %3361 = vmatpush1.msra.mxu0 %v3320
    %3362 = vmatprep.subr.mxu0 0.0
    %3363 = vmatpush1.msra.mxu0 %v3319
    %3364 = vmatprep.subr.mxu0 0.0
    %3365 = vmatpush1.msra.mxu0 %v3318
    %3366 = vmatprep.subr.mxu0 0.0
    %3367 = vmatpush1.msra.mxu0 %v3317
    %3368 = vmatprep.subr.mxu0 0.0
    %3369 = vmatpush1.msra.mxu0 %v3316
    %3370 = vmatprep.subr.mxu0 0.0
    %3371 = vmatpush1.msra.mxu0 %v3315
    %3372 = vmatprep.subr.mxu0 0.0
    %3373 = vmatpush1.msra.mxu0 %v3314
    %3374 = vmatprep.subr.mxu0 0.0
    %3375 = vmatpush2.msra.mxu0 0.0
    %3376 = vmatprep.subr.mxu0 0.0
    %3377 = vmatpush2.msra.mxu0 0.0
    %3378 = vmatprep.subr.mxu0 0.0
    %3379 = vmatpush2.msra.mxu0 0.0
    %3380 = vmatprep.subr.mxu0 0.0
    %3381 = vmatpush2.msra.mxu0 0.0
    %3382 = vmatprep.subr.mxu0 0.0
    %3383 = vmatpush2.msra.mxu0 0.0
    %3384 = vmatprep.subr.mxu0 0.0
    %3385 = vmatpush2.msra.mxu0 0.0
    %3386 = vmatprep.subr.mxu0 0.0
    %3387 = vmatpush2.msra.mxu0 0.0
    %3388 = vmatprep.subr.mxu0 0.0
    %3389 = vmatpush2.msra.mxu0 %v3340
    %3390 = vmatprep.subr.mxu0 0.0
    %3391 = vmatpush2.msra.mxu0 %v3337
    %3392 = vmatprep.subr.mxu0 0.0
    %3393 = vmatpush2.msra.mxu0 %v3336
    %3394 = vmatprep.subr.mxu0 0.0
    %3395 = vmatpush2.msra.mxu0 %v3335
    %3396 = vmatprep.subr.mxu0 0.0
    %3397 = vmatpush2.msra.mxu0 %v3334
    %3398 = vmatprep.subr.mxu0 0.0
    %3399 = vmatpush2.msra.mxu0 %v3333
    %3400 = vmatprep.subr.mxu0 0.0
    %3401 = vmatpush2.msra.mxu0 %v3332
    %3402 = vmatprep.subr.mxu0 0.0
    %3403 = vmatpush2.msra.mxu0 %v3331
    %3404 = vmatprep.subr.mxu0 0.0
    %3405 = vmatpush2.msra.mxu0 %v3330
    %3406 = vmatprep.mubr.f32.mxu0 %v998
    %3407 = vmatmul.mubr.f32.gmra.mxu0 %v961
    %v3408 = vpop.f32.mrf.mxu0
    %v3409 = vadd.f32 0.0, %v3408
    %v3410 = vpop.f32.mrf.mxu0
    %3411 = vmatprep.mubr.f32.mxu0 %v1001
    %3412 = vmatmul.mubr.f32.gmra.mxu0 %v967
    %v3413 = vpop.f32.mrf.mxu0
    %v3414 = vadd.f32 0.0, %v3413
    %v3415 = vpop.f32.mrf.mxu0
    %3416 = vdwg.mxu0
    %s3417 = scalar_lea.vmem %s5, 352
    %v3418 = vld [vmem:[%s3417] sm:$0xff]
    %v3419 = vld [vmem:[%s3417 + $0x8] sm:$0xff]
    %v3420 = vld [vmem:[%s3417 + $0x10] sm:$0xff]
    %v3421 = vld [vmem:[%s3417 + $0x18] sm:$0xff]
    %v3423 = vsel %vm1195, %v3418, 0
    %v3426 = vsel %vm1195, %v3419, 0
    %v3429 = vsel %vm1195, %v3420, 0
    %v3432 = vsel %vm1195, %v3421, 0
    %v3435 = vsel %vm1003, %v3414, 0
    %3437 = vmatprep.subr.mxu0 0.0
    %3438 = vmatpush1.msra.mxu0 0.0
    %3439 = vmatprep.subr.mxu0 0.0
    %3440 = vmatpush1.msra.mxu0 0.0
    %3441 = vmatprep.subr.mxu0 0.0
    %3442 = vmatpush1.msra.mxu0 0.0
    %3443 = vmatprep.subr.mxu0 0.0
    %3444 = vmatpush1.msra.mxu0 0.0
    %3445 = vmatprep.subr.mxu0 0.0
    %3446 = vmatpush1.msra.mxu0 0.0
    %3447 = vmatprep.subr.mxu0 0.0
    %3448 = vmatpush1.msra.mxu0 0.0
    %3449 = vmatprep.subr.mxu0 0.0
    %3450 = vmatpush1.msra.mxu0 0.0
    %3451 = vmatprep.subr.mxu0 0.0
    %3452 = vmatpush1.msra.mxu0 0.0
    %3453 = vmatprep.subr.mxu0 0.0
    %3454 = vmatpush1.msra.mxu0 0.0
    %3455 = vmatprep.subr.mxu0 0.0
    %3456 = vmatpush1.msra.mxu0 0.0
    %3457 = vmatprep.subr.mxu0 0.0
    %3458 = vmatpush1.msra.mxu0 0.0
    %3459 = vmatprep.subr.mxu0 0.0
    %3460 = vmatpush1.msra.mxu0 0.0
    %3461 = vmatprep.subr.mxu0 0.0
    %3462 = vmatpush1.msra.mxu0 0.0
    %3463 = vmatprep.subr.mxu0 0.0
    %3464 = vmatpush1.msra.mxu0 0.0
    %3465 = vmatprep.subr.mxu0 0.0
    %3466 = vmatpush1.msra.mxu0 %v3435
    %3467 = vmatprep.subr.mxu0 0.0
    %3468 = vmatpush1.msra.mxu0 %v3409
    %3469 = vmatprep.subr.mxu0 0.0
    %3470 = vmatpush2.msra.mxu0 0.0
    %3471 = vmatprep.subr.mxu0 0.0
    %3472 = vmatpush2.msra.mxu0 0.0
    %3473 = vmatprep.subr.mxu0 0.0
    %3474 = vmatpush2.msra.mxu0 0.0
    %3475 = vmatprep.subr.mxu0 0.0
    %3476 = vmatpush2.msra.mxu0 0.0
    %3477 = vmatprep.subr.mxu0 0.0
    %3478 = vmatpush2.msra.mxu0 0.0
    %3479 = vmatprep.subr.mxu0 0.0
    %3480 = vmatpush2.msra.mxu0 0.0
    %3481 = vmatprep.subr.mxu0 0.0
    %3482 = vmatpush2.msra.mxu0 0.0
    %3483 = vmatprep.subr.mxu0 0.0
    %3484 = vmatpush2.msra.mxu0 0.0
    %3485 = vmatprep.subr.mxu0 0.0
    %3486 = vmatpush2.msra.mxu0 0.0
    %3487 = vmatprep.subr.mxu0 0.0
    %3488 = vmatpush2.msra.mxu0 0.0
    %3489 = vmatprep.subr.mxu0 0.0
    %3490 = vmatpush2.msra.mxu0 0.0
    %3491 = vmatprep.subr.mxu0 0.0
    %3492 = vmatpush2.msra.mxu0 0.0
    %3493 = vmatprep.subr.mxu0 0.0
    %3494 = vmatpush2.msra.mxu0 0.0
    %3495 = vmatprep.subr.mxu0 0.0
    %3496 = vmatpush2.msra.mxu0 0.0
    %3497 = vmatprep.subr.mxu0 0.0
    %3498 = vmatpush2.msra.mxu0 0.0
    %3499 = vmatprep.subr.mxu0 0.0
    %3500 = vmatpush2.msra.mxu0 0.0
    %3501 = vmatprep.mubr.f32.mxu0 0.0
    %3502 = vmatmul.mubr.f32.gmra.mxu0 %v3423
    %v3503 = vpop.f32.mrf.mxu0
    %v3504 = vadd.f32 0.0, %v3503
    %v3505 = vpop.f32.mrf.mxu0
    %3506 = vmatprep.mubr.f32.mxu0 0.0
    %3507 = vmatmul.mubr.f32.gmra.mxu0 %v3426
    %v3508 = vpop.f32.mrf.mxu0
    %v3509 = vadd.f32 0.0, %v3508
    %v3510 = vpop.f32.mrf.mxu0
    %3511 = vmatprep.mubr.f32.mxu0 0.0
    %3512 = vmatmul.mubr.f32.gmra.mxu0 %v3429
    %v3513 = vpop.f32.mrf.mxu0
    %v3514 = vadd.f32 0.0, %v3513
    %v3515 = vpop.f32.mrf.mxu0
    %3516 = vmatprep.mubr.f32.mxu0 0.0
    %3517 = vmatmul.mubr.f32.gmra.mxu0 %v3432
    %v3518 = vpop.f32.mrf.mxu0
    %v3519 = vadd.f32 0.0, %v3518
    %v3520 = vpop.f32.mrf.mxu0
    %3521 = vdwg.mxu0
    %v3522 = vadd.f32 %v3309, %v3504
    %v3523 = vadd.f32 %v3310, %v3509
    %v3524 = vadd.f32 %v3311, %v3514
    %v3525 = vadd.f32 %v3312, %v3519
    %s3526 = scalar_lea.vmem %s4, 2400
    %v3527 = vld [vmem:[%s3526] sm:$0xff]
    %v3528 = vld [vmem:[%s3526 + $0x8] sm:$0xff]
    %v3529 = vld [vmem:[%s3526 + $0x10] sm:$0xff]
    %v3530 = vld [vmem:[%s3526 + $0x18] sm:$0xff]
    %v3531 = vld [vmem:[%s3526 + $0x20] sm:$0xff]
    %v3532 = vld [vmem:[%s3526 + $0x28] sm:$0xff]
    %v3533 = vld [vmem:[%s3526 + $0x30] sm:$0xff]
    %v3534 = vld [vmem:[%s3526 + $0x38] sm:$0xff]
    %v3535 = vld [vmem:[%s3526 + $0x40] sm:$0xff]
    %v3536 = vld [vmem:[%s3526 + $0x48] sm:$0xff]
    %v3537 = vld [vmem:[%s3526 + $0x50] sm:$0xff]
    %v3538 = vld [vmem:[%s3526 + $0x58] sm:$0xff]
    %v3539 = vld [vmem:[%s3526 + $0x60] sm:$0xff]
    %v3540 = vld [vmem:[%s3526 + $0x68] sm:$0xff]
    %v3541 = vld [vmem:[%s3526 + $0x70] sm:$0xff]
    %v3542 = vld [vmem:[%s3526 + $0x78] sm:$0xff]
    %v3543 = vld [vmem:[%s3526 + $0x80] sm:$0xff]
    %v3544 = vld [vmem:[%s3526 + $0x88] sm:$0xff]
    %v3545 = vld [vmem:[%s3526 + $0x90] sm:$0xff]
    %v3546 = vld [vmem:[%s3526 + $0x98] sm:$0xff]
    %v3547 = vld [vmem:[%s3526 + $0xa0] sm:$0xff]
    %v3548 = vld [vmem:[%s3526 + $0xa8] sm:$0xff]
    %v3549 = vld [vmem:[%s3526 + $0xb0] sm:$0xff]
    %v3550 = vld [vmem:[%s3526 + $0xb8] sm:$0xff]
    %v3551 = vld [vmem:[%s3526 + $0xc0] sm:$0xf]
    %v3553 = vsel %vm1003, %v3551, 0
    %3555 = vmatprep.subr.mxu0 0.0
    %3556 = vmatpush1.msra.mxu0 %v3542
    %3557 = vmatprep.subr.mxu0 0.0
    %3558 = vmatpush1.msra.mxu0 %v3541
    %3559 = vmatprep.subr.mxu0 0.0
    %3560 = vmatpush1.msra.mxu0 %v3540
    %3561 = vmatprep.subr.mxu0 0.0
    %3562 = vmatpush1.msra.mxu0 %v3539
    %3563 = vmatprep.subr.mxu0 0.0
    %3564 = vmatpush1.msra.mxu0 %v3538
    %3565 = vmatprep.subr.mxu0 0.0
    %3566 = vmatpush1.msra.mxu0 %v3537
    %3567 = vmatprep.subr.mxu0 0.0
    %3568 = vmatpush1.msra.mxu0 %v3536
    %3569 = vmatprep.subr.mxu0 0.0
    %3570 = vmatpush1.msra.mxu0 %v3535
    %3571 = vmatprep.subr.mxu0 0.0
    %3572 = vmatpush1.msra.mxu0 %v3534
    %3573 = vmatprep.subr.mxu0 0.0
    %3574 = vmatpush1.msra.mxu0 %v3533
    %3575 = vmatprep.subr.mxu0 0.0
    %3576 = vmatpush1.msra.mxu0 %v3532
    %3577 = vmatprep.subr.mxu0 0.0
    %3578 = vmatpush1.msra.mxu0 %v3531
    %3579 = vmatprep.subr.mxu0 0.0
    %3580 = vmatpush1.msra.mxu0 %v3530
    %3581 = vmatprep.subr.mxu0 0.0
    %3582 = vmatpush1.msra.mxu0 %v3529
    %3583 = vmatprep.subr.mxu0 0.0
    %3584 = vmatpush1.msra.mxu0 %v3528
    %3585 = vmatprep.subr.mxu0 0.0
    %3586 = vmatpush1.msra.mxu0 %v3527
    %3587 = vmatprep.subr.mxu0 0.0
    %3588 = vmatpush2.msra.mxu0 0.0
    %3589 = vmatprep.subr.mxu0 0.0
    %3590 = vmatpush2.msra.mxu0 0.0
    %3591 = vmatprep.subr.mxu0 0.0
    %3592 = vmatpush2.msra.mxu0 0.0
    %3593 = vmatprep.subr.mxu0 0.0
    %3594 = vmatpush2.msra.mxu0 0.0
    %3595 = vmatprep.subr.mxu0 0.0
    %3596 = vmatpush2.msra.mxu0 0.0
    %3597 = vmatprep.subr.mxu0 0.0
    %3598 = vmatpush2.msra.mxu0 0.0
    %3599 = vmatprep.subr.mxu0 0.0
    %3600 = vmatpush2.msra.mxu0 0.0
    %3601 = vmatprep.subr.mxu0 0.0
    %3602 = vmatpush2.msra.mxu0 %v3553
    %3603 = vmatprep.subr.mxu0 0.0
    %3604 = vmatpush2.msra.mxu0 %v3550
    %3605 = vmatprep.subr.mxu0 0.0
    %3606 = vmatpush2.msra.mxu0 %v3549
    %3607 = vmatprep.subr.mxu0 0.0
    %3608 = vmatpush2.msra.mxu0 %v3548
    %3609 = vmatprep.subr.mxu0 0.0
    %3610 = vmatpush2.msra.mxu0 %v3547
    %3611 = vmatprep.subr.mxu0 0.0
    %3612 = vmatpush2.msra.mxu0 %v3546
    %3613 = vmatprep.subr.mxu0 0.0
    %3614 = vmatpush2.msra.mxu0 %v3545
    %3615 = vmatprep.subr.mxu0 0.0
    %3616 = vmatpush2.msra.mxu0 %v3544
    %3617 = vmatprep.subr.mxu0 0.0
    %3618 = vmatpush2.msra.mxu0 %v3543
    %3619 = vmatprep.mubr.f32.mxu0 %v998
    %3620 = vmatmul.mubr.f32.gmra.mxu0 %v961
    %v3621 = vpop.f32.mrf.mxu0
    %v3622 = vadd.f32 0.0, %v3621
    %v3623 = vpop.f32.mrf.mxu0
    %3624 = vmatprep.mubr.f32.mxu0 %v1001
    %3625 = vmatmul.mubr.f32.gmra.mxu0 %v967
    %v3626 = vpop.f32.mrf.mxu0
    %v3627 = vadd.f32 0.0, %v3626
    %v3628 = vpop.f32.mrf.mxu0
    %3629 = vdwg.mxu0
    %s3630 = scalar_lea.vmem %s5, 384
    %v3631 = vld [vmem:[%s3630] sm:$0xff]
    %v3632 = vld [vmem:[%s3630 + $0x8] sm:$0xff]
    %v3633 = vld [vmem:[%s3630 + $0x10] sm:$0xff]
    %v3634 = vld [vmem:[%s3630 + $0x18] sm:$0xff]
    %v3636 = vsel %vm1195, %v3631, 0
    %v3639 = vsel %vm1195, %v3632, 0
    %v3642 = vsel %vm1195, %v3633, 0
    %v3645 = vsel %vm1195, %v3634, 0
    %v3648 = vsel %vm1003, %v3627, 0
    %3650 = vmatprep.subr.mxu0 0.0
    %3651 = vmatpush1.msra.mxu0 0.0
    %3652 = vmatprep.subr.mxu0 0.0
    %3653 = vmatpush1.msra.mxu0 0.0
    %3654 = vmatprep.subr.mxu0 0.0
    %3655 = vmatpush1.msra.mxu0 0.0
    %3656 = vmatprep.subr.mxu0 0.0
    %3657 = vmatpush1.msra.mxu0 0.0
    %3658 = vmatprep.subr.mxu0 0.0
    %3659 = vmatpush1.msra.mxu0 0.0
    %3660 = vmatprep.subr.mxu0 0.0
    %3661 = vmatpush1.msra.mxu0 0.0
    %3662 = vmatprep.subr.mxu0 0.0
    %3663 = vmatpush1.msra.mxu0 0.0
    %3664 = vmatprep.subr.mxu0 0.0
    %3665 = vmatpush1.msra.mxu0 0.0
    %3666 = vmatprep.subr.mxu0 0.0
    %3667 = vmatpush1.msra.mxu0 0.0
    %3668 = vmatprep.subr.mxu0 0.0
    %3669 = vmatpush1.msra.mxu0 0.0
    %3670 = vmatprep.subr.mxu0 0.0
    %3671 = vmatpush1.msra.mxu0 0.0
    %3672 = vmatprep.subr.mxu0 0.0
    %3673 = vmatpush1.msra.mxu0 0.0
    %3674 = vmatprep.subr.mxu0 0.0
    %3675 = vmatpush1.msra.mxu0 0.0
    %3676 = vmatprep.subr.mxu0 0.0
    %3677 = vmatpush1.msra.mxu0 0.0
    %3678 = vmatprep.subr.mxu0 0.0
    %3679 = vmatpush1.msra.mxu0 %v3648
    %3680 = vmatprep.subr.mxu0 0.0
    %3681 = vmatpush1.msra.mxu0 %v3622
    %3682 = vmatprep.subr.mxu0 0.0
    %3683 = vmatpush2.msra.mxu0 0.0
    %3684 = vmatprep.subr.mxu0 0.0
    %3685 = vmatpush2.msra.mxu0 0.0
    %3686 = vmatprep.subr.mxu0 0.0
    %3687 = vmatpush2.msra.mxu0 0.0
    %3688 = vmatprep.subr.mxu0 0.0
    %3689 = vmatpush2.msra.mxu0 0.0
    %3690 = vmatprep.subr.mxu0 0.0
    %3691 = vmatpush2.msra.mxu0 0.0
    %3692 = vmatprep.subr.mxu0 0.0
    %3693 = vmatpush2.msra.mxu0 0.0
    %3694 = vmatprep.subr.mxu0 0.0
    %3695 = vmatpush2.msra.mxu0 0.0
    %3696 = vmatprep.subr.mxu0 0.0
    %3697 = vmatpush2.msra.mxu0 0.0
    %3698 = vmatprep.subr.mxu0 0.0
    %3699 = vmatpush2.msra.mxu0 0.0
    %3700 = vmatprep.subr.mxu0 0.0
    %3701 = vmatpush2.msra.mxu0 0.0
    %3702 = vmatprep.subr.mxu0 0.0
    %3703 = vmatpush2.msra.mxu0 0.0
    %3704 = vmatprep.subr.mxu0 0.0
    %3705 = vmatpush2.msra.mxu0 0.0
    %3706 = vmatprep.subr.mxu0 0.0
    %3707 = vmatpush2.msra.mxu0 0.0
    %3708 = vmatprep.subr.mxu0 0.0
    %3709 = vmatpush2.msra.mxu0 0.0
    %3710 = vmatprep.subr.mxu0 0.0
    %3711 = vmatpush2.msra.mxu0 0.0
    %3712 = vmatprep.subr.mxu0 0.0
    %3713 = vmatpush2.msra.mxu0 0.0
    %3714 = vmatprep.mubr.f32.mxu0 0.0
    %3715 = vmatmul.mubr.f32.gmra.mxu0 %v3636
    %v3716 = vpop.f32.mrf.mxu0
    %v3717 = vadd.f32 0.0, %v3716
    %v3718 = vpop.f32.mrf.mxu0
    %3719 = vmatprep.mubr.f32.mxu0 0.0
    %3720 = vmatmul.mubr.f32.gmra.mxu0 %v3639
    %v3721 = vpop.f32.mrf.mxu0
    %v3722 = vadd.f32 0.0, %v3721
    %v3723 = vpop.f32.mrf.mxu0
    %3724 = vmatprep.mubr.f32.mxu0 0.0
    %3725 = vmatmul.mubr.f32.gmra.mxu0 %v3642
    %v3726 = vpop.f32.mrf.mxu0
    %v3727 = vadd.f32 0.0, %v3726
    %v3728 = vpop.f32.mrf.mxu0
    %3729 = vmatprep.mubr.f32.mxu0 0.0
    %3730 = vmatmul.mubr.f32.gmra.mxu0 %v3645
    %v3731 = vpop.f32.mrf.mxu0
    %v3732 = vadd.f32 0.0, %v3731
    %v3733 = vpop.f32.mrf.mxu0
    %3734 = vdwg.mxu0
    %v3735 = vadd.f32 %v3522, %v3717
    %v3736 = vadd.f32 %v3523, %v3722
    %v3737 = vadd.f32 %v3524, %v3727
    %v3738 = vadd.f32 %v3525, %v3732
    %s3739 = scalar_lea.vmem %s4, 2600
    %v3740 = vld [vmem:[%s3739] sm:$0xff]
    %v3741 = vld [vmem:[%s3739 + $0x8] sm:$0xff]
    %v3742 = vld [vmem:[%s3739 + $0x10] sm:$0xff]
    %v3743 = vld [vmem:[%s3739 + $0x18] sm:$0xff]
    %v3744 = vld [vmem:[%s3739 + $0x20] sm:$0xff]
    %v3745 = vld [vmem:[%s3739 + $0x28] sm:$0xff]
    %v3746 = vld [vmem:[%s3739 + $0x30] sm:$0xff]
    %v3747 = vld [vmem:[%s3739 + $0x38] sm:$0xff]
    %v3748 = vld [vmem:[%s3739 + $0x40] sm:$0xff]
    %v3749 = vld [vmem:[%s3739 + $0x48] sm:$0xff]
    %v3750 = vld [vmem:[%s3739 + $0x50] sm:$0xff]
    %v3751 = vld [vmem:[%s3739 + $0x58] sm:$0xff]
    %v3752 = vld [vmem:[%s3739 + $0x60] sm:$0xff]
    %v3753 = vld [vmem:[%s3739 + $0x68] sm:$0xff]
    %v3754 = vld [vmem:[%s3739 + $0x70] sm:$0xff]
    %v3755 = vld [vmem:[%s3739 + $0x78] sm:$0xff]
    %v3756 = vld [vmem:[%s3739 + $0x80] sm:$0xff]
    %v3757 = vld [vmem:[%s3739 + $0x88] sm:$0xff]
    %v3758 = vld [vmem:[%s3739 + $0x90] sm:$0xff]
    %v3759 = vld [vmem:[%s3739 + $0x98] sm:$0xff]
    %v3760 = vld [vmem:[%s3739 + $0xa0] sm:$0xff]
    %v3761 = vld [vmem:[%s3739 + $0xa8] sm:$0xff]
    %v3762 = vld [vmem:[%s3739 + $0xb0] sm:$0xff]
    %v3763 = vld [vmem:[%s3739 + $0xb8] sm:$0xff]
    %v3764 = vld [vmem:[%s3739 + $0xc0] sm:$0xf]
    %v3766 = vsel %vm1003, %v3764, 0
    %3768 = vmatprep.subr.mxu0 0.0
    %3769 = vmatpush1.msra.mxu0 %v3755
    %3770 = vmatprep.subr.mxu0 0.0
    %3771 = vmatpush1.msra.mxu0 %v3754
    %3772 = vmatprep.subr.mxu0 0.0
    %3773 = vmatpush1.msra.mxu0 %v3753
    %3774 = vmatprep.subr.mxu0 0.0
    %3775 = vmatpush1.msra.mxu0 %v3752
    %3776 = vmatprep.subr.mxu0 0.0
    %3777 = vmatpush1.msra.mxu0 %v3751
    %3778 = vmatprep.subr.mxu0 0.0
    %3779 = vmatpush1.msra.mxu0 %v3750
    %3780 = vmatprep.subr.mxu0 0.0
    %3781 = vmatpush1.msra.mxu0 %v3749
    %3782 = vmatprep.subr.mxu0 0.0
    %3783 = vmatpush1.msra.mxu0 %v3748
    %3784 = vmatprep.subr.mxu0 0.0
    %3785 = vmatpush1.msra.mxu0 %v3747
    %3786 = vmatprep.subr.mxu0 0.0
    %3787 = vmatpush1.msra.mxu0 %v3746
    %3788 = vmatprep.subr.mxu0 0.0
    %3789 = vmatpush1.msra.mxu0 %v3745
    %3790 = vmatprep.subr.mxu0 0.0
    %3791 = vmatpush1.msra.mxu0 %v3744
    %3792 = vmatprep.subr.mxu0 0.0
    %3793 = vmatpush1.msra.mxu0 %v3743
    %3794 = vmatprep.subr.mxu0 0.0
    %3795 = vmatpush1.msra.mxu0 %v3742
    %3796 = vmatprep.subr.mxu0 0.0
    %3797 = vmatpush1.msra.mxu0 %v3741
    %3798 = vmatprep.subr.mxu0 0.0
    %3799 = vmatpush1.msra.mxu0 %v3740
    %3800 = vmatprep.subr.mxu0 0.0
    %3801 = vmatpush2.msra.mxu0 0.0
    %3802 = vmatprep.subr.mxu0 0.0
    %3803 = vmatpush2.msra.mxu0 0.0
    %3804 = vmatprep.subr.mxu0 0.0
    %3805 = vmatpush2.msra.mxu0 0.0
    %3806 = vmatprep.subr.mxu0 0.0
    %3807 = vmatpush2.msra.mxu0 0.0
    %3808 = vmatprep.subr.mxu0 0.0
    %3809 = vmatpush2.msra.mxu0 0.0
    %3810 = vmatprep.subr.mxu0 0.0
    %3811 = vmatpush2.msra.mxu0 0.0
    %3812 = vmatprep.subr.mxu0 0.0
    %3813 = vmatpush2.msra.mxu0 0.0
    %3814 = vmatprep.subr.mxu0 0.0
    %3815 = vmatpush2.msra.mxu0 %v3766
    %3816 = vmatprep.subr.mxu0 0.0
    %3817 = vmatpush2.msra.mxu0 %v3763
    %3818 = vmatprep.subr.mxu0 0.0
    %3819 = vmatpush2.msra.mxu0 %v3762
    %3820 = vmatprep.subr.mxu0 0.0
    %3821 = vmatpush2.msra.mxu0 %v3761
    %3822 = vmatprep.subr.mxu0 0.0
    %3823 = vmatpush2.msra.mxu0 %v3760
    %3824 = vmatprep.subr.mxu0 0.0
    %3825 = vmatpush2.msra.mxu0 %v3759
    %3826 = vmatprep.subr.mxu0 0.0
    %3827 = vmatpush2.msra.mxu0 %v3758
    %3828 = vmatprep.subr.mxu0 0.0
    %3829 = vmatpush2.msra.mxu0 %v3757
    %3830 = vmatprep.subr.mxu0 0.0
    %3831 = vmatpush2.msra.mxu0 %v3756
    %3832 = vmatprep.mubr.f32.mxu0 %v998
    %3833 = vmatmul.mubr.f32.gmra.mxu0 %v961
    %v3834 = vpop.f32.mrf.mxu0
    %v3835 = vadd.f32 0.0, %v3834
    %v3836 = vpop.f32.mrf.mxu0
    %3837 = vmatprep.mubr.f32.mxu0 %v1001
    %3838 = vmatmul.mubr.f32.gmra.mxu0 %v967
    %v3839 = vpop.f32.mrf.mxu0
    %v3840 = vadd.f32 0.0, %v3839
    %v3841 = vpop.f32.mrf.mxu0
    %3842 = vdwg.mxu0
    %s3843 = scalar_lea.vmem %s5, 416
    %v3844 = vld [vmem:[%s3843] sm:$0xff]
    %v3845 = vld [vmem:[%s3843 + $0x8] sm:$0xff]
    %v3846 = vld [vmem:[%s3843 + $0x10] sm:$0xff]
    %v3847 = vld [vmem:[%s3843 + $0x18] sm:$0xff]
    %v3849 = vsel %vm1195, %v3844, 0
    %v3852 = vsel %vm1195, %v3845, 0
    %v3855 = vsel %vm1195, %v3846, 0
    %v3858 = vsel %vm1195, %v3847, 0
    %v3861 = vsel %vm1003, %v3840, 0
    %3863 = vmatprep.subr.mxu0 0.0
    %3864 = vmatpush1.msra.mxu0 0.0
    %3865 = vmatprep.subr.mxu0 0.0
    %3866 = vmatpush1.msra.mxu0 0.0
    %3867 = vmatprep.subr.mxu0 0.0
    %3868 = vmatpush1.msra.mxu0 0.0
    %3869 = vmatprep.subr.mxu0 0.0
    %3870 = vmatpush1.msra.mxu0 0.0
    %3871 = vmatprep.subr.mxu0 0.0
    %3872 = vmatpush1.msra.mxu0 0.0
    %3873 = vmatprep.subr.mxu0 0.0
    %3874 = vmatpush1.msra.mxu0 0.0
    %3875 = vmatprep.subr.mxu0 0.0
    %3876 = vmatpush1.msra.mxu0 0.0
    %3877 = vmatprep.subr.mxu0 0.0
    %3878 = vmatpush1.msra.mxu0 0.0
    %3879 = vmatprep.subr.mxu0 0.0
    %3880 = vmatpush1.msra.mxu0 0.0
    %3881 = vmatprep.subr.mxu0 0.0
    %3882 = vmatpush1.msra.mxu0 0.0
    %3883 = vmatprep.subr.mxu0 0.0
    %3884 = vmatpush1.msra.mxu0 0.0
    %3885 = vmatprep.subr.mxu0 0.0
    %3886 = vmatpush1.msra.mxu0 0.0
    %3887 = vmatprep.subr.mxu0 0.0
    %3888 = vmatpush1.msra.mxu0 0.0
    %3889 = vmatprep.subr.mxu0 0.0
    %3890 = vmatpush1.msra.mxu0 0.0
    %3891 = vmatprep.subr.mxu0 0.0
    %3892 = vmatpush1.msra.mxu0 %v3861
    %3893 = vmatprep.subr.mxu0 0.0
    %3894 = vmatpush1.msra.mxu0 %v3835
    %3895 = vmatprep.subr.mxu0 0.0
    %3896 = vmatpush2.msra.mxu0 0.0
    %3897 = vmatprep.subr.mxu0 0.0
    %3898 = vmatpush2.msra.mxu0 0.0
    %3899 = vmatprep.subr.mxu0 0.0
    %3900 = vmatpush2.msra.mxu0 0.0
    %3901 = vmatprep.subr.mxu0 0.0
    %3902 = vmatpush2.msra.mxu0 0.0
    %3903 = vmatprep.subr.mxu0 0.0
    %3904 = vmatpush2.msra.mxu0 0.0
    %3905 = vmatprep.subr.mxu0 0.0
    %3906 = vmatpush2.msra.mxu0 0.0
    %3907 = vmatprep.subr.mxu0 0.0
    %3908 = vmatpush2.msra.mxu0 0.0
    %3909 = vmatprep.subr.mxu0 0.0
    %3910 = vmatpush2.msra.mxu0 0.0
    %3911 = vmatprep.subr.mxu0 0.0
    %3912 = vmatpush2.msra.mxu0 0.0
    %3913 = vmatprep.subr.mxu0 0.0
    %3914 = vmatpush2.msra.mxu0 0.0
    %3915 = vmatprep.subr.mxu0 0.0
    %3916 = vmatpush2.msra.mxu0 0.0
    %3917 = vmatprep.subr.mxu0 0.0
    %3918 = vmatpush2.msra.mxu0 0.0
    %3919 = vmatprep.subr.mxu0 0.0
    %3920 = vmatpush2.msra.mxu0 0.0
    %3921 = vmatprep.subr.mxu0 0.0
    %3922 = vmatpush2.msra.mxu0 0.0
    %3923 = vmatprep.subr.mxu0 0.0
    %3924 = vmatpush2.msra.mxu0 0.0
    %3925 = vmatprep.subr.mxu0 0.0
    %3926 = vmatpush2.msra.mxu0 0.0
    %3927 = vmatprep.mubr.f32.mxu0 0.0
    %3928 = vmatmul.mubr.f32.gmra.mxu0 %v3849
    %v3929 = vpop.f32.mrf.mxu0
    %v3930 = vadd.f32 0.0, %v3929
    %v3931 = vpop.f32.mrf.mxu0
    %3932 = vmatprep.mubr.f32.mxu0 0.0
    %3933 = vmatmul.mubr.f32.gmra.mxu0 %v3852
    %v3934 = vpop.f32.mrf.mxu0
    %v3935 = vadd.f32 0.0, %v3934
    %v3936 = vpop.f32.mrf.mxu0
    %3937 = vmatprep.mubr.f32.mxu0 0.0
    %3938 = vmatmul.mubr.f32.gmra.mxu0 %v3855
    %v3939 = vpop.f32.mrf.mxu0
    %v3940 = vadd.f32 0.0, %v3939
    %v3941 = vpop.f32.mrf.mxu0
    %3942 = vmatprep.mubr.f32.mxu0 0.0
    %3943 = vmatmul.mubr.f32.gmra.mxu0 %v3858
    %v3944 = vpop.f32.mrf.mxu0
    %v3945 = vadd.f32 0.0, %v3944
    %v3946 = vpop.f32.mrf.mxu0
    %3947 = vdwg.mxu0
    %v3948 = vadd.f32 %v3735, %v3930
    %v3949 = vadd.f32 %v3736, %v3935
    %v3950 = vadd.f32 %v3737, %v3940
    %v3951 = vadd.f32 %v3738, %v3945
    %s3952 = scalar_lea.vmem %s4, 2800
    %v3953 = vld [vmem:[%s3952] sm:$0xff]
    %v3954 = vld [vmem:[%s3952 + $0x8] sm:$0xff]
    %v3955 = vld [vmem:[%s3952 + $0x10] sm:$0xff]
    %v3956 = vld [vmem:[%s3952 + $0x18] sm:$0xff]
    %v3957 = vld [vmem:[%s3952 + $0x20] sm:$0xff]
    %v3958 = vld [vmem:[%s3952 + $0x28] sm:$0xff]
    %v3959 = vld [vmem:[%s3952 + $0x30] sm:$0xff]
    %v3960 = vld [vmem:[%s3952 + $0x38] sm:$0xff]
    %v3961 = vld [vmem:[%s3952 + $0x40] sm:$0xff]
    %v3962 = vld [vmem:[%s3952 + $0x48] sm:$0xff]
    %v3963 = vld [vmem:[%s3952 + $0x50] sm:$0xff]
    %v3964 = vld [vmem:[%s3952 + $0x58] sm:$0xff]
    %v3965 = vld [vmem:[%s3952 + $0x60] sm:$0xff]
    %v3966 = vld [vmem:[%s3952 + $0x68] sm:$0xff]
    %v3967 = vld [vmem:[%s3952 + $0x70] sm:$0xff]
    %v3968 = vld [vmem:[%s3952 + $0x78] sm:$0xff]
    %v3969 = vld [vmem:[%s3952 + $0x80] sm:$0xff]
    %v3970 = vld [vmem:[%s3952 + $0x88] sm:$0xff]
    %v3971 = vld [vmem:[%s3952 + $0x90] sm:$0xff]
    %v3972 = vld [vmem:[%s3952 + $0x98] sm:$0xff]
    %v3973 = vld [vmem:[%s3952 + $0xa0] sm:$0xff]
    %v3974 = vld [vmem:[%s3952 + $0xa8] sm:$0xff]
    %v3975 = vld [vmem:[%s3952 + $0xb0] sm:$0xff]
    %v3976 = vld [vmem:[%s3952 + $0xb8] sm:$0xff]
    %v3977 = vld [vmem:[%s3952 + $0xc0] sm:$0xf]
    %v3979 = vsel %vm1003, %v3977, 0
    %3981 = vmatprep.subr.mxu0 0.0
    %3982 = vmatpush1.msra.mxu0 %v3968
    %3983 = vmatprep.subr.mxu0 0.0
    %3984 = vmatpush1.msra.mxu0 %v3967
    %3985 = vmatprep.subr.mxu0 0.0
    %3986 = vmatpush1.msra.mxu0 %v3966
    %3987 = vmatprep.subr.mxu0 0.0
    %3988 = vmatpush1.msra.mxu0 %v3965
    %3989 = vmatprep.subr.mxu0 0.0
    %3990 = vmatpush1.msra.mxu0 %v3964
    %3991 = vmatprep.subr.mxu0 0.0
    %3992 = vmatpush1.msra.mxu0 %v3963
    %3993 = vmatprep.subr.mxu0 0.0
    %3994 = vmatpush1.msra.mxu0 %v3962
    %3995 = vmatprep.subr.mxu0 0.0
    %3996 = vmatpush1.msra.mxu0 %v3961
    %3997 = vmatprep.subr.mxu0 0.0
    %3998 = vmatpush1.msra.mxu0 %v3960
    %3999 = vmatprep.subr.mxu0 0.0
    %4000 = vmatpush1.msra.mxu0 %v3959
    %4001 = vmatprep.subr.mxu0 0.0
    %4002 = vmatpush1.msra.mxu0 %v3958
    %4003 = vmatprep.subr.mxu0 0.0
    %4004 = vmatpush1.msra.mxu0 %v3957
    %4005 = vmatprep.subr.mxu0 0.0
    %4006 = vmatpush1.msra.mxu0 %v3956
    %4007 = vmatprep.subr.mxu0 0.0
    %4008 = vmatpush1.msra.mxu0 %v3955
    %4009 = vmatprep.subr.mxu0 0.0
    %4010 = vmatpush1.msra.mxu0 %v3954
    %4011 = vmatprep.subr.mxu0 0.0
    %4012 = vmatpush1.msra.mxu0 %v3953
    %4013 = vmatprep.subr.mxu0 0.0
    %4014 = vmatpush2.msra.mxu0 0.0
    %4015 = vmatprep.subr.mxu0 0.0
    %4016 = vmatpush2.msra.mxu0 0.0
    %4017 = vmatprep.subr.mxu0 0.0
    %4018 = vmatpush2.msra.mxu0 0.0
    %4019 = vmatprep.subr.mxu0 0.0
    %4020 = vmatpush2.msra.mxu0 0.0
    %4021 = vmatprep.subr.mxu0 0.0
    %4022 = vmatpush2.msra.mxu0 0.0
    %4023 = vmatprep.subr.mxu0 0.0
    %4024 = vmatpush2.msra.mxu0 0.0
    %4025 = vmatprep.subr.mxu0 0.0
    %4026 = vmatpush2.msra.mxu0 0.0
    %4027 = vmatprep.subr.mxu0 0.0
    %4028 = vmatpush2.msra.mxu0 %v3979
    %4029 = vmatprep.subr.mxu0 0.0
    %4030 = vmatpush2.msra.mxu0 %v3976
    %4031 = vmatprep.subr.mxu0 0.0
    %4032 = vmatpush2.msra.mxu0 %v3975
    %4033 = vmatprep.subr.mxu0 0.0
    %4034 = vmatpush2.msra.mxu0 %v3974
    %4035 = vmatprep.subr.mxu0 0.0
    %4036 = vmatpush2.msra.mxu0 %v3973
    %4037 = vmatprep.subr.mxu0 0.0
    %4038 = vmatpush2.msra.mxu0 %v3972
    %4039 = vmatprep.subr.mxu0 0.0
    %4040 = vmatpush2.msra.mxu0 %v3971
    %4041 = vmatprep.subr.mxu0 0.0
    %4042 = vmatpush2.msra.mxu0 %v3970
    %4043 = vmatprep.subr.mxu0 0.0
    %4044 = vmatpush2.msra.mxu0 %v3969
    %4045 = vmatprep.mubr.f32.mxu0 %v998
    %4046 = vmatmul.mubr.f32.gmra.mxu0 %v961
    %v4047 = vpop.f32.mrf.mxu0
    %v4048 = vadd.f32 0.0, %v4047
    %v4049 = vpop.f32.mrf.mxu0
    %4050 = vmatprep.mubr.f32.mxu0 %v1001
    %4051 = vmatmul.mubr.f32.gmra.mxu0 %v967
    %v4052 = vpop.f32.mrf.mxu0
    %v4053 = vadd.f32 0.0, %v4052
    %v4054 = vpop.f32.mrf.mxu0
    %4055 = vdwg.mxu0
    %s4056 = scalar_lea.vmem %s5, 448
    %v4057 = vld [vmem:[%s4056] sm:$0xff]
    %v4058 = vld [vmem:[%s4056 + $0x8] sm:$0xff]
    %v4059 = vld [vmem:[%s4056 + $0x10] sm:$0xff]
    %v4060 = vld [vmem:[%s4056 + $0x18] sm:$0xff]
    %v4062 = vsel %vm1195, %v4057, 0
    %v4065 = vsel %vm1195, %v4058, 0
    %v4068 = vsel %vm1195, %v4059, 0
    %v4071 = vsel %vm1195, %v4060, 0
    %v4074 = vsel %vm1003, %v4053, 0
    %4076 = vmatprep.subr.mxu0 0.0
    %4077 = vmatpush1.msra.mxu0 0.0
    %4078 = vmatprep.subr.mxu0 0.0
    %4079 = vmatpush1.msra.mxu0 0.0
    %4080 = vmatprep.subr.mxu0 0.0
    %4081 = vmatpush1.msra.mxu0 0.0
    %4082 = vmatprep.subr.mxu0 0.0
    %4083 = vmatpush1.msra.mxu0 0.0
    %4084 = vmatprep.subr.mxu0 0.0
    %4085 = vmatpush1.msra.mxu0 0.0
    %4086 = vmatprep.subr.mxu0 0.0
    %4087 = vmatpush1.msra.mxu0 0.0
    %4088 = vmatprep.subr.mxu0 0.0
    %4089 = vmatpush1.msra.mxu0 0.0
    %4090 = vmatprep.subr.mxu0 0.0
    %4091 = vmatpush1.msra.mxu0 0.0
    %4092 = vmatprep.subr.mxu0 0.0
    %4093 = vmatpush1.msra.mxu0 0.0
    %4094 = vmatprep.subr.mxu0 0.0
    %4095 = vmatpush1.msra.mxu0 0.0
    %4096 = vmatprep.subr.mxu0 0.0
    %4097 = vmatpush1.msra.mxu0 0.0
    %4098 = vmatprep.subr.mxu0 0.0
    %4099 = vmatpush1.msra.mxu0 0.0
    %4100 = vmatprep.subr.mxu0 0.0
    %4101 = vmatpush1.msra.mxu0 0.0
    %4102 = vmatprep.subr.mxu0 0.0
    %4103 = vmatpush1.msra.mxu0 0.0
    %4104 = vmatprep.subr.mxu0 0.0
    %4105 = vmatpush1.msra.mxu0 %v4074
    %4106 = vmatprep.subr.mxu0 0.0
    %4107 = vmatpush1.msra.mxu0 %v4048
    %4108 = vmatprep.subr.mxu0 0.0
    %4109 = vmatpush2.msra.mxu0 0.0
    %4110 = vmatprep.subr.mxu0 0.0
    %4111 = vmatpush2.msra.mxu0 0.0
    %4112 = vmatprep.subr.mxu0 0.0
    %4113 = vmatpush2.msra.mxu0 0.0
    %4114 = vmatprep.subr.mxu0 0.0
    %4115 = vmatpush2.msra.mxu0 0.0
    %4116 = vmatprep.subr.mxu0 0.0
    %4117 = vmatpush2.msra.mxu0 0.0
    %4118 = vmatprep.subr.mxu0 0.0
    %4119 = vmatpush2.msra.mxu0 0.0
    %4120 = vmatprep.subr.mxu0 0.0
    %4121 = vmatpush2.msra.mxu0 0.0
    %4122 = vmatprep.subr.mxu0 0.0
    %4123 = vmatpush2.msra.mxu0 0.0
    %4124 = vmatprep.subr.mxu0 0.0
    %4125 = vmatpush2.msra.mxu0 0.0
    %4126 = vmatprep.subr.mxu0 0.0
    %4127 = vmatpush2.msra.mxu0 0.0
    %4128 = vmatprep.subr.mxu0 0.0
    %4129 = vmatpush2.msra.mxu0 0.0
    %4130 = vmatprep.subr.mxu0 0.0
    %4131 = vmatpush2.msra.mxu0 0.0
    %4132 = vmatprep.subr.mxu0 0.0
    %4133 = vmatpush2.msra.mxu0 0.0
    %4134 = vmatprep.subr.mxu0 0.0
    %4135 = vmatpush2.msra.mxu0 0.0
    %4136 = vmatprep.subr.mxu0 0.0
    %4137 = vmatpush2.msra.mxu0 0.0
    %4138 = vmatprep.subr.mxu0 0.0
    %4139 = vmatpush2.msra.mxu0 0.0
    %4140 = vmatprep.mubr.f32.mxu0 0.0
    %4141 = vmatmul.mubr.f32.gmra.mxu0 %v4062
    %v4142 = vpop.f32.mrf.mxu0
    %v4143 = vadd.f32 0.0, %v4142
    %v4144 = vpop.f32.mrf.mxu0
    %4145 = vmatprep.mubr.f32.mxu0 0.0
    %4146 = vmatmul.mubr.f32.gmra.mxu0 %v4065
    %v4147 = vpop.f32.mrf.mxu0
    %v4148 = vadd.f32 0.0, %v4147
    %v4149 = vpop.f32.mrf.mxu0
    %4150 = vmatprep.mubr.f32.mxu0 0.0
    %4151 = vmatmul.mubr.f32.gmra.mxu0 %v4068
    %v4152 = vpop.f32.mrf.mxu0
    %v4153 = vadd.f32 0.0, %v4152
    %v4154 = vpop.f32.mrf.mxu0
    %4155 = vmatprep.mubr.f32.mxu0 0.0
    %4156 = vmatmul.mubr.f32.gmra.mxu0 %v4071
    %v4157 = vpop.f32.mrf.mxu0
    %v4158 = vadd.f32 0.0, %v4157
    %v4159 = vpop.f32.mrf.mxu0
    %4160 = vdwg.mxu0
    %v4161 = vadd.f32 %v3948, %v4143
    %v4162 = vadd.f32 %v3949, %v4148
    %v4163 = vadd.f32 %v3950, %v4153
    %v4164 = vadd.f32 %v3951, %v4158
    %s4165 = scalar_lea.vmem %s4, 3000
    %v4166 = vld [vmem:[%s4165] sm:$0xff]
    %v4167 = vld [vmem:[%s4165 + $0x8] sm:$0xff]
    %v4168 = vld [vmem:[%s4165 + $0x10] sm:$0xff]
    %v4169 = vld [vmem:[%s4165 + $0x18] sm:$0xff]
    %v4170 = vld [vmem:[%s4165 + $0x20] sm:$0xff]
    %v4171 = vld [vmem:[%s4165 + $0x28] sm:$0xff]
    %v4172 = vld [vmem:[%s4165 + $0x30] sm:$0xff]
    %v4173 = vld [vmem:[%s4165 + $0x38] sm:$0xff]
    %v4174 = vld [vmem:[%s4165 + $0x40] sm:$0xff]
    %v4175 = vld [vmem:[%s4165 + $0x48] sm:$0xff]
    %v4176 = vld [vmem:[%s4165 + $0x50] sm:$0xff]
    %v4177 = vld [vmem:[%s4165 + $0x58] sm:$0xff]
    %v4178 = vld [vmem:[%s4165 + $0x60] sm:$0xff]
    %v4179 = vld [vmem:[%s4165 + $0x68] sm:$0xff]
    %v4180 = vld [vmem:[%s4165 + $0x70] sm:$0xff]
    %v4181 = vld [vmem:[%s4165 + $0x78] sm:$0xff]
    %v4182 = vld [vmem:[%s4165 + $0x80] sm:$0xff]
    %v4183 = vld [vmem:[%s4165 + $0x88] sm:$0xff]
    %v4184 = vld [vmem:[%s4165 + $0x90] sm:$0xff]
    %v4185 = vld [vmem:[%s4165 + $0x98] sm:$0xff]
    %v4186 = vld [vmem:[%s4165 + $0xa0] sm:$0xff]
    %v4187 = vld [vmem:[%s4165 + $0xa8] sm:$0xff]
    %v4188 = vld [vmem:[%s4165 + $0xb0] sm:$0xff]
    %v4189 = vld [vmem:[%s4165 + $0xb8] sm:$0xff]
    %v4190 = vld [vmem:[%s4165 + $0xc0] sm:$0xf]
    %v4192 = vsel %vm1003, %v4190, 0
    %4194 = vmatprep.subr.mxu0 0.0
    %4195 = vmatpush1.msra.mxu0 %v4181
    %4196 = vmatprep.subr.mxu0 0.0
    %4197 = vmatpush1.msra.mxu0 %v4180
    %4198 = vmatprep.subr.mxu0 0.0
    %4199 = vmatpush1.msra.mxu0 %v4179
    %4200 = vmatprep.subr.mxu0 0.0
    %4201 = vmatpush1.msra.mxu0 %v4178
    %4202 = vmatprep.subr.mxu0 0.0
    %4203 = vmatpush1.msra.mxu0 %v4177
    %4204 = vmatprep.subr.mxu0 0.0
    %4205 = vmatpush1.msra.mxu0 %v4176
    %4206 = vmatprep.subr.mxu0 0.0
    %4207 = vmatpush1.msra.mxu0 %v4175
    %4208 = vmatprep.subr.mxu0 0.0
    %4209 = vmatpush1.msra.mxu0 %v4174
    %4210 = vmatprep.subr.mxu0 0.0
    %4211 = vmatpush1.msra.mxu0 %v4173
    %4212 = vmatprep.subr.mxu0 0.0
    %4213 = vmatpush1.msra.mxu0 %v4172
    %4214 = vmatprep.subr.mxu0 0.0
    %4215 = vmatpush1.msra.mxu0 %v4171
    %4216 = vmatprep.subr.mxu0 0.0
    %4217 = vmatpush1.msra.mxu0 %v4170
    %4218 = vmatprep.subr.mxu0 0.0
    %4219 = vmatpush1.msra.mxu0 %v4169
    %4220 = vmatprep.subr.mxu0 0.0
    %4221 = vmatpush1.msra.mxu0 %v4168
    %4222 = vmatprep.subr.mxu0 0.0
    %4223 = vmatpush1.msra.mxu0 %v4167
    %4224 = vmatprep.subr.mxu0 0.0
    %4225 = vmatpush1.msra.mxu0 %v4166
    %4226 = vmatprep.subr.mxu0 0.0
    %4227 = vmatpush2.msra.mxu0 0.0
    %4228 = vmatprep.subr.mxu0 0.0
    %4229 = vmatpush2.msra.mxu0 0.0
    %4230 = vmatprep.subr.mxu0 0.0
    %4231 = vmatpush2.msra.mxu0 0.0
    %4232 = vmatprep.subr.mxu0 0.0
    %4233 = vmatpush2.msra.mxu0 0.0
    %4234 = vmatprep.subr.mxu0 0.0
    %4235 = vmatpush2.msra.mxu0 0.0
    %4236 = vmatprep.subr.mxu0 0.0
    %4237 = vmatpush2.msra.mxu0 0.0
    %4238 = vmatprep.subr.mxu0 0.0
    %4239 = vmatpush2.msra.mxu0 0.0
    %4240 = vmatprep.subr.mxu0 0.0
    %4241 = vmatpush2.msra.mxu0 %v4192
    %4242 = vmatprep.subr.mxu0 0.0
    %4243 = vmatpush2.msra.mxu0 %v4189
    %4244 = vmatprep.subr.mxu0 0.0
    %4245 = vmatpush2.msra.mxu0 %v4188
    %4246 = vmatprep.subr.mxu0 0.0
    %4247 = vmatpush2.msra.mxu0 %v4187
    %4248 = vmatprep.subr.mxu0 0.0
    %4249 = vmatpush2.msra.mxu0 %v4186
    %4250 = vmatprep.subr.mxu0 0.0
    %4251 = vmatpush2.msra.mxu0 %v4185
    %4252 = vmatprep.subr.mxu0 0.0
    %4253 = vmatpush2.msra.mxu0 %v4184
    %4254 = vmatprep.subr.mxu0 0.0
    %4255 = vmatpush2.msra.mxu0 %v4183
    %4256 = vmatprep.subr.mxu0 0.0
    %4257 = vmatpush2.msra.mxu0 %v4182
    %4258 = vmatprep.mubr.f32.mxu0 %v998
    %4259 = vmatmul.mubr.f32.gmra.mxu0 %v961
    %v4260 = vpop.f32.mrf.mxu0
    %v4261 = vadd.f32 0.0, %v4260
    %v4262 = vpop.f32.mrf.mxu0
    %4263 = vmatprep.mubr.f32.mxu0 %v1001
    %4264 = vmatmul.mubr.f32.gmra.mxu0 %v967
    %v4265 = vpop.f32.mrf.mxu0
    %v4266 = vadd.f32 0.0, %v4265
    %v4267 = vpop.f32.mrf.mxu0
    %4268 = vdwg.mxu0
    %s4269 = scalar_lea.vmem %s5, 480
    %v4270 = vld [vmem:[%s4269] sm:$0xff]
    %v4271 = vld [vmem:[%s4269 + $0x8] sm:$0xff]
    %v4272 = vld [vmem:[%s4269 + $0x10] sm:$0xff]
    %v4273 = vld [vmem:[%s4269 + $0x18] sm:$0xff]
    %v4275 = vsel %vm1195, %v4270, 0
    %v4278 = vsel %vm1195, %v4271, 0
    %v4281 = vsel %vm1195, %v4272, 0
    %v4284 = vsel %vm1195, %v4273, 0
    %v4287 = vsel %vm1003, %v4266, 0
    %4289 = vmatprep.subr.mxu0 0.0
    %4290 = vmatpush1.msra.mxu0 0.0
    %4291 = vmatprep.subr.mxu0 0.0
    %4292 = vmatpush1.msra.mxu0 0.0
    %4293 = vmatprep.subr.mxu0 0.0
    %4294 = vmatpush1.msra.mxu0 0.0
    %4295 = vmatprep.subr.mxu0 0.0
    %4296 = vmatpush1.msra.mxu0 0.0
    %4297 = vmatprep.subr.mxu0 0.0
    %4298 = vmatpush1.msra.mxu0 0.0
    %4299 = vmatprep.subr.mxu0 0.0
    %4300 = vmatpush1.msra.mxu0 0.0
    %4301 = vmatprep.subr.mxu0 0.0
    %4302 = vmatpush1.msra.mxu0 0.0
    %4303 = vmatprep.subr.mxu0 0.0
    %4304 = vmatpush1.msra.mxu0 0.0
    %4305 = vmatprep.subr.mxu0 0.0
    %4306 = vmatpush1.msra.mxu0 0.0
    %4307 = vmatprep.subr.mxu0 0.0
    %4308 = vmatpush1.msra.mxu0 0.0
    %4309 = vmatprep.subr.mxu0 0.0
    %4310 = vmatpush1.msra.mxu0 0.0
    %4311 = vmatprep.subr.mxu0 0.0
    %4312 = vmatpush1.msra.mxu0 0.0
    %4313 = vmatprep.subr.mxu0 0.0
    %4314 = vmatpush1.msra.mxu0 0.0
    %4315 = vmatprep.subr.mxu0 0.0
    %4316 = vmatpush1.msra.mxu0 0.0
    %4317 = vmatprep.subr.mxu0 0.0
    %4318 = vmatpush1.msra.mxu0 %v4287
    %4319 = vmatprep.subr.mxu0 0.0
    %4320 = vmatpush1.msra.mxu0 %v4261
    %4321 = vmatprep.subr.mxu0 0.0
    %4322 = vmatpush2.msra.mxu0 0.0
    %4323 = vmatprep.subr.mxu0 0.0
    %4324 = vmatpush2.msra.mxu0 0.0
    %4325 = vmatprep.subr.mxu0 0.0
    %4326 = vmatpush2.msra.mxu0 0.0
    %4327 = vmatprep.subr.mxu0 0.0
    %4328 = vmatpush2.msra.mxu0 0.0
    %4329 = vmatprep.subr.mxu0 0.0
    %4330 = vmatpush2.msra.mxu0 0.0
    %4331 = vmatprep.subr.mxu0 0.0
    %4332 = vmatpush2.msra.mxu0 0.0
    %4333 = vmatprep.subr.mxu0 0.0
    %4334 = vmatpush2.msra.mxu0 0.0
    %4335 = vmatprep.subr.mxu0 0.0
    %4336 = vmatpush2.msra.mxu0 0.0
    %4337 = vmatprep.subr.mxu0 0.0
    %4338 = vmatpush2.msra.mxu0 0.0
    %4339 = vmatprep.subr.mxu0 0.0
    %4340 = vmatpush2.msra.mxu0 0.0
    %4341 = vmatprep.subr.mxu0 0.0
    %4342 = vmatpush2.msra.mxu0 0.0
    %4343 = vmatprep.subr.mxu0 0.0
    %4344 = vmatpush2.msra.mxu0 0.0
    %4345 = vmatprep.subr.mxu0 0.0
    %4346 = vmatpush2.msra.mxu0 0.0
    %4347 = vmatprep.subr.mxu0 0.0
    %4348 = vmatpush2.msra.mxu0 0.0
    %4349 = vmatprep.subr.mxu0 0.0
    %4350 = vmatpush2.msra.mxu0 0.0
    %4351 = vmatprep.subr.mxu0 0.0
    %4352 = vmatpush2.msra.mxu0 0.0
    %4353 = vmatprep.mubr.f32.mxu0 0.0
    %4354 = vmatmul.mubr.f32.gmra.mxu0 %v4275
    %v4355 = vpop.f32.mrf.mxu0
    %v4356 = vadd.f32 0.0, %v4355
    %v4357 = vpop.f32.mrf.mxu0
    %4358 = vmatprep.mubr.f32.mxu0 0.0
    %4359 = vmatmul.mubr.f32.gmra.mxu0 %v4278
    %v4360 = vpop.f32.mrf.mxu0
    %v4361 = vadd.f32 0.0, %v4360
    %v4362 = vpop.f32.mrf.mxu0
    %4363 = vmatprep.mubr.f32.mxu0 0.0
    %4364 = vmatmul.mubr.f32.gmra.mxu0 %v4281
    %v4365 = vpop.f32.mrf.mxu0
    %v4366 = vadd.f32 0.0, %v4365
    %v4367 = vpop.f32.mrf.mxu0
    %4368 = vmatprep.mubr.f32.mxu0 0.0
    %4369 = vmatmul.mubr.f32.gmra.mxu0 %v4284
    %v4370 = vpop.f32.mrf.mxu0
    %v4371 = vadd.f32 0.0, %v4370
    %v4372 = vpop.f32.mrf.mxu0
    %4373 = vdwg.mxu0
    %v4374 = vadd.f32 %v4161, %v4356
    %v4375 = vadd.f32 %v4162, %v4361
    %v4376 = vadd.f32 %v4163, %v4366
    %v4377 = vadd.f32 %v4164, %v4371
    %s4378 = scalar_lea.vmem %s4, 3200
    %v4379 = vld [vmem:[%s4378] sm:$0xff]
    %v4380 = vld [vmem:[%s4378 + $0x8] sm:$0xff]
    %v4381 = vld [vmem:[%s4378 + $0x10] sm:$0xff]
    %v4382 = vld [vmem:[%s4378 + $0x18] sm:$0xff]
    %v4383 = vld [vmem:[%s4378 + $0x20] sm:$0xff]
    %v4384 = vld [vmem:[%s4378 + $0x28] sm:$0xff]
    %v4385 = vld [vmem:[%s4378 + $0x30] sm:$0xff]
    %v4386 = vld [vmem:[%s4378 + $0x38] sm:$0xff]
    %v4387 = vld [vmem:[%s4378 + $0x40] sm:$0xff]
    %v4388 = vld [vmem:[%s4378 + $0x48] sm:$0xff]
    %v4389 = vld [vmem:[%s4378 + $0x50] sm:$0xff]
    %v4390 = vld [vmem:[%s4378 + $0x58] sm:$0xff]
    %v4391 = vld [vmem:[%s4378 + $0x60] sm:$0xff]
    %v4392 = vld [vmem:[%s4378 + $0x68] sm:$0xff]
    %v4393 = vld [vmem:[%s4378 + $0x70] sm:$0xff]
    %v4394 = vld [vmem:[%s4378 + $0x78] sm:$0xff]
    %v4395 = vld [vmem:[%s4378 + $0x80] sm:$0xff]
    %v4396 = vld [vmem:[%s4378 + $0x88] sm:$0xff]
    %v4397 = vld [vmem:[%s4378 + $0x90] sm:$0xff]
    %v4398 = vld [vmem:[%s4378 + $0x98] sm:$0xff]
    %v4399 = vld [vmem:[%s4378 + $0xa0] sm:$0xff]
    %v4400 = vld [vmem:[%s4378 + $0xa8] sm:$0xff]
    %v4401 = vld [vmem:[%s4378 + $0xb0] sm:$0xff]
    %v4402 = vld [vmem:[%s4378 + $0xb8] sm:$0xff]
    %v4403 = vld [vmem:[%s4378 + $0xc0] sm:$0xf]
    %v4405 = vsel %vm1003, %v4403, 0
    %4407 = vmatprep.subr.mxu0 0.0
    %4408 = vmatpush1.msra.mxu0 %v4394
    %4409 = vmatprep.subr.mxu0 0.0
    %4410 = vmatpush1.msra.mxu0 %v4393
    %4411 = vmatprep.subr.mxu0 0.0
    %4412 = vmatpush1.msra.mxu0 %v4392
    %4413 = vmatprep.subr.mxu0 0.0
    %4414 = vmatpush1.msra.mxu0 %v4391
    %4415 = vmatprep.subr.mxu0 0.0
    %4416 = vmatpush1.msra.mxu0 %v4390
    %4417 = vmatprep.subr.mxu0 0.0
    %4418 = vmatpush1.msra.mxu0 %v4389
    %4419 = vmatprep.subr.mxu0 0.0
    %4420 = vmatpush1.msra.mxu0 %v4388
    %4421 = vmatprep.subr.mxu0 0.0
    %4422 = vmatpush1.msra.mxu0 %v4387
    %4423 = vmatprep.subr.mxu0 0.0
    %4424 = vmatpush1.msra.mxu0 %v4386
    %4425 = vmatprep.subr.mxu0 0.0
    %4426 = vmatpush1.msra.mxu0 %v4385
    %4427 = vmatprep.subr.mxu0 0.0
    %4428 = vmatpush1.msra.mxu0 %v4384
    %4429 = vmatprep.subr.mxu0 0.0
    %4430 = vmatpush1.msra.mxu0 %v4383
    %4431 = vmatprep.subr.mxu0 0.0
    %4432 = vmatpush1.msra.mxu0 %v4382
    %4433 = vmatprep.subr.mxu0 0.0
    %4434 = vmatpush1.msra.mxu0 %v4381
    %4435 = vmatprep.subr.mxu0 0.0
    %4436 = vmatpush1.msra.mxu0 %v4380
    %4437 = vmatprep.subr.mxu0 0.0
    %4438 = vmatpush1.msra.mxu0 %v4379
    %4439 = vmatprep.subr.mxu0 0.0
    %4440 = vmatpush2.msra.mxu0 0.0
    %4441 = vmatprep.subr.mxu0 0.0
    %4442 = vmatpush2.msra.mxu0 0.0
    %4443 = vmatprep.subr.mxu0 0.0
    %4444 = vmatpush2.msra.mxu0 0.0
    %4445 = vmatprep.subr.mxu0 0.0
    %4446 = vmatpush2.msra.mxu0 0.0
    %4447 = vmatprep.subr.mxu0 0.0
    %4448 = vmatpush2.msra.mxu0 0.0
    %4449 = vmatprep.subr.mxu0 0.0
    %4450 = vmatpush2.msra.mxu0 0.0
    %4451 = vmatprep.subr.mxu0 0.0
    %4452 = vmatpush2.msra.mxu0 0.0
    %4453 = vmatprep.subr.mxu0 0.0
    %4454 = vmatpush2.msra.mxu0 %v4405
    %4455 = vmatprep.subr.mxu0 0.0
    %4456 = vmatpush2.msra.mxu0 %v4402
    %4457 = vmatprep.subr.mxu0 0.0
    %4458 = vmatpush2.msra.mxu0 %v4401
    %4459 = vmatprep.subr.mxu0 0.0
    %4460 = vmatpush2.msra.mxu0 %v4400
    %4461 = vmatprep.subr.mxu0 0.0
    %4462 = vmatpush2.msra.mxu0 %v4399
    %4463 = vmatprep.subr.mxu0 0.0
    %4464 = vmatpush2.msra.mxu0 %v4398
    %4465 = vmatprep.subr.mxu0 0.0
    %4466 = vmatpush2.msra.mxu0 %v4397
    %4467 = vmatprep.subr.mxu0 0.0
    %4468 = vmatpush2.msra.mxu0 %v4396
    %4469 = vmatprep.subr.mxu0 0.0
    %4470 = vmatpush2.msra.mxu0 %v4395
    %4471 = vmatprep.mubr.f32.mxu0 %v998
    %4472 = vmatmul.mubr.f32.gmra.mxu0 %v961
    %v4473 = vpop.f32.mrf.mxu0
    %v4474 = vadd.f32 0.0, %v4473
    %v4475 = vpop.f32.mrf.mxu0
    %4476 = vmatprep.mubr.f32.mxu0 %v1001
    %4477 = vmatmul.mubr.f32.gmra.mxu0 %v967
    %v4478 = vpop.f32.mrf.mxu0
    %v4479 = vadd.f32 0.0, %v4478
    %v4480 = vpop.f32.mrf.mxu0
    %4481 = vdwg.mxu0
    %s4482 = scalar_lea.vmem %s5, 512
    %v4483 = vld [vmem:[%s4482] sm:$0xff]
    %v4484 = vld [vmem:[%s4482 + $0x8] sm:$0xff]
    %v4485 = vld [vmem:[%s4482 + $0x10] sm:$0xff]
    %v4486 = vld [vmem:[%s4482 + $0x18] sm:$0xff]
    %v4488 = vsel %vm1195, %v4483, 0
    %v4491 = vsel %vm1195, %v4484, 0
    %v4494 = vsel %vm1195, %v4485, 0
    %v4497 = vsel %vm1195, %v4486, 0
    %v4500 = vsel %vm1003, %v4479, 0
    %4502 = vmatprep.subr.mxu0 0.0
    %4503 = vmatpush1.msra.mxu0 0.0
    %4504 = vmatprep.subr.mxu0 0.0
    %4505 = vmatpush1.msra.mxu0 0.0
    %4506 = vmatprep.subr.mxu0 0.0
    %4507 = vmatpush1.msra.mxu0 0.0
    %4508 = vmatprep.subr.mxu0 0.0
    %4509 = vmatpush1.msra.mxu0 0.0
    %4510 = vmatprep.subr.mxu0 0.0
    %4511 = vmatpush1.msra.mxu0 0.0
    %4512 = vmatprep.subr.mxu0 0.0
    %4513 = vmatpush1.msra.mxu0 0.0
    %4514 = vmatprep.subr.mxu0 0.0
    %4515 = vmatpush1.msra.mxu0 0.0
    %4516 = vmatprep.subr.mxu0 0.0
    %4517 = vmatpush1.msra.mxu0 0.0
    %4518 = vmatprep.subr.mxu0 0.0
    %4519 = vmatpush1.msra.mxu0 0.0
    %4520 = vmatprep.subr.mxu0 0.0
    %4521 = vmatpush1.msra.mxu0 0.0
    %4522 = vmatprep.subr.mxu0 0.0
    %4523 = vmatpush1.msra.mxu0 0.0
    %4524 = vmatprep.subr.mxu0 0.0
    %4525 = vmatpush1.msra.mxu0 0.0
    %4526 = vmatprep.subr.mxu0 0.0
    %4527 = vmatpush1.msra.mxu0 0.0
    %4528 = vmatprep.subr.mxu0 0.0
    %4529 = vmatpush1.msra.mxu0 0.0
    %4530 = vmatprep.subr.mxu0 0.0
    %4531 = vmatpush1.msra.mxu0 %v4500
    %4532 = vmatprep.subr.mxu0 0.0
    %4533 = vmatpush1.msra.mxu0 %v4474
    %4534 = vmatprep.subr.mxu0 0.0
    %4535 = vmatpush2.msra.mxu0 0.0
    %4536 = vmatprep.subr.mxu0 0.0
    %4537 = vmatpush2.msra.mxu0 0.0
    %4538 = vmatprep.subr.mxu0 0.0
    %4539 = vmatpush2.msra.mxu0 0.0
    %4540 = vmatprep.subr.mxu0 0.0
    %4541 = vmatpush2.msra.mxu0 0.0
    %4542 = vmatprep.subr.mxu0 0.0
    %4543 = vmatpush2.msra.mxu0 0.0
    %4544 = vmatprep.subr.mxu0 0.0
    %4545 = vmatpush2.msra.mxu0 0.0
    %4546 = vmatprep.subr.mxu0 0.0
    %4547 = vmatpush2.msra.mxu0 0.0
    %4548 = vmatprep.subr.mxu0 0.0
    %4549 = vmatpush2.msra.mxu0 0.0
    %4550 = vmatprep.subr.mxu0 0.0
    %4551 = vmatpush2.msra.mxu0 0.0
    %4552 = vmatprep.subr.mxu0 0.0
    %4553 = vmatpush2.msra.mxu0 0.0
    %4554 = vmatprep.subr.mxu0 0.0
    %4555 = vmatpush2.msra.mxu0 0.0
    %4556 = vmatprep.subr.mxu0 0.0
    %4557 = vmatpush2.msra.mxu0 0.0
    %4558 = vmatprep.subr.mxu0 0.0
    %4559 = vmatpush2.msra.mxu0 0.0
    %4560 = vmatprep.subr.mxu0 0.0
    %4561 = vmatpush2.msra.mxu0 0.0
    %4562 = vmatprep.subr.mxu0 0.0
    %4563 = vmatpush2.msra.mxu0 0.0
    %4564 = vmatprep.subr.mxu0 0.0
    %4565 = vmatpush2.msra.mxu0 0.0
    %4566 = vmatprep.mubr.f32.mxu0 0.0
    %4567 = vmatmul.mubr.f32.gmra.mxu0 %v4488
    %v4568 = vpop.f32.mrf.mxu0
    %v4569 = vadd.f32 0.0, %v4568
    %v4570 = vpop.f32.mrf.mxu0
    %4571 = vmatprep.mubr.f32.mxu0 0.0
    %4572 = vmatmul.mubr.f32.gmra.mxu0 %v4491
    %v4573 = vpop.f32.mrf.mxu0
    %v4574 = vadd.f32 0.0, %v4573
    %v4575 = vpop.f32.mrf.mxu0
    %4576 = vmatprep.mubr.f32.mxu0 0.0
    %4577 = vmatmul.mubr.f32.gmra.mxu0 %v4494
    %v4578 = vpop.f32.mrf.mxu0
    %v4579 = vadd.f32 0.0, %v4578
    %v4580 = vpop.f32.mrf.mxu0
    %4581 = vmatprep.mubr.f32.mxu0 0.0
    %4582 = vmatmul.mubr.f32.gmra.mxu0 %v4497
    %v4583 = vpop.f32.mrf.mxu0
    %v4584 = vadd.f32 0.0, %v4583
    %v4585 = vpop.f32.mrf.mxu0
    %4586 = vdwg.mxu0
    %v4587 = vadd.f32 %v4374, %v4569
    %v4588 = vadd.f32 %v4375, %v4574
    %v4589 = vadd.f32 %v4376, %v4579
    %v4590 = vadd.f32 %v4377, %v4584
    %s4591 = scalar_lea.vmem %s4, 3400
    %v4592 = vld [vmem:[%s4591] sm:$0xff]
    %v4593 = vld [vmem:[%s4591 + $0x8] sm:$0xff]
    %v4594 = vld [vmem:[%s4591 + $0x10] sm:$0xff]
    %v4595 = vld [vmem:[%s4591 + $0x18] sm:$0xff]
    %v4596 = vld [vmem:[%s4591 + $0x20] sm:$0xff]
    %v4597 = vld [vmem:[%s4591 + $0x28] sm:$0xff]
    %v4598 = vld [vmem:[%s4591 + $0x30] sm:$0xff]
    %v4599 = vld [vmem:[%s4591 + $0x38] sm:$0xff]
    %v4600 = vld [vmem:[%s4591 + $0x40] sm:$0xff]
    %v4601 = vld [vmem:[%s4591 + $0x48] sm:$0xff]
    %v4602 = vld [vmem:[%s4591 + $0x50] sm:$0xff]
    %v4603 = vld [vmem:[%s4591 + $0x58] sm:$0xff]
    %v4604 = vld [vmem:[%s4591 + $0x60] sm:$0xff]
    %v4605 = vld [vmem:[%s4591 + $0x68] sm:$0xff]
    %v4606 = vld [vmem:[%s4591 + $0x70] sm:$0xff]
    %v4607 = vld [vmem:[%s4591 + $0x78] sm:$0xff]
    %v4608 = vld [vmem:[%s4591 + $0x80] sm:$0xff]
    %v4609 = vld [vmem:[%s4591 + $0x88] sm:$0xff]
    %v4610 = vld [vmem:[%s4591 + $0x90] sm:$0xff]
    %v4611 = vld [vmem:[%s4591 + $0x98] sm:$0xff]
    %v4612 = vld [vmem:[%s4591 + $0xa0] sm:$0xff]
    %v4613 = vld [vmem:[%s4591 + $0xa8] sm:$0xff]
    %v4614 = vld [vmem:[%s4591 + $0xb0] sm:$0xff]
    %v4615 = vld [vmem:[%s4591 + $0xb8] sm:$0xff]
    %v4616 = vld [vmem:[%s4591 + $0xc0] sm:$0xf]
    %v4618 = vsel %vm1003, %v4616, 0
    %4620 = vmatprep.subr.mxu0 0.0
    %4621 = vmatpush1.msra.mxu0 %v4607
    %4622 = vmatprep.subr.mxu0 0.0
    %4623 = vmatpush1.msra.mxu0 %v4606
    %4624 = vmatprep.subr.mxu0 0.0
    %4625 = vmatpush1.msra.mxu0 %v4605
    %4626 = vmatprep.subr.mxu0 0.0
    %4627 = vmatpush1.msra.mxu0 %v4604
    %4628 = vmatprep.subr.mxu0 0.0
    %4629 = vmatpush1.msra.mxu0 %v4603
    %4630 = vmatprep.subr.mxu0 0.0
    %4631 = vmatpush1.msra.mxu0 %v4602
    %4632 = vmatprep.subr.mxu0 0.0
    %4633 = vmatpush1.msra.mxu0 %v4601
    %4634 = vmatprep.subr.mxu0 0.0
    %4635 = vmatpush1.msra.mxu0 %v4600
    %4636 = vmatprep.subr.mxu0 0.0
    %4637 = vmatpush1.msra.mxu0 %v4599
    %4638 = vmatprep.subr.mxu0 0.0
    %4639 = vmatpush1.msra.mxu0 %v4598
    %4640 = vmatprep.subr.mxu0 0.0
    %4641 = vmatpush1.msra.mxu0 %v4597
    %4642 = vmatprep.subr.mxu0 0.0
    %4643 = vmatpush1.msra.mxu0 %v4596
    %4644 = vmatprep.subr.mxu0 0.0
    %4645 = vmatpush1.msra.mxu0 %v4595
    %4646 = vmatprep.subr.mxu0 0.0
    %4647 = vmatpush1.msra.mxu0 %v4594
    %4648 = vmatprep.subr.mxu0 0.0
    %4649 = vmatpush1.msra.mxu0 %v4593
    %4650 = vmatprep.subr.mxu0 0.0
    %4651 = vmatpush1.msra.mxu0 %v4592
    %4652 = vmatprep.subr.mxu0 0.0
    %4653 = vmatpush2.msra.mxu0 0.0
    %4654 = vmatprep.subr.mxu0 0.0
    %4655 = vmatpush2.msra.mxu0 0.0
    %4656 = vmatprep.subr.mxu0 0.0
    %4657 = vmatpush2.msra.mxu0 0.0
    %4658 = vmatprep.subr.mxu0 0.0
    %4659 = vmatpush2.msra.mxu0 0.0
    %4660 = vmatprep.subr.mxu0 0.0
    %4661 = vmatpush2.msra.mxu0 0.0
    %4662 = vmatprep.subr.mxu0 0.0
    %4663 = vmatpush2.msra.mxu0 0.0
    %4664 = vmatprep.subr.mxu0 0.0
    %4665 = vmatpush2.msra.mxu0 0.0
    %4666 = vmatprep.subr.mxu0 0.0
    %4667 = vmatpush2.msra.mxu0 %v4618
    %4668 = vmatprep.subr.mxu0 0.0
    %4669 = vmatpush2.msra.mxu0 %v4615
    %4670 = vmatprep.subr.mxu0 0.0
    %4671 = vmatpush2.msra.mxu0 %v4614
    %4672 = vmatprep.subr.mxu0 0.0
    %4673 = vmatpush2.msra.mxu0 %v4613
    %4674 = vmatprep.subr.mxu0 0.0
    %4675 = vmatpush2.msra.mxu0 %v4612
    %4676 = vmatprep.subr.mxu0 0.0
    %4677 = vmatpush2.msra.mxu0 %v4611
    %4678 = vmatprep.subr.mxu0 0.0
    %4679 = vmatpush2.msra.mxu0 %v4610
    %4680 = vmatprep.subr.mxu0 0.0
    %4681 = vmatpush2.msra.mxu0 %v4609
    %4682 = vmatprep.subr.mxu0 0.0
    %4683 = vmatpush2.msra.mxu0 %v4608
    %4684 = vmatprep.mubr.f32.mxu0 %v998
    %4685 = vmatmul.mubr.f32.gmra.mxu0 %v961
    %v4686 = vpop.f32.mrf.mxu0
    %v4687 = vadd.f32 0.0, %v4686
    %v4688 = vpop.f32.mrf.mxu0
    %4689 = vmatprep.mubr.f32.mxu0 %v1001
    %4690 = vmatmul.mubr.f32.gmra.mxu0 %v967
    %v4691 = vpop.f32.mrf.mxu0
    %v4692 = vadd.f32 0.0, %v4691
    %v4693 = vpop.f32.mrf.mxu0
    %4694 = vdwg.mxu0
    %s4695 = scalar_lea.vmem %s5, 544
    %v4696 = vld [vmem:[%s4695] sm:$0xff]
    %v4697 = vld [vmem:[%s4695 + $0x8] sm:$0xff]
    %v4698 = vld [vmem:[%s4695 + $0x10] sm:$0xff]
    %v4699 = vld [vmem:[%s4695 + $0x18] sm:$0xff]
    %v4701 = vsel %vm1195, %v4696, 0
    %v4704 = vsel %vm1195, %v4697, 0
    %v4707 = vsel %vm1195, %v4698, 0
    %v4710 = vsel %vm1195, %v4699, 0
    %v4713 = vsel %vm1003, %v4692, 0
    %4715 = vmatprep.subr.mxu0 0.0
    %4716 = vmatpush1.msra.mxu0 0.0
    %4717 = vmatprep.subr.mxu0 0.0
    %4718 = vmatpush1.msra.mxu0 0.0
    %4719 = vmatprep.subr.mxu0 0.0
    %4720 = vmatpush1.msra.mxu0 0.0
    %4721 = vmatprep.subr.mxu0 0.0
    %4722 = vmatpush1.msra.mxu0 0.0
    %4723 = vmatprep.subr.mxu0 0.0
    %4724 = vmatpush1.msra.mxu0 0.0
    %4725 = vmatprep.subr.mxu0 0.0
    %4726 = vmatpush1.msra.mxu0 0.0
    %4727 = vmatprep.subr.mxu0 0.0
    %4728 = vmatpush1.msra.mxu0 0.0
    %4729 = vmatprep.subr.mxu0 0.0
    %4730 = vmatpush1.msra.mxu0 0.0
    %4731 = vmatprep.subr.mxu0 0.0
    %4732 = vmatpush1.msra.mxu0 0.0
    %4733 = vmatprep.subr.mxu0 0.0
    %4734 = vmatpush1.msra.mxu0 0.0
    %4735 = vmatprep.subr.mxu0 0.0
    %4736 = vmatpush1.msra.mxu0 0.0
    %4737 = vmatprep.subr.mxu0 0.0
    %4738 = vmatpush1.msra.mxu0 0.0
    %4739 = vmatprep.subr.mxu0 0.0
    %4740 = vmatpush1.msra.mxu0 0.0
    %4741 = vmatprep.subr.mxu0 0.0
    %4742 = vmatpush1.msra.mxu0 0.0
    %4743 = vmatprep.subr.mxu0 0.0
    %4744 = vmatpush1.msra.mxu0 %v4713
    %4745 = vmatprep.subr.mxu0 0.0
    %4746 = vmatpush1.msra.mxu0 %v4687
    %4747 = vmatprep.subr.mxu0 0.0
    %4748 = vmatpush2.msra.mxu0 0.0
    %4749 = vmatprep.subr.mxu0 0.0
    %4750 = vmatpush2.msra.mxu0 0.0
    %4751 = vmatprep.subr.mxu0 0.0
    %4752 = vmatpush2.msra.mxu0 0.0
    %4753 = vmatprep.subr.mxu0 0.0
    %4754 = vmatpush2.msra.mxu0 0.0
    %4755 = vmatprep.subr.mxu0 0.0
    %4756 = vmatpush2.msra.mxu0 0.0
    %4757 = vmatprep.subr.mxu0 0.0
    %4758 = vmatpush2.msra.mxu0 0.0
    %4759 = vmatprep.subr.mxu0 0.0
    %4760 = vmatpush2.msra.mxu0 0.0
    %4761 = vmatprep.subr.mxu0 0.0
    %4762 = vmatpush2.msra.mxu0 0.0
    %4763 = vmatprep.subr.mxu0 0.0
    %4764 = vmatpush2.msra.mxu0 0.0
    %4765 = vmatprep.subr.mxu0 0.0
    %4766 = vmatpush2.msra.mxu0 0.0
    %4767 = vmatprep.subr.mxu0 0.0
    %4768 = vmatpush2.msra.mxu0 0.0
    %4769 = vmatprep.subr.mxu0 0.0
    %4770 = vmatpush2.msra.mxu0 0.0
    %4771 = vmatprep.subr.mxu0 0.0
    %4772 = vmatpush2.msra.mxu0 0.0
    %4773 = vmatprep.subr.mxu0 0.0
    %4774 = vmatpush2.msra.mxu0 0.0
    %4775 = vmatprep.subr.mxu0 0.0
    %4776 = vmatpush2.msra.mxu0 0.0
    %4777 = vmatprep.subr.mxu0 0.0
    %4778 = vmatpush2.msra.mxu0 0.0
    %4779 = vmatprep.mubr.f32.mxu0 0.0
    %4780 = vmatmul.mubr.f32.gmra.mxu0 %v4701
    %v4781 = vpop.f32.mrf.mxu0
    %v4782 = vadd.f32 0.0, %v4781
    %v4783 = vpop.f32.mrf.mxu0
    %4784 = vmatprep.mubr.f32.mxu0 0.0
    %4785 = vmatmul.mubr.f32.gmra.mxu0 %v4704
    %v4786 = vpop.f32.mrf.mxu0
    %v4787 = vadd.f32 0.0, %v4786
    %v4788 = vpop.f32.mrf.mxu0
    %4789 = vmatprep.mubr.f32.mxu0 0.0
    %4790 = vmatmul.mubr.f32.gmra.mxu0 %v4707
    %v4791 = vpop.f32.mrf.mxu0
    %v4792 = vadd.f32 0.0, %v4791
    %v4793 = vpop.f32.mrf.mxu0
    %4794 = vmatprep.mubr.f32.mxu0 0.0
    %4795 = vmatmul.mubr.f32.gmra.mxu0 %v4710
    %v4796 = vpop.f32.mrf.mxu0
    %v4797 = vadd.f32 0.0, %v4796
    %v4798 = vpop.f32.mrf.mxu0
    %4799 = vdwg.mxu0
    %v4800 = vadd.f32 %v4587, %v4782
    %v4801 = vadd.f32 %v4588, %v4787
    %v4802 = vadd.f32 %v4589, %v4792
    %v4803 = vadd.f32 %v4590, %v4797
    %s4804 = scalar_lea.vmem %s4, 3600
    %v4805 = vld [vmem:[%s4804] sm:$0xff]
    %v4806 = vld [vmem:[%s4804 + $0x8] sm:$0xff]
    %v4807 = vld [vmem:[%s4804 + $0x10] sm:$0xff]
    %v4808 = vld [vmem:[%s4804 + $0x18] sm:$0xff]
    %v4809 = vld [vmem:[%s4804 + $0x20] sm:$0xff]
    %v4810 = vld [vmem:[%s4804 + $0x28] sm:$0xff]
    %v4811 = vld [vmem:[%s4804 + $0x30] sm:$0xff]
    %v4812 = vld [vmem:[%s4804 + $0x38] sm:$0xff]
    %v4813 = vld [vmem:[%s4804 + $0x40] sm:$0xff]
    %v4814 = vld [vmem:[%s4804 + $0x48] sm:$0xff]
    %v4815 = vld [vmem:[%s4804 + $0x50] sm:$0xff]
    %v4816 = vld [vmem:[%s4804 + $0x58] sm:$0xff]
    %v4817 = vld [vmem:[%s4804 + $0x60] sm:$0xff]
    %v4818 = vld [vmem:[%s4804 + $0x68] sm:$0xff]
    %v4819 = vld [vmem:[%s4804 + $0x70] sm:$0xff]
    %v4820 = vld [vmem:[%s4804 + $0x78] sm:$0xff]
    %v4821 = vld [vmem:[%s4804 + $0x80] sm:$0xff]
    %v4822 = vld [vmem:[%s4804 + $0x88] sm:$0xff]
    %v4823 = vld [vmem:[%s4804 + $0x90] sm:$0xff]
    %v4824 = vld [vmem:[%s4804 + $0x98] sm:$0xff]
    %v4825 = vld [vmem:[%s4804 + $0xa0] sm:$0xff]
    %v4826 = vld [vmem:[%s4804 + $0xa8] sm:$0xff]
    %v4827 = vld [vmem:[%s4804 + $0xb0] sm:$0xff]
    %v4828 = vld [vmem:[%s4804 + $0xb8] sm:$0xff]
    %v4829 = vld [vmem:[%s4804 + $0xc0] sm:$0xf]
    %v4831 = vsel %vm1003, %v4829, 0
    %4833 = vmatprep.subr.mxu0 0.0
    %4834 = vmatpush1.msra.mxu0 %v4820
    %4835 = vmatprep.subr.mxu0 0.0
    %4836 = vmatpush1.msra.mxu0 %v4819
    %4837 = vmatprep.subr.mxu0 0.0
    %4838 = vmatpush1.msra.mxu0 %v4818
    %4839 = vmatprep.subr.mxu0 0.0
    %4840 = vmatpush1.msra.mxu0 %v4817
    %4841 = vmatprep.subr.mxu0 0.0
    %4842 = vmatpush1.msra.mxu0 %v4816
    %4843 = vmatprep.subr.mxu0 0.0
    %4844 = vmatpush1.msra.mxu0 %v4815
    %4845 = vmatprep.subr.mxu0 0.0
    %4846 = vmatpush1.msra.mxu0 %v4814
    %4847 = vmatprep.subr.mxu0 0.0
    %4848 = vmatpush1.msra.mxu0 %v4813
    %4849 = vmatprep.subr.mxu0 0.0
    %4850 = vmatpush1.msra.mxu0 %v4812
    %4851 = vmatprep.subr.mxu0 0.0
    %4852 = vmatpush1.msra.mxu0 %v4811
    %4853 = vmatprep.subr.mxu0 0.0
    %4854 = vmatpush1.msra.mxu0 %v4810
    %4855 = vmatprep.subr.mxu0 0.0
    %4856 = vmatpush1.msra.mxu0 %v4809
    %4857 = vmatprep.subr.mxu0 0.0
    %4858 = vmatpush1.msra.mxu0 %v4808
    %4859 = vmatprep.subr.mxu0 0.0
    %4860 = vmatpush1.msra.mxu0 %v4807
    %4861 = vmatprep.subr.mxu0 0.0
    %4862 = vmatpush1.msra.mxu0 %v4806
    %4863 = vmatprep.subr.mxu0 0.0
    %4864 = vmatpush1.msra.mxu0 %v4805
    %4865 = vmatprep.subr.mxu0 0.0
    %4866 = vmatpush2.msra.mxu0 0.0
    %4867 = vmatprep.subr.mxu0 0.0
    %4868 = vmatpush2.msra.mxu0 0.0
    %4869 = vmatprep.subr.mxu0 0.0
    %4870 = vmatpush2.msra.mxu0 0.0
    %4871 = vmatprep.subr.mxu0 0.0
    %4872 = vmatpush2.msra.mxu0 0.0
    %4873 = vmatprep.subr.mxu0 0.0
    %4874 = vmatpush2.msra.mxu0 0.0
    %4875 = vmatprep.subr.mxu0 0.0
    %4876 = vmatpush2.msra.mxu0 0.0
    %4877 = vmatprep.subr.mxu0 0.0
    %4878 = vmatpush2.msra.mxu0 0.0
    %4879 = vmatprep.subr.mxu0 0.0
    %4880 = vmatpush2.msra.mxu0 %v4831
    %4881 = vmatprep.subr.mxu0 0.0
    %4882 = vmatpush2.msra.mxu0 %v4828
    %4883 = vmatprep.subr.mxu0 0.0
    %4884 = vmatpush2.msra.mxu0 %v4827
    %4885 = vmatprep.subr.mxu0 0.0
    %4886 = vmatpush2.msra.mxu0 %v4826
    %4887 = vmatprep.subr.mxu0 0.0
    %4888 = vmatpush2.msra.mxu0 %v4825
    %4889 = vmatprep.subr.mxu0 0.0
    %4890 = vmatpush2.msra.mxu0 %v4824
    %4891 = vmatprep.subr.mxu0 0.0
    %4892 = vmatpush2.msra.mxu0 %v4823
    %4893 = vmatprep.subr.mxu0 0.0
    %4894 = vmatpush2.msra.mxu0 %v4822
    %4895 = vmatprep.subr.mxu0 0.0
    %4896 = vmatpush2.msra.mxu0 %v4821
    %4897 = vmatprep.mubr.f32.mxu0 %v998
    %4898 = vmatmul.mubr.f32.gmra.mxu0 %v961
    %v4899 = vpop.f32.mrf.mxu0
    %v4900 = vadd.f32 0.0, %v4899
    %v4901 = vpop.f32.mrf.mxu0
    %4902 = vmatprep.mubr.f32.mxu0 %v1001
    %4903 = vmatmul.mubr.f32.gmra.mxu0 %v967
    %v4904 = vpop.f32.mrf.mxu0
    %v4905 = vadd.f32 0.0, %v4904
    %v4906 = vpop.f32.mrf.mxu0
    %4907 = vdwg.mxu0
    %s4908 = scalar_lea.vmem %s5, 576
    %v4909 = vld [vmem:[%s4908] sm:$0xff]
    %v4910 = vld [vmem:[%s4908 + $0x8] sm:$0xff]
    %v4911 = vld [vmem:[%s4908 + $0x10] sm:$0xff]
    %v4912 = vld [vmem:[%s4908 + $0x18] sm:$0xff]
    %v4914 = vsel %vm1195, %v4909, 0
    %v4917 = vsel %vm1195, %v4910, 0
    %v4920 = vsel %vm1195, %v4911, 0
    %v4923 = vsel %vm1195, %v4912, 0
    %v4926 = vsel %vm1003, %v4905, 0
    %4928 = vmatprep.subr.mxu0 0.0
    %4929 = vmatpush1.msra.mxu0 0.0
    %4930 = vmatprep.subr.mxu0 0.0
    %4931 = vmatpush1.msra.mxu0 0.0
    %4932 = vmatprep.subr.mxu0 0.0
    %4933 = vmatpush1.msra.mxu0 0.0
    %4934 = vmatprep.subr.mxu0 0.0
    %4935 = vmatpush1.msra.mxu0 0.0
    %4936 = vmatprep.subr.mxu0 0.0
    %4937 = vmatpush1.msra.mxu0 0.0
    %4938 = vmatprep.subr.mxu0 0.0
    %4939 = vmatpush1.msra.mxu0 0.0
    %4940 = vmatprep.subr.mxu0 0.0
    %4941 = vmatpush1.msra.mxu0 0.0
    %4942 = vmatprep.subr.mxu0 0.0
    %4943 = vmatpush1.msra.mxu0 0.0
    %4944 = vmatprep.subr.mxu0 0.0
    %4945 = vmatpush1.msra.mxu0 0.0
    %4946 = vmatprep.subr.mxu0 0.0
    %4947 = vmatpush1.msra.mxu0 0.0
    %4948 = vmatprep.subr.mxu0 0.0
    %4949 = vmatpush1.msra.mxu0 0.0
    %4950 = vmatprep.subr.mxu0 0.0
    %4951 = vmatpush1.msra.mxu0 0.0
    %4952 = vmatprep.subr.mxu0 0.0
    %4953 = vmatpush1.msra.mxu0 0.0
    %4954 = vmatprep.subr.mxu0 0.0
    %4955 = vmatpush1.msra.mxu0 0.0
    %4956 = vmatprep.subr.mxu0 0.0
    %4957 = vmatpush1.msra.mxu0 %v4926
    %4958 = vmatprep.subr.mxu0 0.0
    %4959 = vmatpush1.msra.mxu0 %v4900
    %4960 = vmatprep.subr.mxu0 0.0
    %4961 = vmatpush2.msra.mxu0 0.0
    %4962 = vmatprep.subr.mxu0 0.0
    %4963 = vmatpush2.msra.mxu0 0.0
    %4964 = vmatprep.subr.mxu0 0.0
    %4965 = vmatpush2.msra.mxu0 0.0
    %4966 = vmatprep.subr.mxu0 0.0
    %4967 = vmatpush2.msra.mxu0 0.0
    %4968 = vmatprep.subr.mxu0 0.0
    %4969 = vmatpush2.msra.mxu0 0.0
    %4970 = vmatprep.subr.mxu0 0.0
    %4971 = vmatpush2.msra.mxu0 0.0
    %4972 = vmatprep.subr.mxu0 0.0
    %4973 = vmatpush2.msra.mxu0 0.0
    %4974 = vmatprep.subr.mxu0 0.0
    %4975 = vmatpush2.msra.mxu0 0.0
    %4976 = vmatprep.subr.mxu0 0.0
    %4977 = vmatpush2.msra.mxu0 0.0
    %4978 = vmatprep.subr.mxu0 0.0
    %4979 = vmatpush2.msra.mxu0 0.0
    %4980 = vmatprep.subr.mxu0 0.0
    %4981 = vmatpush2.msra.mxu0 0.0
    %4982 = vmatprep.subr.mxu0 0.0
    %4983 = vmatpush2.msra.mxu0 0.0
    %4984 = vmatprep.subr.mxu0 0.0
    %4985 = vmatpush2.msra.mxu0 0.0
    %4986 = vmatprep.subr.mxu0 0.0
    %4987 = vmatpush2.msra.mxu0 0.0
    %4988 = vmatprep.subr.mxu0 0.0
    %4989 = vmatpush2.msra.mxu0 0.0
    %4990 = vmatprep.subr.mxu0 0.0
    %4991 = vmatpush2.msra.mxu0 0.0
    %4992 = vmatprep.mubr.f32.mxu0 0.0
    %4993 = vmatmul.mubr.f32.gmra.mxu0 %v4914
    %v4994 = vpop.f32.mrf.mxu0
    %v4995 = vadd.f32 0.0, %v4994
    %v4996 = vpop.f32.mrf.mxu0
    %4997 = vmatprep.mubr.f32.mxu0 0.0
    %4998 = vmatmul.mubr.f32.gmra.mxu0 %v4917
    %v4999 = vpop.f32.mrf.mxu0
    %v5000 = vadd.f32 0.0, %v4999
    %v5001 = vpop.f32.mrf.mxu0
    %5002 = vmatprep.mubr.f32.mxu0 0.0
    %5003 = vmatmul.mubr.f32.gmra.mxu0 %v4920
    %v5004 = vpop.f32.mrf.mxu0
    %v5005 = vadd.f32 0.0, %v5004
    %v5006 = vpop.f32.mrf.mxu0
    %5007 = vmatprep.mubr.f32.mxu0 0.0
    %5008 = vmatmul.mubr.f32.gmra.mxu0 %v4923
    %v5009 = vpop.f32.mrf.mxu0
    %v5010 = vadd.f32 0.0, %v5009
    %v5011 = vpop.f32.mrf.mxu0
    %5012 = vdwg.mxu0
    %v5013 = vadd.f32 %v4800, %v4995
    %v5014 = vadd.f32 %v4801, %v5000
    %v5015 = vadd.f32 %v4802, %v5005
    %v5016 = vadd.f32 %v4803, %v5010
    %s5017 = scalar_lea.vmem %s4, 3800
    %v5018 = vld [vmem:[%s5017] sm:$0xff]
    %v5019 = vld [vmem:[%s5017 + $0x8] sm:$0xff]
    %v5020 = vld [vmem:[%s5017 + $0x10] sm:$0xff]
    %v5021 = vld [vmem:[%s5017 + $0x18] sm:$0xff]
    %v5022 = vld [vmem:[%s5017 + $0x20] sm:$0xff]
    %v5023 = vld [vmem:[%s5017 + $0x28] sm:$0xff]
    %v5024 = vld [vmem:[%s5017 + $0x30] sm:$0xff]
    %v5025 = vld [vmem:[%s5017 + $0x38] sm:$0xff]
    %v5026 = vld [vmem:[%s5017 + $0x40] sm:$0xff]
    %v5027 = vld [vmem:[%s5017 + $0x48] sm:$0xff]
    %v5028 = vld [vmem:[%s5017 + $0x50] sm:$0xff]
    %v5029 = vld [vmem:[%s5017 + $0x58] sm:$0xff]
    %v5030 = vld [vmem:[%s5017 + $0x60] sm:$0xff]
    %v5031 = vld [vmem:[%s5017 + $0x68] sm:$0xff]
    %v5032 = vld [vmem:[%s5017 + $0x70] sm:$0xff]
    %v5033 = vld [vmem:[%s5017 + $0x78] sm:$0xff]
    %v5034 = vld [vmem:[%s5017 + $0x80] sm:$0xff]
    %v5035 = vld [vmem:[%s5017 + $0x88] sm:$0xff]
    %v5036 = vld [vmem:[%s5017 + $0x90] sm:$0xff]
    %v5037 = vld [vmem:[%s5017 + $0x98] sm:$0xff]
    %v5038 = vld [vmem:[%s5017 + $0xa0] sm:$0xff]
    %v5039 = vld [vmem:[%s5017 + $0xa8] sm:$0xff]
    %v5040 = vld [vmem:[%s5017 + $0xb0] sm:$0xff]
    %v5041 = vld [vmem:[%s5017 + $0xb8] sm:$0xff]
    %v5042 = vld [vmem:[%s5017 + $0xc0] sm:$0xf]
    %v5044 = vsel %vm1003, %v5042, 0
    %5046 = vmatprep.subr.mxu0 0.0
    %5047 = vmatpush1.msra.mxu0 %v5033
    %5048 = vmatprep.subr.mxu0 0.0
    %5049 = vmatpush1.msra.mxu0 %v5032
    %5050 = vmatprep.subr.mxu0 0.0
    %5051 = vmatpush1.msra.mxu0 %v5031
    %5052 = vmatprep.subr.mxu0 0.0
    %5053 = vmatpush1.msra.mxu0 %v5030
    %5054 = vmatprep.subr.mxu0 0.0
    %5055 = vmatpush1.msra.mxu0 %v5029
    %5056 = vmatprep.subr.mxu0 0.0
    %5057 = vmatpush1.msra.mxu0 %v5028
    %5058 = vmatprep.subr.mxu0 0.0
    %5059 = vmatpush1.msra.mxu0 %v5027
    %5060 = vmatprep.subr.mxu0 0.0
    %5061 = vmatpush1.msra.mxu0 %v5026
    %5062 = vmatprep.subr.mxu0 0.0
    %5063 = vmatpush1.msra.mxu0 %v5025
    %5064 = vmatprep.subr.mxu0 0.0
    %5065 = vmatpush1.msra.mxu0 %v5024
    %5066 = vmatprep.subr.mxu0 0.0
    %5067 = vmatpush1.msra.mxu0 %v5023
    %5068 = vmatprep.subr.mxu0 0.0
    %5069 = vmatpush1.msra.mxu0 %v5022
    %5070 = vmatprep.subr.mxu0 0.0
    %5071 = vmatpush1.msra.mxu0 %v5021
    %5072 = vmatprep.subr.mxu0 0.0
    %5073 = vmatpush1.msra.mxu0 %v5020
    %5074 = vmatprep.subr.mxu0 0.0
    %5075 = vmatpush1.msra.mxu0 %v5019
    %5076 = vmatprep.subr.mxu0 0.0
    %5077 = vmatpush1.msra.mxu0 %v5018
    %5078 = vmatprep.subr.mxu0 0.0
    %5079 = vmatpush2.msra.mxu0 0.0
    %5080 = vmatprep.subr.mxu0 0.0
    %5081 = vmatpush2.msra.mxu0 0.0
    %5082 = vmatprep.subr.mxu0 0.0
    %5083 = vmatpush2.msra.mxu0 0.0
    %5084 = vmatprep.subr.mxu0 0.0
    %5085 = vmatpush2.msra.mxu0 0.0
    %5086 = vmatprep.subr.mxu0 0.0
    %5087 = vmatpush2.msra.mxu0 0.0
    %5088 = vmatprep.subr.mxu0 0.0
    %5089 = vmatpush2.msra.mxu0 0.0
    %5090 = vmatprep.subr.mxu0 0.0
    %5091 = vmatpush2.msra.mxu0 0.0
    %5092 = vmatprep.subr.mxu0 0.0
    %5093 = vmatpush2.msra.mxu0 %v5044
    %5094 = vmatprep.subr.mxu0 0.0
    %5095 = vmatpush2.msra.mxu0 %v5041
    %5096 = vmatprep.subr.mxu0 0.0
    %5097 = vmatpush2.msra.mxu0 %v5040
    %5098 = vmatprep.subr.mxu0 0.0
    %5099 = vmatpush2.msra.mxu0 %v5039
    %5100 = vmatprep.subr.mxu0 0.0
    %5101 = vmatpush2.msra.mxu0 %v5038
    %5102 = vmatprep.subr.mxu0 0.0
    %5103 = vmatpush2.msra.mxu0 %v5037
    %5104 = vmatprep.subr.mxu0 0.0
    %5105 = vmatpush2.msra.mxu0 %v5036
    %5106 = vmatprep.subr.mxu0 0.0
    %5107 = vmatpush2.msra.mxu0 %v5035
    %5108 = vmatprep.subr.mxu0 0.0
    %5109 = vmatpush2.msra.mxu0 %v5034
    %5110 = vmatprep.mubr.f32.mxu0 %v998
    %5111 = vmatmul.mubr.f32.gmra.mxu0 %v961
    %v5112 = vpop.f32.mrf.mxu0
    %v5113 = vadd.f32 0.0, %v5112
    %v5114 = vpop.f32.mrf.mxu0
    %5115 = vmatprep.mubr.f32.mxu0 %v1001
    %5116 = vmatmul.mubr.f32.gmra.mxu0 %v967
    %v5117 = vpop.f32.mrf.mxu0
    %v5118 = vadd.f32 0.0, %v5117
    %v5119 = vpop.f32.mrf.mxu0
    %5120 = vdwg.mxu0
    %s5121 = scalar_lea.vmem %s5, 608
    %v5122 = vld [vmem:[%s5121] sm:$0xff]
    %v5123 = vld [vmem:[%s5121 + $0x8] sm:$0xff]
    %v5124 = vld [vmem:[%s5121 + $0x10] sm:$0xff]
    %v5125 = vld [vmem:[%s5121 + $0x18] sm:$0xff]
    %v5127 = vsel %vm1195, %v5122, 0
    %v5130 = vsel %vm1195, %v5123, 0
    %v5133 = vsel %vm1195, %v5124, 0
    %v5136 = vsel %vm1195, %v5125, 0
    %v5139 = vsel %vm1003, %v5118, 0
    %5141 = vmatprep.subr.mxu0 0.0
    %5142 = vmatpush1.msra.mxu0 0.0
    %5143 = vmatprep.subr.mxu0 0.0
    %5144 = vmatpush1.msra.mxu0 0.0
    %5145 = vmatprep.subr.mxu0 0.0
    %5146 = vmatpush1.msra.mxu0 0.0
    %5147 = vmatprep.subr.mxu0 0.0
    %5148 = vmatpush1.msra.mxu0 0.0
    %5149 = vmatprep.subr.mxu0 0.0
    %5150 = vmatpush1.msra.mxu0 0.0
    %5151 = vmatprep.subr.mxu0 0.0
    %5152 = vmatpush1.msra.mxu0 0.0
    %5153 = vmatprep.subr.mxu0 0.0
    %5154 = vmatpush1.msra.mxu0 0.0
    %5155 = vmatprep.subr.mxu0 0.0
    %5156 = vmatpush1.msra.mxu0 0.0
    %5157 = vmatprep.subr.mxu0 0.0
    %5158 = vmatpush1.msra.mxu0 0.0
    %5159 = vmatprep.subr.mxu0 0.0
    %5160 = vmatpush1.msra.mxu0 0.0
    %5161 = vmatprep.subr.mxu0 0.0
    %5162 = vmatpush1.msra.mxu0 0.0
    %5163 = vmatprep.subr.mxu0 0.0
    %5164 = vmatpush1.msra.mxu0 0.0
    %5165 = vmatprep.subr.mxu0 0.0
    %5166 = vmatpush1.msra.mxu0 0.0
    %5167 = vmatprep.subr.mxu0 0.0
    %5168 = vmatpush1.msra.mxu0 0.0
    %5169 = vmatprep.subr.mxu0 0.0
    %5170 = vmatpush1.msra.mxu0 %v5139
    %5171 = vmatprep.subr.mxu0 0.0
    %5172 = vmatpush1.msra.mxu0 %v5113
    %5173 = vmatprep.subr.mxu0 0.0
    %5174 = vmatpush2.msra.mxu0 0.0
    %5175 = vmatprep.subr.mxu0 0.0
    %5176 = vmatpush2.msra.mxu0 0.0
    %5177 = vmatprep.subr.mxu0 0.0
    %5178 = vmatpush2.msra.mxu0 0.0
    %5179 = vmatprep.subr.mxu0 0.0
    %5180 = vmatpush2.msra.mxu0 0.0
    %5181 = vmatprep.subr.mxu0 0.0
    %5182 = vmatpush2.msra.mxu0 0.0
    %5183 = vmatprep.subr.mxu0 0.0
    %5184 = vmatpush2.msra.mxu0 0.0
    %5185 = vmatprep.subr.mxu0 0.0
    %5186 = vmatpush2.msra.mxu0 0.0
    %5187 = vmatprep.subr.mxu0 0.0
    %5188 = vmatpush2.msra.mxu0 0.0
    %5189 = vmatprep.subr.mxu0 0.0
    %5190 = vmatpush2.msra.mxu0 0.0
    %5191 = vmatprep.subr.mxu0 0.0
    %5192 = vmatpush2.msra.mxu0 0.0
    %5193 = vmatprep.subr.mxu0 0.0
    %5194 = vmatpush2.msra.mxu0 0.0
    %5195 = vmatprep.subr.mxu0 0.0
    %5196 = vmatpush2.msra.mxu0 0.0
    %5197 = vmatprep.subr.mxu0 0.0
    %5198 = vmatpush2.msra.mxu0 0.0
    %5199 = vmatprep.subr.mxu0 0.0
    %5200 = vmatpush2.msra.mxu0 0.0
    %5201 = vmatprep.subr.mxu0 0.0
    %5202 = vmatpush2.msra.mxu0 0.0
    %5203 = vmatprep.subr.mxu0 0.0
    %5204 = vmatpush2.msra.mxu0 0.0
    %5205 = vmatprep.mubr.f32.mxu0 0.0
    %5206 = vmatmul.mubr.f32.gmra.mxu0 %v5127
    %v5207 = vpop.f32.mrf.mxu0
    %v5208 = vadd.f32 0.0, %v5207
    %v5209 = vpop.f32.mrf.mxu0
    %5210 = vmatprep.mubr.f32.mxu0 0.0
    %5211 = vmatmul.mubr.f32.gmra.mxu0 %v5130
    %v5212 = vpop.f32.mrf.mxu0
    %v5213 = vadd.f32 0.0, %v5212
    %v5214 = vpop.f32.mrf.mxu0
    %5215 = vmatprep.mubr.f32.mxu0 0.0
    %5216 = vmatmul.mubr.f32.gmra.mxu0 %v5133
    %v5217 = vpop.f32.mrf.mxu0
    %v5218 = vadd.f32 0.0, %v5217
    %v5219 = vpop.f32.mrf.mxu0
    %5220 = vmatprep.mubr.f32.mxu0 0.0
    %5221 = vmatmul.mubr.f32.gmra.mxu0 %v5136
    %v5222 = vpop.f32.mrf.mxu0
    %v5223 = vadd.f32 0.0, %v5222
    %v5224 = vpop.f32.mrf.mxu0
    %5225 = vdwg.mxu0
    %v5226 = vadd.f32 %v5013, %v5208
    %v5227 = vadd.f32 %v5014, %v5213
    %v5228 = vadd.f32 %v5015, %v5218
    %v5229 = vadd.f32 %v5016, %v5223
    %s5230 = scalar_lea.vmem %s4, 4000
    %v5231 = vld [vmem:[%s5230] sm:$0xff]
    %v5232 = vld [vmem:[%s5230 + $0x8] sm:$0xff]
    %v5233 = vld [vmem:[%s5230 + $0x10] sm:$0xff]
    %v5234 = vld [vmem:[%s5230 + $0x18] sm:$0xff]
    %v5235 = vld [vmem:[%s5230 + $0x20] sm:$0xff]
    %v5236 = vld [vmem:[%s5230 + $0x28] sm:$0xff]
    %v5237 = vld [vmem:[%s5230 + $0x30] sm:$0xff]
    %v5238 = vld [vmem:[%s5230 + $0x38] sm:$0xff]
    %v5239 = vld [vmem:[%s5230 + $0x40] sm:$0xff]
    %v5240 = vld [vmem:[%s5230 + $0x48] sm:$0xff]
    %v5241 = vld [vmem:[%s5230 + $0x50] sm:$0xff]
    %v5242 = vld [vmem:[%s5230 + $0x58] sm:$0xff]
    %v5243 = vld [vmem:[%s5230 + $0x60] sm:$0xff]
    %v5244 = vld [vmem:[%s5230 + $0x68] sm:$0xff]
    %v5245 = vld [vmem:[%s5230 + $0x70] sm:$0xff]
    %v5246 = vld [vmem:[%s5230 + $0x78] sm:$0xff]
    %v5247 = vld [vmem:[%s5230 + $0x80] sm:$0xff]
    %v5248 = vld [vmem:[%s5230 + $0x88] sm:$0xff]
    %v5249 = vld [vmem:[%s5230 + $0x90] sm:$0xff]
    %v5250 = vld [vmem:[%s5230 + $0x98] sm:$0xff]
    %v5251 = vld [vmem:[%s5230 + $0xa0] sm:$0xff]
    %v5252 = vld [vmem:[%s5230 + $0xa8] sm:$0xff]
    %v5253 = vld [vmem:[%s5230 + $0xb0] sm:$0xff]
    %v5254 = vld [vmem:[%s5230 + $0xb8] sm:$0xff]
    %v5255 = vld [vmem:[%s5230 + $0xc0] sm:$0xf]
    %v5257 = vsel %vm1003, %v5255, 0
    %5259 = vmatprep.subr.mxu0 0.0
    %5260 = vmatpush1.msra.mxu0 %v5246
    %5261 = vmatprep.subr.mxu0 0.0
    %5262 = vmatpush1.msra.mxu0 %v5245
    %5263 = vmatprep.subr.mxu0 0.0
    %5264 = vmatpush1.msra.mxu0 %v5244
    %5265 = vmatprep.subr.mxu0 0.0
    %5266 = vmatpush1.msra.mxu0 %v5243
    %5267 = vmatprep.subr.mxu0 0.0
    %5268 = vmatpush1.msra.mxu0 %v5242
    %5269 = vmatprep.subr.mxu0 0.0
    %5270 = vmatpush1.msra.mxu0 %v5241
    %5271 = vmatprep.subr.mxu0 0.0
    %5272 = vmatpush1.msra.mxu0 %v5240
    %5273 = vmatprep.subr.mxu0 0.0
    %5274 = vmatpush1.msra.mxu0 %v5239
    %5275 = vmatprep.subr.mxu0 0.0
    %5276 = vmatpush1.msra.mxu0 %v5238
    %5277 = vmatprep.subr.mxu0 0.0
    %5278 = vmatpush1.msra.mxu0 %v5237
    %5279 = vmatprep.subr.mxu0 0.0
    %5280 = vmatpush1.msra.mxu0 %v5236
    %5281 = vmatprep.subr.mxu0 0.0
    %5282 = vmatpush1.msra.mxu0 %v5235
    %5283 = vmatprep.subr.mxu0 0.0
    %5284 = vmatpush1.msra.mxu0 %v5234
    %5285 = vmatprep.subr.mxu0 0.0
    %5286 = vmatpush1.msra.mxu0 %v5233
    %5287 = vmatprep.subr.mxu0 0.0
    %5288 = vmatpush1.msra.mxu0 %v5232
    %5289 = vmatprep.subr.mxu0 0.0
    %5290 = vmatpush1.msra.mxu0 %v5231
    %5291 = vmatprep.subr.mxu0 0.0
    %5292 = vmatpush2.msra.mxu0 0.0
    %5293 = vmatprep.subr.mxu0 0.0
    %5294 = vmatpush2.msra.mxu0 0.0
    %5295 = vmatprep.subr.mxu0 0.0
    %5296 = vmatpush2.msra.mxu0 0.0
    %5297 = vmatprep.subr.mxu0 0.0
    %5298 = vmatpush2.msra.mxu0 0.0
    %5299 = vmatprep.subr.mxu0 0.0
    %5300 = vmatpush2.msra.mxu0 0.0
    %5301 = vmatprep.subr.mxu0 0.0
    %5302 = vmatpush2.msra.mxu0 0.0
    %5303 = vmatprep.subr.mxu0 0.0
    %5304 = vmatpush2.msra.mxu0 0.0
    %5305 = vmatprep.subr.mxu0 0.0
    %5306 = vmatpush2.msra.mxu0 %v5257
    %5307 = vmatprep.subr.mxu0 0.0
    %5308 = vmatpush2.msra.mxu0 %v5254
    %5309 = vmatprep.subr.mxu0 0.0
    %5310 = vmatpush2.msra.mxu0 %v5253
    %5311 = vmatprep.subr.mxu0 0.0
    %5312 = vmatpush2.msra.mxu0 %v5252
    %5313 = vmatprep.subr.mxu0 0.0
    %5314 = vmatpush2.msra.mxu0 %v5251
    %5315 = vmatprep.subr.mxu0 0.0
    %5316 = vmatpush2.msra.mxu0 %v5250
    %5317 = vmatprep.subr.mxu0 0.0
    %5318 = vmatpush2.msra.mxu0 %v5249
    %5319 = vmatprep.subr.mxu0 0.0
    %5320 = vmatpush2.msra.mxu0 %v5248
    %5321 = vmatprep.subr.mxu0 0.0
    %5322 = vmatpush2.msra.mxu0 %v5247
    %5323 = vmatprep.mubr.f32.mxu0 %v998
    %5324 = vmatmul.mubr.f32.gmra.mxu0 %v961
    %v5325 = vpop.f32.mrf.mxu0
    %v5326 = vadd.f32 0.0, %v5325
    %v5327 = vpop.f32.mrf.mxu0
    %5328 = vmatprep.mubr.f32.mxu0 %v1001
    %5329 = vmatmul.mubr.f32.gmra.mxu0 %v967
    %v5330 = vpop.f32.mrf.mxu0
    %v5331 = vadd.f32 0.0, %v5330
    %v5332 = vpop.f32.mrf.mxu0
    %5333 = vdwg.mxu0
    %s5334 = scalar_lea.vmem %s5, 640
    %v5335 = vld [vmem:[%s5334] sm:$0xff]
    %v5336 = vld [vmem:[%s5334 + $0x8] sm:$0xff]
    %v5337 = vld [vmem:[%s5334 + $0x10] sm:$0xff]
    %v5338 = vld [vmem:[%s5334 + $0x18] sm:$0xff]
    %v5340 = vsel %vm1195, %v5335, 0
    %v5343 = vsel %vm1195, %v5336, 0
    %v5346 = vsel %vm1195, %v5337, 0
    %v5349 = vsel %vm1195, %v5338, 0
    %v5352 = vsel %vm1003, %v5331, 0
    %5354 = vmatprep.subr.mxu0 0.0
    %5355 = vmatpush1.msra.mxu0 0.0
    %5356 = vmatprep.subr.mxu0 0.0
    %5357 = vmatpush1.msra.mxu0 0.0
    %5358 = vmatprep.subr.mxu0 0.0
    %5359 = vmatpush1.msra.mxu0 0.0
    %5360 = vmatprep.subr.mxu0 0.0
    %5361 = vmatpush1.msra.mxu0 0.0
    %5362 = vmatprep.subr.mxu0 0.0
    %5363 = vmatpush1.msra.mxu0 0.0
    %5364 = vmatprep.subr.mxu0 0.0
    %5365 = vmatpush1.msra.mxu0 0.0
    %5366 = vmatprep.subr.mxu0 0.0
    %5367 = vmatpush1.msra.mxu0 0.0
    %5368 = vmatprep.subr.mxu0 0.0
    %5369 = vmatpush1.msra.mxu0 0.0
    %5370 = vmatprep.subr.mxu0 0.0
    %5371 = vmatpush1.msra.mxu0 0.0
    %5372 = vmatprep.subr.mxu0 0.0
    %5373 = vmatpush1.msra.mxu0 0.0
    %5374 = vmatprep.subr.mxu0 0.0
    %5375 = vmatpush1.msra.mxu0 0.0
    %5376 = vmatprep.subr.mxu0 0.0
    %5377 = vmatpush1.msra.mxu0 0.0
    %5378 = vmatprep.subr.mxu0 0.0
    %5379 = vmatpush1.msra.mxu0 0.0
    %5380 = vmatprep.subr.mxu0 0.0
    %5381 = vmatpush1.msra.mxu0 0.0
    %5382 = vmatprep.subr.mxu0 0.0
    %5383 = vmatpush1.msra.mxu0 %v5352
    %5384 = vmatprep.subr.mxu0 0.0
    %5385 = vmatpush1.msra.mxu0 %v5326
    %5386 = vmatprep.subr.mxu0 0.0
    %5387 = vmatpush2.msra.mxu0 0.0
    %5388 = vmatprep.subr.mxu0 0.0
    %5389 = vmatpush2.msra.mxu0 0.0
    %5390 = vmatprep.subr.mxu0 0.0
    %5391 = vmatpush2.msra.mxu0 0.0
    %5392 = vmatprep.subr.mxu0 0.0
    %5393 = vmatpush2.msra.mxu0 0.0
    %5394 = vmatprep.subr.mxu0 0.0
    %5395 = vmatpush2.msra.mxu0 0.0
    %5396 = vmatprep.subr.mxu0 0.0
    %5397 = vmatpush2.msra.mxu0 0.0
    %5398 = vmatprep.subr.mxu0 0.0
    %5399 = vmatpush2.msra.mxu0 0.0
    %5400 = vmatprep.subr.mxu0 0.0
    %5401 = vmatpush2.msra.mxu0 0.0
    %5402 = vmatprep.subr.mxu0 0.0
    %5403 = vmatpush2.msra.mxu0 0.0
    %5404 = vmatprep.subr.mxu0 0.0
    %5405 = vmatpush2.msra.mxu0 0.0
    %5406 = vmatprep.subr.mxu0 0.0
    %5407 = vmatpush2.msra.mxu0 0.0
    %5408 = vmatprep.subr.mxu0 0.0
    %5409 = vmatpush2.msra.mxu0 0.0
    %5410 = vmatprep.subr.mxu0 0.0
    %5411 = vmatpush2.msra.mxu0 0.0
    %5412 = vmatprep.subr.mxu0 0.0
    %5413 = vmatpush2.msra.mxu0 0.0
    %5414 = vmatprep.subr.mxu0 0.0
    %5415 = vmatpush2.msra.mxu0 0.0
    %5416 = vmatprep.subr.mxu0 0.0
    %5417 = vmatpush2.msra.mxu0 0.0
    %5418 = vmatprep.mubr.f32.mxu0 0.0
    %5419 = vmatmul.mubr.f32.gmra.mxu0 %v5340
    %v5420 = vpop.f32.mrf.mxu0
    %v5421 = vadd.f32 0.0, %v5420
    %v5422 = vpop.f32.mrf.mxu0
    %5423 = vmatprep.mubr.f32.mxu0 0.0
    %5424 = vmatmul.mubr.f32.gmra.mxu0 %v5343
    %v5425 = vpop.f32.mrf.mxu0
    %v5426 = vadd.f32 0.0, %v5425
    %v5427 = vpop.f32.mrf.mxu0
    %5428 = vmatprep.mubr.f32.mxu0 0.0
    %5429 = vmatmul.mubr.f32.gmra.mxu0 %v5346
    %v5430 = vpop.f32.mrf.mxu0
    %v5431 = vadd.f32 0.0, %v5430
    %v5432 = vpop.f32.mrf.mxu0
    %5433 = vmatprep.mubr.f32.mxu0 0.0
    %5434 = vmatmul.mubr.f32.gmra.mxu0 %v5349
    %v5435 = vpop.f32.mrf.mxu0
    %v5436 = vadd.f32 0.0, %v5435
    %v5437 = vpop.f32.mrf.mxu0
    %5438 = vdwg.mxu0
    %v5439 = vadd.f32 %v5226, %v5421
    %v5440 = vadd.f32 %v5227, %v5426
    %v5441 = vadd.f32 %v5228, %v5431
    %v5442 = vadd.f32 %v5229, %v5436
    %s5443 = scalar_lea.vmem %s4, 4200
    %v5444 = vld [vmem:[%s5443] sm:$0xff]
    %v5445 = vld [vmem:[%s5443 + $0x8] sm:$0xff]
    %v5446 = vld [vmem:[%s5443 + $0x10] sm:$0xff]
    %v5447 = vld [vmem:[%s5443 + $0x18] sm:$0xff]
    %v5448 = vld [vmem:[%s5443 + $0x20] sm:$0xff]
    %v5449 = vld [vmem:[%s5443 + $0x28] sm:$0xff]
    %v5450 = vld [vmem:[%s5443 + $0x30] sm:$0xff]
    %v5451 = vld [vmem:[%s5443 + $0x38] sm:$0xff]
    %v5452 = vld [vmem:[%s5443 + $0x40] sm:$0xff]
    %v5453 = vld [vmem:[%s5443 + $0x48] sm:$0xff]
    %v5454 = vld [vmem:[%s5443 + $0x50] sm:$0xff]
    %v5455 = vld [vmem:[%s5443 + $0x58] sm:$0xff]
    %v5456 = vld [vmem:[%s5443 + $0x60] sm:$0xff]
    %v5457 = vld [vmem:[%s5443 + $0x68] sm:$0xff]
    %v5458 = vld [vmem:[%s5443 + $0x70] sm:$0xff]
    %v5459 = vld [vmem:[%s5443 + $0x78] sm:$0xff]
    %v5460 = vld [vmem:[%s5443 + $0x80] sm:$0xff]
    %v5461 = vld [vmem:[%s5443 + $0x88] sm:$0xff]
    %v5462 = vld [vmem:[%s5443 + $0x90] sm:$0xff]
    %v5463 = vld [vmem:[%s5443 + $0x98] sm:$0xff]
    %v5464 = vld [vmem:[%s5443 + $0xa0] sm:$0xff]
    %v5465 = vld [vmem:[%s5443 + $0xa8] sm:$0xff]
    %v5466 = vld [vmem:[%s5443 + $0xb0] sm:$0xff]
    %v5467 = vld [vmem:[%s5443 + $0xb8] sm:$0xff]
    %v5468 = vld [vmem:[%s5443 + $0xc0] sm:$0xf]
    %v5470 = vsel %vm1003, %v5468, 0
    %5472 = vmatprep.subr.mxu0 0.0
    %5473 = vmatpush1.msra.mxu0 %v5459
    %5474 = vmatprep.subr.mxu0 0.0
    %5475 = vmatpush1.msra.mxu0 %v5458
    %5476 = vmatprep.subr.mxu0 0.0
    %5477 = vmatpush1.msra.mxu0 %v5457
    %5478 = vmatprep.subr.mxu0 0.0
    %5479 = vmatpush1.msra.mxu0 %v5456
    %5480 = vmatprep.subr.mxu0 0.0
    %5481 = vmatpush1.msra.mxu0 %v5455
    %5482 = vmatprep.subr.mxu0 0.0
    %5483 = vmatpush1.msra.mxu0 %v5454
    %5484 = vmatprep.subr.mxu0 0.0
    %5485 = vmatpush1.msra.mxu0 %v5453
    %5486 = vmatprep.subr.mxu0 0.0
    %5487 = vmatpush1.msra.mxu0 %v5452
    %5488 = vmatprep.subr.mxu0 0.0
    %5489 = vmatpush1.msra.mxu0 %v5451
    %5490 = vmatprep.subr.mxu0 0.0
    %5491 = vmatpush1.msra.mxu0 %v5450
    %5492 = vmatprep.subr.mxu0 0.0
    %5493 = vmatpush1.msra.mxu0 %v5449
    %5494 = vmatprep.subr.mxu0 0.0
    %5495 = vmatpush1.msra.mxu0 %v5448
    %5496 = vmatprep.subr.mxu0 0.0
    %5497 = vmatpush1.msra.mxu0 %v5447
    %5498 = vmatprep.subr.mxu0 0.0
    %5499 = vmatpush1.msra.mxu0 %v5446
    %5500 = vmatprep.subr.mxu0 0.0
    %5501 = vmatpush1.msra.mxu0 %v5445
    %5502 = vmatprep.subr.mxu0 0.0
    %5503 = vmatpush1.msra.mxu0 %v5444
    %5504 = vmatprep.subr.mxu0 0.0
    %5505 = vmatpush2.msra.mxu0 0.0
    %5506 = vmatprep.subr.mxu0 0.0
    %5507 = vmatpush2.msra.mxu0 0.0
    %5508 = vmatprep.subr.mxu0 0.0
    %5509 = vmatpush2.msra.mxu0 0.0
    %5510 = vmatprep.subr.mxu0 0.0
    %5511 = vmatpush2.msra.mxu0 0.0
    %5512 = vmatprep.subr.mxu0 0.0
    %5513 = vmatpush2.msra.mxu0 0.0
    %5514 = vmatprep.subr.mxu0 0.0
    %5515 = vmatpush2.msra.mxu0 0.0
    %5516 = vmatprep.subr.mxu0 0.0
    %5517 = vmatpush2.msra.mxu0 0.0
    %5518 = vmatprep.subr.mxu0 0.0
    %5519 = vmatpush2.msra.mxu0 %v5470
    %5520 = vmatprep.subr.mxu0 0.0
    %5521 = vmatpush2.msra.mxu0 %v5467
    %5522 = vmatprep.subr.mxu0 0.0
    %5523 = vmatpush2.msra.mxu0 %v5466
    %5524 = vmatprep.subr.mxu0 0.0
    %5525 = vmatpush2.msra.mxu0 %v5465
    %5526 = vmatprep.subr.mxu0 0.0
    %5527 = vmatpush2.msra.mxu0 %v5464
    %5528 = vmatprep.subr.mxu0 0.0
    %5529 = vmatpush2.msra.mxu0 %v5463
    %5530 = vmatprep.subr.mxu0 0.0
    %5531 = vmatpush2.msra.mxu0 %v5462
    %5532 = vmatprep.subr.mxu0 0.0
    %5533 = vmatpush2.msra.mxu0 %v5461
    %5534 = vmatprep.subr.mxu0 0.0
    %5535 = vmatpush2.msra.mxu0 %v5460
    %5536 = vmatprep.mubr.f32.mxu0 %v998
    %5537 = vmatmul.mubr.f32.gmra.mxu0 %v961
    %v5538 = vpop.f32.mrf.mxu0
    %v5539 = vadd.f32 0.0, %v5538
    %v5540 = vpop.f32.mrf.mxu0
    %5541 = vmatprep.mubr.f32.mxu0 %v1001
    %5542 = vmatmul.mubr.f32.gmra.mxu0 %v967
    %v5543 = vpop.f32.mrf.mxu0
    %v5544 = vadd.f32 0.0, %v5543
    %v5545 = vpop.f32.mrf.mxu0
    %5546 = vdwg.mxu0
    %s5547 = scalar_lea.vmem %s5, 672
    %v5548 = vld [vmem:[%s5547] sm:$0xff]
    %v5549 = vld [vmem:[%s5547 + $0x8] sm:$0xff]
    %v5550 = vld [vmem:[%s5547 + $0x10] sm:$0xff]
    %v5551 = vld [vmem:[%s5547 + $0x18] sm:$0xff]
    %v5553 = vsel %vm1195, %v5548, 0
    %v5556 = vsel %vm1195, %v5549, 0
    %v5559 = vsel %vm1195, %v5550, 0
    %v5562 = vsel %vm1195, %v5551, 0
    %v5565 = vsel %vm1003, %v5544, 0
    %5567 = vmatprep.subr.mxu0 0.0
    %5568 = vmatpush1.msra.mxu0 0.0
    %5569 = vmatprep.subr.mxu0 0.0
    %5570 = vmatpush1.msra.mxu0 0.0
    %5571 = vmatprep.subr.mxu0 0.0
    %5572 = vmatpush1.msra.mxu0 0.0
    %5573 = vmatprep.subr.mxu0 0.0
    %5574 = vmatpush1.msra.mxu0 0.0
    %5575 = vmatprep.subr.mxu0 0.0
    %5576 = vmatpush1.msra.mxu0 0.0
    %5577 = vmatprep.subr.mxu0 0.0
    %5578 = vmatpush1.msra.mxu0 0.0
    %5579 = vmatprep.subr.mxu0 0.0
    %5580 = vmatpush1.msra.mxu0 0.0
    %5581 = vmatprep.subr.mxu0 0.0
    %5582 = vmatpush1.msra.mxu0 0.0
    %5583 = vmatprep.subr.mxu0 0.0
    %5584 = vmatpush1.msra.mxu0 0.0
    %5585 = vmatprep.subr.mxu0 0.0
    %5586 = vmatpush1.msra.mxu0 0.0
    %5587 = vmatprep.subr.mxu0 0.0
    %5588 = vmatpush1.msra.mxu0 0.0
    %5589 = vmatprep.subr.mxu0 0.0
    %5590 = vmatpush1.msra.mxu0 0.0
    %5591 = vmatprep.subr.mxu0 0.0
    %5592 = vmatpush1.msra.mxu0 0.0
    %5593 = vmatprep.subr.mxu0 0.0
    %5594 = vmatpush1.msra.mxu0 0.0
    %5595 = vmatprep.subr.mxu0 0.0
    %5596 = vmatpush1.msra.mxu0 %v5565
    %5597 = vmatprep.subr.mxu0 0.0
    %5598 = vmatpush1.msra.mxu0 %v5539
    %5599 = vmatprep.subr.mxu0 0.0
    %5600 = vmatpush2.msra.mxu0 0.0
    %5601 = vmatprep.subr.mxu0 0.0
    %5602 = vmatpush2.msra.mxu0 0.0
    %5603 = vmatprep.subr.mxu0 0.0
    %5604 = vmatpush2.msra.mxu0 0.0
    %5605 = vmatprep.subr.mxu0 0.0
    %5606 = vmatpush2.msra.mxu0 0.0
    %5607 = vmatprep.subr.mxu0 0.0
    %5608 = vmatpush2.msra.mxu0 0.0
    %5609 = vmatprep.subr.mxu0 0.0
    %5610 = vmatpush2.msra.mxu0 0.0
    %5611 = vmatprep.subr.mxu0 0.0
    %5612 = vmatpush2.msra.mxu0 0.0
    %5613 = vmatprep.subr.mxu0 0.0
    %5614 = vmatpush2.msra.mxu0 0.0
    %5615 = vmatprep.subr.mxu0 0.0
    %5616 = vmatpush2.msra.mxu0 0.0
    %5617 = vmatprep.subr.mxu0 0.0
    %5618 = vmatpush2.msra.mxu0 0.0
    %5619 = vmatprep.subr.mxu0 0.0
    %5620 = vmatpush2.msra.mxu0 0.0
    %5621 = vmatprep.subr.mxu0 0.0
    %5622 = vmatpush2.msra.mxu0 0.0
    %5623 = vmatprep.subr.mxu0 0.0
    %5624 = vmatpush2.msra.mxu0 0.0
    %5625 = vmatprep.subr.mxu0 0.0
    %5626 = vmatpush2.msra.mxu0 0.0
    %5627 = vmatprep.subr.mxu0 0.0
    %5628 = vmatpush2.msra.mxu0 0.0
    %5629 = vmatprep.subr.mxu0 0.0
    %5630 = vmatpush2.msra.mxu0 0.0
    %5631 = vmatprep.mubr.f32.mxu0 0.0
    %5632 = vmatmul.mubr.f32.gmra.mxu0 %v5553
    %v5633 = vpop.f32.mrf.mxu0
    %v5634 = vadd.f32 0.0, %v5633
    %v5635 = vpop.f32.mrf.mxu0
    %5636 = vmatprep.mubr.f32.mxu0 0.0
    %5637 = vmatmul.mubr.f32.gmra.mxu0 %v5556
    %v5638 = vpop.f32.mrf.mxu0
    %v5639 = vadd.f32 0.0, %v5638
    %v5640 = vpop.f32.mrf.mxu0
    %5641 = vmatprep.mubr.f32.mxu0 0.0
    %5642 = vmatmul.mubr.f32.gmra.mxu0 %v5559
    %v5643 = vpop.f32.mrf.mxu0
    %v5644 = vadd.f32 0.0, %v5643
    %v5645 = vpop.f32.mrf.mxu0
    %5646 = vmatprep.mubr.f32.mxu0 0.0
    %5647 = vmatmul.mubr.f32.gmra.mxu0 %v5562
    %v5648 = vpop.f32.mrf.mxu0
    %v5649 = vadd.f32 0.0, %v5648
    %v5650 = vpop.f32.mrf.mxu0
    %5651 = vdwg.mxu0
    %v5652 = vadd.f32 %v5439, %v5634
    %v5653 = vadd.f32 %v5440, %v5639
    %v5654 = vadd.f32 %v5441, %v5644
    %v5655 = vadd.f32 %v5442, %v5649
    %s5656 = scalar_lea.vmem %s4, 4400
    %v5657 = vld [vmem:[%s5656] sm:$0xff]
    %v5658 = vld [vmem:[%s5656 + $0x8] sm:$0xff]
    %v5659 = vld [vmem:[%s5656 + $0x10] sm:$0xff]
    %v5660 = vld [vmem:[%s5656 + $0x18] sm:$0xff]
    %v5661 = vld [vmem:[%s5656 + $0x20] sm:$0xff]
    %v5662 = vld [vmem:[%s5656 + $0x28] sm:$0xff]
    %v5663 = vld [vmem:[%s5656 + $0x30] sm:$0xff]
    %v5664 = vld [vmem:[%s5656 + $0x38] sm:$0xff]
    %v5665 = vld [vmem:[%s5656 + $0x40] sm:$0xff]
    %v5666 = vld [vmem:[%s5656 + $0x48] sm:$0xff]
    %v5667 = vld [vmem:[%s5656 + $0x50] sm:$0xff]
    %v5668 = vld [vmem:[%s5656 + $0x58] sm:$0xff]
    %v5669 = vld [vmem:[%s5656 + $0x60] sm:$0xff]
    %v5670 = vld [vmem:[%s5656 + $0x68] sm:$0xff]
    %v5671 = vld [vmem:[%s5656 + $0x70] sm:$0xff]
    %v5672 = vld [vmem:[%s5656 + $0x78] sm:$0xff]
    %v5673 = vld [vmem:[%s5656 + $0x80] sm:$0xff]
    %v5674 = vld [vmem:[%s5656 + $0x88] sm:$0xff]
    %v5675 = vld [vmem:[%s5656 + $0x90] sm:$0xff]
    %v5676 = vld [vmem:[%s5656 + $0x98] sm:$0xff]
    %v5677 = vld [vmem:[%s5656 + $0xa0] sm:$0xff]
    %v5678 = vld [vmem:[%s5656 + $0xa8] sm:$0xff]
    %v5679 = vld [vmem:[%s5656 + $0xb0] sm:$0xff]
    %v5680 = vld [vmem:[%s5656 + $0xb8] sm:$0xff]
    %v5681 = vld [vmem:[%s5656 + $0xc0] sm:$0xf]
    %v5683 = vsel %vm1003, %v5681, 0
    %5685 = vmatprep.subr.mxu0 0.0
    %5686 = vmatpush1.msra.mxu0 %v5672
    %5687 = vmatprep.subr.mxu0 0.0
    %5688 = vmatpush1.msra.mxu0 %v5671
    %5689 = vmatprep.subr.mxu0 0.0
    %5690 = vmatpush1.msra.mxu0 %v5670
    %5691 = vmatprep.subr.mxu0 0.0
    %5692 = vmatpush1.msra.mxu0 %v5669
    %5693 = vmatprep.subr.mxu0 0.0
    %5694 = vmatpush1.msra.mxu0 %v5668
    %5695 = vmatprep.subr.mxu0 0.0
    %5696 = vmatpush1.msra.mxu0 %v5667
    %5697 = vmatprep.subr.mxu0 0.0
    %5698 = vmatpush1.msra.mxu0 %v5666
    %5699 = vmatprep.subr.mxu0 0.0
    %5700 = vmatpush1.msra.mxu0 %v5665
    %5701 = vmatprep.subr.mxu0 0.0
    %5702 = vmatpush1.msra.mxu0 %v5664
    %5703 = vmatprep.subr.mxu0 0.0
    %5704 = vmatpush1.msra.mxu0 %v5663
    %5705 = vmatprep.subr.mxu0 0.0
    %5706 = vmatpush1.msra.mxu0 %v5662
    %5707 = vmatprep.subr.mxu0 0.0
    %5708 = vmatpush1.msra.mxu0 %v5661
    %5709 = vmatprep.subr.mxu0 0.0
    %5710 = vmatpush1.msra.mxu0 %v5660
    %5711 = vmatprep.subr.mxu0 0.0
    %5712 = vmatpush1.msra.mxu0 %v5659
    %5713 = vmatprep.subr.mxu0 0.0
    %5714 = vmatpush1.msra.mxu0 %v5658
    %5715 = vmatprep.subr.mxu0 0.0
    %5716 = vmatpush1.msra.mxu0 %v5657
    %5717 = vmatprep.subr.mxu0 0.0
    %5718 = vmatpush2.msra.mxu0 0.0
    %5719 = vmatprep.subr.mxu0 0.0
    %5720 = vmatpush2.msra.mxu0 0.0
    %5721 = vmatprep.subr.mxu0 0.0
    %5722 = vmatpush2.msra.mxu0 0.0
    %5723 = vmatprep.subr.mxu0 0.0
    %5724 = vmatpush2.msra.mxu0 0.0
    %5725 = vmatprep.subr.mxu0 0.0
    %5726 = vmatpush2.msra.mxu0 0.0
    %5727 = vmatprep.subr.mxu0 0.0
    %5728 = vmatpush2.msra.mxu0 0.0
    %5729 = vmatprep.subr.mxu0 0.0
    %5730 = vmatpush2.msra.mxu0 0.0
    %5731 = vmatprep.subr.mxu0 0.0
    %5732 = vmatpush2.msra.mxu0 %v5683
    %5733 = vmatprep.subr.mxu0 0.0
    %5734 = vmatpush2.msra.mxu0 %v5680
    %5735 = vmatprep.subr.mxu0 0.0
    %5736 = vmatpush2.msra.mxu0 %v5679
    %5737 = vmatprep.subr.mxu0 0.0
    %5738 = vmatpush2.msra.mxu0 %v5678
    %5739 = vmatprep.subr.mxu0 0.0
    %5740 = vmatpush2.msra.mxu0 %v5677
    %5741 = vmatprep.subr.mxu0 0.0
    %5742 = vmatpush2.msra.mxu0 %v5676
    %5743 = vmatprep.subr.mxu0 0.0
    %5744 = vmatpush2.msra.mxu0 %v5675
    %5745 = vmatprep.subr.mxu0 0.0
    %5746 = vmatpush2.msra.mxu0 %v5674
    %5747 = vmatprep.subr.mxu0 0.0
    %5748 = vmatpush2.msra.mxu0 %v5673
    %5749 = vmatprep.mubr.f32.mxu0 %v998
    %5750 = vmatmul.mubr.f32.gmra.mxu0 %v961
    %v5751 = vpop.f32.mrf.mxu0
    %v5752 = vadd.f32 0.0, %v5751
    %v5753 = vpop.f32.mrf.mxu0
    %5754 = vmatprep.mubr.f32.mxu0 %v1001
    %5755 = vmatmul.mubr.f32.gmra.mxu0 %v967
    %v5756 = vpop.f32.mrf.mxu0
    %v5757 = vadd.f32 0.0, %v5756
    %v5758 = vpop.f32.mrf.mxu0
    %5759 = vdwg.mxu0
    %s5760 = scalar_lea.vmem %s5, 704
    %v5761 = vld [vmem:[%s5760] sm:$0xff]
    %v5762 = vld [vmem:[%s5760 + $0x8] sm:$0xff]
    %v5763 = vld [vmem:[%s5760 + $0x10] sm:$0xff]
    %v5764 = vld [vmem:[%s5760 + $0x18] sm:$0xff]
    %v5766 = vsel %vm1195, %v5761, 0
    %v5769 = vsel %vm1195, %v5762, 0
    %v5772 = vsel %vm1195, %v5763, 0
    %v5775 = vsel %vm1195, %v5764, 0
    %v5778 = vsel %vm1003, %v5757, 0
    %5780 = vmatprep.subr.mxu0 0.0
    %5781 = vmatpush1.msra.mxu0 0.0
    %5782 = vmatprep.subr.mxu0 0.0
    %5783 = vmatpush1.msra.mxu0 0.0
    %5784 = vmatprep.subr.mxu0 0.0
    %5785 = vmatpush1.msra.mxu0 0.0
    %5786 = vmatprep.subr.mxu0 0.0
    %5787 = vmatpush1.msra.mxu0 0.0
    %5788 = vmatprep.subr.mxu0 0.0
    %5789 = vmatpush1.msra.mxu0 0.0
    %5790 = vmatprep.subr.mxu0 0.0
    %5791 = vmatpush1.msra.mxu0 0.0
    %5792 = vmatprep.subr.mxu0 0.0
    %5793 = vmatpush1.msra.mxu0 0.0
    %5794 = vmatprep.subr.mxu0 0.0
    %5795 = vmatpush1.msra.mxu0 0.0
    %5796 = vmatprep.subr.mxu0 0.0
    %5797 = vmatpush1.msra.mxu0 0.0
    %5798 = vmatprep.subr.mxu0 0.0
    %5799 = vmatpush1.msra.mxu0 0.0
    %5800 = vmatprep.subr.mxu0 0.0
    %5801 = vmatpush1.msra.mxu0 0.0
    %5802 = vmatprep.subr.mxu0 0.0
    %5803 = vmatpush1.msra.mxu0 0.0
    %5804 = vmatprep.subr.mxu0 0.0
    %5805 = vmatpush1.msra.mxu0 0.0
    %5806 = vmatprep.subr.mxu0 0.0
    %5807 = vmatpush1.msra.mxu0 0.0
    %5808 = vmatprep.subr.mxu0 0.0
    %5809 = vmatpush1.msra.mxu0 %v5778
    %5810 = vmatprep.subr.mxu0 0.0
    %5811 = vmatpush1.msra.mxu0 %v5752
    %5812 = vmatprep.subr.mxu0 0.0
    %5813 = vmatpush2.msra.mxu0 0.0
    %5814 = vmatprep.subr.mxu0 0.0
    %5815 = vmatpush2.msra.mxu0 0.0
    %5816 = vmatprep.subr.mxu0 0.0
    %5817 = vmatpush2.msra.mxu0 0.0
    %5818 = vmatprep.subr.mxu0 0.0
    %5819 = vmatpush2.msra.mxu0 0.0
    %5820 = vmatprep.subr.mxu0 0.0
    %5821 = vmatpush2.msra.mxu0 0.0
    %5822 = vmatprep.subr.mxu0 0.0
    %5823 = vmatpush2.msra.mxu0 0.0
    %5824 = vmatprep.subr.mxu0 0.0
    %5825 = vmatpush2.msra.mxu0 0.0
    %5826 = vmatprep.subr.mxu0 0.0
    %5827 = vmatpush2.msra.mxu0 0.0
    %5828 = vmatprep.subr.mxu0 0.0
    %5829 = vmatpush2.msra.mxu0 0.0
    %5830 = vmatprep.subr.mxu0 0.0
    %5831 = vmatpush2.msra.mxu0 0.0
    %5832 = vmatprep.subr.mxu0 0.0
    %5833 = vmatpush2.msra.mxu0 0.0
    %5834 = vmatprep.subr.mxu0 0.0
    %5835 = vmatpush2.msra.mxu0 0.0
    %5836 = vmatprep.subr.mxu0 0.0
    %5837 = vmatpush2.msra.mxu0 0.0
    %5838 = vmatprep.subr.mxu0 0.0
    %5839 = vmatpush2.msra.mxu0 0.0
    %5840 = vmatprep.subr.mxu0 0.0
    %5841 = vmatpush2.msra.mxu0 0.0
    %5842 = vmatprep.subr.mxu0 0.0
    %5843 = vmatpush2.msra.mxu0 0.0
    %5844 = vmatprep.mubr.f32.mxu0 0.0
    %5845 = vmatmul.mubr.f32.gmra.mxu0 %v5766
    %v5846 = vpop.f32.mrf.mxu0
    %v5847 = vadd.f32 0.0, %v5846
    %v5848 = vpop.f32.mrf.mxu0
    %5849 = vmatprep.mubr.f32.mxu0 0.0
    %5850 = vmatmul.mubr.f32.gmra.mxu0 %v5769
    %v5851 = vpop.f32.mrf.mxu0
    %v5852 = vadd.f32 0.0, %v5851
    %v5853 = vpop.f32.mrf.mxu0
    %5854 = vmatprep.mubr.f32.mxu0 0.0
    %5855 = vmatmul.mubr.f32.gmra.mxu0 %v5772
    %v5856 = vpop.f32.mrf.mxu0
    %v5857 = vadd.f32 0.0, %v5856
    %v5858 = vpop.f32.mrf.mxu0
    %5859 = vmatprep.mubr.f32.mxu0 0.0
    %5860 = vmatmul.mubr.f32.gmra.mxu0 %v5775
    %v5861 = vpop.f32.mrf.mxu0
    %v5862 = vadd.f32 0.0, %v5861
    %v5863 = vpop.f32.mrf.mxu0
    %5864 = vdwg.mxu0
    %v5865 = vadd.f32 %v5652, %v5847
    %v5866 = vadd.f32 %v5653, %v5852
    %v5867 = vadd.f32 %v5654, %v5857
    %v5868 = vadd.f32 %v5655, %v5862
    %s5869 = scalar_lea.vmem %s4, 4600
    %v5870 = vld [vmem:[%s5869] sm:$0xff]
    %v5871 = vld [vmem:[%s5869 + $0x8] sm:$0xff]
    %v5872 = vld [vmem:[%s5869 + $0x10] sm:$0xff]
    %v5873 = vld [vmem:[%s5869 + $0x18] sm:$0xff]
    %v5874 = vld [vmem:[%s5869 + $0x20] sm:$0xff]
    %v5875 = vld [vmem:[%s5869 + $0x28] sm:$0xff]
    %v5876 = vld [vmem:[%s5869 + $0x30] sm:$0xff]
    %v5877 = vld [vmem:[%s5869 + $0x38] sm:$0xff]
    %v5878 = vld [vmem:[%s5869 + $0x40] sm:$0xff]
    %v5879 = vld [vmem:[%s5869 + $0x48] sm:$0xff]
    %v5880 = vld [vmem:[%s5869 + $0x50] sm:$0xff]
    %v5881 = vld [vmem:[%s5869 + $0x58] sm:$0xff]
    %v5882 = vld [vmem:[%s5869 + $0x60] sm:$0xff]
    %v5883 = vld [vmem:[%s5869 + $0x68] sm:$0xff]
    %v5884 = vld [vmem:[%s5869 + $0x70] sm:$0xff]
    %v5885 = vld [vmem:[%s5869 + $0x78] sm:$0xff]
    %v5886 = vld [vmem:[%s5869 + $0x80] sm:$0xff]
    %v5887 = vld [vmem:[%s5869 + $0x88] sm:$0xff]
    %v5888 = vld [vmem:[%s5869 + $0x90] sm:$0xff]
    %v5889 = vld [vmem:[%s5869 + $0x98] sm:$0xff]
    %v5890 = vld [vmem:[%s5869 + $0xa0] sm:$0xff]
    %v5891 = vld [vmem:[%s5869 + $0xa8] sm:$0xff]
    %v5892 = vld [vmem:[%s5869 + $0xb0] sm:$0xff]
    %v5893 = vld [vmem:[%s5869 + $0xb8] sm:$0xff]
    %v5894 = vld [vmem:[%s5869 + $0xc0] sm:$0xf]
    %v5896 = vsel %vm1003, %v5894, 0
    %5898 = vmatprep.subr.mxu0 0.0
    %5899 = vmatpush1.msra.mxu0 %v5885
    %5900 = vmatprep.subr.mxu0 0.0
    %5901 = vmatpush1.msra.mxu0 %v5884
    %5902 = vmatprep.subr.mxu0 0.0
    %5903 = vmatpush1.msra.mxu0 %v5883
    %5904 = vmatprep.subr.mxu0 0.0
    %5905 = vmatpush1.msra.mxu0 %v5882
    %5906 = vmatprep.subr.mxu0 0.0
    %5907 = vmatpush1.msra.mxu0 %v5881
    %5908 = vmatprep.subr.mxu0 0.0
    %5909 = vmatpush1.msra.mxu0 %v5880
    %5910 = vmatprep.subr.mxu0 0.0
    %5911 = vmatpush1.msra.mxu0 %v5879
    %5912 = vmatprep.subr.mxu0 0.0
    %5913 = vmatpush1.msra.mxu0 %v5878
    %5914 = vmatprep.subr.mxu0 0.0
    %5915 = vmatpush1.msra.mxu0 %v5877
    %5916 = vmatprep.subr.mxu0 0.0
    %5917 = vmatpush1.msra.mxu0 %v5876
    %5918 = vmatprep.subr.mxu0 0.0
    %5919 = vmatpush1.msra.mxu0 %v5875
    %5920 = vmatprep.subr.mxu0 0.0
    %5921 = vmatpush1.msra.mxu0 %v5874
    %5922 = vmatprep.subr.mxu0 0.0
    %5923 = vmatpush1.msra.mxu0 %v5873
    %5924 = vmatprep.subr.mxu0 0.0
    %5925 = vmatpush1.msra.mxu0 %v5872
    %5926 = vmatprep.subr.mxu0 0.0
    %5927 = vmatpush1.msra.mxu0 %v5871
    %5928 = vmatprep.subr.mxu0 0.0
    %5929 = vmatpush1.msra.mxu0 %v5870
    %5930 = vmatprep.subr.mxu0 0.0
    %5931 = vmatpush2.msra.mxu0 0.0
    %5932 = vmatprep.subr.mxu0 0.0
    %5933 = vmatpush2.msra.mxu0 0.0
    %5934 = vmatprep.subr.mxu0 0.0
    %5935 = vmatpush2.msra.mxu0 0.0
    %5936 = vmatprep.subr.mxu0 0.0
    %5937 = vmatpush2.msra.mxu0 0.0
    %5938 = vmatprep.subr.mxu0 0.0
    %5939 = vmatpush2.msra.mxu0 0.0
    %5940 = vmatprep.subr.mxu0 0.0
    %5941 = vmatpush2.msra.mxu0 0.0
    %5942 = vmatprep.subr.mxu0 0.0
    %5943 = vmatpush2.msra.mxu0 0.0
    %5944 = vmatprep.subr.mxu0 0.0
    %5945 = vmatpush2.msra.mxu0 %v5896
    %5946 = vmatprep.subr.mxu0 0.0
    %5947 = vmatpush2.msra.mxu0 %v5893
    %5948 = vmatprep.subr.mxu0 0.0
    %5949 = vmatpush2.msra.mxu0 %v5892
    %5950 = vmatprep.subr.mxu0 0.0
    %5951 = vmatpush2.msra.mxu0 %v5891
    %5952 = vmatprep.subr.mxu0 0.0
    %5953 = vmatpush2.msra.mxu0 %v5890
    %5954 = vmatprep.subr.mxu0 0.0
    %5955 = vmatpush2.msra.mxu0 %v5889
    %5956 = vmatprep.subr.mxu0 0.0
    %5957 = vmatpush2.msra.mxu0 %v5888
    %5958 = vmatprep.subr.mxu0 0.0
    %5959 = vmatpush2.msra.mxu0 %v5887
    %5960 = vmatprep.subr.mxu0 0.0
    %5961 = vmatpush2.msra.mxu0 %v5886
    %5962 = vmatprep.mubr.f32.mxu0 %v998
    %5963 = vmatmul.mubr.f32.gmra.mxu0 %v961
    %v5964 = vpop.f32.mrf.mxu0
    %v5965 = vadd.f32 0.0, %v5964
    %v5966 = vpop.f32.mrf.mxu0
    %5967 = vmatprep.mubr.f32.mxu0 %v1001
    %5968 = vmatmul.mubr.f32.gmra.mxu0 %v967
    %v5969 = vpop.f32.mrf.mxu0
    %v5970 = vadd.f32 0.0, %v5969
    %v5971 = vpop.f32.mrf.mxu0
    %5972 = vdwg.mxu0
    %s5973 = scalar_lea.vmem %s5, 736
    %v5974 = vld [vmem:[%s5973] sm:$0xff]
    %v5975 = vld [vmem:[%s5973 + $0x8] sm:$0xff]
    %v5976 = vld [vmem:[%s5973 + $0x10] sm:$0xff]
    %v5977 = vld [vmem:[%s5973 + $0x18] sm:$0xff]
    %v5979 = vsel %vm1195, %v5974, 0
    %v5982 = vsel %vm1195, %v5975, 0
    %v5985 = vsel %vm1195, %v5976, 0
    %v5988 = vsel %vm1195, %v5977, 0
    %v5991 = vsel %vm1003, %v5970, 0
    %5993 = vmatprep.subr.mxu0 0.0
    %5994 = vmatpush1.msra.mxu0 0.0
    %5995 = vmatprep.subr.mxu0 0.0
    %5996 = vmatpush1.msra.mxu0 0.0
    %5997 = vmatprep.subr.mxu0 0.0
    %5998 = vmatpush1.msra.mxu0 0.0
    %5999 = vmatprep.subr.mxu0 0.0
    %6000 = vmatpush1.msra.mxu0 0.0
    %6001 = vmatprep.subr.mxu0 0.0
    %6002 = vmatpush1.msra.mxu0 0.0
    %6003 = vmatprep.subr.mxu0 0.0
    %6004 = vmatpush1.msra.mxu0 0.0
    %6005 = vmatprep.subr.mxu0 0.0
    %6006 = vmatpush1.msra.mxu0 0.0
    %6007 = vmatprep.subr.mxu0 0.0
    %6008 = vmatpush1.msra.mxu0 0.0
    %6009 = vmatprep.subr.mxu0 0.0
    %6010 = vmatpush1.msra.mxu0 0.0
    %6011 = vmatprep.subr.mxu0 0.0
    %6012 = vmatpush1.msra.mxu0 0.0
    %6013 = vmatprep.subr.mxu0 0.0
    %6014 = vmatpush1.msra.mxu0 0.0
    %6015 = vmatprep.subr.mxu0 0.0
    %6016 = vmatpush1.msra.mxu0 0.0
    %6017 = vmatprep.subr.mxu0 0.0
    %6018 = vmatpush1.msra.mxu0 0.0
    %6019 = vmatprep.subr.mxu0 0.0
    %6020 = vmatpush1.msra.mxu0 0.0
    %6021 = vmatprep.subr.mxu0 0.0
    %6022 = vmatpush1.msra.mxu0 %v5991
    %6023 = vmatprep.subr.mxu0 0.0
    %6024 = vmatpush1.msra.mxu0 %v5965
    %6025 = vmatprep.subr.mxu0 0.0
    %6026 = vmatpush2.msra.mxu0 0.0
    %6027 = vmatprep.subr.mxu0 0.0
    %6028 = vmatpush2.msra.mxu0 0.0
    %6029 = vmatprep.subr.mxu0 0.0
    %6030 = vmatpush2.msra.mxu0 0.0
    %6031 = vmatprep.subr.mxu0 0.0
    %6032 = vmatpush2.msra.mxu0 0.0
    %6033 = vmatprep.subr.mxu0 0.0
    %6034 = vmatpush2.msra.mxu0 0.0
    %6035 = vmatprep.subr.mxu0 0.0
    %6036 = vmatpush2.msra.mxu0 0.0
    %6037 = vmatprep.subr.mxu0 0.0
    %6038 = vmatpush2.msra.mxu0 0.0
    %6039 = vmatprep.subr.mxu0 0.0
    %6040 = vmatpush2.msra.mxu0 0.0
    %6041 = vmatprep.subr.mxu0 0.0
    %6042 = vmatpush2.msra.mxu0 0.0
    %6043 = vmatprep.subr.mxu0 0.0
    %6044 = vmatpush2.msra.mxu0 0.0
    %6045 = vmatprep.subr.mxu0 0.0
    %6046 = vmatpush2.msra.mxu0 0.0
    %6047 = vmatprep.subr.mxu0 0.0
    %6048 = vmatpush2.msra.mxu0 0.0
    %6049 = vmatprep.subr.mxu0 0.0
    %6050 = vmatpush2.msra.mxu0 0.0
    %6051 = vmatprep.subr.mxu0 0.0
    %6052 = vmatpush2.msra.mxu0 0.0
    %6053 = vmatprep.subr.mxu0 0.0
    %6054 = vmatpush2.msra.mxu0 0.0
    %6055 = vmatprep.subr.mxu0 0.0
    %6056 = vmatpush2.msra.mxu0 0.0
    %6057 = vmatprep.mubr.f32.mxu0 0.0
    %6058 = vmatmul.mubr.f32.gmra.mxu0 %v5979
    %v6059 = vpop.f32.mrf.mxu0
    %v6060 = vadd.f32 0.0, %v6059
    %v6061 = vpop.f32.mrf.mxu0
    %6062 = vmatprep.mubr.f32.mxu0 0.0
    %6063 = vmatmul.mubr.f32.gmra.mxu0 %v5982
    %v6064 = vpop.f32.mrf.mxu0
    %v6065 = vadd.f32 0.0, %v6064
    %v6066 = vpop.f32.mrf.mxu0
    %6067 = vmatprep.mubr.f32.mxu0 0.0
    %6068 = vmatmul.mubr.f32.gmra.mxu0 %v5985
    %v6069 = vpop.f32.mrf.mxu0
    %v6070 = vadd.f32 0.0, %v6069
    %v6071 = vpop.f32.mrf.mxu0
    %6072 = vmatprep.mubr.f32.mxu0 0.0
    %6073 = vmatmul.mubr.f32.gmra.mxu0 %v5988
    %v6074 = vpop.f32.mrf.mxu0
    %v6075 = vadd.f32 0.0, %v6074
    %v6076 = vpop.f32.mrf.mxu0
    %6077 = vdwg.mxu0
    %v6078 = vadd.f32 %v5865, %v6060
    %v6079 = vadd.f32 %v5866, %v6065
    %v6080 = vadd.f32 %v5867, %v6070
    %v6081 = vadd.f32 %v5868, %v6075
    %s6082 = scalar_lea.vmem %s4, 4800
    %v6083 = vld [vmem:[%s6082] sm:$0xff]
    %v6084 = vld [vmem:[%s6082 + $0x8] sm:$0xff]
    %v6085 = vld [vmem:[%s6082 + $0x10] sm:$0xff]
    %v6086 = vld [vmem:[%s6082 + $0x18] sm:$0xff]
    %v6087 = vld [vmem:[%s6082 + $0x20] sm:$0xff]
    %v6088 = vld [vmem:[%s6082 + $0x28] sm:$0xff]
    %v6089 = vld [vmem:[%s6082 + $0x30] sm:$0xff]
    %v6090 = vld [vmem:[%s6082 + $0x38] sm:$0xff]
    %v6091 = vld [vmem:[%s6082 + $0x40] sm:$0xff]
    %v6092 = vld [vmem:[%s6082 + $0x48] sm:$0xff]
    %v6093 = vld [vmem:[%s6082 + $0x50] sm:$0xff]
    %v6094 = vld [vmem:[%s6082 + $0x58] sm:$0xff]
    %v6095 = vld [vmem:[%s6082 + $0x60] sm:$0xff]
    %v6096 = vld [vmem:[%s6082 + $0x68] sm:$0xff]
    %v6097 = vld [vmem:[%s6082 + $0x70] sm:$0xff]
    %v6098 = vld [vmem:[%s6082 + $0x78] sm:$0xff]
    %v6099 = vld [vmem:[%s6082 + $0x80] sm:$0xff]
    %v6100 = vld [vmem:[%s6082 + $0x88] sm:$0xff]
    %v6101 = vld [vmem:[%s6082 + $0x90] sm:$0xff]
    %v6102 = vld [vmem:[%s6082 + $0x98] sm:$0xff]
    %v6103 = vld [vmem:[%s6082 + $0xa0] sm:$0xff]
    %v6104 = vld [vmem:[%s6082 + $0xa8] sm:$0xff]
    %v6105 = vld [vmem:[%s6082 + $0xb0] sm:$0xff]
    %v6106 = vld [vmem:[%s6082 + $0xb8] sm:$0xff]
    %v6107 = vld [vmem:[%s6082 + $0xc0] sm:$0xf]
    %v6109 = vsel %vm1003, %v6107, 0
    %6111 = vmatprep.subr.mxu0 0.0
    %6112 = vmatpush1.msra.mxu0 %v6098
    %6113 = vmatprep.subr.mxu0 0.0
    %6114 = vmatpush1.msra.mxu0 %v6097
    %6115 = vmatprep.subr.mxu0 0.0
    %6116 = vmatpush1.msra.mxu0 %v6096
    %6117 = vmatprep.subr.mxu0 0.0
    %6118 = vmatpush1.msra.mxu0 %v6095
    %6119 = vmatprep.subr.mxu0 0.0
    %6120 = vmatpush1.msra.mxu0 %v6094
    %6121 = vmatprep.subr.mxu0 0.0
    %6122 = vmatpush1.msra.mxu0 %v6093
    %6123 = vmatprep.subr.mxu0 0.0
    %6124 = vmatpush1.msra.mxu0 %v6092
    %6125 = vmatprep.subr.mxu0 0.0
    %6126 = vmatpush1.msra.mxu0 %v6091
    %6127 = vmatprep.subr.mxu0 0.0
    %6128 = vmatpush1.msra.mxu0 %v6090
    %6129 = vmatprep.subr.mxu0 0.0
    %6130 = vmatpush1.msra.mxu0 %v6089
    %6131 = vmatprep.subr.mxu0 0.0
    %6132 = vmatpush1.msra.mxu0 %v6088
    %6133 = vmatprep.subr.mxu0 0.0
    %6134 = vmatpush1.msra.mxu0 %v6087
    %6135 = vmatprep.subr.mxu0 0.0
    %6136 = vmatpush1.msra.mxu0 %v6086
    %6137 = vmatprep.subr.mxu0 0.0
    %6138 = vmatpush1.msra.mxu0 %v6085
    %6139 = vmatprep.subr.mxu0 0.0
    %6140 = vmatpush1.msra.mxu0 %v6084
    %6141 = vmatprep.subr.mxu0 0.0
    %6142 = vmatpush1.msra.mxu0 %v6083
    %6143 = vmatprep.subr.mxu0 0.0
    %6144 = vmatpush2.msra.mxu0 0.0
    %6145 = vmatprep.subr.mxu0 0.0
    %6146 = vmatpush2.msra.mxu0 0.0
    %6147 = vmatprep.subr.mxu0 0.0
    %6148 = vmatpush2.msra.mxu0 0.0
    %6149 = vmatprep.subr.mxu0 0.0
    %6150 = vmatpush2.msra.mxu0 0.0
    %6151 = vmatprep.subr.mxu0 0.0
    %6152 = vmatpush2.msra.mxu0 0.0
    %6153 = vmatprep.subr.mxu0 0.0
    %6154 = vmatpush2.msra.mxu0 0.0
    %6155 = vmatprep.subr.mxu0 0.0
    %6156 = vmatpush2.msra.mxu0 0.0
    %6157 = vmatprep.subr.mxu0 0.0
    %6158 = vmatpush2.msra.mxu0 %v6109
    %6159 = vmatprep.subr.mxu0 0.0
    %6160 = vmatpush2.msra.mxu0 %v6106
    %6161 = vmatprep.subr.mxu0 0.0
    %6162 = vmatpush2.msra.mxu0 %v6105
    %6163 = vmatprep.subr.mxu0 0.0
    %6164 = vmatpush2.msra.mxu0 %v6104
    %6165 = vmatprep.subr.mxu0 0.0
    %6166 = vmatpush2.msra.mxu0 %v6103
    %6167 = vmatprep.subr.mxu0 0.0
    %6168 = vmatpush2.msra.mxu0 %v6102
    %6169 = vmatprep.subr.mxu0 0.0
    %6170 = vmatpush2.msra.mxu0 %v6101
    %6171 = vmatprep.subr.mxu0 0.0
    %6172 = vmatpush2.msra.mxu0 %v6100
    %6173 = vmatprep.subr.mxu0 0.0
    %6174 = vmatpush2.msra.mxu0 %v6099
    %6175 = vmatprep.mubr.f32.mxu0 %v998
    %6176 = vmatmul.mubr.f32.gmra.mxu0 %v961
    %v6177 = vpop.f32.mrf.mxu0
    %v6178 = vadd.f32 0.0, %v6177
    %v6179 = vpop.f32.mrf.mxu0
    %6180 = vmatprep.mubr.f32.mxu0 %v1001
    %6181 = vmatmul.mubr.f32.gmra.mxu0 %v967
    %v6182 = vpop.f32.mrf.mxu0
    %v6183 = vadd.f32 0.0, %v6182
    %v6184 = vpop.f32.mrf.mxu0
    %6185 = vdwg.mxu0
    %s6186 = scalar_lea.vmem %s5, 768
    %v6187 = vld [vmem:[%s6186] sm:$0xff]
    %v6188 = vld [vmem:[%s6186 + $0x8] sm:$0xff]
    %v6189 = vld [vmem:[%s6186 + $0x10] sm:$0xff]
    %v6190 = vld [vmem:[%s6186 + $0x18] sm:$0xff]
    %v6192 = vsel %vm1195, %v6187, 0
    %v6195 = vsel %vm1195, %v6188, 0
    %v6198 = vsel %vm1195, %v6189, 0
    %v6201 = vsel %vm1195, %v6190, 0
    %v6204 = vsel %vm1003, %v6183, 0
    %6206 = vmatprep.subr.mxu0 0.0
    %6207 = vmatpush1.msra.mxu0 0.0
    %6208 = vmatprep.subr.mxu0 0.0
    %6209 = vmatpush1.msra.mxu0 0.0
    %6210 = vmatprep.subr.mxu0 0.0
    %6211 = vmatpush1.msra.mxu0 0.0
    %6212 = vmatprep.subr.mxu0 0.0
    %6213 = vmatpush1.msra.mxu0 0.0
    %6214 = vmatprep.subr.mxu0 0.0
    %6215 = vmatpush1.msra.mxu0 0.0
    %6216 = vmatprep.subr.mxu0 0.0
    %6217 = vmatpush1.msra.mxu0 0.0
    %6218 = vmatprep.subr.mxu0 0.0
    %6219 = vmatpush1.msra.mxu0 0.0
    %6220 = vmatprep.subr.mxu0 0.0
    %6221 = vmatpush1.msra.mxu0 0.0
    %6222 = vmatprep.subr.mxu0 0.0
    %6223 = vmatpush1.msra.mxu0 0.0
    %6224 = vmatprep.subr.mxu0 0.0
    %6225 = vmatpush1.msra.mxu0 0.0
    %6226 = vmatprep.subr.mxu0 0.0
    %6227 = vmatpush1.msra.mxu0 0.0
    %6228 = vmatprep.subr.mxu0 0.0
    %6229 = vmatpush1.msra.mxu0 0.0
    %6230 = vmatprep.subr.mxu0 0.0
    %6231 = vmatpush1.msra.mxu0 0.0
    %6232 = vmatprep.subr.mxu0 0.0
    %6233 = vmatpush1.msra.mxu0 0.0
    %6234 = vmatprep.subr.mxu0 0.0
    %6235 = vmatpush1.msra.mxu0 %v6204
    %6236 = vmatprep.subr.mxu0 0.0
    %6237 = vmatpush1.msra.mxu0 %v6178
    %6238 = vmatprep.subr.mxu0 0.0
    %6239 = vmatpush2.msra.mxu0 0.0
    %6240 = vmatprep.subr.mxu0 0.0
    %6241 = vmatpush2.msra.mxu0 0.0
    %6242 = vmatprep.subr.mxu0 0.0
    %6243 = vmatpush2.msra.mxu0 0.0
    %6244 = vmatprep.subr.mxu0 0.0
    %6245 = vmatpush2.msra.mxu0 0.0
    %6246 = vmatprep.subr.mxu0 0.0
    %6247 = vmatpush2.msra.mxu0 0.0
    %6248 = vmatprep.subr.mxu0 0.0
    %6249 = vmatpush2.msra.mxu0 0.0
    %6250 = vmatprep.subr.mxu0 0.0
    %6251 = vmatpush2.msra.mxu0 0.0
    %6252 = vmatprep.subr.mxu0 0.0
    %6253 = vmatpush2.msra.mxu0 0.0
    %6254 = vmatprep.subr.mxu0 0.0
    %6255 = vmatpush2.msra.mxu0 0.0
    %6256 = vmatprep.subr.mxu0 0.0
    %6257 = vmatpush2.msra.mxu0 0.0
    %6258 = vmatprep.subr.mxu0 0.0
    %6259 = vmatpush2.msra.mxu0 0.0
    %6260 = vmatprep.subr.mxu0 0.0
    %6261 = vmatpush2.msra.mxu0 0.0
    %6262 = vmatprep.subr.mxu0 0.0
    %6263 = vmatpush2.msra.mxu0 0.0
    %6264 = vmatprep.subr.mxu0 0.0
    %6265 = vmatpush2.msra.mxu0 0.0
    %6266 = vmatprep.subr.mxu0 0.0
    %6267 = vmatpush2.msra.mxu0 0.0
    %6268 = vmatprep.subr.mxu0 0.0
    %6269 = vmatpush2.msra.mxu0 0.0
    %6270 = vmatprep.mubr.f32.mxu0 0.0
    %6271 = vmatmul.mubr.f32.gmra.mxu0 %v6192
    %v6272 = vpop.f32.mrf.mxu0
    %v6273 = vadd.f32 0.0, %v6272
    %v6274 = vpop.f32.mrf.mxu0
    %6275 = vmatprep.mubr.f32.mxu0 0.0
    %6276 = vmatmul.mubr.f32.gmra.mxu0 %v6195
    %v6277 = vpop.f32.mrf.mxu0
    %v6278 = vadd.f32 0.0, %v6277
    %v6279 = vpop.f32.mrf.mxu0
    %6280 = vmatprep.mubr.f32.mxu0 0.0
    %6281 = vmatmul.mubr.f32.gmra.mxu0 %v6198
    %v6282 = vpop.f32.mrf.mxu0
    %v6283 = vadd.f32 0.0, %v6282
    %v6284 = vpop.f32.mrf.mxu0
    %6285 = vmatprep.mubr.f32.mxu0 0.0
    %6286 = vmatmul.mubr.f32.gmra.mxu0 %v6201
    %v6287 = vpop.f32.mrf.mxu0
    %v6288 = vadd.f32 0.0, %v6287
    %v6289 = vpop.f32.mrf.mxu0
    %6290 = vdwg.mxu0
    %v6291 = vadd.f32 %v6078, %v6273
    %v6292 = vadd.f32 %v6079, %v6278
    %v6293 = vadd.f32 %v6080, %v6283
    %v6294 = vadd.f32 %v6081, %v6288
    %v6295 = vld [vmem:[%s6] sm:$0xff]
    %v6296 = vld [vmem:[%s6 + $0x8] sm:$0xff]
    %v6297 = vld [vmem:[%s6 + $0x10] sm:$0xff]
    %v6298 = vld [vmem:[%s6 + $0x18] sm:$0xff]
    %6300 = vset.pattern.permute.xlu0 0
    %6301 = vperm.xlu0 %6300, %v6295
    %v6302 = vpop.permute.xlu0 %6301
    %6305 = vset.pattern.permute.xlu0 0
    %6306 = vperm.xlu0 %6305, %v6296
    %v6307 = vpop.permute.xlu0 %6306
    %6310 = vset.pattern.permute.xlu0 0
    %6311 = vperm.xlu0 %6310, %v6297
    %v6312 = vpop.permute.xlu0 %6311
    %6315 = vset.pattern.permute.xlu0 0
    %6316 = vperm.xlu0 %6315, %v6298
    %v6317 = vpop.permute.xlu0 %6316
    %v6319 = vadd.f32 %v6291, %v6302
    %v6320 = vadd.f32 %v6292, %v6307
    %v6321 = vadd.f32 %v6293, %v6312
    %v6322 = vadd.f32 %v6294, %v6317
    %v6323 = vtanh.pop %v6319
    %v6324 = vtanh.pop %v6320
    %v6325 = vtanh.pop %v6321
    %v6326 = vtanh.pop %v6322
    %v6327 = vld [vmem:[%s7] sm:$0xff]
    %v6328 = vld [vmem:[%s7 + $0x8] sm:$0xff]
    %v6329 = vld [vmem:[%s7 + $0x10] sm:$0xff]
    %v6330 = vld [vmem:[%s7 + $0x18] sm:$0xff]
    %v6331 = vld [vmem:[%s7 + $0x20] sm:$0xff]
    %v6332 = vld [vmem:[%s7 + $0x28] sm:$0xff]
    %v6333 = vld [vmem:[%s7 + $0x30] sm:$0xff]
    %v6334 = vld [vmem:[%s7 + $0x38] sm:$0xff]
    %v6335 = vld [vmem:[%s7 + $0x40] sm:$0xff]
    %v6336 = vld [vmem:[%s7 + $0x48] sm:$0xff]
    %v6337 = vld [vmem:[%s7 + $0x50] sm:$0xff]
    %v6338 = vld [vmem:[%s7 + $0x58] sm:$0xff]
    %v6339 = vld [vmem:[%s7 + $0x60] sm:$0xf]
    %vm6340 = vcmask 818176
    %v6342 = vsel %vm6340, %v6323, 0
    %v6345 = vsel %vm6340, %v6324, 0
    %v6348 = vsel %vm6340, %v6325, 0
    %v6351 = vsel %vm6340, %v6326, 0
    %v6354 = vsel %vm1003, %v6339, 0
    %6356 = vmatprep.subr.mxu0 0.0
    %6357 = vmatpush1.msra.mxu0 0.0
    %6358 = vmatprep.subr.mxu0 0.0
    %6359 = vmatpush1.msra.mxu0 0.0
    %6360 = vmatprep.subr.mxu0 0.0
    %6361 = vmatpush1.msra.mxu0 0.0
    %6362 = vmatprep.subr.mxu0 0.0
    %6363 = vmatpush1.msra.mxu0 %v6354
    %6364 = vmatprep.subr.mxu0 0.0
    %6365 = vmatpush1.msra.mxu0 %v6338
    %6366 = vmatprep.subr.mxu0 0.0
    %6367 = vmatpush1.msra.mxu0 %v6337
    %6368 = vmatprep.subr.mxu0 0.0
    %6369 = vmatpush1.msra.mxu0 %v6336
    %6370 = vmatprep.subr.mxu0 0.0
    %6371 = vmatpush1.msra.mxu0 %v6335
    %6372 = vmatprep.subr.mxu0 0.0
    %6373 = vmatpush1.msra.mxu0 %v6334
    %6374 = vmatprep.subr.mxu0 0.0
    %6375 = vmatpush1.msra.mxu0 %v6333
    %6376 = vmatprep.subr.mxu0 0.0
    %6377 = vmatpush1.msra.mxu0 %v6332
    %6378 = vmatprep.subr.mxu0 0.0
    %6379 = vmatpush1.msra.mxu0 %v6331
    %6380 = vmatprep.subr.mxu0 0.0
    %6381 = vmatpush1.msra.mxu0 %v6330
    %6382 = vmatprep.subr.mxu0 0.0
    %6383 = vmatpush1.msra.mxu0 %v6329
    %6384 = vmatprep.subr.mxu0 0.0
    %6385 = vmatpush1.msra.mxu0 %v6328
    %6386 = vmatprep.subr.mxu0 0.0
    %6387 = vmatpush1.msra.mxu0 %v6327
    %6388 = vmatprep.subr.mxu0 0.0
    %6389 = vmatpush2.msra.mxu0 0.0
    %6390 = vmatprep.subr.mxu0 0.0
    %6391 = vmatpush2.msra.mxu0 0.0
    %6392 = vmatprep.subr.mxu0 0.0
    %6393 = vmatpush2.msra.mxu0 0.0
    %6394 = vmatprep.subr.mxu0 0.0
    %6395 = vmatpush2.msra.mxu0 0.0
    %6396 = vmatprep.subr.mxu0 0.0
    %6397 = vmatpush2.msra.mxu0 0.0
    %6398 = vmatprep.subr.mxu0 0.0
    %6399 = vmatpush2.msra.mxu0 0.0
    %6400 = vmatprep.subr.mxu0 0.0
    %6401 = vmatpush2.msra.mxu0 0.0
    %6402 = vmatprep.subr.mxu0 0.0
    %6403 = vmatpush2.msra.mxu0 0.0
    %6404 = vmatprep.subr.mxu0 0.0
    %6405 = vmatpush2.msra.mxu0 0.0
    %6406 = vmatprep.subr.mxu0 0.0
    %6407 = vmatpush2.msra.mxu0 0.0
    %6408 = vmatprep.subr.mxu0 0.0
    %6409 = vmatpush2.msra.mxu0 0.0
    %6410 = vmatprep.subr.mxu0 0.0
    %6411 = vmatpush2.msra.mxu0 0.0
    %6412 = vmatprep.subr.mxu0 0.0
    %6413 = vmatpush2.msra.mxu0 0.0
    %6414 = vmatprep.subr.mxu0 0.0
    %6415 = vmatpush2.msra.mxu0 0.0
    %6416 = vmatprep.subr.mxu0 0.0
    %6417 = vmatpush2.msra.mxu0 0.0
    %6418 = vmatprep.subr.mxu0 0.0
    %6419 = vmatpush2.msra.mxu0 0.0
    %6420 = vmatprep.mubr.f32.mxu0 0.0
    %6421 = vmatmul.mubr.f32.gmra.mxu0 %v6342
    %v6422 = vpop.f32.mrf.mxu0
    %v6423 = vadd.f32 0.0, %v6422
    %v6424 = vpop.f32.mrf.mxu0
    %6425 = vmatprep.mubr.f32.mxu0 0.0
    %6426 = vmatmul.mubr.f32.gmra.mxu0 %v6345
    %v6427 = vpop.f32.mrf.mxu0
    %v6428 = vadd.f32 0.0, %v6427
    %v6429 = vpop.f32.mrf.mxu0
    %6430 = vmatprep.mubr.f32.mxu0 0.0
    %6431 = vmatmul.mubr.f32.gmra.mxu0 %v6348
    %v6432 = vpop.f32.mrf.mxu0
    %v6433 = vadd.f32 0.0, %v6432
    %v6434 = vpop.f32.mrf.mxu0
    %6435 = vmatprep.mubr.f32.mxu0 0.0
    %6436 = vmatmul.mubr.f32.gmra.mxu0 %v6351
    %v6437 = vpop.f32.mrf.mxu0
    %v6438 = vadd.f32 0.0, %v6437
    %v6439 = vpop.f32.mrf.mxu0
    %6440 = vdwg.mxu0
    %v6441 = vld [vmem:[%s8] sm:$0xff]
    %v6442 = vld [vmem:[%s8 + $0x8] sm:$0xff]
    %v6443 = vld [vmem:[%s8 + $0x10] sm:$0xff]
    %v6444 = vld [vmem:[%s8 + $0x18] sm:$0x1]
    %s6445 = scalar_lea.vmem %s8, 32
    %v6446 = vld [vmem:[%s6445] sm:$0xff]
    %v6447 = vld [vmem:[%s6445 + $0x8] sm:$0xff]
    %v6448 = vld [vmem:[%s6445 + $0x10] sm:$0xff]
    %v6449 = vld [vmem:[%s6445 + $0x18] sm:$0x1]
    %v6451 = vrot.slane %v6423, 2
    %vm6452 = vcmask 203776
    %v6453 = vsel %vm6452, %v6451, 0
    %vm6455 = vcmask 1040384
    %v6457 = vsel %vm6455, %v6449, 0
    %6459 = vmatprep.subr.mxu0 0.0
    %6460 = vmatpush1.msra.mxu0 0.0
    %6461 = vmatprep.subr.mxu0 0.0
    %6462 = vmatpush1.msra.mxu0 0.0
    %6463 = vmatprep.subr.mxu0 0.0
    %6464 = vmatpush1.msra.mxu0 0.0
    %6465 = vmatprep.subr.mxu0 0.0
    %6466 = vmatpush1.msra.mxu0 0.0
    %6467 = vmatprep.subr.mxu0 0.0
    %6468 = vmatpush1.msra.mxu0 0.0
    %6469 = vmatprep.subr.mxu0 0.0
    %6470 = vmatpush1.msra.mxu0 0.0
    %6471 = vmatprep.subr.mxu0 0.0
    %6472 = vmatpush1.msra.mxu0 0.0
    %6473 = vmatprep.subr.mxu0 0.0
    %6474 = vmatpush1.msra.mxu0 0.0
    %6475 = vmatprep.subr.mxu0 0.0
    %6476 = vmatpush1.msra.mxu0 0.0
    %6477 = vmatprep.subr.mxu0 0.0
    %6478 = vmatpush1.msra.mxu0 0.0
    %6479 = vmatprep.subr.mxu0 0.0
    %6480 = vmatpush1.msra.mxu0 0.0
    %6481 = vmatprep.subr.mxu0 0.0
    %6482 = vmatpush1.msra.mxu0 0.0
    %6483 = vmatprep.subr.mxu0 0.0
    %6484 = vmatpush1.msra.mxu0 %v6457
    %6485 = vmatprep.subr.mxu0 0.0
    %6486 = vmatpush1.msra.mxu0 %v6448
    %6487 = vmatprep.subr.mxu0 0.0
    %6488 = vmatpush1.msra.mxu0 %v6447
    %6489 = vmatprep.subr.mxu0 0.0
    %6490 = vmatpush1.msra.mxu0 %v6446
    %6491 = vmatprep.subr.mxu0 0.0
    %6492 = vmatpush2.msra.mxu0 0.0
    %6493 = vmatprep.subr.mxu0 0.0
    %6494 = vmatpush2.msra.mxu0 0.0
    %6495 = vmatprep.subr.mxu0 0.0
    %6496 = vmatpush2.msra.mxu0 0.0
    %6497 = vmatprep.subr.mxu0 0.0
    %6498 = vmatpush2.msra.mxu0 0.0
    %6499 = vmatprep.subr.mxu0 0.0
    %6500 = vmatpush2.msra.mxu0 0.0
    %6501 = vmatprep.subr.mxu0 0.0
    %6502 = vmatpush2.msra.mxu0 0.0
    %6503 = vmatprep.subr.mxu0 0.0
    %6504 = vmatpush2.msra.mxu0 0.0
    %6505 = vmatprep.subr.mxu0 0.0
    %6506 = vmatpush2.msra.mxu0 0.0
    %6507 = vmatprep.subr.mxu0 0.0
    %6508 = vmatpush2.msra.mxu0 0.0
    %6509 = vmatprep.subr.mxu0 0.0
    %6510 = vmatpush2.msra.mxu0 0.0
    %6511 = vmatprep.subr.mxu0 0.0
    %6512 = vmatpush2.msra.mxu0 0.0
    %6513 = vmatprep.subr.mxu0 0.0
    %6514 = vmatpush2.msra.mxu0 0.0
    %6515 = vmatprep.subr.mxu0 0.0
    %6516 = vmatpush2.msra.mxu0 0.0
    %6517 = vmatprep.subr.mxu0 0.0
    %6518 = vmatpush2.msra.mxu0 0.0
    %6519 = vmatprep.subr.mxu0 0.0
    %6520 = vmatpush2.msra.mxu0 0.0
    %6521 = vmatprep.subr.mxu0 0.0
    %6522 = vmatpush2.msra.mxu0 0.0
    %6523 = vmatprep.mubr.f32.mxu0 0.0
    %6524 = vmatmul.mubr.f32.gmra.mxu0 %v6453
    %v6525 = vpop.f32.mrf.mxu0
    %v6526 = vadd.f32 0.0, %v6525
    %v6527 = vpop.f32.mrf.mxu0
    %6528 = vdwg.mxu0
    %v6529 = vsel %vm6452, %v6423, 0
    %v6532 = vsel %vm6455, %v6444, 0
    %6534 = vmatprep.subr.mxu0 0.0
    %6535 = vmatpush1.msra.mxu0 0.0
    %6536 = vmatprep.subr.mxu0 0.0
    %6537 = vmatpush1.msra.mxu0 0.0
    %6538 = vmatprep.subr.mxu0 0.0
    %6539 = vmatpush1.msra.mxu0 0.0
    %6540 = vmatprep.subr.mxu0 0.0
    %6541 = vmatpush1.msra.mxu0 0.0
    %6542 = vmatprep.subr.mxu0 0.0
    %6543 = vmatpush1.msra.mxu0 0.0
    %6544 = vmatprep.subr.mxu0 0.0
    %6545 = vmatpush1.msra.mxu0 0.0
    %6546 = vmatprep.subr.mxu0 0.0
    %6547 = vmatpush1.msra.mxu0 0.0
    %6548 = vmatprep.subr.mxu0 0.0
    %6549 = vmatpush1.msra.mxu0 0.0
    %6550 = vmatprep.subr.mxu0 0.0
    %6551 = vmatpush1.msra.mxu0 0.0
    %6552 = vmatprep.subr.mxu0 0.0
    %6553 = vmatpush1.msra.mxu0 0.0
    %6554 = vmatprep.subr.mxu0 0.0
    %6555 = vmatpush1.msra.mxu0 0.0
    %6556 = vmatprep.subr.mxu0 0.0
    %6557 = vmatpush1.msra.mxu0 0.0
    %6558 = vmatprep.subr.mxu0 0.0
    %6559 = vmatpush1.msra.mxu0 %v6532
    %6560 = vmatprep.subr.mxu0 0.0
    %6561 = vmatpush1.msra.mxu0 %v6443
    %6562 = vmatprep.subr.mxu0 0.0
    %6563 = vmatpush1.msra.mxu0 %v6442
    %6564 = vmatprep.subr.mxu0 0.0
    %6565 = vmatpush1.msra.mxu0 %v6441
    %6566 = vmatprep.subr.mxu0 0.0
    %6567 = vmatpush2.msra.mxu0 0.0
    %6568 = vmatprep.subr.mxu0 0.0
    %6569 = vmatpush2.msra.mxu0 0.0
    %6570 = vmatprep.subr.mxu0 0.0
    %6571 = vmatpush2.msra.mxu0 0.0
    %6572 = vmatprep.subr.mxu0 0.0
    %6573 = vmatpush2.msra.mxu0 0.0
    %6574 = vmatprep.subr.mxu0 0.0
    %6575 = vmatpush2.msra.mxu0 0.0
    %6576 = vmatprep.subr.mxu0 0.0
    %6577 = vmatpush2.msra.mxu0 0.0
    %6578 = vmatprep.subr.mxu0 0.0
    %6579 = vmatpush2.msra.mxu0 0.0
    %6580 = vmatprep.subr.mxu0 0.0
    %6581 = vmatpush2.msra.mxu0 0.0
    %6582 = vmatprep.subr.mxu0 0.0
    %6583 = vmatpush2.msra.mxu0 0.0
    %6584 = vmatprep.subr.mxu0 0.0
    %6585 = vmatpush2.msra.mxu0 0.0
    %6586 = vmatprep.subr.mxu0 0.0
    %6587 = vmatpush2.msra.mxu0 0.0
    %6588 = vmatprep.subr.mxu0 0.0
    %6589 = vmatpush2.msra.mxu0 0.0
    %6590 = vmatprep.subr.mxu0 0.0
    %6591 = vmatpush2.msra.mxu0 0.0
    %6592 = vmatprep.subr.mxu0 0.0
    %6593 = vmatpush2.msra.mxu0 0.0
    %6594 = vmatprep.subr.mxu0 0.0
    %6595 = vmatpush2.msra.mxu0 0.0
    %6596 = vmatprep.subr.mxu0 0.0
    %6597 = vmatpush2.msra.mxu0 0.0
    %6598 = vmatprep.mubr.f32.mxu0 0.0
    %6599 = vmatmul.mubr.f32.gmra.mxu0 %v6529
    %v6600 = vpop.f32.mrf.mxu0
    %v6601 = vadd.f32 %v6526, %v6600
    %v6602 = vpop.f32.mrf.mxu0
    %6603 = vdwg.mxu0
    %s6604 = scalar_lea.vmem %s8, 64
    %v6605 = vld [vmem:[%s6604] sm:$0xff]
    %v6606 = vld [vmem:[%s6604 + $0x8] sm:$0xff]
    %v6607 = vld [vmem:[%s6604 + $0x10] sm:$0xff]
    %v6608 = vld [vmem:[%s6604 + $0x18] sm:$0x1]
    %v6609 = vrot.slane %v6423, 4
    %v6610 = vsel %vm6452, %v6609, 0
    %v6613 = vsel %vm6455, %v6608, 0
    %6615 = vmatprep.subr.mxu0 0.0
    %6616 = vmatpush1.msra.mxu0 0.0
    %6617 = vmatprep.subr.mxu0 0.0
    %6618 = vmatpush1.msra.mxu0 0.0
    %6619 = vmatprep.subr.mxu0 0.0
    %6620 = vmatpush1.msra.mxu0 0.0
    %6621 = vmatprep.subr.mxu0 0.0
    %6622 = vmatpush1.msra.mxu0 0.0
    %6623 = vmatprep.subr.mxu0 0.0
    %6624 = vmatpush1.msra.mxu0 0.0
    %6625 = vmatprep.subr.mxu0 0.0
    %6626 = vmatpush1.msra.mxu0 0.0
    %6627 = vmatprep.subr.mxu0 0.0
    %6628 = vmatpush1.msra.mxu0 0.0
    %6629 = vmatprep.subr.mxu0 0.0
    %6630 = vmatpush1.msra.mxu0 0.0
    %6631 = vmatprep.subr.mxu0 0.0
    %6632 = vmatpush1.msra.mxu0 0.0
    %6633 = vmatprep.subr.mxu0 0.0
    %6634 = vmatpush1.msra.mxu0 0.0
    %6635 = vmatprep.subr.mxu0 0.0
    %6636 = vmatpush1.msra.mxu0 0.0
    %6637 = vmatprep.subr.mxu0 0.0
    %6638 = vmatpush1.msra.mxu0 0.0
    %6639 = vmatprep.subr.mxu0 0.0
    %6640 = vmatpush1.msra.mxu0 %v6613
    %6641 = vmatprep.subr.mxu0 0.0
    %6642 = vmatpush1.msra.mxu0 %v6607
    %6643 = vmatprep.subr.mxu0 0.0
    %6644 = vmatpush1.msra.mxu0 %v6606
    %6645 = vmatprep.subr.mxu0 0.0
    %6646 = vmatpush1.msra.mxu0 %v6605
    %6647 = vmatprep.subr.mxu0 0.0
    %6648 = vmatpush2.msra.mxu0 0.0
    %6649 = vmatprep.subr.mxu0 0.0
    %6650 = vmatpush2.msra.mxu0 0.0
    %6651 = vmatprep.subr.mxu0 0.0
    %6652 = vmatpush2.msra.mxu0 0.0
    %6653 = vmatprep.subr.mxu0 0.0
    %6654 = vmatpush2.msra.mxu0 0.0
    %6655 = vmatprep.subr.mxu0 0.0
    %6656 = vmatpush2.msra.mxu0 0.0
    %6657 = vmatprep.subr.mxu0 0.0
    %6658 = vmatpush2.msra.mxu0 0.0
    %6659 = vmatprep.subr.mxu0 0.0
    %6660 = vmatpush2.msra.mxu0 0.0
    %6661 = vmatprep.subr.mxu0 0.0
    %6662 = vmatpush2.msra.mxu0 0.0
    %6663 = vmatprep.subr.mxu0 0.0
    %6664 = vmatpush2.msra.mxu0 0.0
    %6665 = vmatprep.subr.mxu0 0.0
    %6666 = vmatpush2.msra.mxu0 0.0
    %6667 = vmatprep.subr.mxu0 0.0
    %6668 = vmatpush2.msra.mxu0 0.0
    %6669 = vmatprep.subr.mxu0 0.0
    %6670 = vmatpush2.msra.mxu0 0.0
    %6671 = vmatprep.subr.mxu0 0.0
    %6672 = vmatpush2.msra.mxu0 0.0
    %6673 = vmatprep.subr.mxu0 0.0
    %6674 = vmatpush2.msra.mxu0 0.0
    %6675 = vmatprep.subr.mxu0 0.0
    %6676 = vmatpush2.msra.mxu0 0.0
    %6677 = vmatprep.subr.mxu0 0.0
    %6678 = vmatpush2.msra.mxu0 0.0
    %6679 = vmatprep.mubr.f32.mxu0 0.0
    %6680 = vmatmul.mubr.f32.gmra.mxu0 %v6610
    %v6681 = vpop.f32.mrf.mxu0
    %v6682 = vadd.f32 0.0, %v6681
    %v6683 = vpop.f32.mrf.mxu0
    %6684 = vdwg.mxu0
    %v6685 = vadd.f32 %v6601, %v6682
    %s6686 = scalar_lea.vmem %s8, 96
    %v6687 = vld [vmem:[%s6686] sm:$0xff]
    %v6688 = vld [vmem:[%s6686 + $0x8] sm:$0xff]
    %v6689 = vld [vmem:[%s6686 + $0x10] sm:$0xff]
    %v6690 = vld [vmem:[%s6686 + $0x18] sm:$0x1]
    %v6691 = vrot.slane %v6423, 6
    %v6692 = vsel %vm6452, %v6691, 0
    %v6695 = vsel %vm6455, %v6690, 0
    %6697 = vmatprep.subr.mxu0 0.0
    %6698 = vmatpush1.msra.mxu0 0.0
    %6699 = vmatprep.subr.mxu0 0.0
    %6700 = vmatpush1.msra.mxu0 0.0
    %6701 = vmatprep.subr.mxu0 0.0
    %6702 = vmatpush1.msra.mxu0 0.0
    %6703 = vmatprep.subr.mxu0 0.0
    %6704 = vmatpush1.msra.mxu0 0.0
    %6705 = vmatprep.subr.mxu0 0.0
    %6706 = vmatpush1.msra.mxu0 0.0
    %6707 = vmatprep.subr.mxu0 0.0
    %6708 = vmatpush1.msra.mxu0 0.0
    %6709 = vmatprep.subr.mxu0 0.0
    %6710 = vmatpush1.msra.mxu0 0.0
    %6711 = vmatprep.subr.mxu0 0.0
    %6712 = vmatpush1.msra.mxu0 0.0
    %6713 = vmatprep.subr.mxu0 0.0
    %6714 = vmatpush1.msra.mxu0 0.0
    %6715 = vmatprep.subr.mxu0 0.0
    %6716 = vmatpush1.msra.mxu0 0.0
    %6717 = vmatprep.subr.mxu0 0.0
    %6718 = vmatpush1.msra.mxu0 0.0
    %6719 = vmatprep.subr.mxu0 0.0
    %6720 = vmatpush1.msra.mxu0 0.0
    %6721 = vmatprep.subr.mxu0 0.0
    %6722 = vmatpush1.msra.mxu0 %v6695
    %6723 = vmatprep.subr.mxu0 0.0
    %6724 = vmatpush1.msra.mxu0 %v6689
    %6725 = vmatprep.subr.mxu0 0.0
    %6726 = vmatpush1.msra.mxu0 %v6688
    %6727 = vmatprep.subr.mxu0 0.0
    %6728 = vmatpush1.msra.mxu0 %v6687
    %6729 = vmatprep.subr.mxu0 0.0
    %6730 = vmatpush2.msra.mxu0 0.0
    %6731 = vmatprep.subr.mxu0 0.0
    %6732 = vmatpush2.msra.mxu0 0.0
    %6733 = vmatprep.subr.mxu0 0.0
    %6734 = vmatpush2.msra.mxu0 0.0
    %6735 = vmatprep.subr.mxu0 0.0
    %6736 = vmatpush2.msra.mxu0 0.0
    %6737 = vmatprep.subr.mxu0 0.0
    %6738 = vmatpush2.msra.mxu0 0.0
    %6739 = vmatprep.subr.mxu0 0.0
    %6740 = vmatpush2.msra.mxu0 0.0
    %6741 = vmatprep.subr.mxu0 0.0
    %6742 = vmatpush2.msra.mxu0 0.0
    %6743 = vmatprep.subr.mxu0 0.0
    %6744 = vmatpush2.msra.mxu0 0.0
    %6745 = vmatprep.subr.mxu0 0.0
    %6746 = vmatpush2.msra.mxu0 0.0
    %6747 = vmatprep.subr.mxu0 0.0
    %6748 = vmatpush2.msra.mxu0 0.0
    %6749 = vmatprep.subr.mxu0 0.0
    %6750 = vmatpush2.msra.mxu0 0.0
    %6751 = vmatprep.subr.mxu0 0.0
    %6752 = vmatpush2.msra.mxu0 0.0
    %6753 = vmatprep.subr.mxu0 0.0
    %6754 = vmatpush2.msra.mxu0 0.0
    %6755 = vmatprep.subr.mxu0 0.0
    %6756 = vmatpush2.msra.mxu0 0.0
    %6757 = vmatprep.subr.mxu0 0.0
    %6758 = vmatpush2.msra.mxu0 0.0
    %6759 = vmatprep.subr.mxu0 0.0
    %6760 = vmatpush2.msra.mxu0 0.0
    %6761 = vmatprep.mubr.f32.mxu0 0.0
    %6762 = vmatmul.mubr.f32.gmra.mxu0 %v6692
    %v6763 = vpop.f32.mrf.mxu0
    %v6764 = vadd.f32 0.0, %v6763
    %v6765 = vpop.f32.mrf.mxu0
    %6766 = vdwg.mxu0
    %v6767 = vadd.f32 %v6685, %v6764
    %s6768 = scalar_lea.vmem %s8, 128
    %v6769 = vld [vmem:[%s6768] sm:$0xff]
    %v6770 = vld [vmem:[%s6768 + $0x8] sm:$0xff]
    %v6771 = vld [vmem:[%s6768 + $0x10] sm:$0xff]
    %v6772 = vld [vmem:[%s6768 + $0x18] sm:$0x1]
    %v6774 = vsel %vm6452, %v6428, 0
    %v6777 = vsel %vm6455, %v6772, 0
    %6779 = vmatprep.subr.mxu0 0.0
    %6780 = vmatpush1.msra.mxu0 0.0
    %6781 = vmatprep.subr.mxu0 0.0
    %6782 = vmatpush1.msra.mxu0 0.0
    %6783 = vmatprep.subr.mxu0 0.0
    %6784 = vmatpush1.msra.mxu0 0.0
    %6785 = vmatprep.subr.mxu0 0.0
    %6786 = vmatpush1.msra.mxu0 0.0
    %6787 = vmatprep.subr.mxu0 0.0
    %6788 = vmatpush1.msra.mxu0 0.0
    %6789 = vmatprep.subr.mxu0 0.0
    %6790 = vmatpush1.msra.mxu0 0.0
    %6791 = vmatprep.subr.mxu0 0.0
    %6792 = vmatpush1.msra.mxu0 0.0
    %6793 = vmatprep.subr.mxu0 0.0
    %6794 = vmatpush1.msra.mxu0 0.0
    %6795 = vmatprep.subr.mxu0 0.0
    %6796 = vmatpush1.msra.mxu0 0.0
    %6797 = vmatprep.subr.mxu0 0.0
    %6798 = vmatpush1.msra.mxu0 0.0
    %6799 = vmatprep.subr.mxu0 0.0
    %6800 = vmatpush1.msra.mxu0 0.0
    %6801 = vmatprep.subr.mxu0 0.0
    %6802 = vmatpush1.msra.mxu0 0.0
    %6803 = vmatprep.subr.mxu0 0.0
    %6804 = vmatpush1.msra.mxu0 %v6777
    %6805 = vmatprep.subr.mxu0 0.0
    %6806 = vmatpush1.msra.mxu0 %v6771
    %6807 = vmatprep.subr.mxu0 0.0
    %6808 = vmatpush1.msra.mxu0 %v6770
    %6809 = vmatprep.subr.mxu0 0.0
    %6810 = vmatpush1.msra.mxu0 %v6769
    %6811 = vmatprep.subr.mxu0 0.0
    %6812 = vmatpush2.msra.mxu0 0.0
    %6813 = vmatprep.subr.mxu0 0.0
    %6814 = vmatpush2.msra.mxu0 0.0
    %6815 = vmatprep.subr.mxu0 0.0
    %6816 = vmatpush2.msra.mxu0 0.0
    %6817 = vmatprep.subr.mxu0 0.0
    %6818 = vmatpush2.msra.mxu0 0.0
    %6819 = vmatprep.subr.mxu0 0.0
    %6820 = vmatpush2.msra.mxu0 0.0
    %6821 = vmatprep.subr.mxu0 0.0
    %6822 = vmatpush2.msra.mxu0 0.0
    %6823 = vmatprep.subr.mxu0 0.0
    %6824 = vmatpush2.msra.mxu0 0.0
    %6825 = vmatprep.subr.mxu0 0.0
    %6826 = vmatpush2.msra.mxu0 0.0
    %6827 = vmatprep.subr.mxu0 0.0
    %6828 = vmatpush2.msra.mxu0 0.0
    %6829 = vmatprep.subr.mxu0 0.0
    %6830 = vmatpush2.msra.mxu0 0.0
    %6831 = vmatprep.subr.mxu0 0.0
    %6832 = vmatpush2.msra.mxu0 0.0
    %6833 = vmatprep.subr.mxu0 0.0
    %6834 = vmatpush2.msra.mxu0 0.0
    %6835 = vmatprep.subr.mxu0 0.0
    %6836 = vmatpush2.msra.mxu0 0.0
    %6837 = vmatprep.subr.mxu0 0.0
    %6838 = vmatpush2.msra.mxu0 0.0
    %6839 = vmatprep.subr.mxu0 0.0
    %6840 = vmatpush2.msra.mxu0 0.0
    %6841 = vmatprep.subr.mxu0 0.0
    %6842 = vmatpush2.msra.mxu0 0.0
    %6843 = vmatprep.mubr.f32.mxu0 0.0
    %6844 = vmatmul.mubr.f32.gmra.mxu0 %v6774
    %v6845 = vpop.f32.mrf.mxu0
    %v6846 = vadd.f32 0.0, %v6845
    %v6847 = vpop.f32.mrf.mxu0
    %6848 = vdwg.mxu0
    %v6849 = vadd.f32 %v6767, %v6846
    %s6850 = scalar_lea.vmem %s8, 160
    %v6851 = vld [vmem:[%s6850] sm:$0xff]
    %v6852 = vld [vmem:[%s6850 + $0x8] sm:$0xff]
    %v6853 = vld [vmem:[%s6850 + $0x10] sm:$0xff]
    %v6854 = vld [vmem:[%s6850 + $0x18] sm:$0x1]
    %v6855 = vrot.slane %v6428, 2
    %v6856 = vsel %vm6452, %v6855, 0
    %v6859 = vsel %vm6455, %v6854, 0
    %6861 = vmatprep.subr.mxu0 0.0
    %6862 = vmatpush1.msra.mxu0 0.0
    %6863 = vmatprep.subr.mxu0 0.0
    %6864 = vmatpush1.msra.mxu0 0.0
    %6865 = vmatprep.subr.mxu0 0.0
    %6866 = vmatpush1.msra.mxu0 0.0
    %6867 = vmatprep.subr.mxu0 0.0
    %6868 = vmatpush1.msra.mxu0 0.0
    %6869 = vmatprep.subr.mxu0 0.0
    %6870 = vmatpush1.msra.mxu0 0.0
    %6871 = vmatprep.subr.mxu0 0.0
    %6872 = vmatpush1.msra.mxu0 0.0
    %6873 = vmatprep.subr.mxu0 0.0
    %6874 = vmatpush1.msra.mxu0 0.0
    %6875 = vmatprep.subr.mxu0 0.0
    %6876 = vmatpush1.msra.mxu0 0.0
    %6877 = vmatprep.subr.mxu0 0.0
    %6878 = vmatpush1.msra.mxu0 0.0
    %6879 = vmatprep.subr.mxu0 0.0
    %6880 = vmatpush1.msra.mxu0 0.0
    %6881 = vmatprep.subr.mxu0 0.0
    %6882 = vmatpush1.msra.mxu0 0.0
    %6883 = vmatprep.subr.mxu0 0.0
    %6884 = vmatpush1.msra.mxu0 0.0
    %6885 = vmatprep.subr.mxu0 0.0
    %6886 = vmatpush1.msra.mxu0 %v6859
    %6887 = vmatprep.subr.mxu0 0.0
    %6888 = vmatpush1.msra.mxu0 %v6853
    %6889 = vmatprep.subr.mxu0 0.0
    %6890 = vmatpush1.msra.mxu0 %v6852
    %6891 = vmatprep.subr.mxu0 0.0
    %6892 = vmatpush1.msra.mxu0 %v6851
    %6893 = vmatprep.subr.mxu0 0.0
    %6894 = vmatpush2.msra.mxu0 0.0
    %6895 = vmatprep.subr.mxu0 0.0
    %6896 = vmatpush2.msra.mxu0 0.0
    %6897 = vmatprep.subr.mxu0 0.0
    %6898 = vmatpush2.msra.mxu0 0.0
    %6899 = vmatprep.subr.mxu0 0.0
    %6900 = vmatpush2.msra.mxu0 0.0
    %6901 = vmatprep.subr.mxu0 0.0
    %6902 = vmatpush2.msra.mxu0 0.0
    %6903 = vmatprep.subr.mxu0 0.0
    %6904 = vmatpush2.msra.mxu0 0.0
    %6905 = vmatprep.subr.mxu0 0.0
    %6906 = vmatpush2.msra.mxu0 0.0
    %6907 = vmatprep.subr.mxu0 0.0
    %6908 = vmatpush2.msra.mxu0 0.0
    %6909 = vmatprep.subr.mxu0 0.0
    %6910 = vmatpush2.msra.mxu0 0.0
    %6911 = vmatprep.subr.mxu0 0.0
    %6912 = vmatpush2.msra.mxu0 0.0
    %6913 = vmatprep.subr.mxu0 0.0
    %6914 = vmatpush2.msra.mxu0 0.0
    %6915 = vmatprep.subr.mxu0 0.0
    %6916 = vmatpush2.msra.mxu0 0.0
    %6917 = vmatprep.subr.mxu0 0.0
    %6918 = vmatpush2.msra.mxu0 0.0
    %6919 = vmatprep.subr.mxu0 0.0
    %6920 = vmatpush2.msra.mxu0 0.0
    %6921 = vmatprep.subr.mxu0 0.0
    %6922 = vmatpush2.msra.mxu0 0.0
    %6923 = vmatprep.subr.mxu0 0.0
    %6924 = vmatpush2.msra.mxu0 0.0
    %6925 = vmatprep.mubr.f32.mxu0 0.0
    %6926 = vmatmul.mubr.f32.gmra.mxu0 %v6856
    %v6927 = vpop.f32.mrf.mxu0
    %v6928 = vadd.f32 0.0, %v6927
    %v6929 = vpop.f32.mrf.mxu0
    %6930 = vdwg.mxu0
    %v6931 = vadd.f32 %v6849, %v6928
    %s6932 = scalar_lea.vmem %s8, 192
    %v6933 = vld [vmem:[%s6932] sm:$0xff]
    %v6934 = vld [vmem:[%s6932 + $0x8] sm:$0xff]
    %v6935 = vld [vmem:[%s6932 + $0x10] sm:$0xff]
    %v6936 = vld [vmem:[%s6932 + $0x18] sm:$0x1]
    %v6937 = vrot.slane %v6428, 4
    %v6938 = vsel %vm6452, %v6937, 0
    %v6941 = vsel %vm6455, %v6936, 0
    %6943 = vmatprep.subr.mxu0 0.0
    %6944 = vmatpush1.msra.mxu0 0.0
    %6945 = vmatprep.subr.mxu0 0.0
    %6946 = vmatpush1.msra.mxu0 0.0
    %6947 = vmatprep.subr.mxu0 0.0
    %6948 = vmatpush1.msra.mxu0 0.0
    %6949 = vmatprep.subr.mxu0 0.0
    %6950 = vmatpush1.msra.mxu0 0.0
    %6951 = vmatprep.subr.mxu0 0.0
    %6952 = vmatpush1.msra.mxu0 0.0
    %6953 = vmatprep.subr.mxu0 0.0
    %6954 = vmatpush1.msra.mxu0 0.0
    %6955 = vmatprep.subr.mxu0 0.0
    %6956 = vmatpush1.msra.mxu0 0.0
    %6957 = vmatprep.subr.mxu0 0.0
    %6958 = vmatpush1.msra.mxu0 0.0
    %6959 = vmatprep.subr.mxu0 0.0
    %6960 = vmatpush1.msra.mxu0 0.0
    %6961 = vmatprep.subr.mxu0 0.0
    %6962 = vmatpush1.msra.mxu0 0.0
    %6963 = vmatprep.subr.mxu0 0.0
    %6964 = vmatpush1.msra.mxu0 0.0
    %6965 = vmatprep.subr.mxu0 0.0
    %6966 = vmatpush1.msra.mxu0 0.0
    %6967 = vmatprep.subr.mxu0 0.0
    %6968 = vmatpush1.msra.mxu0 %v6941
    %6969 = vmatprep.subr.mxu0 0.0
    %6970 = vmatpush1.msra.mxu0 %v6935
    %6971 = vmatprep.subr.mxu0 0.0
    %6972 = vmatpush1.msra.mxu0 %v6934
    %6973 = vmatprep.subr.mxu0 0.0
    %6974 = vmatpush1.msra.mxu0 %v6933
    %6975 = vmatprep.subr.mxu0 0.0
    %6976 = vmatpush2.msra.mxu0 0.0
    %6977 = vmatprep.subr.mxu0 0.0
    %6978 = vmatpush2.msra.mxu0 0.0
    %6979 = vmatprep.subr.mxu0 0.0
    %6980 = vmatpush2.msra.mxu0 0.0
    %6981 = vmatprep.subr.mxu0 0.0
    %6982 = vmatpush2.msra.mxu0 0.0
    %6983 = vmatprep.subr.mxu0 0.0
    %6984 = vmatpush2.msra.mxu0 0.0
    %6985 = vmatprep.subr.mxu0 0.0
    %6986 = vmatpush2.msra.mxu0 0.0
    %6987 = vmatprep.subr.mxu0 0.0
    %6988 = vmatpush2.msra.mxu0 0.0
    %6989 = vmatprep.subr.mxu0 0.0
    %6990 = vmatpush2.msra.mxu0 0.0
    %6991 = vmatprep.subr.mxu0 0.0
    %6992 = vmatpush2.msra.mxu0 0.0
    %6993 = vmatprep.subr.mxu0 0.0
    %6994 = vmatpush2.msra.mxu0 0.0
    %6995 = vmatprep.subr.mxu0 0.0
    %6996 = vmatpush2.msra.mxu0 0.0
    %6997 = vmatprep.subr.mxu0 0.0
    %6998 = vmatpush2.msra.mxu0 0.0
    %6999 = vmatprep.subr.mxu0 0.0
    %7000 = vmatpush2.msra.mxu0 0.0
    %7001 = vmatprep.subr.mxu0 0.0
    %7002 = vmatpush2.msra.mxu0 0.0
    %7003 = vmatprep.subr.mxu0 0.0
    %7004 = vmatpush2.msra.mxu0 0.0
    %7005 = vmatprep.subr.mxu0 0.0
    %7006 = vmatpush2.msra.mxu0 0.0
    %7007 = vmatprep.mubr.f32.mxu0 0.0
    %7008 = vmatmul.mubr.f32.gmra.mxu0 %v6938
    %v7009 = vpop.f32.mrf.mxu0
    %v7010 = vadd.f32 0.0, %v7009
    %v7011 = vpop.f32.mrf.mxu0
    %7012 = vdwg.mxu0
    %v7013 = vadd.f32 %v6931, %v7010
    %s7014 = scalar_lea.vmem %s8, 224
    %v7015 = vld [vmem:[%s7014] sm:$0xff]
    %v7016 = vld [vmem:[%s7014 + $0x8] sm:$0xff]
    %v7017 = vld [vmem:[%s7014 + $0x10] sm:$0xff]
    %v7018 = vld [vmem:[%s7014 + $0x18] sm:$0x1]
    %v7019 = vrot.slane %v6428, 6
    %v7020 = vsel %vm6452, %v7019, 0
    %v7023 = vsel %vm6455, %v7018, 0
    %7025 = vmatprep.subr.mxu0 0.0
    %7026 = vmatpush1.msra.mxu0 0.0
    %7027 = vmatprep.subr.mxu0 0.0
    %7028 = vmatpush1.msra.mxu0 0.0
    %7029 = vmatprep.subr.mxu0 0.0
    %7030 = vmatpush1.msra.mxu0 0.0
    %7031 = vmatprep.subr.mxu0 0.0
    %7032 = vmatpush1.msra.mxu0 0.0
    %7033 = vmatprep.subr.mxu0 0.0
    %7034 = vmatpush1.msra.mxu0 0.0
    %7035 = vmatprep.subr.mxu0 0.0
    %7036 = vmatpush1.msra.mxu0 0.0
    %7037 = vmatprep.subr.mxu0 0.0
    %7038 = vmatpush1.msra.mxu0 0.0
    %7039 = vmatprep.subr.mxu0 0.0
    %7040 = vmatpush1.msra.mxu0 0.0
    %7041 = vmatprep.subr.mxu0 0.0
    %7042 = vmatpush1.msra.mxu0 0.0
    %7043 = vmatprep.subr.mxu0 0.0
    %7044 = vmatpush1.msra.mxu0 0.0
    %7045 = vmatprep.subr.mxu0 0.0
    %7046 = vmatpush1.msra.mxu0 0.0
    %7047 = vmatprep.subr.mxu0 0.0
    %7048 = vmatpush1.msra.mxu0 0.0
    %7049 = vmatprep.subr.mxu0 0.0
    %7050 = vmatpush1.msra.mxu0 %v7023
    %7051 = vmatprep.subr.mxu0 0.0
    %7052 = vmatpush1.msra.mxu0 %v7017
    %7053 = vmatprep.subr.mxu0 0.0
    %7054 = vmatpush1.msra.mxu0 %v7016
    %7055 = vmatprep.subr.mxu0 0.0
    %7056 = vmatpush1.msra.mxu0 %v7015
    %7057 = vmatprep.subr.mxu0 0.0
    %7058 = vmatpush2.msra.mxu0 0.0
    %7059 = vmatprep.subr.mxu0 0.0
    %7060 = vmatpush2.msra.mxu0 0.0
    %7061 = vmatprep.subr.mxu0 0.0
    %7062 = vmatpush2.msra.mxu0 0.0
    %7063 = vmatprep.subr.mxu0 0.0
    %7064 = vmatpush2.msra.mxu0 0.0
    %7065 = vmatprep.subr.mxu0 0.0
    %7066 = vmatpush2.msra.mxu0 0.0
    %7067 = vmatprep.subr.mxu0 0.0
    %7068 = vmatpush2.msra.mxu0 0.0
    %7069 = vmatprep.subr.mxu0 0.0
    %7070 = vmatpush2.msra.mxu0 0.0
    %7071 = vmatprep.subr.mxu0 0.0
    %7072 = vmatpush2.msra.mxu0 0.0
    %7073 = vmatprep.subr.mxu0 0.0
    %7074 = vmatpush2.msra.mxu0 0.0
    %7075 = vmatprep.subr.mxu0 0.0
    %7076 = vmatpush2.msra.mxu0 0.0
    %7077 = vmatprep.subr.mxu0 0.0
    %7078 = vmatpush2.msra.mxu0 0.0
    %7079 = vmatprep.subr.mxu0 0.0
    %7080 = vmatpush2.msra.mxu0 0.0
    %7081 = vmatprep.subr.mxu0 0.0
    %7082 = vmatpush2.msra.mxu0 0.0
    %7083 = vmatprep.subr.mxu0 0.0
    %7084 = vmatpush2.msra.mxu0 0.0
    %7085 = vmatprep.subr.mxu0 0.0
    %7086 = vmatpush2.msra.mxu0 0.0
    %7087 = vmatprep.subr.mxu0 0.0
    %7088 = vmatpush2.msra.mxu0 0.0
    %7089 = vmatprep.mubr.f32.mxu0 0.0
    %7090 = vmatmul.mubr.f32.gmra.mxu0 %v7020
    %v7091 = vpop.f32.mrf.mxu0
    %v7092 = vadd.f32 0.0, %v7091
    %v7093 = vpop.f32.mrf.mxu0
    %7094 = vdwg.mxu0
    %v7095 = vadd.f32 %v7013, %v7092
    %s7096 = scalar_lea.vmem %s8, 256
    %v7097 = vld [vmem:[%s7096] sm:$0xff]
    %v7098 = vld [vmem:[%s7096 + $0x8] sm:$0xff]
    %v7099 = vld [vmem:[%s7096 + $0x10] sm:$0xff]
    %v7100 = vld [vmem:[%s7096 + $0x18] sm:$0x1]
    %v7102 = vsel %vm6452, %v6433, 0
    %v7105 = vsel %vm6455, %v7100, 0
    %7107 = vmatprep.subr.mxu0 0.0
    %7108 = vmatpush1.msra.mxu0 0.0
    %7109 = vmatprep.subr.mxu0 0.0
    %7110 = vmatpush1.msra.mxu0 0.0
    %7111 = vmatprep.subr.mxu0 0.0
    %7112 = vmatpush1.msra.mxu0 0.0
    %7113 = vmatprep.subr.mxu0 0.0
    %7114 = vmatpush1.msra.mxu0 0.0
    %7115 = vmatprep.subr.mxu0 0.0
    %7116 = vmatpush1.msra.mxu0 0.0
    %7117 = vmatprep.subr.mxu0 0.0
    %7118 = vmatpush1.msra.mxu0 0.0
    %7119 = vmatprep.subr.mxu0 0.0
    %7120 = vmatpush1.msra.mxu0 0.0
    %7121 = vmatprep.subr.mxu0 0.0
    %7122 = vmatpush1.msra.mxu0 0.0
    %7123 = vmatprep.subr.mxu0 0.0
    %7124 = vmatpush1.msra.mxu0 0.0
    %7125 = vmatprep.subr.mxu0 0.0
    %7126 = vmatpush1.msra.mxu0 0.0
    %7127 = vmatprep.subr.mxu0 0.0
    %7128 = vmatpush1.msra.mxu0 0.0
    %7129 = vmatprep.subr.mxu0 0.0
    %7130 = vmatpush1.msra.mxu0 0.0
    %7131 = vmatprep.subr.mxu0 0.0
    %7132 = vmatpush1.msra.mxu0 %v7105
    %7133 = vmatprep.subr.mxu0 0.0
    %7134 = vmatpush1.msra.mxu0 %v7099
    %7135 = vmatprep.subr.mxu0 0.0
    %7136 = vmatpush1.msra.mxu0 %v7098
    %7137 = vmatprep.subr.mxu0 0.0
    %7138 = vmatpush1.msra.mxu0 %v7097
    %7139 = vmatprep.subr.mxu0 0.0
    %7140 = vmatpush2.msra.mxu0 0.0
    %7141 = vmatprep.subr.mxu0 0.0
    %7142 = vmatpush2.msra.mxu0 0.0
    %7143 = vmatprep.subr.mxu0 0.0
    %7144 = vmatpush2.msra.mxu0 0.0
    %7145 = vmatprep.subr.mxu0 0.0
    %7146 = vmatpush2.msra.mxu0 0.0
    %7147 = vmatprep.subr.mxu0 0.0
    %7148 = vmatpush2.msra.mxu0 0.0
    %7149 = vmatprep.subr.mxu0 0.0
    %7150 = vmatpush2.msra.mxu0 0.0
    %7151 = vmatprep.subr.mxu0 0.0
    %7152 = vmatpush2.msra.mxu0 0.0
    %7153 = vmatprep.subr.mxu0 0.0
    %7154 = vmatpush2.msra.mxu0 0.0
    %7155 = vmatprep.subr.mxu0 0.0
    %7156 = vmatpush2.msra.mxu0 0.0
    %7157 = vmatprep.subr.mxu0 0.0
    %7158 = vmatpush2.msra.mxu0 0.0
    %7159 = vmatprep.subr.mxu0 0.0
    %7160 = vmatpush2.msra.mxu0 0.0
    %7161 = vmatprep.subr.mxu0 0.0
    %7162 = vmatpush2.msra.mxu0 0.0
    %7163 = vmatprep.subr.mxu0 0.0
    %7164 = vmatpush2.msra.mxu0 0.0
    %7165 = vmatprep.subr.mxu0 0.0
    %7166 = vmatpush2.msra.mxu0 0.0
    %7167 = vmatprep.subr.mxu0 0.0
    %7168 = vmatpush2.msra.mxu0 0.0
    %7169 = vmatprep.subr.mxu0 0.0
    %7170 = vmatpush2.msra.mxu0 0.0
    %7171 = vmatprep.mubr.f32.mxu0 0.0
    %7172 = vmatmul.mubr.f32.gmra.mxu0 %v7102
    %v7173 = vpop.f32.mrf.mxu0
    %v7174 = vadd.f32 0.0, %v7173
    %v7175 = vpop.f32.mrf.mxu0
    %7176 = vdwg.mxu0
    %v7177 = vadd.f32 %v7095, %v7174
    %s7178 = scalar_lea.vmem %s8, 288
    %v7179 = vld [vmem:[%s7178] sm:$0xff]
    %v7180 = vld [vmem:[%s7178 + $0x8] sm:$0xff]
    %v7181 = vld [vmem:[%s7178 + $0x10] sm:$0xff]
    %v7182 = vld [vmem:[%s7178 + $0x18] sm:$0x1]
    %v7183 = vrot.slane %v6433, 2
    %v7184 = vsel %vm6452, %v7183, 0
    %v7187 = vsel %vm6455, %v7182, 0
    %7189 = vmatprep.subr.mxu0 0.0
    %7190 = vmatpush1.msra.mxu0 0.0
    %7191 = vmatprep.subr.mxu0 0.0
    %7192 = vmatpush1.msra.mxu0 0.0
    %7193 = vmatprep.subr.mxu0 0.0
    %7194 = vmatpush1.msra.mxu0 0.0
    %7195 = vmatprep.subr.mxu0 0.0
    %7196 = vmatpush1.msra.mxu0 0.0
    %7197 = vmatprep.subr.mxu0 0.0
    %7198 = vmatpush1.msra.mxu0 0.0
    %7199 = vmatprep.subr.mxu0 0.0
    %7200 = vmatpush1.msra.mxu0 0.0
    %7201 = vmatprep.subr.mxu0 0.0
    %7202 = vmatpush1.msra.mxu0 0.0
    %7203 = vmatprep.subr.mxu0 0.0
    %7204 = vmatpush1.msra.mxu0 0.0
    %7205 = vmatprep.subr.mxu0 0.0
    %7206 = vmatpush1.msra.mxu0 0.0
    %7207 = vmatprep.subr.mxu0 0.0
    %7208 = vmatpush1.msra.mxu0 0.0
    %7209 = vmatprep.subr.mxu0 0.0
    %7210 = vmatpush1.msra.mxu0 0.0
    %7211 = vmatprep.subr.mxu0 0.0
    %7212 = vmatpush1.msra.mxu0 0.0
    %7213 = vmatprep.subr.mxu0 0.0
    %7214 = vmatpush1.msra.mxu0 %v7187
    %7215 = vmatprep.subr.mxu0 0.0
    %7216 = vmatpush1.msra.mxu0 %v7181
    %7217 = vmatprep.subr.mxu0 0.0
    %7218 = vmatpush1.msra.mxu0 %v7180
    %7219 = vmatprep.subr.mxu0 0.0
    %7220 = vmatpush1.msra.mxu0 %v7179
    %7221 = vmatprep.subr.mxu0 0.0
    %7222 = vmatpush2.msra.mxu0 0.0
    %7223 = vmatprep.subr.mxu0 0.0
    %7224 = vmatpush2.msra.mxu0 0.0
    %7225 = vmatprep.subr.mxu0 0.0
    %7226 = vmatpush2.msra.mxu0 0.0
    %7227 = vmatprep.subr.mxu0 0.0
    %7228 = vmatpush2.msra.mxu0 0.0
    %7229 = vmatprep.subr.mxu0 0.0
    %7230 = vmatpush2.msra.mxu0 0.0
    %7231 = vmatprep.subr.mxu0 0.0
    %7232 = vmatpush2.msra.mxu0 0.0
    %7233 = vmatprep.subr.mxu0 0.0
    %7234 = vmatpush2.msra.mxu0 0.0
    %7235 = vmatprep.subr.mxu0 0.0
    %7236 = vmatpush2.msra.mxu0 0.0
    %7237 = vmatprep.subr.mxu0 0.0
    %7238 = vmatpush2.msra.mxu0 0.0
    %7239 = vmatprep.subr.mxu0 0.0
    %7240 = vmatpush2.msra.mxu0 0.0
    %7241 = vmatprep.subr.mxu0 0.0
    %7242 = vmatpush2.msra.mxu0 0.0
    %7243 = vmatprep.subr.mxu0 0.0
    %7244 = vmatpush2.msra.mxu0 0.0
    %7245 = vmatprep.subr.mxu0 0.0
    %7246 = vmatpush2.msra.mxu0 0.0
    %7247 = vmatprep.subr.mxu0 0.0
    %7248 = vmatpush2.msra.mxu0 0.0
    %7249 = vmatprep.subr.mxu0 0.0
    %7250 = vmatpush2.msra.mxu0 0.0
    %7251 = vmatprep.subr.mxu0 0.0
    %7252 = vmatpush2.msra.mxu0 0.0
    %7253 = vmatprep.mubr.f32.mxu0 0.0
    %7254 = vmatmul.mubr.f32.gmra.mxu0 %v7184
    %v7255 = vpop.f32.mrf.mxu0
    %v7256 = vadd.f32 0.0, %v7255
    %v7257 = vpop.f32.mrf.mxu0
    %7258 = vdwg.mxu0
    %v7259 = vadd.f32 %v7177, %v7256
    %s7260 = scalar_lea.vmem %s8, 320
    %v7261 = vld [vmem:[%s7260] sm:$0xff]
    %v7262 = vld [vmem:[%s7260 + $0x8] sm:$0xff]
    %v7263 = vld [vmem:[%s7260 + $0x10] sm:$0xff]
    %v7264 = vld [vmem:[%s7260 + $0x18] sm:$0x1]
    %v7265 = vrot.slane %v6433, 4
    %v7266 = vsel %vm6452, %v7265, 0
    %v7269 = vsel %vm6455, %v7264, 0
    %7271 = vmatprep.subr.mxu0 0.0
    %7272 = vmatpush1.msra.mxu0 0.0
    %7273 = vmatprep.subr.mxu0 0.0
    %7274 = vmatpush1.msra.mxu0 0.0
    %7275 = vmatprep.subr.mxu0 0.0
    %7276 = vmatpush1.msra.mxu0 0.0
    %7277 = vmatprep.subr.mxu0 0.0
    %7278 = vmatpush1.msra.mxu0 0.0
    %7279 = vmatprep.subr.mxu0 0.0
    %7280 = vmatpush1.msra.mxu0 0.0
    %7281 = vmatprep.subr.mxu0 0.0
    %7282 = vmatpush1.msra.mxu0 0.0
    %7283 = vmatprep.subr.mxu0 0.0
    %7284 = vmatpush1.msra.mxu0 0.0
    %7285 = vmatprep.subr.mxu0 0.0
    %7286 = vmatpush1.msra.mxu0 0.0
    %7287 = vmatprep.subr.mxu0 0.0
    %7288 = vmatpush1.msra.mxu0 0.0
    %7289 = vmatprep.subr.mxu0 0.0
    %7290 = vmatpush1.msra.mxu0 0.0
    %7291 = vmatprep.subr.mxu0 0.0
    %7292 = vmatpush1.msra.mxu0 0.0
    %7293 = vmatprep.subr.mxu0 0.0
    %7294 = vmatpush1.msra.mxu0 0.0
    %7295 = vmatprep.subr.mxu0 0.0
    %7296 = vmatpush1.msra.mxu0 %v7269
    %7297 = vmatprep.subr.mxu0 0.0
    %7298 = vmatpush1.msra.mxu0 %v7263
    %7299 = vmatprep.subr.mxu0 0.0
    %7300 = vmatpush1.msra.mxu0 %v7262
    %7301 = vmatprep.subr.mxu0 0.0
    %7302 = vmatpush1.msra.mxu0 %v7261
    %7303 = vmatprep.subr.mxu0 0.0
    %7304 = vmatpush2.msra.mxu0 0.0
    %7305 = vmatprep.subr.mxu0 0.0
    %7306 = vmatpush2.msra.mxu0 0.0
    %7307 = vmatprep.subr.mxu0 0.0
    %7308 = vmatpush2.msra.mxu0 0.0
    %7309 = vmatprep.subr.mxu0 0.0
    %7310 = vmatpush2.msra.mxu0 0.0
    %7311 = vmatprep.subr.mxu0 0.0
    %7312 = vmatpush2.msra.mxu0 0.0
    %7313 = vmatprep.subr.mxu0 0.0
    %7314 = vmatpush2.msra.mxu0 0.0
    %7315 = vmatprep.subr.mxu0 0.0
    %7316 = vmatpush2.msra.mxu0 0.0
    %7317 = vmatprep.subr.mxu0 0.0
    %7318 = vmatpush2.msra.mxu0 0.0
    %7319 = vmatprep.subr.mxu0 0.0
    %7320 = vmatpush2.msra.mxu0 0.0
    %7321 = vmatprep.subr.mxu0 0.0
    %7322 = vmatpush2.msra.mxu0 0.0
    %7323 = vmatprep.subr.mxu0 0.0
    %7324 = vmatpush2.msra.mxu0 0.0
    %7325 = vmatprep.subr.mxu0 0.0
    %7326 = vmatpush2.msra.mxu0 0.0
    %7327 = vmatprep.subr.mxu0 0.0
    %7328 = vmatpush2.msra.mxu0 0.0
    %7329 = vmatprep.subr.mxu0 0.0
    %7330 = vmatpush2.msra.mxu0 0.0
    %7331 = vmatprep.subr.mxu0 0.0
    %7332 = vmatpush2.msra.mxu0 0.0
    %7333 = vmatprep.subr.mxu0 0.0
    %7334 = vmatpush2.msra.mxu0 0.0
    %7335 = vmatprep.mubr.f32.mxu0 0.0
    %7336 = vmatmul.mubr.f32.gmra.mxu0 %v7266
    %v7337 = vpop.f32.mrf.mxu0
    %v7338 = vadd.f32 0.0, %v7337
    %v7339 = vpop.f32.mrf.mxu0
    %7340 = vdwg.mxu0
    %v7341 = vadd.f32 %v7259, %v7338
    %s7342 = scalar_lea.vmem %s8, 352
    %v7343 = vld [vmem:[%s7342] sm:$0xff]
    %v7344 = vld [vmem:[%s7342 + $0x8] sm:$0xff]
    %v7345 = vld [vmem:[%s7342 + $0x10] sm:$0xff]
    %v7346 = vld [vmem:[%s7342 + $0x18] sm:$0x1]
    %v7347 = vrot.slane %v6433, 6
    %v7348 = vsel %vm6452, %v7347, 0
    %v7351 = vsel %vm6455, %v7346, 0
    %7353 = vmatprep.subr.mxu0 0.0
    %7354 = vmatpush1.msra.mxu0 0.0
    %7355 = vmatprep.subr.mxu0 0.0
    %7356 = vmatpush1.msra.mxu0 0.0
    %7357 = vmatprep.subr.mxu0 0.0
    %7358 = vmatpush1.msra.mxu0 0.0
    %7359 = vmatprep.subr.mxu0 0.0
    %7360 = vmatpush1.msra.mxu0 0.0
    %7361 = vmatprep.subr.mxu0 0.0
    %7362 = vmatpush1.msra.mxu0 0.0
    %7363 = vmatprep.subr.mxu0 0.0
    %7364 = vmatpush1.msra.mxu0 0.0
    %7365 = vmatprep.subr.mxu0 0.0
    %7366 = vmatpush1.msra.mxu0 0.0
    %7367 = vmatprep.subr.mxu0 0.0
    %7368 = vmatpush1.msra.mxu0 0.0
    %7369 = vmatprep.subr.mxu0 0.0
    %7370 = vmatpush1.msra.mxu0 0.0
    %7371 = vmatprep.subr.mxu0 0.0
    %7372 = vmatpush1.msra.mxu0 0.0
    %7373 = vmatprep.subr.mxu0 0.0
    %7374 = vmatpush1.msra.mxu0 0.0
    %7375 = vmatprep.subr.mxu0 0.0
    %7376 = vmatpush1.msra.mxu0 0.0
    %7377 = vmatprep.subr.mxu0 0.0
    %7378 = vmatpush1.msra.mxu0 %v7351
    %7379 = vmatprep.subr.mxu0 0.0
    %7380 = vmatpush1.msra.mxu0 %v7345
    %7381 = vmatprep.subr.mxu0 0.0
    %7382 = vmatpush1.msra.mxu0 %v7344
    %7383 = vmatprep.subr.mxu0 0.0
    %7384 = vmatpush1.msra.mxu0 %v7343
    %7385 = vmatprep.subr.mxu0 0.0
    %7386 = vmatpush2.msra.mxu0 0.0
    %7387 = vmatprep.subr.mxu0 0.0
    %7388 = vmatpush2.msra.mxu0 0.0
    %7389 = vmatprep.subr.mxu0 0.0
    %7390 = vmatpush2.msra.mxu0 0.0
    %7391 = vmatprep.subr.mxu0 0.0
    %7392 = vmatpush2.msra.mxu0 0.0
    %7393 = vmatprep.subr.mxu0 0.0
    %7394 = vmatpush2.msra.mxu0 0.0
    %7395 = vmatprep.subr.mxu0 0.0
    %7396 = vmatpush2.msra.mxu0 0.0
    %7397 = vmatprep.subr.mxu0 0.0
    %7398 = vmatpush2.msra.mxu0 0.0
    %7399 = vmatprep.subr.mxu0 0.0
    %7400 = vmatpush2.msra.mxu0 0.0
    %7401 = vmatprep.subr.mxu0 0.0
    %7402 = vmatpush2.msra.mxu0 0.0
    %7403 = vmatprep.subr.mxu0 0.0
    %7404 = vmatpush2.msra.mxu0 0.0
    %7405 = vmatprep.subr.mxu0 0.0
    %7406 = vmatpush2.msra.mxu0 0.0
    %7407 = vmatprep.subr.mxu0 0.0
    %7408 = vmatpush2.msra.mxu0 0.0
    %7409 = vmatprep.subr.mxu0 0.0
    %7410 = vmatpush2.msra.mxu0 0.0
    %7411 = vmatprep.subr.mxu0 0.0
    %7412 = vmatpush2.msra.mxu0 0.0
    %7413 = vmatprep.subr.mxu0 0.0
    %7414 = vmatpush2.msra.mxu0 0.0
    %7415 = vmatprep.subr.mxu0 0.0
    %7416 = vmatpush2.msra.mxu0 0.0
    %7417 = vmatprep.mubr.f32.mxu0 0.0
    %7418 = vmatmul.mubr.f32.gmra.mxu0 %v7348
    %v7419 = vpop.f32.mrf.mxu0
    %v7420 = vadd.f32 0.0, %v7419
    %v7421 = vpop.f32.mrf.mxu0
    %7422 = vdwg.mxu0
    %v7423 = vadd.f32 %v7341, %v7420
    %s7424 = scalar_lea.vmem %s8, 384
    %v7425 = vld [vmem:[%s7424] sm:$0xff]
    %v7426 = vld [vmem:[%s7424 + $0x8] sm:$0xff]
    %v7427 = vld [vmem:[%s7424 + $0x10] sm:$0xff]
    %v7428 = vld [vmem:[%s7424 + $0x18] sm:$0x1]
    %v7430 = vsel %vm6452, %v6438, 0
    %v7433 = vsel %vm6455, %v7428, 0
    %7435 = vmatprep.subr.mxu0 0.0
    %7436 = vmatpush1.msra.mxu0 0.0
    %7437 = vmatprep.subr.mxu0 0.0
    %7438 = vmatpush1.msra.mxu0 0.0
    %7439 = vmatprep.subr.mxu0 0.0
    %7440 = vmatpush1.msra.mxu0 0.0
    %7441 = vmatprep.subr.mxu0 0.0
    %7442 = vmatpush1.msra.mxu0 0.0
    %7443 = vmatprep.subr.mxu0 0.0
    %7444 = vmatpush1.msra.mxu0 0.0
    %7445 = vmatprep.subr.mxu0 0.0
    %7446 = vmatpush1.msra.mxu0 0.0
    %7447 = vmatprep.subr.mxu0 0.0
    %7448 = vmatpush1.msra.mxu0 0.0
    %7449 = vmatprep.subr.mxu0 0.0
    %7450 = vmatpush1.msra.mxu0 0.0
    %7451 = vmatprep.subr.mxu0 0.0
    %7452 = vmatpush1.msra.mxu0 0.0
    %7453 = vmatprep.subr.mxu0 0.0
    %7454 = vmatpush1.msra.mxu0 0.0
    %7455 = vmatprep.subr.mxu0 0.0
    %7456 = vmatpush1.msra.mxu0 0.0
    %7457 = vmatprep.subr.mxu0 0.0
    %7458 = vmatpush1.msra.mxu0 0.0
    %7459 = vmatprep.subr.mxu0 0.0
    %7460 = vmatpush1.msra.mxu0 %v7433
    %7461 = vmatprep.subr.mxu0 0.0
    %7462 = vmatpush1.msra.mxu0 %v7427
    %7463 = vmatprep.subr.mxu0 0.0
    %7464 = vmatpush1.msra.mxu0 %v7426
    %7465 = vmatprep.subr.mxu0 0.0
    %7466 = vmatpush1.msra.mxu0 %v7425
    %7467 = vmatprep.subr.mxu0 0.0
    %7468 = vmatpush2.msra.mxu0 0.0
    %7469 = vmatprep.subr.mxu0 0.0
    %7470 = vmatpush2.msra.mxu0 0.0
    %7471 = vmatprep.subr.mxu0 0.0
    %7472 = vmatpush2.msra.mxu0 0.0
    %7473 = vmatprep.subr.mxu0 0.0
    %7474 = vmatpush2.msra.mxu0 0.0
    %7475 = vmatprep.subr.mxu0 0.0
    %7476 = vmatpush2.msra.mxu0 0.0
    %7477 = vmatprep.subr.mxu0 0.0
    %7478 = vmatpush2.msra.mxu0 0.0
    %7479 = vmatprep.subr.mxu0 0.0
    %7480 = vmatpush2.msra.mxu0 0.0
    %7481 = vmatprep.subr.mxu0 0.0
    %7482 = vmatpush2.msra.mxu0 0.0
    %7483 = vmatprep.subr.mxu0 0.0
    %7484 = vmatpush2.msra.mxu0 0.0
    %7485 = vmatprep.subr.mxu0 0.0
    %7486 = vmatpush2.msra.mxu0 0.0
    %7487 = vmatprep.subr.mxu0 0.0
    %7488 = vmatpush2.msra.mxu0 0.0
    %7489 = vmatprep.subr.mxu0 0.0
    %7490 = vmatpush2.msra.mxu0 0.0
    %7491 = vmatprep.subr.mxu0 0.0
    %7492 = vmatpush2.msra.mxu0 0.0
    %7493 = vmatprep.subr.mxu0 0.0
    %7494 = vmatpush2.msra.mxu0 0.0
    %7495 = vmatprep.subr.mxu0 0.0
    %7496 = vmatpush2.msra.mxu0 0.0
    %7497 = vmatprep.subr.mxu0 0.0
    %7498 = vmatpush2.msra.mxu0 0.0
    %7499 = vmatprep.mubr.f32.mxu0 0.0
    %7500 = vmatmul.mubr.f32.gmra.mxu0 %v7430
    %v7501 = vpop.f32.mrf.mxu0
    %v7502 = vadd.f32 0.0, %v7501
    %v7503 = vpop.f32.mrf.mxu0
    %7504 = vdwg.mxu0
    %v7505 = vadd.f32 %v7423, %v7502
    %s7506 = scalar_lea.vmem %s8, 416
    %v7507 = vld [vmem:[%s7506] sm:$0xff]
    %v7508 = vld [vmem:[%s7506 + $0x8] sm:$0xff]
    %v7509 = vld [vmem:[%s7506 + $0x10] sm:$0xff]
    %v7510 = vld [vmem:[%s7506 + $0x18] sm:$0x1]
    %v7511 = vrot.slane %v6438, 2
    %v7512 = vsel %vm6452, %v7511, 0
    %v7515 = vsel %vm6455, %v7510, 0
    %7517 = vmatprep.subr.mxu0 0.0
    %7518 = vmatpush1.msra.mxu0 0.0
    %7519 = vmatprep.subr.mxu0 0.0
    %7520 = vmatpush1.msra.mxu0 0.0
    %7521 = vmatprep.subr.mxu0 0.0
    %7522 = vmatpush1.msra.mxu0 0.0
    %7523 = vmatprep.subr.mxu0 0.0
    %7524 = vmatpush1.msra.mxu0 0.0
    %7525 = vmatprep.subr.mxu0 0.0
    %7526 = vmatpush1.msra.mxu0 0.0
    %7527 = vmatprep.subr.mxu0 0.0
    %7528 = vmatpush1.msra.mxu0 0.0
    %7529 = vmatprep.subr.mxu0 0.0
    %7530 = vmatpush1.msra.mxu0 0.0
    %7531 = vmatprep.subr.mxu0 0.0
    %7532 = vmatpush1.msra.mxu0 0.0
    %7533 = vmatprep.subr.mxu0 0.0
    %7534 = vmatpush1.msra.mxu0 0.0
    %7535 = vmatprep.subr.mxu0 0.0
    %7536 = vmatpush1.msra.mxu0 0.0
    %7537 = vmatprep.subr.mxu0 0.0
    %7538 = vmatpush1.msra.mxu0 0.0
    %7539 = vmatprep.subr.mxu0 0.0
    %7540 = vmatpush1.msra.mxu0 0.0
    %7541 = vmatprep.subr.mxu0 0.0
    %7542 = vmatpush1.msra.mxu0 %v7515
    %7543 = vmatprep.subr.mxu0 0.0
    %7544 = vmatpush1.msra.mxu0 %v7509
    %7545 = vmatprep.subr.mxu0 0.0
    %7546 = vmatpush1.msra.mxu0 %v7508
    %7547 = vmatprep.subr.mxu0 0.0
    %7548 = vmatpush1.msra.mxu0 %v7507
    %7549 = vmatprep.subr.mxu0 0.0
    %7550 = vmatpush2.msra.mxu0 0.0
    %7551 = vmatprep.subr.mxu0 0.0
    %7552 = vmatpush2.msra.mxu0 0.0
    %7553 = vmatprep.subr.mxu0 0.0
    %7554 = vmatpush2.msra.mxu0 0.0
    %7555 = vmatprep.subr.mxu0 0.0
    %7556 = vmatpush2.msra.mxu0 0.0
    %7557 = vmatprep.subr.mxu0 0.0
    %7558 = vmatpush2.msra.mxu0 0.0
    %7559 = vmatprep.subr.mxu0 0.0
    %7560 = vmatpush2.msra.mxu0 0.0
    %7561 = vmatprep.subr.mxu0 0.0
    %7562 = vmatpush2.msra.mxu0 0.0
    %7563 = vmatprep.subr.mxu0 0.0
    %7564 = vmatpush2.msra.mxu0 0.0
    %7565 = vmatprep.subr.mxu0 0.0
    %7566 = vmatpush2.msra.mxu0 0.0
    %7567 = vmatprep.subr.mxu0 0.0
    %7568 = vmatpush2.msra.mxu0 0.0
    %7569 = vmatprep.subr.mxu0 0.0
    %7570 = vmatpush2.msra.mxu0 0.0
    %7571 = vmatprep.subr.mxu0 0.0
    %7572 = vmatpush2.msra.mxu0 0.0
    %7573 = vmatprep.subr.mxu0 0.0
    %7574 = vmatpush2.msra.mxu0 0.0
    %7575 = vmatprep.subr.mxu0 0.0
    %7576 = vmatpush2.msra.mxu0 0.0
    %7577 = vmatprep.subr.mxu0 0.0
    %7578 = vmatpush2.msra.mxu0 0.0
    %7579 = vmatprep.subr.mxu0 0.0
    %7580 = vmatpush2.msra.mxu0 0.0
    %7581 = vmatprep.mubr.f32.mxu0 0.0
    %7582 = vmatmul.mubr.f32.gmra.mxu0 %v7512
    %v7583 = vpop.f32.mrf.mxu0
    %v7584 = vadd.f32 0.0, %v7583
    %v7585 = vpop.f32.mrf.mxu0
    %7586 = vdwg.mxu0
    %v7587 = vadd.f32 %v7505, %v7584
    %s7588 = scalar_lea.vmem %s8, 448
    %v7589 = vld [vmem:[%s7588] sm:$0xff]
    %v7590 = vld [vmem:[%s7588 + $0x8] sm:$0xff]
    %v7591 = vld [vmem:[%s7588 + $0x10] sm:$0xff]
    %v7592 = vld [vmem:[%s7588 + $0x18] sm:$0x1]
    %v7593 = vrot.slane %v6438, 4
    %v7594 = vsel %vm6452, %v7593, 0
    %v7597 = vsel %vm6455, %v7592, 0
    %7599 = vmatprep.subr.mxu0 0.0
    %7600 = vmatpush1.msra.mxu0 0.0
    %7601 = vmatprep.subr.mxu0 0.0
    %7602 = vmatpush1.msra.mxu0 0.0
    %7603 = vmatprep.subr.mxu0 0.0
    %7604 = vmatpush1.msra.mxu0 0.0
    %7605 = vmatprep.subr.mxu0 0.0
    %7606 = vmatpush1.msra.mxu0 0.0
    %7607 = vmatprep.subr.mxu0 0.0
    %7608 = vmatpush1.msra.mxu0 0.0
    %7609 = vmatprep.subr.mxu0 0.0
    %7610 = vmatpush1.msra.mxu0 0.0
    %7611 = vmatprep.subr.mxu0 0.0
    %7612 = vmatpush1.msra.mxu0 0.0
    %7613 = vmatprep.subr.mxu0 0.0
    %7614 = vmatpush1.msra.mxu0 0.0
    %7615 = vmatprep.subr.mxu0 0.0
    %7616 = vmatpush1.msra.mxu0 0.0
    %7617 = vmatprep.subr.mxu0 0.0
    %7618 = vmatpush1.msra.mxu0 0.0
    %7619 = vmatprep.subr.mxu0 0.0
    %7620 = vmatpush1.msra.mxu0 0.0
    %7621 = vmatprep.subr.mxu0 0.0
    %7622 = vmatpush1.msra.mxu0 0.0
    %7623 = vmatprep.subr.mxu0 0.0
    %7624 = vmatpush1.msra.mxu0 %v7597
    %7625 = vmatprep.subr.mxu0 0.0
    %7626 = vmatpush1.msra.mxu0 %v7591
    %7627 = vmatprep.subr.mxu0 0.0
    %7628 = vmatpush1.msra.mxu0 %v7590
    %7629 = vmatprep.subr.mxu0 0.0
    %7630 = vmatpush1.msra.mxu0 %v7589
    %7631 = vmatprep.subr.mxu0 0.0
    %7632 = vmatpush2.msra.mxu0 0.0
    %7633 = vmatprep.subr.mxu0 0.0
    %7634 = vmatpush2.msra.mxu0 0.0
    %7635 = vmatprep.subr.mxu0 0.0
    %7636 = vmatpush2.msra.mxu0 0.0
    %7637 = vmatprep.subr.mxu0 0.0
    %7638 = vmatpush2.msra.mxu0 0.0
    %7639 = vmatprep.subr.mxu0 0.0
    %7640 = vmatpush2.msra.mxu0 0.0
    %7641 = vmatprep.subr.mxu0 0.0
    %7642 = vmatpush2.msra.mxu0 0.0
    %7643 = vmatprep.subr.mxu0 0.0
    %7644 = vmatpush2.msra.mxu0 0.0
    %7645 = vmatprep.subr.mxu0 0.0
    %7646 = vmatpush2.msra.mxu0 0.0
    %7647 = vmatprep.subr.mxu0 0.0
    %7648 = vmatpush2.msra.mxu0 0.0
    %7649 = vmatprep.subr.mxu0 0.0
    %7650 = vmatpush2.msra.mxu0 0.0
    %7651 = vmatprep.subr.mxu0 0.0
    %7652 = vmatpush2.msra.mxu0 0.0
    %7653 = vmatprep.subr.mxu0 0.0
    %7654 = vmatpush2.msra.mxu0 0.0
    %7655 = vmatprep.subr.mxu0 0.0
    %7656 = vmatpush2.msra.mxu0 0.0
    %7657 = vmatprep.subr.mxu0 0.0
    %7658 = vmatpush2.msra.mxu0 0.0
    %7659 = vmatprep.subr.mxu0 0.0
    %7660 = vmatpush2.msra.mxu0 0.0
    %7661 = vmatprep.subr.mxu0 0.0
    %7662 = vmatpush2.msra.mxu0 0.0
    %7663 = vmatprep.mubr.f32.mxu0 0.0
    %7664 = vmatmul.mubr.f32.gmra.mxu0 %v7594
    %v7665 = vpop.f32.mrf.mxu0
    %v7666 = vadd.f32 0.0, %v7665
    %v7667 = vpop.f32.mrf.mxu0
    %7668 = vdwg.mxu0
    %v7669 = vadd.f32 %v7587, %v7666
    %s7670 = scalar_lea.vmem %s8, 480
    %v7671 = vld [vmem:[%s7670] sm:$0xff]
    %v7672 = vld [vmem:[%s7670 + $0x8] sm:$0xff]
    %v7673 = vld [vmem:[%s7670 + $0x10] sm:$0xff]
    %v7674 = vld [vmem:[%s7670 + $0x18] sm:$0x1]
    %v7675 = vrot.slane %v6438, 6
    %v7676 = vsel %vm6452, %v7675, 0
    %v7679 = vsel %vm6455, %v7674, 0
    %7681 = vmatprep.subr.mxu0 0.0
    %7682 = vmatpush1.msra.mxu0 0.0
    %7683 = vmatprep.subr.mxu0 0.0
    %7684 = vmatpush1.msra.mxu0 0.0
    %7685 = vmatprep.subr.mxu0 0.0
    %7686 = vmatpush1.msra.mxu0 0.0
    %7687 = vmatprep.subr.mxu0 0.0
    %7688 = vmatpush1.msra.mxu0 0.0
    %7689 = vmatprep.subr.mxu0 0.0
    %7690 = vmatpush1.msra.mxu0 0.0
    %7691 = vmatprep.subr.mxu0 0.0
    %7692 = vmatpush1.msra.mxu0 0.0
    %7693 = vmatprep.subr.mxu0 0.0
    %7694 = vmatpush1.msra.mxu0 0.0
    %7695 = vmatprep.subr.mxu0 0.0
    %7696 = vmatpush1.msra.mxu0 0.0
    %7697 = vmatprep.subr.mxu0 0.0
    %7698 = vmatpush1.msra.mxu0 0.0
    %7699 = vmatprep.subr.mxu0 0.0
    %7700 = vmatpush1.msra.mxu0 0.0
    %7701 = vmatprep.subr.mxu0 0.0
    %7702 = vmatpush1.msra.mxu0 0.0
    %7703 = vmatprep.subr.mxu0 0.0
    %7704 = vmatpush1.msra.mxu0 0.0
    %7705 = vmatprep.subr.mxu0 0.0
    %7706 = vmatpush1.msra.mxu0 %v7679
    %7707 = vmatprep.subr.mxu0 0.0
    %7708 = vmatpush1.msra.mxu0 %v7673
    %7709 = vmatprep.subr.mxu0 0.0
    %7710 = vmatpush1.msra.mxu0 %v7672
    %7711 = vmatprep.subr.mxu0 0.0
    %7712 = vmatpush1.msra.mxu0 %v7671
    %7713 = vmatprep.subr.mxu0 0.0
    %7714 = vmatpush2.msra.mxu0 0.0
    %7715 = vmatprep.subr.mxu0 0.0
    %7716 = vmatpush2.msra.mxu0 0.0
    %7717 = vmatprep.subr.mxu0 0.0
    %7718 = vmatpush2.msra.mxu0 0.0
    %7719 = vmatprep.subr.mxu0 0.0
    %7720 = vmatpush2.msra.mxu0 0.0
    %7721 = vmatprep.subr.mxu0 0.0
    %7722 = vmatpush2.msra.mxu0 0.0
    %7723 = vmatprep.subr.mxu0 0.0
    %7724 = vmatpush2.msra.mxu0 0.0
    %7725 = vmatprep.subr.mxu0 0.0
    %7726 = vmatpush2.msra.mxu0 0.0
    %7727 = vmatprep.subr.mxu0 0.0
    %7728 = vmatpush2.msra.mxu0 0.0
    %7729 = vmatprep.subr.mxu0 0.0
    %7730 = vmatpush2.msra.mxu0 0.0
    %7731 = vmatprep.subr.mxu0 0.0
    %7732 = vmatpush2.msra.mxu0 0.0
    %7733 = vmatprep.subr.mxu0 0.0
    %7734 = vmatpush2.msra.mxu0 0.0
    %7735 = vmatprep.subr.mxu0 0.0
    %7736 = vmatpush2.msra.mxu0 0.0
    %7737 = vmatprep.subr.mxu0 0.0
    %7738 = vmatpush2.msra.mxu0 0.0
    %7739 = vmatprep.subr.mxu0 0.0
    %7740 = vmatpush2.msra.mxu0 0.0
    %7741 = vmatprep.subr.mxu0 0.0
    %7742 = vmatpush2.msra.mxu0 0.0
    %7743 = vmatprep.subr.mxu0 0.0
    %7744 = vmatpush2.msra.mxu0 0.0
    %7745 = vmatprep.mubr.f32.mxu0 0.0
    %7746 = vmatmul.mubr.f32.gmra.mxu0 %v7676
    %v7747 = vpop.f32.mrf.mxu0
    %v7748 = vadd.f32 0.0, %v7747
    %v7749 = vpop.f32.mrf.mxu0
    %7750 = vdwg.mxu0
    %v7751 = vadd.f32 %v7669, %v7748
    %v7752 = vld [vmem:[%s9] sm:$0x1]
    %v7754 = vlaneseq
    %v7755 = vshrl.u32 %v7754, 7
    %v7756 = vsub.s32 0, %v7755
    %v7757 = vrot.slane %v7752, %v7756
    %v7759 = vadd.f32 %v7751, %v7757
    %v7760 = vtanh.pop %v7759
    %v7761 = vld [vmem:[%s10] sm:$0xff]
    %v7762 = vld [vmem:[%s10 + $0x8] sm:$0xff]
    %v7763 = vld [vmem:[%s10 + $0x10] sm:$0xff]
    %v7764 = vld [vmem:[%s10 + $0x18] sm:$0xff]
    %v7765 = vld [vmem:[%s10 + $0x20] sm:$0xff]
    %v7766 = vld [vmem:[%s10 + $0x28] sm:$0xff]
    %v7767 = vld [vmem:[%s10 + $0x30] sm:$0xff]
    %v7768 = vld [vmem:[%s10 + $0x38] sm:$0xff]
    %v7769 = vld [vmem:[%s10 + $0x40] sm:$0xff]
    %v7770 = vld [vmem:[%s10 + $0x48] sm:$0xff]
    %v7771 = vld [vmem:[%s10 + $0x50] sm:$0xff]
    %v7772 = vld [vmem:[%s10 + $0x58] sm:$0xff]
    %v7773 = vld [vmem:[%s10 + $0x60] sm:$0xff]
    %v7774 = vld [vmem:[%s10 + $0x68] sm:$0xff]
    %v7775 = vld [vmem:[%s10 + $0x70] sm:$0xff]
    %v7776 = vld [vmem:[%s10 + $0x78] sm:$0xff]
    %v7777 = vld [vmem:[%s11] sm:$0x1]
    %v7779 = vlaneseq
    %v7780 = vshrl.u32 %v7779, 7
    %v7781 = vsub.s32 0, %v7780
    %v7782 = vrot.slane %v7777, %v7781
    %7784 = vmatprep.subr.mxu0 0.0
    %7785 = vmatpush1.msra.mxu0 %v7776
    %7786 = vmatprep.subr.mxu0 0.0
    %7787 = vmatpush1.msra.mxu0 %v7775
    %7788 = vmatprep.subr.mxu0 0.0
    %7789 = vmatpush1.msra.mxu0 %v7774
    %7790 = vmatprep.subr.mxu0 0.0
    %7791 = vmatpush1.msra.mxu0 %v7773
    %7792 = vmatprep.subr.mxu0 0.0
    %7793 = vmatpush1.msra.mxu0 %v7772
    %7794 = vmatprep.subr.mxu0 0.0
    %7795 = vmatpush1.msra.mxu0 %v7771
    %7796 = vmatprep.subr.mxu0 0.0
    %7797 = vmatpush1.msra.mxu0 %v7770
    %7798 = vmatprep.subr.mxu0 0.0
    %7799 = vmatpush1.msra.mxu0 %v7769
    %7800 = vmatprep.subr.mxu0 0.0
    %7801 = vmatpush1.msra.mxu0 %v7768
    %7802 = vmatprep.subr.mxu0 0.0
    %7803 = vmatpush1.msra.mxu0 %v7767
    %7804 = vmatprep.subr.mxu0 0.0
    %7805 = vmatpush1.msra.mxu0 %v7766
    %7806 = vmatprep.subr.mxu0 0.0
    %7807 = vmatpush1.msra.mxu0 %v7765
    %7808 = vmatprep.subr.mxu0 0.0
    %7809 = vmatpush1.msra.mxu0 %v7764
    %7810 = vmatprep.subr.mxu0 0.0
    %7811 = vmatpush1.msra.mxu0 %v7763
    %7812 = vmatprep.subr.mxu0 0.0
    %7813 = vmatpush1.msra.mxu0 %v7762
    %7814 = vmatprep.subr.mxu0 0.0
    %7815 = vmatpush1.msra.mxu0 %v7761
    %7816 = vmatprep.subr.mxu0 0.0
    %7817 = vmatpush2.msra.mxu0 0.0
    %7818 = vmatprep.subr.mxu0 0.0
    %7819 = vmatpush2.msra.mxu0 0.0
    %7820 = vmatprep.subr.mxu0 0.0
    %7821 = vmatpush2.msra.mxu0 0.0
    %7822 = vmatprep.subr.mxu0 0.0
    %7823 = vmatpush2.msra.mxu0 0.0
    %7824 = vmatprep.subr.mxu0 0.0
    %7825 = vmatpush2.msra.mxu0 0.0
    %7826 = vmatprep.subr.mxu0 0.0
    %7827 = vmatpush2.msra.mxu0 0.0
    %7828 = vmatprep.subr.mxu0 0.0
    %7829 = vmatpush2.msra.mxu0 0.0
    %7830 = vmatprep.subr.mxu0 0.0
    %7831 = vmatpush2.msra.mxu0 0.0
    %7832 = vmatprep.subr.mxu0 0.0
    %7833 = vmatpush2.msra.mxu0 0.0
    %7834 = vmatprep.subr.mxu0 0.0
    %7835 = vmatpush2.msra.mxu0 0.0
    %7836 = vmatprep.subr.mxu0 0.0
    %7837 = vmatpush2.msra.mxu0 0.0
    %7838 = vmatprep.subr.mxu0 0.0
    %7839 = vmatpush2.msra.mxu0 0.0
    %7840 = vmatprep.subr.mxu0 0.0
    %7841 = vmatpush2.msra.mxu0 0.0
    %7842 = vmatprep.subr.mxu0 0.0
    %7843 = vmatpush2.msra.mxu0 0.0
    %7844 = vmatprep.subr.mxu0 0.0
    %7845 = vmatpush2.msra.mxu0 0.0
    %7846 = vmatprep.subr.mxu0 0.0
    %7847 = vmatpush2.msra.mxu0 0.0
    %7848 = vmatprep.mubr.f32.mxu0 0.0
    %7849 = vmatmul.mubr.f32.gmra.mxu0 %v7760
    %v7850 = vpop.f32.mrf.mxu0
    %v7851 = vadd.f32 %v7782, %v7850
    %v7852 = vpop.f32.mrf.mxu0
    %7853 = vdwg.mxu0
    %v7854 = vtanh.pop %v7851
    %v7855 = vld [vmem:[%s12] sm:$0xff]
    %v7856 = vld [vmem:[%s12 + $0x8] sm:$0xff]
    %v7857 = vld [vmem:[%s12 + $0x10] sm:$0xff]
    %v7858 = vld [vmem:[%s12 + $0x18] sm:$0xff]
    %v7859 = vld [vmem:[%s12 + $0x20] sm:$0xff]
    %v7860 = vld [vmem:[%s12 + $0x28] sm:$0xff]
    %v7861 = vld [vmem:[%s12 + $0x30] sm:$0xff]
    %v7862 = vld [vmem:[%s12 + $0x38] sm:$0xff]
    %v7863 = vld [vmem:[%s12 + $0x40] sm:$0xff]
    %v7864 = vld [vmem:[%s12 + $0x48] sm:$0xff]
    %v7865 = vld [vmem:[%s12 + $0x50] sm:$0xff]
    %v7866 = vld [vmem:[%s12 + $0x58] sm:$0xff]
    %v7867 = vld [vmem:[%s12 + $0x60] sm:$0xff]
    %v7868 = vld [vmem:[%s12 + $0x68] sm:$0xff]
    %v7869 = vld [vmem:[%s12 + $0x70] sm:$0xff]
    %v7870 = vld [vmem:[%s12 + $0x78] sm:$0xff]
    %v7871 = vld [vmem:[%s13] sm:$0x1]
    %v7873 = vlaneseq
    %v7874 = vshrl.u32 %v7873, 7
    %v7875 = vsub.s32 0, %v7874
    %v7876 = vrot.slane %v7871, %v7875
    %7878 = vmatprep.subr.mxu0 0.0
    %7879 = vmatpush1.msra.mxu0 %v7870
    %7880 = vmatprep.subr.mxu0 0.0
    %7881 = vmatpush1.msra.mxu0 %v7869
    %7882 = vmatprep.subr.mxu0 0.0
    %7883 = vmatpush1.msra.mxu0 %v7868
    %7884 = vmatprep.subr.mxu0 0.0
    %7885 = vmatpush1.msra.mxu0 %v7867
    %7886 = vmatprep.subr.mxu0 0.0
    %7887 = vmatpush1.msra.mxu0 %v7866
    %7888 = vmatprep.subr.mxu0 0.0
    %7889 = vmatpush1.msra.mxu0 %v7865
    %7890 = vmatprep.subr.mxu0 0.0
    %7891 = vmatpush1.msra.mxu0 %v7864
    %7892 = vmatprep.subr.mxu0 0.0
    %7893 = vmatpush1.msra.mxu0 %v7863
    %7894 = vmatprep.subr.mxu0 0.0
    %7895 = vmatpush1.msra.mxu0 %v7862
    %7896 = vmatprep.subr.mxu0 0.0
    %7897 = vmatpush1.msra.mxu0 %v7861
    %7898 = vmatprep.subr.mxu0 0.0
    %7899 = vmatpush1.msra.mxu0 %v7860
    %7900 = vmatprep.subr.mxu0 0.0
    %7901 = vmatpush1.msra.mxu0 %v7859
    %7902 = vmatprep.subr.mxu0 0.0
    %7903 = vmatpush1.msra.mxu0 %v7858
    %7904 = vmatprep.subr.mxu0 0.0
    %7905 = vmatpush1.msra.mxu0 %v7857
    %7906 = vmatprep.subr.mxu0 0.0
    %7907 = vmatpush1.msra.mxu0 %v7856
    %7908 = vmatprep.subr.mxu0 0.0
    %7909 = vmatpush1.msra.mxu0 %v7855
    %7910 = vmatprep.subr.mxu0 0.0
    %7911 = vmatpush2.msra.mxu0 0.0
    %7912 = vmatprep.subr.mxu0 0.0
    %7913 = vmatpush2.msra.mxu0 0.0
    %7914 = vmatprep.subr.mxu0 0.0
    %7915 = vmatpush2.msra.mxu0 0.0
    %7916 = vmatprep.subr.mxu0 0.0
    %7917 = vmatpush2.msra.mxu0 0.0
    %7918 = vmatprep.subr.mxu0 0.0
    %7919 = vmatpush2.msra.mxu0 0.0
    %7920 = vmatprep.subr.mxu0 0.0
    %7921 = vmatpush2.msra.mxu0 0.0
    %7922 = vmatprep.subr.mxu0 0.0
    %7923 = vmatpush2.msra.mxu0 0.0
    %7924 = vmatprep.subr.mxu0 0.0
    %7925 = vmatpush2.msra.mxu0 0.0
    %7926 = vmatprep.subr.mxu0 0.0
    %7927 = vmatpush2.msra.mxu0 0.0
    %7928 = vmatprep.subr.mxu0 0.0
    %7929 = vmatpush2.msra.mxu0 0.0
    %7930 = vmatprep.subr.mxu0 0.0
    %7931 = vmatpush2.msra.mxu0 0.0
    %7932 = vmatprep.subr.mxu0 0.0
    %7933 = vmatpush2.msra.mxu0 0.0
    %7934 = vmatprep.subr.mxu0 0.0
    %7935 = vmatpush2.msra.mxu0 0.0
    %7936 = vmatprep.subr.mxu0 0.0
    %7937 = vmatpush2.msra.mxu0 0.0
    %7938 = vmatprep.subr.mxu0 0.0
    %7939 = vmatpush2.msra.mxu0 0.0
    %7940 = vmatprep.subr.mxu0 0.0
    %7941 = vmatpush2.msra.mxu0 0.0
    %7942 = vmatprep.mubr.f32.mxu0 0.0
    %7943 = vmatmul.mubr.f32.gmra.mxu0 %v7854
    %v7944 = vpop.f32.mrf.mxu0
    %v7945 = vadd.f32 %v7876, %v7944
    %v7946 = vpop.f32.mrf.mxu0
    %7947 = vdwg.mxu0
    %v7948 = vtanh.pop %v7945
    %7949 = vst [vmem:[#allocation2] sm:$0x3] %v7948
    // Predicated region
    $region58: #{lenet_forward.1} parent=1 // pred_check
      _
    $region59: #{lenet_forward.1} parent=1 // pred_check_branch
      %7951 = sbr.rel (0) target = $region61
    $region60: #{lenet_forward.1} parent=1 // pred_region
      %s7953 = ssub.s32 32, 32
      %7954 = vsyncadd [#allocation3], %s7953
      %s7956 = sshll.u32 [#allocation2], 4
      %s7957 = int_to_ptr.vmem [resolvable:$true] %s7956
      %7959 = dma.vmem_to_hbm [thread:$0]  %s7957, 32, %s14, [#allocation3]
    $region61: #{lenet_forward.1} parent=1 // pred_fallthru
      _
    // Predicated region
    $region62: #{lenet_forward.1} parent=1 // pred_check
      _
    $region63: #{lenet_forward.1} parent=1 // pred_check_branch
      %7961 = sbr.rel (0) target = $region65
    $region64: #{lenet_forward.1} parent=1 // pred_region
      %7962 = dma.done [#allocation3], 32
    $region65: #{lenet_forward.1} parent=1 // pred_fallthru
      _
    %7963 = vsyncpa [#allocation3], 1

</llo_original>
